<compile_context>
chip_gen: v7x
topology: tpu7x:2x2x1
jax: 0.10.0
libtpu: 0.0.40
codegen_flags: <defaults>
</compile_context>

<pallas_src>
import functools

import jax
import jax.numpy as jnp
from jax.experimental import pallas as pl
from jax.experimental.pallas import tpu as pltpu

EPS = 1e-5                            # nn.InstanceNorm2d default eps
CPAD = 128                            # lane-dense output-channel padding
VMEM_LIMIT_BYTES = 32 * 1024 * 1024   # explicit scoped-VMEM cap (safe on v5e/v6e/v7x)


def _round_up(x, m):
    return (x + m - 1) // m * m


# ----------------------------- Pallas kernels ------------------------------

def _elu(a):
    # ELU(alpha=1); clamp the exp argument so the discarded branch cannot overflow to inf.
    return jnp.where(a > 0, a, jnp.exp(jnp.minimum(a, 0.0)) - 1.0)


def _make_conv_kernel(n, hw, norm, act, inv_count=1.0, cpad=CPAD):
    """Single-matmul conv: patches (M,Kpad) bf16 @ weight (Kpad,CPAD) bf16 -> f32 acc,
    + bias + {InstanceNorm | phase-grouped InstanceNorm | none} + {ELU | ReLU | none}."""
    m = n * hw

    def kernel(*refs):
        if norm == "phase":
            x_ref, w_ref, b_ref, g_ref, o_ref = refs
        else:
            x_ref, w_ref, b_ref, o_ref = refs

        acc = jnp.dot(x_ref[...], w_ref[...], preferred_element_type=jnp.float32)
        acc = acc + b_ref[...]

        if norm == "standard":
            a = acc.reshape(n, hw, cpad)
            mean = jnp.mean(a, axis=1, keepdims=True)
            c = a - mean
            var = jnp.mean(c * c, axis=1, keepdims=True)
            acc = (c * jax.lax.rsqrt(var + EPS)).reshape(m, cpad)
        elif norm == "phase":
            # Stats of output channel co are taken over all spatial positions AND the 4
            # sub-pixel phase lane groups {p*cout+co}; combined + broadcast with one tiny
            # matmul against the constant 0/1 phase-group matrix (no cross-lane relayouts).
            a = acc.reshape(n, hw, cpad)
            s1 = jnp.sum(a, axis=1)                    # (n, cpad)
            s2 = jnp.sum(a * a, axis=1)
            g = g_ref[...]
            mean = jnp.dot(s1, g, preferred_element_type=jnp.float32) * inv_count
            ex2 = jnp.dot(s2, g, preferred_element_type=jnp.float32) * inv_count
            var = jnp.maximum(ex2 - mean * mean, 0.0)
            acc = ((a - mean[:, None, :]) * jax.lax.rsqrt(var + EPS)[:, None, :]
                   ).reshape(m, cpad)

        if act == "elu":
            acc = _elu(acc)
        elif act == "relu":
            acc = jnp.maximum(acc, 0.0)

        o_ref[...] = acc                               # lane-dense full-width store

    return kernel


def _make_blocks_kernel(n_blocks, n, h, w, cin, kreal, kpad, cpad=CPAD):
    """All 6 resnet blocks (12 convs) fused in one kernel.  The activation stays resident in
    the VMEM output buffer across a fori_loop over blocks; reflect-pad(1) and the K-slab
    im2col packing are done in-VMEM."""
    hw = h * w
    m = n * hw

    def instance_norm(a):                              # (m, cpad) f32, per-sample stats
        a = a.reshape(n, hw, cpad)
        mean = jnp.mean(a, axis=1, keepdims=True)
        c = a - mean
        var = jnp.mean(c * c, axis=1, keepdims=True)
        return (c * jax.lax.rsqrt(var + EPS)).reshape(m, cpad)

    def conv3x3(x, w_k, b_k):                          # x: (n, h, w, cin) bf16
        # reflect-pad(1) via edge row/col copies
        xp = jnp.concatenate([x[:, 1:2], x, x[:, h - 2:h - 1]], axis=1)
        xp = jnp.concatenate([xp[:, :, 1:2], xp, xp[:, :, w - 2:w - 1]], axis=2)
        # small in-VMEM im2col: real channels of all 9 taps packed into lane-dense K slabs
        taps = [xp[:, ki:ki + h, kj:kj + w, :] for ki in range(3) for kj in range(3)]
        if kpad > kreal:
            taps.append(jnp.zeros((n, h, w, kpad - kreal), jnp.bfloat16))
        patches = jnp.concatenate(taps, axis=-1).reshape(m, kpad)
        return jnp.dot(patches, w_k, preferred_element_type=jnp.float32) + b_k

    def kernel(x_ref, w1_ref, b1_ref, w2_ref, b2_ref, o_ref):
        o_ref[...] = x_ref[...]                        # activation becomes VMEM-resident

        def body(i, carry):
            x = o_ref[...]                             # (n, h, w, cpad) f32
            xb = x[..., :cin].astype(jnp.bfloat16)     # cast once per conv input
            hmid = jnp.maximum(instance_norm(conv3x3(xb, w1_ref[i], b1_ref[i])), 0.0)
            hb = hmid.reshape(n, h, w, cpad)[..., :cin].astype(jnp.bfloat16)
            y = instance_norm(conv3x3(hb, w2_ref[i], b2_ref[i]))
            o_ref[...] = x + y.reshape(n, h, w, cpad)  # residual
            return carry

        jax.lax.fori_loop(0, n_blocks, body, 0)

    return kernel


# ------------------------------ pallas wrappers ------------------------------

def _conv_call(patches, w_pk, b_pk, *, n, hw, norm, act, g=None, inv_count=1.0):
    m, kpad = patches.shape
    inputs = [patches, w_pk, b_pk]
    in_specs = [
        pl.BlockSpec((m, kpad), lambda i: (0, 0)),
        pl.BlockSpec((kpad, CPAD), lambda i: (0, 0)),
        pl.BlockSpec((1, CPAD), lambda i: (0, 0)),
    ]
    if norm == "phase":
        inputs.append(g)
        in_specs.append(pl.BlockSpec((CPAD, CPAD), lambda i: (0, 0)))
    return pl.pallas_call(
        _make_conv_kernel(n, hw, norm, act, inv_count),
        out_shape=jax.ShapeDtypeStruct((m, CPAD), jnp.float32),
        grid=(1,),
        in_specs=in_specs,
        out_specs=pl.BlockSpec((m, CPAD), lambda i: (0, 0)),
        compiler_params=pltpu.CompilerParams(
            dimension_semantics=("arbitrary",),
            vmem_limit_bytes=VMEM_LIMIT_BYTES),
    )(*inputs)


def resnet_blocks_fused(x, blocks):
    n, h, w, cpad = x.shape
    cin = blocks[0][0][0].shape[1]
    kreal = 9 * cin
    kpad = _round_up(kreal, 128)
    nb = len(blocks)
    w1, b1, w2, b2 = [], [], [], []
    for (wa, ba), (wb, bb) in blocks:
        wp, bp = pack_conv_weight(wa, ba, kpad)
        w1.append(wp); b1.append(bp)
        wp, bp = pack_conv_weight(wb, bb, kpad)
        w2.append(wp); b2.append(bp)
    w1, b1 = jnp.stack(w1), jnp.stack(b1)
    w2, b2 = jnp.stack(w2), jnp.stack(b2)
    return pl.pallas_call(
        _make_blocks_kernel(nb, n, h, w, cin, kreal, kpad, cpad),
        out_shape=jax.ShapeDtypeStruct((n, h, w, cpad), jnp.float32),
        grid=(1,),
        in_specs=[
            pl.BlockSpec((n, h, w, cpad), lambda i: (0, 0, 0, 0)),
            pl.BlockSpec((nb, kpad, cpad), lambda i: (0, 0, 0)),
            pl.BlockSpec((nb, 1, cpad), lambda i: (0, 0, 0)),
            pl.BlockSpec((nb, kpad, cpad), lambda i: (0, 0, 0)),
            pl.BlockSpec((nb, 1, cpad), lambda i: (0, 0, 0)),
        ],
        out_specs=pl.BlockSpec((n, h, w, cpad), lambda i: (0, 0, 0, 0)),
        compiler_params=pltpu.CompilerParams(
            dimension_semantics=("arbitrary",),
            vmem_limit_bytes=VMEM_LIMIT_BYTES),
    )(x, w1, b1, w2, b2)


# ------------------------ layout / packing glue (plain JAX) ------------------

def reflect_pad(x, p):
    return jnp.pad(x, ((0, 0), (p, p), (p, p), (0, 0)), mode="reflect")


def zero_pad_hw(x, lo, hi=None):
    hi = lo if hi is None else hi
    return jnp.pad(x, ((0, 0), (lo, hi), (lo, hi), (0, 0)))


def im2col(x, kh, kw, stride=1):
    """Spatially pre-padded NHWC -> ((N*Ho*Wo, Kpad) bf16 patches, (Ho, Wo)); K packs the
    real channels of all kh*kw taps, padded only to the next multiple of 128."""
    x = x.astype(jnp.bfloat16)
    n, hp, wp, c = x.shape
    ho = (hp - kh) // stride + 1
    wo = (wp - kw) // stride + 1
    span_h = (ho - 1) * stride + 1
    span_w = (wo - 1) * stride + 1
    cols = [x[:, ki:ki + span_h:stride, kj:kj + span_w:stride, :]
            for ki in range(kh) for kj in range(kw)]
    p = jnp.concatenate(cols, axis=-1)
    kreal = kh * kw * c
    kpad = _round_up(kreal, 128)
    if kpad > kreal:
        p = jnp.pad(p, ((0, 0), (0, 0), (0, 0), (0, kpad - kreal)))
    return p.reshape(n * ho * wo, kpad), (ho, wo)


def pack_conv_weight(w_pt, b, kpad, cpad=CPAD):
    """PyTorch conv weight [Cout,Cin,kh,kw] -> (Kpad, CPAD) bf16 with K order (ki,kj,ci)
    matching im2col; bias -> (1, CPAD) f32."""
    cout, cin, kh, kw = w_pt.shape
    kreal = kh * kw * cin
    wk = jnp.transpose(w_pt, (2, 3, 1, 0)).reshape(kreal, cout)
    wk = jnp.pad(wk, ((0, kpad - kreal), (0, cpad - cout))).astype(jnp.bfloat16)
    bp = jnp.pad(b.astype(jnp.float32), (0, cpad - cout)).reshape(1, cpad)
    return wk, bp


def make_subpixel_convT_weight(w_ct):
    """ConvTranspose2d(k=3,s=2,p=1,op=1) weight [Cin,Cout,3,3] -> equivalent stride-1 2x2
    sub-pixel conv weight [4*Cout, Cin, 2, 2]; output channel p*Cout+co, p=(oh%2)*2+(ow%2).
    Tap table derived from oh = 2*ih - 1 + kh (ow likewise)."""
    cin, cout, _, _ = w_ct.shape
    w_new = jnp.zeros((4 * cout, cin, 2, 2), w_ct.dtype)
    assigns = [
        (0, 0, 0, 1, 1),
        (1, 0, 1, 1, 0), (1, 0, 0, 1, 2),
        (2, 1, 0, 0, 1), (2, 0, 0, 2, 1),
        (3, 1, 1, 0, 0), (3, 1, 0, 0, 2), (3, 0, 1, 2, 0), (3, 0, 0, 2, 2),
    ]
    for p, di, dj, a, bb in assigns:
        w_new = w_new.at[p * cout:(p + 1) * cout, :, di, dj].set(w_ct[:, :, a, bb].T)
    return w_new


def depth_to_space2(y, cout):
    """Phase-packed [N, Ho, Wo, >=4*Cout] -> [N, 2*Ho, 2*Wo, Cout] (pure layout)."""
    n, ho, wo = y.shape[0], y.shape[1], y.shape[2]
    y = y[..., :4 * cout].reshape(n, ho, wo, 2, 2, cout)
    return jnp.transpose(y, (0, 1, 3, 2, 4, 5)).reshape(n, 2 * ho, 2 * wo, cout)


def phase_group_matrix(cout, cpad=CPAD):
    """G[j,k] = 1 iff lanes j,k belong to the same real output channel across the 4 sub-pixel
    phases (lane layout p*cout+co); used to combine+broadcast IN stats with one matmul."""
    idx = jnp.arange(cpad)
    valid = idx < 4 * cout
    co = idx % cout
    same = (co[:, None] == co[None, :]) & valid[:, None] & valid[None, :]
    return same.astype(jnp.float32)


# ------------------------- parameter construction --------------------------

def _uniform(key, shape, bound):
    return jax.random.uniform(key, shape, jnp.float32, -bound, bound)


def init_conv(key, cin, cout, k):
    kw_, kb_ = jax.random.split(key)
    bound = 1.0 / (cin * k * k) ** 0.5
    return _uniform(kw_, (cout, cin, k, k), bound), _uniform(kb_, (cout,), bound)


def init_convT(key, cin, cout, k):
    kw_, kb_ = jax.random.split(key)
    bound = 1.0 / (cout * k * k) ** 0.5
    return _uniform(kw_, (cin, cout, k, k), bound), _uniform(kb_, (cout,), bound)


def init_params(key, channels, ngf_base, n_blocks=6):
    ngf = ngf_base * 2  # config.model.ngf * 2
    keys = jax.random.split(key, 4 + 2 * n_blocks)
    return {
        "conv_in": init_conv(keys[0], channels, ngf, 7),
        "down0": init_conv(keys[1], ngf, ngf * 2, 3),
        "blocks": [
            (init_conv(keys[2 + 2 * i], ngf * 2, ngf * 2, 3),
             init_conv(keys[3 + 2 * i], ngf * 2, ngf * 2, 3))
            for i in range(n_blocks)
        ],
        "up0": init_convT(keys[2 + 2 * n_blocks], ngf * 2, ngf, 3),
        "conv_out": init_conv(keys[3 + 2 * n_blocks], ngf, channels, 7),
    }


# ------------------------------ forward pass --------------------------------

def resnet_score_forward(params, x_nchw):
    # NCHW float32 in/out (PyTorch convention); NHWC + lane-dense channels internally.
    x = jnp.transpose(x_nchw, (0, 2, 3, 1)).astype(jnp.float32)
    x = 2.0 * x - 1.0
    n, h, w, _ = x.shape
    assert h % 2 == 0 and w % 2 == 0, "spatial dims must be even for the down/upsample stage"

    # ReflectionPad2d(3) -> Conv 7x7 + bias -> InstanceNorm -> ELU
    wc, bc = params["conv_in"]
    patches, (ho, wo) = im2col(reflect_pad(x, 3), 7, 7)
    wp, bp = pack_conv_weight(wc, bc, patches.shape[1])
    x = _conv_call(patches, wp, bp, n=n, hw=ho * wo, norm="standard", act="elu")
    x = x.reshape(n, ho, wo, CPAD)

    # Conv 3x3 stride 2 pad 1 + bias -> InstanceNorm -> ELU (strided im2col, real-K packing)
    wc, bc = params["down0"]
    cin = wc.shape[1]
    patches, (hd, wd) = im2col(zero_pad_hw(x[..., :cin], 1), 3, 3, stride=2)
    wp, bp = pack_conv_weight(wc, bc, patches.shape[1])
    x = _conv_call(patches, wp, bp, n=n, hw=hd * wd, norm="standard", act="elu")
    x = x.reshape(n, hd, wd, CPAD)

    # 6 ResnetBlocks (refl-pad1 conv3 IN ReLU refl-pad1 conv3 IN, + skip), all in one kernel
    # TODO(synk): assumes the standard CycleGAN ResnetBlock (ReLU inside, no dropout).
    x = resnet_blocks_fused(x, params["blocks"])

    # ConvTranspose2d(3, s=2, p=1, op=1) + bias -> InstanceNorm -> ELU
    # sub-pixel 2x2 conv with phase-grouped IN + ELU fused; depth_to_space is pure layout.
    wc, bc = params["up0"]
    cin, cout = wc.shape[0], wc.shape[1]
    xp = jnp.pad(x[..., :cin], ((0, 0), (0, 1), (0, 1), (0, 0)))   # high-side zero pad
    patches, _ = im2col(xp, 2, 2)
    wp, bp = pack_conv_weight(make_subpixel_convT_weight(wc), jnp.tile(bc, 4),
                              patches.shape[1])
    y = _conv_call(patches, wp, bp, n=n, hw=hd * wd, norm="phase", act="elu",
                   g=phase_group_matrix(cout), inv_count=1.0 / (4.0 * hd * wd))
    y = depth_to_space2(y.reshape(n, hd, wd, CPAD), cout)          # (n, h, w, cout)

    # ReflectionPad2d(3) -> Conv 7x7 + bias (no norm / activation)
    wc, bc = params["conv_out"]
    cout = wc.shape[0]
    patches, _ = im2col(reflect_pad(y, 3), 7, 7)
    wp, bp = pack_conv_weight(wc, bc, patches.shape[1])
    out = _conv_call(patches, wp, bp, n=n, hw=h * w, norm="none", act="none")
    out = out.reshape(n, h, w, CPAD)[..., :cout]
    return jnp.transpose(out, (0, 3, 1, 2))


if __name__ == "__main__":
    key = jax.random.PRNGKey(0)
    k_param, k_x = jax.random.split(key)

    channels = 3      # config.data.channels
    ngf_base = 8      # config.model.ngf  (=> ngf = 16 inside the model)
    params = init_params(k_param, channels=channels, ngf_base=ngf_base, n_blocks=6)

    x = jax.random.uniform(k_x, (2, channels, 16, 16), jnp.float32)

    fwd = jax.jit(functools.partial(resnet_score_forward, params))
    out = jax.block_until_ready(fwd(x))

    assert out.shape == (2, channels, 16, 16), out.shape
    assert bool(jnp.all(jnp.isfinite(out)))
    print("KERNEL_OK")
</pallas_src>

<mosaic_0001>
module attributes {stable_mosaic.version = 11 : i64} {
  func.func @kernel(%arg0: i32, %arg1: memref<512x256xbf16, #tpu.memory_space<vmem>>, %arg2: memref<256x128xbf16, #tpu.memory_space<vmem>>, %arg3: memref<1x128xf32, #tpu.memory_space<vmem>>, %arg4: memref<512x128xf32, #tpu.memory_space<vmem>>) attributes {dimension_semantics = [#tpu.dimension_semantics<arbitrary>], iteration_bounds = array<i64: 1>, scalar_prefetch = 0 : i64, scratch_operands = 0 : i64, tpu.core_type = #tpu.core_type<tc>, window_params = [{pipeline_mode = #tpu.pipeline_mode<synchronous>, transform_indices = @transform_0, window_bounds = array<i64: 512, 256>}, {pipeline_mode = #tpu.pipeline_mode<synchronous>, transform_indices = @transform_1, window_bounds = array<i64: 256, 128>}, {pipeline_mode = #tpu.pipeline_mode<synchronous>, transform_indices = @transform_2, window_bounds = array<i64: 1, 128>}, {pipeline_mode = #tpu.pipeline_mode<synchronous>, transform_indices = @transform_3, window_bounds = array<i64: 512, 128>}]} {
    %c0 = arith.constant 0 : index
    %c0_0 = arith.constant 0 : index
    %0 = vector.load %arg1[%c0, %c0_0] : memref<512x256xbf16, #tpu.memory_space<vmem>>, vector<512x256xbf16>
    %c0_1 = arith.constant 0 : index
    %c0_2 = arith.constant 0 : index
    %1 = vector.load %arg2[%c0_1, %c0_2] : memref<256x128xbf16, #tpu.memory_space<vmem>>, vector<256x128xbf16>
    %cst = arith.constant dense<0.000000e+00> : vector<512x128xf32>
    %2 = tpu.matmul %0, %1, %cst {dimension_numbers = #tpu.dot_dimension_numbers<[1], [0], [0], [1], [0, 0, 1, 1], [], []>} : vector<512x256xbf16>, vector<256x128xbf16>, vector<512x128xf32> -> vector<512x128xf32>
    %c0_3 = arith.constant 0 : index
    %c0_4 = arith.constant 0 : index
    %3 = vector.load %arg3[%c0_3, %c0_4] : memref<1x128xf32, #tpu.memory_space<vmem>>, vector<1x128xf32>
    %4 = vector.broadcast %3 : vector<1x128xf32> to vector<512x128xf32>
    %5 = arith.addf %2, %4 : vector<512x128xf32>
    %6 = vector.shape_cast %5 : vector<512x128xf32> to vector<2x256x128xf32>
    %cst_5 = arith.constant dense<0.000000e+00> : vector<2x128xf32>
    %7 = vector.multi_reduction <add>, %6, %cst_5 [1] : vector<2x256x128xf32> to vector<2x128xf32>
    %8 = vector.shape_cast %7 : vector<2x128xf32> to vector<2x1x128xf32>
    %cst_6 = arith.constant 2.560000e+02 : f32
    %9 = vector.broadcast %cst_6 : f32 to vector<2x1x128xf32>
    %10 = arith.divf %8, %9 : vector<2x1x128xf32>
    %11 = vector.broadcast %10 : vector<2x1x128xf32> to vector<2x256x128xf32>
    %12 = arith.subf %6, %11 : vector<2x256x128xf32>
    %13 = arith.mulf %12, %12 : vector<2x256x128xf32>
    %cst_7 = arith.constant dense<0.000000e+00> : vector<2x128xf32>
    %14 = vector.multi_reduction <add>, %13, %cst_7 [1] : vector<2x256x128xf32> to vector<2x128xf32>
    %15 = vector.shape_cast %14 : vector<2x128xf32> to vector<2x1x128xf32>
    %cst_8 = arith.constant 2.560000e+02 : f32
    %16 = vector.broadcast %cst_8 : f32 to vector<2x1x128xf32>
    %17 = arith.divf %15, %16 : vector<2x1x128xf32>
    %cst_9 = arith.constant 9.99999974E-6 : f32
    %18 = vector.broadcast %cst_9 : f32 to vector<2x1x128xf32>
    %19 = arith.addf %17, %18 : vector<2x1x128xf32>
    %20 = math.rsqrt %19 : vector<2x1x128xf32>
    %21 = vector.broadcast %20 : vector<2x1x128xf32> to vector<2x256x128xf32>
    %22 = arith.mulf %12, %21 : vector<2x256x128xf32>
    %23 = vector.shape_cast %22 : vector<2x256x128xf32> to vector<512x128xf32>
    %cst_10 = arith.constant 0.000000e+00 : f32
    %24 = vector.broadcast %cst_10 : f32 to vector<512x128xf32>
    %25 = arith.cmpf ogt, %23, %24 : vector<512x128xf32>
    %cst_11 = arith.constant 0.000000e+00 : f32
    %26 = vector.broadcast %cst_11 : f32 to vector<512x128xf32>
    %27 = arith.minimumf %23, %26 : vector<512x128xf32>
    %28 = math.exp %27 : vector<512x128xf32>
    %cst_12 = arith.constant 1.000000e+00 : f32
    %29 = vector.broadcast %cst_12 : f32 to vector<512x128xf32>
    %30 = arith.subf %28, %29 : vector<512x128xf32>
    %31 = arith.select %25, %23, %30 : vector<512x128xi1>, vector<512x128xf32>
    %c0_13 = arith.constant 0 : index
    %c0_14 = arith.constant 0 : index
    %32 = vector.load %arg4[%c0_13, %c0_14] : memref<512x128xf32, #tpu.memory_space<vmem>>, vector<512x128xf32>
    tpu.vector_store %arg4[%c0_13, %c0_14], %31 {strides = array<i32>} : memref<512x128xf32, #tpu.memory_space<vmem>>, vector<512x128xf32>,
    return
  }
  func.func @transform_0(%arg0: i32) -> (i32, i32) {
    %c0_i32 = arith.constant 0 : i32
    %c0_i32_0 = arith.constant 0 : i32
    %c0_i32_1 = arith.constant 0 : i32
    return %c0_i32, %c0_i32_0 : i32, i32
  }
  func.func @transform_1(%arg0: i32) -> (i32, i32) {
    %c0_i32 = arith.constant 0 : i32
    %c0_i32_0 = arith.constant 0 : i32
    %c0_i32_1 = arith.constant 0 : i32
    return %c0_i32, %c0_i32_0 : i32, i32
  }
  func.func @transform_2(%arg0: i32) -> (i32, i32) {
    %c0_i32 = arith.constant 0 : i32
    %c0_i32_0 = arith.constant 0 : i32
    %c0_i32_1 = arith.constant 0 : i32
    return %c0_i32, %c0_i32_0 : i32, i32
  }
  func.func @transform_3(%arg0: i32) -> (i32, i32) {
    %c0_i32 = arith.constant 0 : i32
    %c0_i32_0 = arith.constant 0 : i32
    %c0_i32_1 = arith.constant 0 : i32
    return %c0_i32, %c0_i32_0 : i32, i32
  }
}

module attributes {stable_mosaic.version = 11 : i64} {
  func.func @kernel(%arg0: i32, %arg1: memref<128x256xbf16, #tpu.memory_space<vmem>>, %arg2: memref<256x128xbf16, #tpu.memory_space<vmem>>, %arg3: memref<1x128xf32, #tpu.memory_space<vmem>>, %arg4: memref<128x128xf32, #tpu.memory_space<vmem>>) attributes {dimension_semantics = [#tpu.dimension_semantics<arbitrary>], iteration_bounds = array<i64: 1>, scalar_prefetch = 0 : i64, scratch_operands = 0 : i64, tpu.core_type = #tpu.core_type<tc>, window_params = [{pipeline_mode = #tpu.pipeline_mode<synchronous>, transform_indices = @transform_0, window_bounds = array<i64: 128, 256>}, {pipeline_mode = #tpu.pipeline_mode<synchronous>, transform_indices = @transform_1, window_bounds = array<i64: 256, 128>}, {pipeline_mode = #tpu.pipeline_mode<synchronous>, transform_indices = @transform_2, window_bounds = array<i64: 1, 128>}, {pipeline_mode = #tpu.pipeline_mode<synchronous>, transform_indices = @transform_3, window_bounds = array<i64: 128, 128>}]} {
    %c0 = arith.constant 0 : index
    %c0_0 = arith.constant 0 : index
    %0 = vector.load %arg1[%c0, %c0_0] : memref<128x256xbf16, #tpu.memory_space<vmem>>, vector<128x256xbf16>
    %c0_1 = arith.constant 0 : index
    %c0_2 = arith.constant 0 : index
    %1 = vector.load %arg2[%c0_1, %c0_2] : memref<256x128xbf16, #tpu.memory_space<vmem>>, vector<256x128xbf16>
    %cst = arith.constant dense<0.000000e+00> : vector<128x128xf32>
    %2 = tpu.matmul %0, %1, %cst {dimension_numbers = #tpu.dot_dimension_numbers<[1], [0], [0], [1], [0, 0, 1, 1], [], []>} : vector<128x256xbf16>, vector<256x128xbf16>, vector<128x128xf32> -> vector<128x128xf32>
    %c0_3 = arith.constant 0 : index
    %c0_4 = arith.constant 0 : index
    %3 = vector.load %arg3[%c0_3, %c0_4] : memref<1x128xf32, #tpu.memory_space<vmem>>, vector<1x128xf32>
    %4 = vector.broadcast %3 : vector<1x128xf32> to vector<128x128xf32>
    %5 = arith.addf %2, %4 : vector<128x128xf32>
    %6 = vector.shape_cast %5 : vector<128x128xf32> to vector<2x64x128xf32>
    %cst_5 = arith.constant dense<0.000000e+00> : vector<2x128xf32>
    %7 = vector.multi_reduction <add>, %6, %cst_5 [1] : vector<2x64x128xf32> to vector<2x128xf32>
    %8 = vector.shape_cast %7 : vector<2x128xf32> to vector<2x1x128xf32>
    %cst_6 = arith.constant 6.400000e+01 : f32
    %9 = vector.broadcast %cst_6 : f32 to vector<2x1x128xf32>
    %10 = arith.divf %8, %9 : vector<2x1x128xf32>
    %11 = vector.broadcast %10 : vector<2x1x128xf32> to vector<2x64x128xf32>
    %12 = arith.subf %6, %11 : vector<2x64x128xf32>
    %13 = arith.mulf %12, %12 : vector<2x64x128xf32>
    %cst_7 = arith.constant dense<0.000000e+00> : vector<2x128xf32>
    %14 = vector.multi_reduction <add>, %13, %cst_7 [1] : vector<2x64x128xf32> to vector<2x128xf32>
    %15 = vector.shape_cast %14 : vector<2x128xf32> to vector<2x1x128xf32>
    %cst_8 = arith.constant 6.400000e+01 : f32
    %16 = vector.broadcast %cst_8 : f32 to vector<2x1x128xf32>
    %17 = arith.divf %15, %16 : vector<2x1x128xf32>
    %cst_9 = arith.constant 9.99999974E-6 : f32
    %18 = vector.broadcast %cst_9 : f32 to vector<2x1x128xf32>
    %19 = arith.addf %17, %18 : vector<2x1x128xf32>
    %20 = math.rsqrt %19 : vector<2x1x128xf32>
    %21 = vector.broadcast %20 : vector<2x1x128xf32> to vector<2x64x128xf32>
    %22 = arith.mulf %12, %21 : vector<2x64x128xf32>
    %23 = vector.shape_cast %22 : vector<2x64x128xf32> to vector<128x128xf32>
    %cst_10 = arith.constant 0.000000e+00 : f32
    %24 = vector.broadcast %cst_10 : f32 to vector<128x128xf32>
    %25 = arith.cmpf ogt, %23, %24 : vector<128x128xf32>
    %cst_11 = arith.constant 0.000000e+00 : f32
    %26 = vector.broadcast %cst_11 : f32 to vector<128x128xf32>
    %27 = arith.minimumf %23, %26 : vector<128x128xf32>
    %28 = math.exp %27 : vector<128x128xf32>
    %cst_12 = arith.constant 1.000000e+00 : f32
    %29 = vector.broadcast %cst_12 : f32 to vector<128x128xf32>
    %30 = arith.subf %28, %29 : vector<128x128xf32>
    %31 = arith.select %25, %23, %30 : vector<128x128xi1>, vector<128x128xf32>
    %c0_13 = arith.constant 0 : index
    %c0_14 = arith.constant 0 : index
    %32 = vector.load %arg4[%c0_13, %c0_14] : memref<128x128xf32, #tpu.memory_space<vmem>>, vector<128x128xf32>
    tpu.vector_store %arg4[%c0_13, %c0_14], %31 {strides = array<i32>} : memref<128x128xf32, #tpu.memory_space<vmem>>, vector<128x128xf32>,
    return
  }
  func.func @transform_0(%arg0: i32) -> (i32, i32) {
    %c0_i32 = arith.constant 0 : i32
    %c0_i32_0 = arith.constant 0 : i32
    %c0_i32_1 = arith.constant 0 : i32
    return %c0_i32, %c0_i32_0 : i32, i32
  }
  func.func @transform_1(%arg0: i32) -> (i32, i32) {
    %c0_i32 = arith.constant 0 : i32
    %c0_i32_0 = arith.constant 0 : i32
    %c0_i32_1 = arith.constant 0 : i32
    return %c0_i32, %c0_i32_0 : i32, i32
  }
  func.func @transform_2(%arg0: i32) -> (i32, i32) {
    %c0_i32 = arith.constant 0 : i32
    %c0_i32_0 = arith.constant 0 : i32
    %c0_i32_1 = arith.constant 0 : i32
    return %c0_i32, %c0_i32_0 : i32, i32
  }
  func.func @transform_3(%arg0: i32) -> (i32, i32) {
    %c0_i32 = arith.constant 0 : i32
    %c0_i32_0 = arith.constant 0 : i32
    %c0_i32_1 = arith.constant 0 : i32
    return %c0_i32, %c0_i32_0 : i32, i32
  }
}

module attributes {stable_mosaic.version = 11 : i64} {
  func.func @kernel(%arg0: i32, %arg1: memref<2x8x8x128xf32, #tpu.memory_space<vmem>>, %arg2: memref<6x384x128xbf16, #tpu.memory_space<vmem>>, %arg3: memref<6x1x128xf32, #tpu.memory_space<vmem>>, %arg4: memref<6x384x128xbf16, #tpu.memory_space<vmem>>, %arg5: memref<6x1x128xf32, #tpu.memory_space<vmem>>, %arg6: memref<2x8x8x128xf32, #tpu.memory_space<vmem>>) attributes {dimension_semantics = [#tpu.dimension_semantics<arbitrary>], iteration_bounds = array<i64: 1>, scalar_prefetch = 0 : i64, scratch_operands = 0 : i64, tpu.core_type = #tpu.core_type<tc>, window_params = [{pipeline_mode = #tpu.pipeline_mode<synchronous>, transform_indices = @transform_0, window_bounds = array<i64: 2, 8, 8, 128>}, {pipeline_mode = #tpu.pipeline_mode<synchronous>, transform_indices = @transform_1, window_bounds = array<i64: 6, 384, 128>}, {pipeline_mode = #tpu.pipeline_mode<synchronous>, transform_indices = @transform_2, window_bounds = array<i64: 6, 1, 128>}, {pipeline_mode = #tpu.pipeline_mode<synchronous>, transform_indices = @transform_3, window_bounds = array<i64: 6, 384, 128>}, {pipeline_mode = #tpu.pipeline_mode<synchronous>, transform_indices = @transform_4, window_bounds = array<i64: 6, 1, 128>}, {pipeline_mode = #tpu.pipeline_mode<synchronous>, transform_indices = @transform_5, window_bounds = array<i64: 2, 8, 8, 128>}]} {
    %c0 = arith.constant 0 : index
    %c0_0 = arith.constant 0 : index
    %c0_1 = arith.constant 0 : index
    %c0_2 = arith.constant 0 : index
    %0 = vector.load %arg1[%c0, %c0_0, %c0_1, %c0_2] : memref<2x8x8x128xf32, #tpu.memory_space<vmem>>, vector<2x8x8x128xf32>
    %c0_3 = arith.constant 0 : index
    %c0_4 = arith.constant 0 : index
    %c0_5 = arith.constant 0 : index
    %c0_6 = arith.constant 0 : index
    %1 = vector.load %arg6[%c0_3, %c0_4, %c0_5, %c0_6] : memref<2x8x8x128xf32, #tpu.memory_space<vmem>>, vector<2x8x8x128xf32>
    tpu.vector_store %arg6[%c0_3, %c0_4, %c0_5, %c0_6], %0 {strides = array<i32>} : memref<2x8x8x128xf32, #tpu.memory_space<vmem>>, vector<2x8x8x128xf32>,
    %c0_i32 = arith.constant 0 : i32
    %c6_i32 = arith.constant 6 : i32
    %2 = arith.addi %c0_i32, %c6_i32 : i32
    %c1_i32 = arith.constant 1 : i32
    scf.for %arg7 = %c0_i32 to %2 step %c1_i32  : i32 {
      %c0_8 = arith.constant 0 : index
      %c0_9 = arith.constant 0 : index
      %c0_10 = arith.constant 0 : index
      %c0_11 = arith.constant 0 : index
      %3 = vector.load %arg6[%c0_8, %c0_9, %c0_10, %c0_11] : memref<2x8x8x128xf32, #tpu.memory_space<vmem>>, vector<2x8x8x128xf32>
      %4 = vector.extract_strided_slice %3 {offsets = [0, 0, 0, 0], sizes = [2, 8, 8, 32], strides = [1, 1, 1, 1]} : vector<2x8x8x128xf32> to vector<2x8x8x32xf32>
      %5 = arith.truncf %4 : vector<2x8x8x32xf32> to vector<2x8x8x32xbf16>
      %6 = arith.index_cast %arg7 : i32 to index
      %c0_12 = arith.constant 0 : index
      %c0_13 = arith.constant 0 : index
      %7 = vector.load %arg2[%6, %c0_12, %c0_13] : memref<6x384x128xbf16, #tpu.memory_space<vmem>>, vector<1x384x128xbf16>
      %8 = vector.shape_cast %7 : vector<1x384x128xbf16> to vector<384x128xbf16>
      %9 = arith.index_cast %arg7 : i32 to index
      %c0_14 = arith.constant 0 : index
      %c0_15 = arith.constant 0 : index
      %10 = vector.load %arg3[%9, %c0_14, %c0_15] : memref<6x1x128xf32, #tpu.memory_space<vmem>>, vector<1x1x128xf32>
      %11 = vector.shape_cast %10 : vector<1x1x128xf32> to vector<1x128xf32>
      %12 = vector.extract_strided_slice %5 {offsets = [0, 1, 0, 0], sizes = [2, 1, 8, 32], strides = [1, 1, 1, 1]} : vector<2x8x8x32xbf16> to vector<2x1x8x32xbf16>
      %13 = vector.extract_strided_slice %5 {offsets = [0, 6, 0, 0], sizes = [2, 1, 8, 32], strides = [1, 1, 1, 1]} : vector<2x8x8x32xbf16> to vector<2x1x8x32xbf16>
      %14 = tpu.concatenate %12, %5, %13 in 1 : vector<2x1x8x32xbf16>, vector<2x8x8x32xbf16>, vector<2x1x8x32xbf16> -> vector<2x10x8x32xbf16>
      %15 = vector.extract_strided_slice %14 {offsets = [0, 0, 1, 0], sizes = [2, 10, 1, 32], strides = [1, 1, 1, 1]} : vector<2x10x8x32xbf16> to vector<2x10x1x32xbf16>
      %16 = vector.extract_strided_slice %14 {offsets = [0, 0, 6, 0], sizes = [2, 10, 1, 32], strides = [1, 1, 1, 1]} : vector<2x10x8x32xbf16> to vector<2x10x1x32xbf16>
      %17 = tpu.concatenate %15, %14, %16 in 2 : vector<2x10x1x32xbf16>, vector<2x10x8x32xbf16>, vector<2x10x1x32xbf16> -> vector<2x10x10x32xbf16>
      %18 = vector.extract_strided_slice %17 {offsets = [0, 0, 0, 0], sizes = [2, 8, 8, 32], strides = [1, 1, 1, 1]} : vector<2x10x10x32xbf16> to vector<2x8x8x32xbf16>
      %19 = vector.extract_strided_slice %17 {offsets = [0, 0, 1, 0], sizes = [2, 8, 8, 32], strides = [1, 1, 1, 1]} : vector<2x10x10x32xbf16> to vector<2x8x8x32xbf16>
      %20 = vector.extract_strided_slice %17 {offsets = [0, 0, 2, 0], sizes = [2, 8, 8, 32], strides = [1, 1, 1, 1]} : vector<2x10x10x32xbf16> to vector<2x8x8x32xbf16>
      %21 = vector.extract_strided_slice %17 {offsets = [0, 1, 0, 0], sizes = [2, 8, 8, 32], strides = [1, 1, 1, 1]} : vector<2x10x10x32xbf16> to vector<2x8x8x32xbf16>
      %22 = vector.extract_strided_slice %17 {offsets = [0, 1, 1, 0], sizes = [2, 8, 8, 32], strides = [1, 1, 1, 1]} : vector<2x10x10x32xbf16> to vector<2x8x8x32xbf16>
      %23 = vector.extract_strided_slice %17 {offsets = [0, 1, 2, 0], sizes = [2, 8, 8, 32], strides = [1, 1, 1, 1]} : vector<2x10x10x32xbf16> to vector<2x8x8x32xbf16>
      %24 = vector.extract_strided_slice %17 {offsets = [0, 2, 0, 0], sizes = [2, 8, 8, 32], strides = [1, 1, 1, 1]} : vector<2x10x10x32xbf16> to vector<2x8x8x32xbf16>
      %25 = vector.extract_strided_slice %17 {offsets = [0, 2, 1, 0], sizes = [2, 8, 8, 32], strides = [1, 1, 1, 1]} : vector<2x10x10x32xbf16> to vector<2x8x8x32xbf16>
      %26 = vector.extract_strided_slice %17 {offsets = [0, 2, 2, 0], sizes = [2, 8, 8, 32], strides = [1, 1, 1, 1]} : vector<2x10x10x32xbf16> to vector<2x8x8x32xbf16>
      %cst = arith.constant 0.000000e+00 : bf16
      %27 = vector.broadcast %cst : bf16 to vector<2x8x8x96xbf16>
      %28 = tpu.concatenate %18, %19, %20, %21, %22, %23, %24, %25, %26, %27 in 3 : vector<2x8x8x32xbf16>, vector<2x8x8x32xbf16>, vector<2x8x8x32xbf16>, vector<2x8x8x32xbf16>, vector<2x8x8x32xbf16>, vector<2x8x8x32xbf16>, vector<2x8x8x32xbf16>, vector<2x8x8x32xbf16>, vector<2x8x8x32xbf16>, vector<2x8x8x96xbf16> -> vector<2x8x8x384xbf16>
      %29 = vector.shape_cast %28 : vector<2x8x8x384xbf16> to vector<128x384xbf16>
      %cst_16 = arith.constant dense<0.000000e+00> : vector<128x128xf32>
      %30 = tpu.matmul %29, %8, %cst_16 {dimension_numbers = #tpu.dot_dimension_numbers<[1], [0], [0], [1], [0, 0, 1, 1], [], []>} : vector<128x384xbf16>, vector<384x128xbf16>, vector<128x128xf32> -> vector<128x128xf32>
      %31 = vector.broadcast %11 : vector<1x128xf32> to vector<128x128xf32>
      %32 = arith.addf %30, %31 : vector<128x128xf32>
      %33 = vector.shape_cast %32 : vector<128x128xf32> to vector<2x64x128xf32>
      %cst_17 = arith.constant dense<0.000000e+00> : vector<2x128xf32>
      %34 = vector.multi_reduction <add>, %33, %cst_17 [1] : vector<2x64x128xf32> to vector<2x128xf32>
      %35 = vector.shape_cast %34 : vector<2x128xf32> to vector<2x1x128xf32>
      %cst_18 = arith.constant 6.400000e+01 : f32
      %36 = vector.broadcast %cst_18 : f32 to vector<2x1x128xf32>
      %37 = arith.divf %35, %36 : vector<2x1x128xf32>
      %38 = vector.broadcast %37 : vector<2x1x128xf32> to vector<2x64x128xf32>
      %39 = arith.subf %33, %38 : vector<2x64x128xf32>
      %40 = arith.mulf %39, %39 : vector<2x64x128xf32>
      %cst_19 = arith.constant dense<0.000000e+00> : vector<2x128xf32>
      %41 = vector.multi_reduction <add>, %40, %cst_19 [1] : vector<2x64x128xf32> to vector<2x128xf32>
      %42 = vector.shape_cast %41 : vector<2x128xf32> to vector<2x1x128xf32>
      %cst_20 = arith.constant 6.400000e+01 : f32
      %43 = vector.broadcast %cst_20 : f32 to vector<2x1x128xf32>
      %44 = arith.divf %42, %43 : vector<2x1x128xf32>
      %cst_21 = arith.constant 9.99999974E-6 : f32
      %45 = vector.broadcast %cst_21 : f32 to vector<2x1x128xf32>
      %46 = arith.addf %44, %45 : vector<2x1x128xf32>
      %47 = math.rsqrt %46 : vector<2x1x128xf32>
      %48 = vector.broadcast %47 : vector<2x1x128xf32> to vector<2x64x128xf32>
      %49 = arith.mulf %39, %48 : vector<2x64x128xf32>
      %50 = vector.shape_cast %49 : vector<2x64x128xf32> to vector<128x128xf32>
      %cst_22 = arith.constant 0.000000e+00 : f32
      %51 = vector.broadcast %cst_22 : f32 to vector<128x128xf32>
      %52 = arith.maximumf %50, %51 : vector<128x128xf32>
      %53 = vector.shape_cast %52 : vector<128x128xf32> to vector<2x8x8x128xf32>
      %54 = vector.extract_strided_slice %53 {offsets = [0, 0, 0, 0], sizes = [2, 8, 8, 32], strides = [1, 1, 1, 1]} : vector<2x8x8x128xf32> to vector<2x8x8x32xf32>
      %55 = arith.truncf %54 : vector<2x8x8x32xf32> to vector<2x8x8x32xbf16>
      %56 = arith.index_cast %arg7 : i32 to index
      %c0_23 = arith.constant 0 : index
      %c0_24 = arith.constant 0 : index
      %57 = vector.load %arg4[%56, %c0_23, %c0_24] : memref<6x384x128xbf16, #tpu.memory_space<vmem>>, vector<1x384x128xbf16>
      %58 = vector.shape_cast %57 : vector<1x384x128xbf16> to vector<384x128xbf16>
      %59 = arith.index_cast %arg7 : i32 to index
      %c0_25 = arith.constant 0 : index
      %c0_26 = arith.constant 0 : index
      %60 = vector.load %arg5[%59, %c0_25, %c0_26] : memref<6x1x128xf32, #tpu.memory_space<vmem>>, vector<1x1x128xf32>
      %61 = vector.shape_cast %60 : vector<1x1x128xf32> to vector<1x128xf32>
      %62 = vector.extract_strided_slice %55 {offsets = [0, 1, 0, 0], sizes = [2, 1, 8, 32], strides = [1, 1, 1, 1]} : vector<2x8x8x32xbf16> to vector<2x1x8x32xbf16>
      %63 = vector.extract_strided_slice %55 {offsets = [0, 6, 0, 0], sizes = [2, 1, 8, 32], strides = [1, 1, 1, 1]} : vector<2x8x8x32xbf16> to vector<2x1x8x32xbf16>
      %64 = tpu.concatenate %62, %55, %63 in 1 : vector<2x1x8x32xbf16>, vector<2x8x8x32xbf16>, vector<2x1x8x32xbf16> -> vector<2x10x8x32xbf16>
      %65 = vector.extract_strided_slice %64 {offsets = [0, 0, 1, 0], sizes = [2, 10, 1, 32], strides = [1, 1, 1, 1]} : vector<2x10x8x32xbf16> to vector<2x10x1x32xbf16>
      %66 = vector.extract_strided_slice %64 {offsets = [0, 0, 6, 0], sizes = [2, 10, 1, 32], strides = [1, 1, 1, 1]} : vector<2x10x8x32xbf16> to vector<2x10x1x32xbf16>
      %67 = tpu.concatenate %65, %64, %66 in 2 : vector<2x10x1x32xbf16>, vector<2x10x8x32xbf16>, vector<2x10x1x32xbf16> -> vector<2x10x10x32xbf16>
      %68 = vector.extract_strided_slice %67 {offsets = [0, 0, 0, 0], sizes = [2, 8, 8, 32], strides = [1, 1, 1, 1]} : vector<2x10x10x32xbf16> to vector<2x8x8x32xbf16>
      %69 = vector.extract_strided_slice %67 {offsets = [0, 0, 1, 0], sizes = [2, 8, 8, 32], strides = [1, 1, 1, 1]} : vector<2x10x10x32xbf16> to vector<2x8x8x32xbf16>
      %70 = vector.extract_strided_slice %67 {offsets = [0, 0, 2, 0], sizes = [2, 8, 8, 32], strides = [1, 1, 1, 1]} : vector<2x10x10x32xbf16> to vector<2x8x8x32xbf16>
      %71 = vector.extract_strided_slice %67 {offsets = [0, 1, 0, 0], sizes = [2, 8, 8, 32], strides = [1, 1, 1, 1]} : vector<2x10x10x32xbf16> to vector<2x8x8x32xbf16>
      %72 = vector.extract_strided_slice %67 {offsets = [0, 1, 1, 0], sizes = [2, 8, 8, 32], strides = [1, 1, 1, 1]} : vector<2x10x10x32xbf16> to vector<2x8x8x32xbf16>
      %73 = vector.extract_strided_slice %67 {offsets = [0, 1, 2, 0], sizes = [2, 8, 8, 32], strides = [1, 1, 1, 1]} : vector<2x10x10x32xbf16> to vector<2x8x8x32xbf16>
      %74 = vector.extract_strided_slice %67 {offsets = [0, 2, 0, 0], sizes = [2, 8, 8, 32], strides = [1, 1, 1, 1]} : vector<2x10x10x32xbf16> to vector<2x8x8x32xbf16>
      %75 = vector.extract_strided_slice %67 {offsets = [0, 2, 1, 0], sizes = [2, 8, 8, 32], strides = [1, 1, 1, 1]} : vector<2x10x10x32xbf16> to vector<2x8x8x32xbf16>
      %76 = vector.extract_strided_slice %67 {offsets = [0, 2, 2, 0], sizes = [2, 8, 8, 32], strides = [1, 1, 1, 1]} : vector<2x10x10x32xbf16> to vector<2x8x8x32xbf16>
      %cst_27 = arith.constant 0.000000e+00 : bf16
      %77 = vector.broadcast %cst_27 : bf16 to vector<2x8x8x96xbf16>
      %78 = tpu.concatenate %68, %69, %70, %71, %72, %73, %74, %75, %76, %77 in 3 : vector<2x8x8x32xbf16>, vector<2x8x8x32xbf16>, vector<2x8x8x32xbf16>, vector<2x8x8x32xbf16>, vector<2x8x8x32xbf16>, vector<2x8x8x32xbf16>, vector<2x8x8x32xbf16>, vector<2x8x8x32xbf16>, vector<2x8x8x32xbf16>, vector<2x8x8x96xbf16> -> vector<2x8x8x384xbf16>
      %79 = vector.shape_cast %78 : vector<2x8x8x384xbf16> to vector<128x384xbf16>
      %cst_28 = arith.constant dense<0.000000e+00> : vector<128x128xf32>
      %80 = tpu.matmul %79, %58, %cst_28 {dimension_numbers = #tpu.dot_dimension_numbers<[1], [0], [0], [1], [0, 0, 1, 1], [], []>} : vector<128x384xbf16>, vector<384x128xbf16>, vector<128x128xf32> -> vector<128x128xf32>
      %81 = vector.broadcast %61 : vector<1x128xf32> to vector<128x128xf32>
      %82 = arith.addf %80, %81 : vector<128x128xf32>
      %83 = vector.shape_cast %82 : vector<128x128xf32> to vector<2x64x128xf32>
      %cst_29 = arith.constant dense<0.000000e+00> : vector<2x128xf32>
      %84 = vector.multi_reduction <add>, %83, %cst_29 [1] : vector<2x64x128xf32> to vector<2x128xf32>
      %85 = vector.shape_cast %84 : vector<2x128xf32> to vector<2x1x128xf32>
      %cst_30 = arith.constant 6.400000e+01 : f32
      %86 = vector.broadcast %cst_30 : f32 to vector<2x1x128xf32>
      %87 = arith.divf %85, %86 : vector<2x1x128xf32>
      %88 = vector.broadcast %87 : vector<2x1x128xf32> to vector<2x64x128xf32>
      %89 = arith.subf %83, %88 : vector<2x64x128xf32>
      %90 = arith.mulf %89, %89 : vector<2x64x128xf32>
      %cst_31 = arith.constant dense<0.000000e+00> : vector<2x128xf32>
      %91 = vector.multi_reduction <add>, %90, %cst_31 [1] : vector<2x64x128xf32> to vector<2x128xf32>
      %92 = vector.shape_cast %91 : vector<2x128xf32> to vector<2x1x128xf32>
      %cst_32 = arith.constant 6.400000e+01 : f32
      %93 = vector.broadcast %cst_32 : f32 to vector<2x1x128xf32>
      %94 = arith.divf %92, %93 : vector<2x1x128xf32>
      %cst_33 = arith.constant 9.99999974E-6 : f32
      %95 = vector.broadcast %cst_33 : f32 to vector<2x1x128xf32>
      %96 = arith.addf %94, %95 : vector<2x1x128xf32>
      %97 = math.rsqrt %96 : vector<2x1x128xf32>
      %98 = vector.broadcast %97 : vector<2x1x128xf32> to vector<2x64x128xf32>
      %99 = arith.mulf %89, %98 : vector<2x64x128xf32>
      %100 = vector.shape_cast %99 : vector<2x64x128xf32> to vector<128x128xf32>
      %101 = vector.shape_cast %100 : vector<128x128xf32> to vector<2x8x8x128xf32>
      %102 = arith.addf %3, %101 : vector<2x8x8x128xf32>
      %c0_34 = arith.constant 0 : index
      %c0_35 = arith.constant 0 : index
      %c0_36 = arith.constant 0 : index
      %c0_37 = arith.constant 0 : index
      %103 = vector.load %arg6[%c0_34, %c0_35, %c0_36, %c0_37] : memref<2x8x8x128xf32, #tpu.memory_space<vmem>>, vector<2x8x8x128xf32>
      tpu.vector_store %arg6[%c0_34, %c0_35, %c0_36, %c0_37], %102 {strides = array<i32>} : memref<2x8x8x128xf32, #tpu.memory_space<vmem>>, vector<2x8x8x128xf32>,
    }
    %c6_i32_7 = arith.constant 6 : i32
    return
  }
  func.func @transform_0(%arg0: i32) -> (i32, i32, i32, i32) {
    %c0_i32 = arith.constant 0 : i32
    %c0_i32_0 = arith.constant 0 : i32
    %c0_i32_1 = arith.constant 0 : i32
    %c0_i32_2 = arith.constant 0 : i32
    %c0_i32_3 = arith.constant 0 : i32
    return %c0_i32, %c0_i32_0, %c0_i32_1, %c0_i32_2 : i32, i32, i32, i32
  }
  func.func @transform_1(%arg0: i32) -> (i32, i32, i32) {
    %c0_i32 = arith.constant 0 : i32
    %c0_i32_0 = arith.constant 0 : i32
    %c0_i32_1 = arith.constant 0 : i32
    %c0_i32_2 = arith.constant 0 : i32
    return %c0_i32, %c0_i32_0, %c0_i32_1 : i32, i32, i32
  }
  func.func @transform_2(%arg0: i32) -> (i32, i32, i32) {
    %c0_i32 = arith.constant 0 : i32
    %c0_i32_0 = arith.constant 0 : i32
    %c0_i32_1 = arith.constant 0 : i32
    %c0_i32_2 = arith.constant 0 : i32
    return %c0_i32, %c0_i32_0, %c0_i32_1 : i32, i32, i32
  }
  func.func @transform_3(%arg0: i32) -> (i32, i32, i32) {
    %c0_i32 = arith.constant 0 : i32
    %c0_i32_0 = arith.constant 0 : i32
    %c0_i32_1 = arith.constant 0 : i32
    %c0_i32_2 = arith.constant 0 : i32
    return %c0_i32, %c0_i32_0, %c0_i32_1 : i32, i32, i32
  }
  func.func @transform_4(%arg0: i32) -> (i32, i32, i32) {
    %c0_i32 = arith.constant 0 : i32
    %c0_i32_0 = arith.constant 0 : i32
    %c0_i32_1 = arith.constant 0 : i32
    %c0_i32_2 = arith.constant 0 : i32
    return %c0_i32, %c0_i32_0, %c0_i32_1 : i32, i32, i32
  }
  func.func @transform_5(%arg0: i32) -> (i32, i32, i32, i32) {
    %c0_i32 = arith.constant 0 : i32
    %c0_i32_0 = arith.constant 0 : i32
    %c0_i32_1 = arith.constant 0 : i32
    %c0_i32_2 = arith.constant 0 : i32
    %c0_i32_3 = arith.constant 0 : i32
    return %c0_i32, %c0_i32_0, %c0_i32_1, %c0_i32_2 : i32, i32, i32, i32
  }
}

module attributes {stable_mosaic.version = 11 : i64} {
  func.func @kernel(%arg0: i32, %arg1: memref<128x128xbf16, #tpu.memory_space<vmem>>, %arg2: memref<128x128xbf16, #tpu.memory_space<vmem>>, %arg3: memref<1x128xf32, #tpu.memory_space<vmem>>, %arg4: memref<128x128xf32, #tpu.memory_space<vmem>>, %arg5: memref<128x128xf32, #tpu.memory_space<vmem>>) attributes {dimension_semantics = [#tpu.dimension_semantics<arbitrary>], iteration_bounds = array<i64: 1>, scalar_prefetch = 0 : i64, scratch_operands = 0 : i64, tpu.core_type = #tpu.core_type<tc>, window_params = [{pipeline_mode = #tpu.pipeline_mode<synchronous>, transform_indices = @transform_0, window_bounds = array<i64: 128, 128>}, {pipeline_mode = #tpu.pipeline_mode<synchronous>, transform_indices = @transform_1, window_bounds = array<i64: 128, 128>}, {pipeline_mode = #tpu.pipeline_mode<synchronous>, transform_indices = @transform_2, window_bounds = array<i64: 1, 128>}, {pipeline_mode = #tpu.pipeline_mode<synchronous>, transform_indices = @transform_3, window_bounds = array<i64: 128, 128>}, {pipeline_mode = #tpu.pipeline_mode<synchronous>, transform_indices = @transform_4, window_bounds = array<i64: 128, 128>}]} {
    %c0 = arith.constant 0 : index
    %c0_0 = arith.constant 0 : index
    %0 = vector.load %arg1[%c0, %c0_0] : memref<128x128xbf16, #tpu.memory_space<vmem>>, vector<128x128xbf16>
    %c0_1 = arith.constant 0 : index
    %c0_2 = arith.constant 0 : index
    %1 = vector.load %arg2[%c0_1, %c0_2] : memref<128x128xbf16, #tpu.memory_space<vmem>>, vector<128x128xbf16>
    %cst = arith.constant dense<0.000000e+00> : vector<128x128xf32>
    %2 = tpu.matmul %0, %1, %cst {dimension_numbers = #tpu.dot_dimension_numbers<[1], [0], [0], [1], [0, 0, 1, 1], [], []>} : vector<128x128xbf16>, vector<128x128xbf16>, vector<128x128xf32> -> vector<128x128xf32>
    %c0_3 = arith.constant 0 : index
    %c0_4 = arith.constant 0 : index
    %3 = vector.load %arg3[%c0_3, %c0_4] : memref<1x128xf32, #tpu.memory_space<vmem>>, vector<1x128xf32>
    %4 = vector.broadcast %3 : vector<1x128xf32> to vector<128x128xf32>
    %5 = arith.addf %2, %4 : vector<128x128xf32>
    %6 = vector.shape_cast %5 : vector<128x128xf32> to vector<2x64x128xf32>
    %cst_5 = arith.constant dense<0.000000e+00> : vector<2x128xf32>
    %7 = vector.multi_reduction <add>, %6, %cst_5 [1] : vector<2x64x128xf32> to vector<2x128xf32>
    %8 = arith.mulf %6, %6 : vector<2x64x128xf32>
    %cst_6 = arith.constant dense<0.000000e+00> : vector<2x128xf32>
    %9 = vector.multi_reduction <add>, %8, %cst_6 [1] : vector<2x64x128xf32> to vector<2x128xf32>
    %c0_7 = arith.constant 0 : index
    %c0_8 = arith.constant 0 : index
    %10 = vector.load %arg4[%c0_7, %c0_8] : memref<128x128xf32, #tpu.memory_space<vmem>>, vector<128x128xf32>
    %cst_9 = arith.constant dense<0.000000e+00> : vector<2x128xf32>
    %11 = tpu.matmul %7, %10, %cst_9 {dimension_numbers = #tpu.dot_dimension_numbers<[1], [0], [0], [1], [0, 0, 1, 1], [], []>} : vector<2x128xf32>, vector<128x128xf32>, vector<2x128xf32> -> vector<2x128xf32>
    %cst_10 = arith.constant 3.906250e-03 : f32
    %12 = vector.broadcast %cst_10 : f32 to vector<2x128xf32>
    %13 = arith.mulf %11, %12 : vector<2x128xf32>
    %cst_11 = arith.constant dense<0.000000e+00> : vector<2x128xf32>
    %14 = tpu.matmul %9, %10, %cst_11 {dimension_numbers = #tpu.dot_dimension_numbers<[1], [0], [0], [1], [0, 0, 1, 1], [], []>} : vector<2x128xf32>, vector<128x128xf32>, vector<2x128xf32> -> vector<2x128xf32>
    %cst_12 = arith.constant 3.906250e-03 : f32
    %15 = vector.broadcast %cst_12 : f32 to vector<2x128xf32>
    %16 = arith.mulf %14, %15 : vector<2x128xf32>
    %17 = arith.mulf %13, %13 : vector<2x128xf32>
    %18 = arith.subf %16, %17 : vector<2x128xf32>
    %cst_13 = arith.constant 0.000000e+00 : f32
    %19 = vector.broadcast %cst_13 : f32 to vector<2x128xf32>
    %20 = arith.maximumf %18, %19 : vector<2x128xf32>
    %21 = vector.shape_cast %13 : vector<2x128xf32> to vector<2x1x128xf32>
    %22 = vector.broadcast %21 : vector<2x1x128xf32> to vector<2x64x128xf32>
    %23 = arith.subf %6, %22 : vector<2x64x128xf32>
    %cst_14 = arith.constant 9.99999974E-6 : f32
    %24 = vector.broadcast %cst_14 : f32 to vector<2x128xf32>
    %25 = arith.addf %20, %24 : vector<2x128xf32>
    %26 = math.rsqrt %25 : vector<2x128xf32>
    %27 = vector.shape_cast %26 : vector<2x128xf32> to vector<2x1x128xf32>
    %28 = vector.broadcast %27 : vector<2x1x128xf32> to vector<2x64x128xf32>
    %29 = arith.mulf %23, %28 : vector<2x64x128xf32>
    %30 = vector.shape_cast %29 : vector<2x64x128xf32> to vector<128x128xf32>
    %cst_15 = arith.constant 0.000000e+00 : f32
    %31 = vector.broadcast %cst_15 : f32 to vector<128x128xf32>
    %32 = arith.cmpf ogt, %30, %31 : vector<128x128xf32>
    %cst_16 = arith.constant 0.000000e+00 : f32
    %33 = vector.broadcast %cst_16 : f32 to vector<128x128xf32>
    %34 = arith.minimumf %30, %33 : vector<128x128xf32>
    %35 = math.exp %34 : vector<128x128xf32>
    %cst_17 = arith.constant 1.000000e+00 : f32
    %36 = vector.broadcast %cst_17 : f32 to vector<128x128xf32>
    %37 = arith.subf %35, %36 : vector<128x128xf32>
    %38 = arith.select %32, %30, %37 : vector<128x128xi1>, vector<128x128xf32>
    %c0_18 = arith.constant 0 : index
    %c0_19 = arith.constant 0 : index
    %39 = vector.load %arg5[%c0_18, %c0_19] : memref<128x128xf32, #tpu.memory_space<vmem>>, vector<128x128xf32>
    tpu.vector_store %arg5[%c0_18, %c0_19], %38 {strides = array<i32>} : memref<128x128xf32, #tpu.memory_space<vmem>>, vector<128x128xf32>,
    return
  }
  func.func @transform_0(%arg0: i32) -> (i32, i32) {
    %c0_i32 = arith.constant 0 : i32
    %c0_i32_0 = arith.constant 0 : i32
    %c0_i32_1 = arith.constant 0 : i32
    return %c0_i32, %c0_i32_0 : i32, i32
  }
  func.func @transform_1(%arg0: i32) -> (i32, i32) {
    %c0_i32 = arith.constant 0 : i32
    %c0_i32_0 = arith.constant 0 : i32
    %c0_i32_1 = arith.constant 0 : i32
    return %c0_i32, %c0_i32_0 : i32, i32
  }
  func.func @transform_2(%arg0: i32) -> (i32, i32) {
    %c0_i32 = arith.constant 0 : i32
    %c0_i32_0 = arith.constant 0 : i32
    %c0_i32_1 = arith.constant 0 : i32
    return %c0_i32, %c0_i32_0 : i32, i32
  }
  func.func @transform_3(%arg0: i32) -> (i32, i32) {
    %c0_i32 = arith.constant 0 : i32
    %c0_i32_0 = arith.constant 0 : i32
    %c0_i32_1 = arith.constant 0 : i32
    return %c0_i32, %c0_i32_0 : i32, i32
  }
  func.func @transform_4(%arg0: i32) -> (i32, i32) {
    %c0_i32 = arith.constant 0 : i32
    %c0_i32_0 = arith.constant 0 : i32
    %c0_i32_1 = arith.constant 0 : i32
    return %c0_i32, %c0_i32_0 : i32, i32
  }
}

module attributes {stable_mosaic.version = 11 : i64} {
  func.func @kernel(%arg0: i32, %arg1: memref<512x896xbf16, #tpu.memory_space<vmem>>, %arg2: memref<896x128xbf16, #tpu.memory_space<vmem>>, %arg3: memref<1x128xf32, #tpu.memory_space<vmem>>, %arg4: memref<512x128xf32, #tpu.memory_space<vmem>>) attributes {dimension_semantics = [#tpu.dimension_semantics<arbitrary>], iteration_bounds = array<i64: 1>, scalar_prefetch = 0 : i64, scratch_operands = 0 : i64, tpu.core_type = #tpu.core_type<tc>, window_params = [{pipeline_mode = #tpu.pipeline_mode<synchronous>, transform_indices = @transform_0, window_bounds = array<i64: 512, 896>}, {pipeline_mode = #tpu.pipeline_mode<synchronous>, transform_indices = @transform_1, window_bounds = array<i64: 896, 128>}, {pipeline_mode = #tpu.pipeline_mode<synchronous>, transform_indices = @transform_2, window_bounds = array<i64: 1, 128>}, {pipeline_mode = #tpu.pipeline_mode<synchronous>, transform_indices = @transform_3, window_bounds = array<i64: 512, 128>}]} {
    %c0 = arith.constant 0 : index
    %c0_0 = arith.constant 0 : index
    %0 = vector.load %arg1[%c0, %c0_0] : memref<512x896xbf16, #tpu.memory_space<vmem>>, vector<512x896xbf16>
    %c0_1 = arith.constant 0 : index
    %c0_2 = arith.constant 0 : index
    %1 = vector.load %arg2[%c0_1, %c0_2] : memref<896x128xbf16, #tpu.memory_space<vmem>>, vector<896x128xbf16>
    %cst = arith.constant dense<0.000000e+00> : vector<512x128xf32>
    %2 = tpu.matmul %0, %1, %cst {dimension_numbers = #tpu.dot_dimension_numbers<[1], [0], [0], [1], [0, 0, 1, 1], [], []>} : vector<512x896xbf16>, vector<896x128xbf16>, vector<512x128xf32> -> vector<512x128xf32>
    %c0_3 = arith.constant 0 : index
    %c0_4 = arith.constant 0 : index
    %3 = vector.load %arg3[%c0_3, %c0_4] : memref<1x128xf32, #tpu.memory_space<vmem>>, vector<1x128xf32>
    %4 = vector.broadcast %3 : vector<1x128xf32> to vector<512x128xf32>
    %5 = arith.addf %2, %4 : vector<512x128xf32>
    %c0_5 = arith.constant 0 : index
    %c0_6 = arith.constant 0 : index
    %6 = vector.load %arg4[%c0_5, %c0_6] : memref<512x128xf32, #tpu.memory_space<vmem>>, vector<512x128xf32>
    tpu.vector_store %arg4[%c0_5, %c0_6], %5 {strides = array<i32>} : memref<512x128xf32, #tpu.memory_space<vmem>>, vector<512x128xf32>,
    return
  }
  func.func @transform_0(%arg0: i32) -> (i32, i32) {
    %c0_i32 = arith.constant 0 : i32
    %c0_i32_0 = arith.constant 0 : i32
    %c0_i32_1 = arith.constant 0 : i32
    return %c0_i32, %c0_i32_0 : i32, i32
  }
  func.func @transform_1(%arg0: i32) -> (i32, i32) {
    %c0_i32 = arith.constant 0 : i32
    %c0_i32_0 = arith.constant 0 : i32
    %c0_i32_1 = arith.constant 0 : i32
    return %c0_i32, %c0_i32_0 : i32, i32
  }
  func.func @transform_2(%arg0: i32) -> (i32, i32) {
    %c0_i32 = arith.constant 0 : i32
    %c0_i32_0 = arith.constant 0 : i32
    %c0_i32_1 = arith.constant 0 : i32
    return %c0_i32, %c0_i32_0 : i32, i32
  }
  func.func @transform_3(%arg0: i32) -> (i32, i32) {
    %c0_i32 = arith.constant 0 : i32
    %c0_i32_0 = arith.constant 0 : i32
    %c0_i32_1 = arith.constant 0 : i32
    return %c0_i32, %c0_i32_0 : i32, i32
  }
}

</mosaic_0001>

<llo_original>
// kernel: tile.7
$region0: #{tile.7}
  %s0 = inlined_call_operand.vmem [shape: f32[4,16], index: 0, kind: input, shape index: {}]
  %s1 = inlined_call_operand.vmem [shape: f32[64], index: 1, kind: output, shape index: {}]
  $region1: #{tile.7} parent=0
    #allocation0 [shape = 'u8[4096]{0}', space=vmem, size = 0x1000, scoped, tag = 'scoped mem for output reshape']
    #allocation1 [shape = 'u8[4096]{0}', space=vmem, size = 0x1000, scoped, tag = 'scoped mem for input reshape']
    %s3 = sshllo.u32 0, 4
    %v4 = vld [vmem:[%s0] sm:%s3]
    %5 = vst [vmem:[#allocation1] sm:%s3] %v4
    %v6 = vld [vmem:[#allocation1] sm:$0x1]
    %vm7 = vcmask 130048
    %8 = vst.msk [vmem:[#allocation0] sm:$0x1] %vm7, %v6
    %s9 = scalar_lea.vmem [#allocation1], 3
    %v10 = vld [vmem:[%s9] sm:$0x1]
    %11 = vrot.lane.b32.xlu0 %v10, 48
    %v12 = vpop.permute.xlu0 %11
    %vm13 = vcmask 523648
    %14 = vst.msk [vmem:[#allocation0] sm:$0x1] %vm13, %v12
    %s15 = scalar_lea.vmem [#allocation1], 2
    %v16 = vld [vmem:[%s15] sm:$0x1]
    %17 = vrot.lane.b32.xlu0 %v16, 32
    %v18 = vpop.permute.xlu0 %17
    %vm19 = vcmask 392448
    %20 = vst.msk [vmem:[#allocation0] sm:$0x1] %vm19, %v18
    %s21 = scalar_lea.vmem [#allocation1], 1
    %v22 = vld [vmem:[%s21] sm:$0x1]
    %23 = vrot.lane.b32.xlu0 %v22, 16
    %v24 = vpop.permute.xlu0 %23
    %vm25 = vcmask 261248
    %26 = vst.msk [vmem:[#allocation0] sm:$0x1] %vm25, %v24
    %s28 = sshllo.u32 0, 1
    %v30 = vld [vmem:[#allocation0] sm:%s28]
    %s31 = sshllo.u32 0, 1
    %32 = vst [vmem:[%s1] sm:%s31] %v30

// kernel: tile.6
$region0: #{tile.6}
  #allocation0 [shape = 's32[1]{0}', space=sflag, size = 0x4, scoped, tag = 'scoped memory for tile.6']
  %s0 = inlined_call_operand.vmem [shape: f32[16], index: 0, kind: input, shape index: {}]
  %s1 = inlined_call_operand.vmem [shape: f32[4,16], index: 1, kind: output, shape index: {}]
  // Predicated region
  $region2: #{tile.6} parent=0 // pred_check
    _
  $region3: #{tile.6} parent=0 // pred_check_branch
    %3 = sbr.rel (0) target = $region5
  $region4: #{tile.6} parent=0 // pred_region
    _
  $region5: #{tile.6} parent=0 // pred_fallthru
    _
  %v4 = vld [vmem:[%s0] ss:$0 sm:$0xff]
  %5 = vst [vmem:[%s1] sm:$0xf] %v4

// kernel: resnet_score_forward.5
$region0: #{resnet_score_forward.5}
  #allocation0 [shape = 'u32[]', space=smem, size = 0x4, offset = 0x4, fixed_abs, tag = 'smem constant byte address 0x4 - core index']
  #allocation1 [shape = 'u32[144,128]{1,0:T(1,128)}', space=vmem, size = 0x12000, scoped, tag = 'internal scratch']
  %s0 = inlined_call_operand.vmem [shape: bf16[512,256], index: 0, kind: input, shape index: {}]
  %s1 = inlined_call_operand.vmem [shape: bf16[256,128], index: 1, kind: input, shape index: {}]
  %s2 = inlined_call_operand.vmem [shape: f32[1,128], index: 2, kind: input, shape index: {}]
  %s3 = inlined_call_operand.vmem [shape: f32[512,128], index: 3, kind: output, shape index: {}]
  %s4 = sld [smem:[#allocation0]]
  $region22: #{resnet_score_forward.5} parent=0
    _
  %s6 = ssub.s32 1, %s4
  %s7 = scalar_select 0, %s6, %s4
  // Predicated region
  $region2: #{resnet_score_forward.5} parent=0 // pred_check
    _
  $region3: #{resnet_score_forward.5} parent=0 // pred_check_branch
    %9 = sbr.rel (0) target = $region5
  $region4: #{resnet_score_forward.5} parent=0 // pred_region
    _
  $region5: #{resnet_score_forward.5} parent=0 // pred_fallthru
    _
  // Predicated region
  $region6: #{resnet_score_forward.5} parent=0 // pred_check
    _
  $region7: #{resnet_score_forward.5} parent=0 // pred_check_branch
    %11 = sbr.rel (0) target = $region9
  $region8: #{resnet_score_forward.5} parent=0 // pred_region
    _
  $region9: #{resnet_score_forward.5} parent=0 // pred_fallthru
    _
  // Predicated region
  $region10: #{resnet_score_forward.5} parent=0 // pred_check
    _
  $region11: #{resnet_score_forward.5} parent=0 // pred_check_branch
    %13 = sbr.rel (0) target = $region13
  $region12: #{resnet_score_forward.5} parent=0 // pred_region
    _
  $region13: #{resnet_score_forward.5} parent=0 // pred_fallthru
    _
  %v15 = vld [vmem:[%s0] sm:$0xff]
  %v16 = vld [vmem:[%s0 + $0x8] sm:$0xff]
  %v17 = vld [vmem:[%s0 + $0x10] sm:$0xff]
  %v18 = vld [vmem:[%s0 + $0x18] sm:$0xff]
  %v19 = vld [vmem:[%s0 + $0x20] sm:$0xff]
  %v20 = vld [vmem:[%s0 + $0x28] sm:$0xff]
  %v21 = vld [vmem:[%s0 + $0x30] sm:$0xff]
  %v22 = vld [vmem:[%s0 + $0x38] sm:$0xff]
  %v23 = vld [vmem:[%s0 + $0x40] sm:$0xff]
  %v24 = vld [vmem:[%s0 + $0x48] sm:$0xff]
  %v25 = vld [vmem:[%s0 + $0x50] sm:$0xff]
  %v26 = vld [vmem:[%s0 + $0x58] sm:$0xff]
  %v27 = vld [vmem:[%s0 + $0x60] sm:$0xff]
  %v28 = vld [vmem:[%s0 + $0x68] sm:$0xff]
  %v29 = vld [vmem:[%s0 + $0x70] sm:$0xff]
  %v30 = vld [vmem:[%s0 + $0x78] sm:$0xff]
  %v31 = vld [vmem:[%s0 + $0x80] sm:$0xff]
  %v32 = vld [vmem:[%s0 + $0x88] sm:$0xff]
  %v33 = vld [vmem:[%s0 + $0x90] sm:$0xff]
  %v34 = vld [vmem:[%s0 + $0x98] sm:$0xff]
  %v35 = vld [vmem:[%s0 + $0xa0] sm:$0xff]
  %v36 = vld [vmem:[%s0 + $0xa8] sm:$0xff]
  %v37 = vld [vmem:[%s0 + $0xb0] sm:$0xff]
  %v38 = vld [vmem:[%s0 + $0xb8] sm:$0xff]
  %v39 = vld [vmem:[%s0 + $0xc0] sm:$0xff]
  %v40 = vld [vmem:[%s0 + $0xc8] sm:$0xff]
  %v41 = vld [vmem:[%s0 + $0xd0] sm:$0xff]
  %v42 = vld [vmem:[%s0 + $0xd8] sm:$0xff]
  %v43 = vld [vmem:[%s0 + $0xe0] sm:$0xff]
  %v44 = vld [vmem:[%s0 + $0xe8] sm:$0xff]
  %v45 = vld [vmem:[%s0 + $0xf0] sm:$0xff]
  %v46 = vld [vmem:[%s0 + $0xf8] sm:$0xff]
  %v47 = vld [vmem:[%s0 + $0x100] sm:$0xff]
  %v48 = vld [vmem:[%s0 + $0x108] sm:$0xff]
  %v49 = vld [vmem:[%s0 + $0x110] sm:$0xff]
  %v50 = vld [vmem:[%s0 + $0x118] sm:$0xff]
  %v51 = vld [vmem:[%s0 + $0x120] sm:$0xff]
  %v52 = vld [vmem:[%s0 + $0x128] sm:$0xff]
  %v53 = vld [vmem:[%s0 + $0x130] sm:$0xff]
  %v54 = vld [vmem:[%s0 + $0x138] sm:$0xff]
  %v55 = vld [vmem:[%s0 + $0x140] sm:$0xff]
  %v56 = vld [vmem:[%s0 + $0x148] sm:$0xff]
  %v57 = vld [vmem:[%s0 + $0x150] sm:$0xff]
  %v58 = vld [vmem:[%s0 + $0x158] sm:$0xff]
  %v59 = vld [vmem:[%s0 + $0x160] sm:$0xff]
  %v60 = vld [vmem:[%s0 + $0x168] sm:$0xff]
  %v61 = vld [vmem:[%s0 + $0x170] sm:$0xff]
  %v62 = vld [vmem:[%s0 + $0x178] sm:$0xff]
  %v63 = vld [vmem:[%s0 + $0x180] sm:$0xff]
  %v64 = vld [vmem:[%s0 + $0x188] sm:$0xff]
  %v65 = vld [vmem:[%s0 + $0x190] sm:$0xff]
  %v66 = vld [vmem:[%s0 + $0x198] sm:$0xff]
  %v67 = vld [vmem:[%s0 + $0x1a0] sm:$0xff]
  %v68 = vld [vmem:[%s0 + $0x1a8] sm:$0xff]
  %v69 = vld [vmem:[%s0 + $0x1b0] sm:$0xff]
  %v70 = vld [vmem:[%s0 + $0x1b8] sm:$0xff]
  %v71 = vld [vmem:[%s0 + $0x1c0] sm:$0xff]
  %v72 = vld [vmem:[%s0 + $0x1c8] sm:$0xff]
  %v73 = vld [vmem:[%s0 + $0x1d0] sm:$0xff]
  %v74 = vld [vmem:[%s0 + $0x1d8] sm:$0xff]
  %v75 = vld [vmem:[%s0 + $0x1e0] sm:$0xff]
  %v76 = vld [vmem:[%s0 + $0x1e8] sm:$0xff]
  %v77 = vld [vmem:[%s0 + $0x1f0] sm:$0xff]
  %v78 = vld [vmem:[%s0 + $0x1f8] sm:$0xff]
  %v79 = vld [vmem:[%s1] sm:$0xf]
  %v80 = vld [vmem:[%s1 + $0x4] sm:$0xf]
  %v81 = vld [vmem:[%s1 + $0x8] sm:$0xf]
  %v82 = vld [vmem:[%s1 + $0xc] sm:$0xf]
  %v83 = vld [vmem:[%s1 + $0x10] sm:$0xf]
  %v84 = vld [vmem:[%s1 + $0x14] sm:$0xf]
  %v85 = vld [vmem:[%s1 + $0x18] sm:$0xf]
  %v86 = vld [vmem:[%s1 + $0x1c] sm:$0xf]
  %v87 = vld [vmem:[%s1 + $0x20] sm:$0xf]
  %v88 = vld [vmem:[%s1 + $0x24] sm:$0xf]
  %v89 = vld [vmem:[%s1 + $0x28] sm:$0xf]
  %v90 = vld [vmem:[%s1 + $0x2c] sm:$0xf]
  %v91 = vld [vmem:[%s1 + $0x30] sm:$0xf]
  %v92 = vld [vmem:[%s1 + $0x34] sm:$0xf]
  %v93 = vld [vmem:[%s1 + $0x38] sm:$0xf]
  %v94 = vld [vmem:[%s1 + $0x3c] sm:$0xf]
  %v95 = vld [vmem:[%s1 + $0x40] sm:$0xf]
  %v96 = vld [vmem:[%s1 + $0x44] sm:$0xf]
  %v97 = vld [vmem:[%s1 + $0x48] sm:$0xf]
  %v98 = vld [vmem:[%s1 + $0x4c] sm:$0xf]
  %v99 = vld [vmem:[%s1 + $0x50] sm:$0xf]
  %v100 = vld [vmem:[%s1 + $0x54] sm:$0xf]
  %v101 = vld [vmem:[%s1 + $0x58] sm:$0xf]
  %v102 = vld [vmem:[%s1 + $0x5c] sm:$0xf]
  %v103 = vld [vmem:[%s1 + $0x60] sm:$0xf]
  %v104 = vld [vmem:[%s1 + $0x64] sm:$0xf]
  %v105 = vld [vmem:[%s1 + $0x68] sm:$0xf]
  %v106 = vld [vmem:[%s1 + $0x6c] sm:$0xf]
  %v107 = vld [vmem:[%s1 + $0x70] sm:$0xf]
  %v108 = vld [vmem:[%s1 + $0x74] sm:$0xf]
  %v109 = vld [vmem:[%s1 + $0x78] sm:$0xf]
  %v110 = vld [vmem:[%s1 + $0x7c] sm:$0xf]
  %v111 = vld [vmem:[%s2] sm:$0x1]
  %v113 = vlaneseq
  %v114 = vshrl.u32 %v113, 7
  %v115 = vsub.s32 0, %v114
  %v116 = vrot.slane %v111, %v115
  %v182 = vunpack.c.l.b16 %v15
  %v183 = vunpack.c.h.b16 %v15
  %v184 = vunpack.c.l.b16 %v16
  %v185 = vunpack.c.h.b16 %v16
  %v186 = vunpack.c.l.b16 %v17
  %v187 = vunpack.c.h.b16 %v17
  %v188 = vunpack.c.l.b16 %v18
  %v189 = vunpack.c.h.b16 %v18
  %v190 = vunpack.c.l.b16 %v19
  %v191 = vunpack.c.h.b16 %v19
  %v192 = vunpack.c.l.b16 %v20
  %v193 = vunpack.c.h.b16 %v20
  %v194 = vunpack.c.l.b16 %v21
  %v195 = vunpack.c.h.b16 %v21
  %v196 = vunpack.c.l.b16 %v22
  %v197 = vunpack.c.h.b16 %v22
  %v198 = vunpack.c.l.b16 %v23
  %v199 = vunpack.c.h.b16 %v23
  %v200 = vunpack.c.l.b16 %v24
  %v201 = vunpack.c.h.b16 %v24
  %v202 = vunpack.c.l.b16 %v25
  %v203 = vunpack.c.h.b16 %v25
  %v204 = vunpack.c.l.b16 %v26
  %v205 = vunpack.c.h.b16 %v26
  %v206 = vunpack.c.l.b16 %v27
  %v207 = vunpack.c.h.b16 %v27
  %v208 = vunpack.c.l.b16 %v28
  %v209 = vunpack.c.h.b16 %v28
  %v210 = vunpack.c.l.b16 %v29
  %v211 = vunpack.c.h.b16 %v29
  %v212 = vunpack.c.l.b16 %v30
  %v213 = vunpack.c.h.b16 %v30
  %v214 = vunpack.c.l.b16 %v31
  %v215 = vunpack.c.h.b16 %v31
  %v216 = vunpack.c.l.b16 %v32
  %v217 = vunpack.c.h.b16 %v32
  %v218 = vunpack.c.l.b16 %v33
  %v219 = vunpack.c.h.b16 %v33
  %v220 = vunpack.c.l.b16 %v34
  %v221 = vunpack.c.h.b16 %v34
  %v222 = vunpack.c.l.b16 %v35
  %v223 = vunpack.c.h.b16 %v35
  %v224 = vunpack.c.l.b16 %v36
  %v225 = vunpack.c.h.b16 %v36
  %v226 = vunpack.c.l.b16 %v37
  %v227 = vunpack.c.h.b16 %v37
  %v228 = vunpack.c.l.b16 %v38
  %v229 = vunpack.c.h.b16 %v38
  %v230 = vunpack.c.l.b16 %v39
  %v231 = vunpack.c.h.b16 %v39
  %v232 = vunpack.c.l.b16 %v40
  %v233 = vunpack.c.h.b16 %v40
  %v234 = vunpack.c.l.b16 %v41
  %v235 = vunpack.c.h.b16 %v41
  %v236 = vunpack.c.l.b16 %v42
  %v237 = vunpack.c.h.b16 %v42
  %v238 = vunpack.c.l.b16 %v43
  %v239 = vunpack.c.h.b16 %v43
  %v240 = vunpack.c.l.b16 %v44
  %v241 = vunpack.c.h.b16 %v44
  %v242 = vunpack.c.l.b16 %v45
  %v243 = vunpack.c.h.b16 %v45
  %v244 = vunpack.c.l.b16 %v46
  %v245 = vunpack.c.h.b16 %v46
  %v246 = vunpack.c.l.b16 %v47
  %v247 = vunpack.c.h.b16 %v47
  %v248 = vunpack.c.l.b16 %v48
  %v249 = vunpack.c.h.b16 %v48
  %v250 = vunpack.c.l.b16 %v49
  %v251 = vunpack.c.h.b16 %v49
  %v252 = vunpack.c.l.b16 %v50
  %v253 = vunpack.c.h.b16 %v50
  %v254 = vunpack.c.l.b16 %v51
  %v255 = vunpack.c.h.b16 %v51
  %v256 = vunpack.c.l.b16 %v52
  %v257 = vunpack.c.h.b16 %v52
  %v258 = vunpack.c.l.b16 %v53
  %v259 = vunpack.c.h.b16 %v53
  %v260 = vunpack.c.l.b16 %v54
  %v261 = vunpack.c.h.b16 %v54
  %v262 = vunpack.c.l.b16 %v55
  %v263 = vunpack.c.h.b16 %v55
  %v264 = vunpack.c.l.b16 %v56
  %v265 = vunpack.c.h.b16 %v56
  %v266 = vunpack.c.l.b16 %v57
  %v267 = vunpack.c.h.b16 %v57
  %v268 = vunpack.c.l.b16 %v58
  %v269 = vunpack.c.h.b16 %v58
  %v270 = vunpack.c.l.b16 %v59
  %v271 = vunpack.c.h.b16 %v59
  %v272 = vunpack.c.l.b16 %v60
  %v273 = vunpack.c.h.b16 %v60
  %v274 = vunpack.c.l.b16 %v61
  %v275 = vunpack.c.h.b16 %v61
  %v276 = vunpack.c.l.b16 %v62
  %v277 = vunpack.c.h.b16 %v62
  %v278 = vunpack.c.l.b16 %v63
  %v279 = vunpack.c.h.b16 %v63
  %v280 = vunpack.c.l.b16 %v64
  %v281 = vunpack.c.h.b16 %v64
  %v282 = vunpack.c.l.b16 %v65
  %v283 = vunpack.c.h.b16 %v65
  %v284 = vunpack.c.l.b16 %v66
  %v285 = vunpack.c.h.b16 %v66
  %v286 = vunpack.c.l.b16 %v67
  %v287 = vunpack.c.h.b16 %v67
  %v288 = vunpack.c.l.b16 %v68
  %v289 = vunpack.c.h.b16 %v68
  %v290 = vunpack.c.l.b16 %v69
  %v291 = vunpack.c.h.b16 %v69
  %v292 = vunpack.c.l.b16 %v70
  %v293 = vunpack.c.h.b16 %v70
  %v294 = vunpack.c.l.b16 %v71
  %v295 = vunpack.c.h.b16 %v71
  %v296 = vunpack.c.l.b16 %v72
  %v297 = vunpack.c.h.b16 %v72
  %v298 = vunpack.c.l.b16 %v73
  %v299 = vunpack.c.h.b16 %v73
  %v300 = vunpack.c.l.b16 %v74
  %v301 = vunpack.c.h.b16 %v74
  %v302 = vunpack.c.l.b16 %v75
  %v303 = vunpack.c.h.b16 %v75
  %v304 = vunpack.c.l.b16 %v76
  %v305 = vunpack.c.h.b16 %v76
  %v306 = vunpack.c.l.b16 %v77
  %v307 = vunpack.c.h.b16 %v77
  %v308 = vunpack.c.l.b16 %v78
  %v309 = vunpack.c.h.b16 %v78
  %v310 = vpack.c.b16 %v184, %v182
  %v311 = vpack.c.b16 %v185, %v183
  %v312 = vpack.c.b16 %v188, %v186
  %v313 = vpack.c.b16 %v189, %v187
  %v314 = vpack.c.b16 %v192, %v190
  %v315 = vpack.c.b16 %v193, %v191
  %v316 = vpack.c.b16 %v196, %v194
  %v317 = vpack.c.b16 %v197, %v195
  %v318 = vpack.c.b16 %v200, %v198
  %v319 = vpack.c.b16 %v201, %v199
  %v320 = vpack.c.b16 %v204, %v202
  %v321 = vpack.c.b16 %v205, %v203
  %v322 = vpack.c.b16 %v208, %v206
  %v323 = vpack.c.b16 %v209, %v207
  %v324 = vpack.c.b16 %v212, %v210
  %v325 = vpack.c.b16 %v213, %v211
  %v326 = vpack.c.b16 %v216, %v214
  %v327 = vpack.c.b16 %v217, %v215
  %v328 = vpack.c.b16 %v220, %v218
  %v329 = vpack.c.b16 %v221, %v219
  %v330 = vpack.c.b16 %v224, %v222
  %v331 = vpack.c.b16 %v225, %v223
  %v332 = vpack.c.b16 %v228, %v226
  %v333 = vpack.c.b16 %v229, %v227
  %v334 = vpack.c.b16 %v232, %v230
  %v335 = vpack.c.b16 %v233, %v231
  %v336 = vpack.c.b16 %v236, %v234
  %v337 = vpack.c.b16 %v237, %v235
  %v338 = vpack.c.b16 %v240, %v238
  %v339 = vpack.c.b16 %v241, %v239
  %v340 = vpack.c.b16 %v244, %v242
  %v341 = vpack.c.b16 %v245, %v243
  %v342 = vpack.c.b16 %v248, %v246
  %v343 = vpack.c.b16 %v249, %v247
  %v344 = vpack.c.b16 %v252, %v250
  %v345 = vpack.c.b16 %v253, %v251
  %v346 = vpack.c.b16 %v256, %v254
  %v347 = vpack.c.b16 %v257, %v255
  %v348 = vpack.c.b16 %v260, %v258
  %v349 = vpack.c.b16 %v261, %v259
  %v350 = vpack.c.b16 %v264, %v262
  %v351 = vpack.c.b16 %v265, %v263
  %v352 = vpack.c.b16 %v268, %v266
  %v353 = vpack.c.b16 %v269, %v267
  %v354 = vpack.c.b16 %v272, %v270
  %v355 = vpack.c.b16 %v273, %v271
  %v356 = vpack.c.b16 %v276, %v274
  %v357 = vpack.c.b16 %v277, %v275
  %v358 = vpack.c.b16 %v280, %v278
  %v359 = vpack.c.b16 %v281, %v279
  %v360 = vpack.c.b16 %v284, %v282
  %v361 = vpack.c.b16 %v285, %v283
  %v362 = vpack.c.b16 %v288, %v286
  %v363 = vpack.c.b16 %v289, %v287
  %v364 = vpack.c.b16 %v292, %v290
  %v365 = vpack.c.b16 %v293, %v291
  %v366 = vpack.c.b16 %v296, %v294
  %v367 = vpack.c.b16 %v297, %v295
  %v368 = vpack.c.b16 %v300, %v298
  %v369 = vpack.c.b16 %v301, %v299
  %v370 = vpack.c.b16 %v304, %v302
  %v371 = vpack.c.b16 %v305, %v303
  %v372 = vpack.c.b16 %v308, %v306
  %v373 = vpack.c.b16 %v309, %v307
  %v470 = vunpack.c.l.b16 %v79
  %v471 = vunpack.c.l.b16 %v80
  %v472 = vunpack.c.l.b16 %v81
  %v473 = vunpack.c.l.b16 %v82
  %v474 = vunpack.c.l.b16 %v83
  %v475 = vunpack.c.l.b16 %v84
  %v476 = vunpack.c.l.b16 %v85
  %v477 = vunpack.c.l.b16 %v86
  %v478 = vunpack.c.l.b16 %v87
  %v479 = vunpack.c.l.b16 %v88
  %v480 = vunpack.c.l.b16 %v89
  %v481 = vunpack.c.l.b16 %v90
  %v482 = vunpack.c.l.b16 %v91
  %v483 = vunpack.c.l.b16 %v92
  %v484 = vunpack.c.l.b16 %v93
  %v485 = vunpack.c.l.b16 %v94
  %v486 = vunpack.c.l.b16 %v95
  %v487 = vunpack.c.l.b16 %v96
  %v488 = vunpack.c.l.b16 %v97
  %v489 = vunpack.c.l.b16 %v98
  %v490 = vunpack.c.l.b16 %v99
  %v491 = vunpack.c.l.b16 %v100
  %v492 = vunpack.c.l.b16 %v101
  %v493 = vunpack.c.l.b16 %v102
  %v494 = vunpack.c.l.b16 %v103
  %v495 = vunpack.c.l.b16 %v104
  %v496 = vunpack.c.l.b16 %v105
  %v497 = vunpack.c.l.b16 %v106
  %v498 = vunpack.c.l.b16 %v107
  %v499 = vunpack.c.l.b16 %v108
  %v500 = vunpack.c.l.b16 %v109
  %v501 = vunpack.c.l.b16 %v110
  %v502 = vpack.c.b16 %v471, %v470
  %v503 = vpack.c.b16 %v473, %v472
  %v504 = vpack.c.b16 %v475, %v474
  %v505 = vpack.c.b16 %v477, %v476
  %v506 = vpack.c.b16 %v479, %v478
  %v507 = vpack.c.b16 %v481, %v480
  %v508 = vpack.c.b16 %v483, %v482
  %v509 = vpack.c.b16 %v485, %v484
  %v510 = vpack.c.b16 %v487, %v486
  %v511 = vpack.c.b16 %v489, %v488
  %v512 = vpack.c.b16 %v491, %v490
  %v513 = vpack.c.b16 %v493, %v492
  %v514 = vpack.c.b16 %v495, %v494
  %v515 = vpack.c.b16 %v497, %v496
  %v516 = vpack.c.b16 %v499, %v498
  %v517 = vpack.c.b16 %v501, %v500
  %534 = vmatprep.subr.bf16.mxu0 0
  %535 = vmatpush1.bf16.msra.mxu0 %v502
  %536 = vmatprep.subr.bf16.mxu0 0
  %537 = vmatpush1.bf16.msra.mxu0 %v503
  %538 = vmatprep.subr.bf16.mxu0 0
  %539 = vmatpush1.bf16.msra.mxu0 %v504
  %540 = vmatprep.subr.bf16.mxu0 0
  %541 = vmatpush1.bf16.msra.mxu0 %v505
  %542 = vmatprep.subr.bf16.mxu0 0
  %543 = vmatpush1.bf16.msra.mxu0 %v506
  %544 = vmatprep.subr.bf16.mxu0 0
  %545 = vmatpush1.bf16.msra.mxu0 %v507
  %546 = vmatprep.subr.bf16.mxu0 0
  %547 = vmatpush1.bf16.msra.mxu0 %v508
  %548 = vmatprep.subr.bf16.mxu0 0
  %549 = vmatpush1.bf16.msra.mxu0 %v509
  %550 = vmatprep.subr.bf16.mxu0 0
  %551 = vmatpush1.bf16.msra.mxu0 %v510
  %552 = vmatprep.subr.bf16.mxu0 0
  %553 = vmatpush1.bf16.msra.mxu0 %v511
  %554 = vmatprep.subr.bf16.mxu0 0
  %555 = vmatpush1.bf16.msra.mxu0 %v512
  %556 = vmatprep.subr.bf16.mxu0 0
  %557 = vmatpush1.bf16.msra.mxu0 %v513
  %558 = vmatprep.subr.bf16.mxu0 0
  %559 = vmatpush1.bf16.msra.mxu0 %v514
  %560 = vmatprep.subr.bf16.mxu0 0
  %561 = vmatpush1.bf16.msra.mxu0 %v515
  %562 = vmatprep.subr.bf16.mxu0 0
  %563 = vmatpush1.bf16.msra.mxu0 %v516
  %564 = vmatprep.subr.bf16.mxu0 0
  %565 = vmatpush1.bf16.msra.mxu0 %v517
  %566 = vmatprep.mubr.bf16.mxu0 %v311
  %567 = vmatmul.mubr.bf16.gmra.mrb[0].mxu0 %v310
  %v568 = vpop.f32.mrb[0].mxu0
  %v569 = vadd.f32 %v116, %v568
  %v570 = vpop.f32.mrb[0].mxu0
  %v571 = vpop.f32.mrb[0].mxu0
  %v572 = vadd.f32 %v116, %v571
  %v573 = vpop.f32.mrb[0].mxu0
  %574 = vmatprep.mubr.bf16.mxu0 %v313
  %575 = vmatmul.mubr.bf16.gmra.mrb[0].mxu0 %v312
  %v576 = vpop.f32.mrb[0].mxu0
  %v577 = vadd.f32 %v116, %v576
  %v578 = vpop.f32.mrb[0].mxu0
  %v579 = vpop.f32.mrb[0].mxu0
  %v580 = vadd.f32 %v116, %v579
  %v581 = vpop.f32.mrb[0].mxu0
  %582 = vmatprep.mubr.bf16.mxu0 %v315
  %583 = vmatmul.mubr.bf16.gmra.mrb[0].mxu0 %v314
  %v584 = vpop.f32.mrb[0].mxu0
  %v585 = vadd.f32 %v116, %v584
  %v586 = vpop.f32.mrb[0].mxu0
  %v587 = vpop.f32.mrb[0].mxu0
  %v588 = vadd.f32 %v116, %v587
  %v589 = vpop.f32.mrb[0].mxu0
  %590 = vmatprep.mubr.bf16.mxu0 %v317
  %591 = vmatmul.mubr.bf16.gmra.mrb[0].mxu0 %v316
  %v592 = vpop.f32.mrb[0].mxu0
  %v593 = vadd.f32 %v116, %v592
  %v594 = vpop.f32.mrb[0].mxu0
  %v595 = vpop.f32.mrb[0].mxu0
  %v596 = vadd.f32 %v116, %v595
  %v597 = vpop.f32.mrb[0].mxu0
  %598 = vmatprep.mubr.bf16.mxu0 %v319
  %599 = vmatmul.mubr.bf16.gmra.mrb[0].mxu0 %v318
  %v600 = vpop.f32.mrb[0].mxu0
  %v601 = vadd.f32 %v116, %v600
  %v602 = vpop.f32.mrb[0].mxu0
  %v603 = vpop.f32.mrb[0].mxu0
  %v604 = vadd.f32 %v116, %v603
  %v605 = vpop.f32.mrb[0].mxu0
  %606 = vmatprep.mubr.bf16.mxu0 %v321
  %607 = vmatmul.mubr.bf16.gmra.mrb[0].mxu0 %v320
  %v608 = vpop.f32.mrb[0].mxu0
  %v609 = vadd.f32 %v116, %v608
  %v610 = vpop.f32.mrb[0].mxu0
  %v611 = vpop.f32.mrb[0].mxu0
  %v612 = vadd.f32 %v116, %v611
  %v613 = vpop.f32.mrb[0].mxu0
  %614 = vmatprep.mubr.bf16.mxu0 %v323
  %615 = vmatmul.mubr.bf16.gmra.mrb[0].mxu0 %v322
  %v616 = vpop.f32.mrb[0].mxu0
  %v617 = vadd.f32 %v116, %v616
  %v618 = vpop.f32.mrb[0].mxu0
  %v619 = vpop.f32.mrb[0].mxu0
  %v620 = vadd.f32 %v116, %v619
  %v621 = vpop.f32.mrb[0].mxu0
  %622 = vmatprep.mubr.bf16.mxu0 %v325
  %623 = vmatmul.mubr.bf16.gmra.mrb[0].mxu0 %v324
  %v624 = vpop.f32.mrb[0].mxu0
  %v625 = vadd.f32 %v116, %v624
  %v626 = vpop.f32.mrb[0].mxu0
  %v627 = vpop.f32.mrb[0].mxu0
  %v628 = vadd.f32 %v116, %v627
  %v629 = vpop.f32.mrb[0].mxu0
  %630 = vmatprep.mubr.bf16.mxu0 %v327
  %631 = vmatmul.mubr.bf16.gmra.mrb[0].mxu0 %v326
  %v632 = vpop.f32.mrb[0].mxu0
  %v633 = vadd.f32 %v116, %v632
  %v634 = vpop.f32.mrb[0].mxu0
  %v635 = vpop.f32.mrb[0].mxu0
  %v636 = vadd.f32 %v116, %v635
  %v637 = vpop.f32.mrb[0].mxu0
  %638 = vmatprep.mubr.bf16.mxu0 %v329
  %639 = vmatmul.mubr.bf16.gmra.mrb[0].mxu0 %v328
  %v640 = vpop.f32.mrb[0].mxu0
  %v641 = vadd.f32 %v116, %v640
  %v642 = vpop.f32.mrb[0].mxu0
  %v643 = vpop.f32.mrb[0].mxu0
  %v644 = vadd.f32 %v116, %v643
  %v645 = vpop.f32.mrb[0].mxu0
  %646 = vmatprep.mubr.bf16.mxu0 %v331
  %647 = vmatmul.mubr.bf16.gmra.mrb[0].mxu0 %v330
  %v648 = vpop.f32.mrb[0].mxu0
  %v649 = vadd.f32 %v116, %v648
  %v650 = vpop.f32.mrb[0].mxu0
  %v651 = vpop.f32.mrb[0].mxu0
  %v652 = vadd.f32 %v116, %v651
  %v653 = vpop.f32.mrb[0].mxu0
  %654 = vmatprep.mubr.bf16.mxu0 %v333
  %655 = vmatmul.mubr.bf16.gmra.mrb[0].mxu0 %v332
  %v656 = vpop.f32.mrb[0].mxu0
  %v657 = vadd.f32 %v116, %v656
  %v658 = vpop.f32.mrb[0].mxu0
  %v659 = vpop.f32.mrb[0].mxu0
  %v660 = vadd.f32 %v116, %v659
  %v661 = vpop.f32.mrb[0].mxu0
  %662 = vmatprep.mubr.bf16.mxu0 %v335
  %663 = vmatmul.mubr.bf16.gmra.mrb[0].mxu0 %v334
  %v664 = vpop.f32.mrb[0].mxu0
  %v665 = vadd.f32 %v116, %v664
  %v666 = vpop.f32.mrb[0].mxu0
  %v667 = vpop.f32.mrb[0].mxu0
  %v668 = vadd.f32 %v116, %v667
  %v669 = vpop.f32.mrb[0].mxu0
  %670 = vmatprep.mubr.bf16.mxu0 %v337
  %671 = vmatmul.mubr.bf16.gmra.mrb[0].mxu0 %v336
  %v672 = vpop.f32.mrb[0].mxu0
  %v673 = vadd.f32 %v116, %v672
  %v674 = vpop.f32.mrb[0].mxu0
  %v675 = vpop.f32.mrb[0].mxu0
  %v676 = vadd.f32 %v116, %v675
  %v677 = vpop.f32.mrb[0].mxu0
  %678 = vmatprep.mubr.bf16.mxu0 %v339
  %679 = vmatmul.mubr.bf16.gmra.mrb[0].mxu0 %v338
  %v680 = vpop.f32.mrb[0].mxu0
  %v681 = vadd.f32 %v116, %v680
  %v682 = vpop.f32.mrb[0].mxu0
  %v683 = vpop.f32.mrb[0].mxu0
  %v684 = vadd.f32 %v116, %v683
  %v685 = vpop.f32.mrb[0].mxu0
  %686 = vmatprep.mubr.bf16.mxu0 %v341
  %687 = vmatmul.mubr.bf16.gmra.mrb[0].mxu0 %v340
  %v688 = vpop.f32.mrb[0].mxu0
  %v689 = vadd.f32 %v116, %v688
  %v690 = vpop.f32.mrb[0].mxu0
  %v691 = vpop.f32.mrb[0].mxu0
  %v692 = vadd.f32 %v116, %v691
  %v693 = vpop.f32.mrb[0].mxu0
  %694 = vmatprep.mubr.bf16.mxu0 %v343
  %695 = vmatmul.mubr.bf16.gmra.mrb[0].mxu0 %v342
  %v696 = vpop.f32.mrb[0].mxu0
  %v697 = vadd.f32 %v116, %v696
  %v698 = vpop.f32.mrb[0].mxu0
  %v699 = vpop.f32.mrb[0].mxu0
  %v700 = vadd.f32 %v116, %v699
  %v701 = vpop.f32.mrb[0].mxu0
  %702 = vmatprep.mubr.bf16.mxu0 %v345
  %703 = vmatmul.mubr.bf16.gmra.mrb[0].mxu0 %v344
  %v704 = vpop.f32.mrb[0].mxu0
  %v705 = vadd.f32 %v116, %v704
  %v706 = vpop.f32.mrb[0].mxu0
  %v707 = vpop.f32.mrb[0].mxu0
  %v708 = vadd.f32 %v116, %v707
  %v709 = vpop.f32.mrb[0].mxu0
  %710 = vmatprep.mubr.bf16.mxu0 %v347
  %711 = vmatmul.mubr.bf16.gmra.mrb[0].mxu0 %v346
  %v712 = vpop.f32.mrb[0].mxu0
  %v713 = vadd.f32 %v116, %v712
  %v714 = vpop.f32.mrb[0].mxu0
  %v715 = vpop.f32.mrb[0].mxu0
  %v716 = vadd.f32 %v116, %v715
  %v717 = vpop.f32.mrb[0].mxu0
  %718 = vmatprep.mubr.bf16.mxu0 %v349
  %719 = vmatmul.mubr.bf16.gmra.mrb[0].mxu0 %v348
  %v720 = vpop.f32.mrb[0].mxu0
  %v721 = vadd.f32 %v116, %v720
  %v722 = vpop.f32.mrb[0].mxu0
  %v723 = vpop.f32.mrb[0].mxu0
  %v724 = vadd.f32 %v116, %v723
  %v725 = vpop.f32.mrb[0].mxu0
  %726 = vmatprep.mubr.bf16.mxu0 %v351
  %727 = vmatmul.mubr.bf16.gmra.mrb[0].mxu0 %v350
  %v728 = vpop.f32.mrb[0].mxu0
  %v729 = vadd.f32 %v116, %v728
  %v730 = vpop.f32.mrb[0].mxu0
  %v731 = vpop.f32.mrb[0].mxu0
  %v732 = vadd.f32 %v116, %v731
  %v733 = vpop.f32.mrb[0].mxu0
  %734 = vmatprep.mubr.bf16.mxu0 %v353
  %735 = vmatmul.mubr.bf16.gmra.mrb[0].mxu0 %v352
  %v736 = vpop.f32.mrb[0].mxu0
  %v737 = vadd.f32 %v116, %v736
  %v738 = vpop.f32.mrb[0].mxu0
  %v739 = vpop.f32.mrb[0].mxu0
  %v740 = vadd.f32 %v116, %v739
  %v741 = vpop.f32.mrb[0].mxu0
  %742 = vmatprep.mubr.bf16.mxu0 %v355
  %743 = vmatmul.mubr.bf16.gmra.mrb[0].mxu0 %v354
  %v744 = vpop.f32.mrb[0].mxu0
  %v745 = vadd.f32 %v116, %v744
  %v746 = vpop.f32.mrb[0].mxu0
  %v747 = vpop.f32.mrb[0].mxu0
  %v748 = vadd.f32 %v116, %v747
  %v749 = vpop.f32.mrb[0].mxu0
  %750 = vmatprep.mubr.bf16.mxu0 %v357
  %751 = vmatmul.mubr.bf16.gmra.mrb[0].mxu0 %v356
  %v752 = vpop.f32.mrb[0].mxu0
  %v753 = vadd.f32 %v116, %v752
  %v754 = vpop.f32.mrb[0].mxu0
  %v755 = vpop.f32.mrb[0].mxu0
  %v756 = vadd.f32 %v116, %v755
  %v757 = vpop.f32.mrb[0].mxu0
  %758 = vmatprep.mubr.bf16.mxu0 %v359
  %759 = vmatmul.mubr.bf16.gmra.mrb[0].mxu0 %v358
  %v760 = vpop.f32.mrb[0].mxu0
  %v761 = vadd.f32 %v116, %v760
  %v762 = vpop.f32.mrb[0].mxu0
  %v763 = vpop.f32.mrb[0].mxu0
  %v764 = vadd.f32 %v116, %v763
  %v765 = vpop.f32.mrb[0].mxu0
  %766 = vmatprep.mubr.bf16.mxu0 %v361
  %767 = vmatmul.mubr.bf16.gmra.mrb[0].mxu0 %v360
  %v768 = vpop.f32.mrb[0].mxu0
  %v769 = vadd.f32 %v116, %v768
  %v770 = vpop.f32.mrb[0].mxu0
  %v771 = vpop.f32.mrb[0].mxu0
  %v772 = vadd.f32 %v116, %v771
  %v773 = vpop.f32.mrb[0].mxu0
  %774 = vmatprep.mubr.bf16.mxu0 %v363
  %775 = vmatmul.mubr.bf16.gmra.mrb[0].mxu0 %v362
  %v776 = vpop.f32.mrb[0].mxu0
  %v777 = vadd.f32 %v116, %v776
  %v778 = vpop.f32.mrb[0].mxu0
  %v779 = vpop.f32.mrb[0].mxu0
  %v780 = vadd.f32 %v116, %v779
  %v781 = vpop.f32.mrb[0].mxu0
  %782 = vmatprep.mubr.bf16.mxu0 %v365
  %783 = vmatmul.mubr.bf16.gmra.mrb[0].mxu0 %v364
  %v784 = vpop.f32.mrb[0].mxu0
  %v785 = vadd.f32 %v116, %v784
  %v786 = vpop.f32.mrb[0].mxu0
  %v787 = vpop.f32.mrb[0].mxu0
  %v788 = vadd.f32 %v116, %v787
  %v789 = vpop.f32.mrb[0].mxu0
  %790 = vmatprep.mubr.bf16.mxu0 %v367
  %791 = vmatmul.mubr.bf16.gmra.mrb[0].mxu0 %v366
  %v792 = vpop.f32.mrb[0].mxu0
  %v793 = vadd.f32 %v116, %v792
  %v794 = vpop.f32.mrb[0].mxu0
  %v795 = vpop.f32.mrb[0].mxu0
  %v796 = vadd.f32 %v116, %v795
  %v797 = vpop.f32.mrb[0].mxu0
  %798 = vmatprep.mubr.bf16.mxu0 %v369
  %799 = vmatmul.mubr.bf16.gmra.mrb[0].mxu0 %v368
  %v800 = vpop.f32.mrb[0].mxu0
  %v801 = vadd.f32 %v116, %v800
  %v802 = vpop.f32.mrb[0].mxu0
  %v803 = vpop.f32.mrb[0].mxu0
  %v804 = vadd.f32 %v116, %v803
  %v805 = vpop.f32.mrb[0].mxu0
  %806 = vmatprep.mubr.bf16.mxu0 %v371
  %807 = vmatmul.mubr.bf16.gmra.mrb[0].mxu0 %v370
  %v808 = vpop.f32.mrb[0].mxu0
  %v809 = vadd.f32 %v116, %v808
  %v810 = vpop.f32.mrb[0].mxu0
  %v811 = vpop.f32.mrb[0].mxu0
  %v812 = vadd.f32 %v116, %v811
  %v813 = vpop.f32.mrb[0].mxu0
  %814 = vmatprep.mubr.bf16.mxu0 %v373
  %815 = vmatmul.mubr.bf16.gmra.mrb[0].mxu0 %v372
  %v816 = vpop.f32.mrb[0].mxu0
  %v817 = vadd.f32 %v116, %v816
  %v818 = vpop.f32.mrb[0].mxu0
  %v819 = vpop.f32.mrb[0].mxu0
  %v820 = vadd.f32 %v116, %v819
  %v821 = vpop.f32.mrb[0].mxu0
  %822 = vdwg.mxu0
  %v823 = vadd.f32 %v569, %v572
  %v824 = vadd.f32 %v823, %v577
  %v825 = vadd.f32 %v824, %v580
  %v826 = vadd.f32 %v825, %v585
  %v827 = vadd.f32 %v826, %v588
  %v828 = vadd.f32 %v827, %v593
  %v829 = vadd.f32 %v828, %v596
  %v830 = vadd.f32 %v829, %v601
  %v831 = vadd.f32 %v830, %v604
  %v832 = vadd.f32 %v831, %v609
  %v833 = vadd.f32 %v832, %v612
  %v834 = vadd.f32 %v833, %v617
  %v835 = vadd.f32 %v834, %v620
  %v836 = vadd.f32 %v835, %v625
  %v837 = vadd.f32 %v836, %v628
  %v838 = vadd.f32 %v837, %v633
  %v839 = vadd.f32 %v838, %v636
  %v840 = vadd.f32 %v839, %v641
  %v841 = vadd.f32 %v840, %v644
  %v842 = vadd.f32 %v841, %v649
  %v843 = vadd.f32 %v842, %v652
  %v844 = vadd.f32 %v843, %v657
  %v845 = vadd.f32 %v844, %v660
  %v846 = vadd.f32 %v845, %v665
  %v847 = vadd.f32 %v846, %v668
  %v848 = vadd.f32 %v847, %v673
  %v849 = vadd.f32 %v848, %v676
  %v850 = vadd.f32 %v849, %v681
  %v851 = vadd.f32 %v850, %v684
  %v852 = vadd.f32 %v851, %v689
  %v853 = vadd.f32 %v852, %v692
  %v854 = vrot.slane %v853, 4
  %v855 = vadd.f32 %v853, %v854
  %v856 = vrot.slane %v855, 2
  %v857 = vadd.f32 %v855, %v856
  %v858 = vrot.slane %v857, 1
  %v859 = vadd.f32 %v857, %v858
  %v860 = vadd.f32 %v697, %v700
  %v861 = vadd.f32 %v860, %v705
  %v862 = vadd.f32 %v861, %v708
  %v863 = vadd.f32 %v862, %v713
  %v864 = vadd.f32 %v863, %v716
  %v865 = vadd.f32 %v864, %v721
  %v866 = vadd.f32 %v865, %v724
  %v867 = vadd.f32 %v866, %v729
  %v868 = vadd.f32 %v867, %v732
  %v869 = vadd.f32 %v868, %v737
  %v870 = vadd.f32 %v869, %v740
  %v871 = vadd.f32 %v870, %v745
  %v872 = vadd.f32 %v871, %v748
  %v873 = vadd.f32 %v872, %v753
  %v874 = vadd.f32 %v873, %v756
  %v875 = vadd.f32 %v874, %v761
  %v876 = vadd.f32 %v875, %v764
  %v877 = vadd.f32 %v876, %v769
  %v878 = vadd.f32 %v877, %v772
  %v879 = vadd.f32 %v878, %v777
  %v880 = vadd.f32 %v879, %v780
  %v881 = vadd.f32 %v880, %v785
  %v882 = vadd.f32 %v881, %v788
  %v883 = vadd.f32 %v882, %v793
  %v884 = vadd.f32 %v883, %v796
  %v885 = vadd.f32 %v884, %v801
  %v886 = vadd.f32 %v885, %v804
  %v887 = vadd.f32 %v886, %v809
  %v888 = vadd.f32 %v887, %v812
  %v889 = vadd.f32 %v888, %v817
  %v890 = vadd.f32 %v889, %v820
  %v891 = vrot.slane %v890, 4
  %v892 = vadd.f32 %v890, %v891
  %v893 = vrot.slane %v892, 2
  %v894 = vadd.f32 %v892, %v893
  %v895 = vrot.slane %v894, 1
  %v896 = vadd.f32 %v894, %v895
  %v897 = vrcp.pop 256.0
  %v898 = vmul.f32 %v859, %v897
  %v899 = vmul.f32 %v896, %v897
  %v900 = vsub.f32 %v569, %v898
  %v901 = vsub.f32 %v572, %v898
  %v902 = vsub.f32 %v577, %v898
  %v903 = vsub.f32 %v580, %v898
  %v904 = vsub.f32 %v585, %v898
  %v905 = vsub.f32 %v588, %v898
  %v906 = vsub.f32 %v593, %v898
  %v907 = vsub.f32 %v596, %v898
  %v908 = vsub.f32 %v601, %v898
  %v909 = vsub.f32 %v604, %v898
  %v910 = vsub.f32 %v609, %v898
  %v911 = vsub.f32 %v612, %v898
  %v912 = vsub.f32 %v617, %v898
  %v913 = vsub.f32 %v620, %v898
  %v914 = vsub.f32 %v625, %v898
  %v915 = vsub.f32 %v628, %v898
  %v916 = vsub.f32 %v633, %v898
  %v917 = vsub.f32 %v636, %v898
  %v918 = vsub.f32 %v641, %v898
  %v919 = vsub.f32 %v644, %v898
  %v920 = vsub.f32 %v649, %v898
  %v921 = vsub.f32 %v652, %v898
  %v922 = vsub.f32 %v657, %v898
  %v923 = vsub.f32 %v660, %v898
  %v924 = vsub.f32 %v665, %v898
  %v925 = vsub.f32 %v668, %v898
  %v926 = vsub.f32 %v673, %v898
  %v927 = vsub.f32 %v676, %v898
  %v928 = vsub.f32 %v681, %v898
  %v929 = vsub.f32 %v684, %v898
  %v930 = vsub.f32 %v689, %v898
  %v931 = vsub.f32 %v692, %v898
  %v932 = vsub.f32 %v697, %v899
  %v933 = vsub.f32 %v700, %v899
  %v934 = vsub.f32 %v705, %v899
  %v935 = vsub.f32 %v708, %v899
  %v936 = vsub.f32 %v713, %v899
  %v937 = vsub.f32 %v716, %v899
  %v938 = vsub.f32 %v721, %v899
  %v939 = vsub.f32 %v724, %v899
  %v940 = vsub.f32 %v729, %v899
  %v941 = vsub.f32 %v732, %v899
  %v942 = vsub.f32 %v737, %v899
  %v943 = vsub.f32 %v740, %v899
  %v944 = vsub.f32 %v745, %v899
  %v945 = vsub.f32 %v748, %v899
  %v946 = vsub.f32 %v753, %v899
  %v947 = vsub.f32 %v756, %v899
  %v948 = vsub.f32 %v761, %v899
  %v949 = vsub.f32 %v764, %v899
  %v950 = vsub.f32 %v769, %v899
  %v951 = vsub.f32 %v772, %v899
  %v952 = vsub.f32 %v777, %v899
  %v953 = vsub.f32 %v780, %v899
  %v954 = vsub.f32 %v785, %v899
  %v955 = vsub.f32 %v788, %v899
  %v956 = vsub.f32 %v793, %v899
  %v957 = vsub.f32 %v796, %v899
  %v958 = vsub.f32 %v801, %v899
  %v959 = vsub.f32 %v804, %v899
  %v960 = vsub.f32 %v809, %v899
  %v961 = vsub.f32 %v812, %v899
  %v962 = vsub.f32 %v817, %v899
  %v963 = vsub.f32 %v820, %v899
  %v964 = vmul.f32 %v900, %v900
  %v965 = vmul.f32 %v901, %v901
  %v966 = vmul.f32 %v902, %v902
  %v967 = vmul.f32 %v903, %v903
  %v968 = vmul.f32 %v904, %v904
  %v969 = vmul.f32 %v905, %v905
  %v970 = vmul.f32 %v906, %v906
  %v971 = vmul.f32 %v907, %v907
  %v972 = vmul.f32 %v908, %v908
  %v973 = vmul.f32 %v909, %v909
  %v974 = vmul.f32 %v910, %v910
  %v975 = vmul.f32 %v911, %v911
  %v976 = vmul.f32 %v912, %v912
  %v977 = vmul.f32 %v913, %v913
  %v978 = vmul.f32 %v914, %v914
  %v979 = vmul.f32 %v915, %v915
  %v980 = vmul.f32 %v916, %v916
  %v981 = vmul.f32 %v917, %v917
  %v982 = vmul.f32 %v918, %v918
  %v983 = vmul.f32 %v919, %v919
  %v984 = vmul.f32 %v920, %v920
  %v985 = vmul.f32 %v921, %v921
  %v986 = vmul.f32 %v922, %v922
  %v987 = vmul.f32 %v923, %v923
  %v988 = vmul.f32 %v924, %v924
  %v989 = vmul.f32 %v925, %v925
  %v990 = vmul.f32 %v926, %v926
  %v991 = vmul.f32 %v927, %v927
  %v992 = vmul.f32 %v928, %v928
  %v993 = vmul.f32 %v929, %v929
  %v994 = vmul.f32 %v930, %v930
  %v995 = vmul.f32 %v931, %v931
  %v996 = vmul.f32 %v932, %v932
  %v997 = vmul.f32 %v933, %v933
  %v998 = vmul.f32 %v934, %v934
  %v999 = vmul.f32 %v935, %v935
  %v1000 = vmul.f32 %v936, %v936
  %v1001 = vmul.f32 %v937, %v937
  %v1002 = vmul.f32 %v938, %v938
  %v1003 = vmul.f32 %v939, %v939
  %v1004 = vmul.f32 %v940, %v940
  %v1005 = vmul.f32 %v941, %v941
  %v1006 = vmul.f32 %v942, %v942
  %v1007 = vmul.f32 %v943, %v943
  %v1008 = vmul.f32 %v944, %v944
  %v1009 = vmul.f32 %v945, %v945
  %v1010 = vmul.f32 %v946, %v946
  %v1011 = vmul.f32 %v947, %v947
  %v1012 = vmul.f32 %v948, %v948
  %v1013 = vmul.f32 %v949, %v949
  %v1014 = vmul.f32 %v950, %v950
  %v1015 = vmul.f32 %v951, %v951
  %v1016 = vmul.f32 %v952, %v952
  %v1017 = vmul.f32 %v953, %v953
  %v1018 = vmul.f32 %v954, %v954
  %v1019 = vmul.f32 %v955, %v955
  %v1020 = vmul.f32 %v956, %v956
  %v1021 = vmul.f32 %v957, %v957
  %v1022 = vmul.f32 %v958, %v958
  %v1023 = vmul.f32 %v959, %v959
  %v1024 = vmul.f32 %v960, %v960
  %v1025 = vmul.f32 %v961, %v961
  %v1026 = vmul.f32 %v962, %v962
  %v1027 = vmul.f32 %v963, %v963
  %v1028 = vadd.f32 %v964, %v965
  %v1029 = vadd.f32 %v1028, %v966
  %v1030 = vadd.f32 %v1029, %v967
  %v1031 = vadd.f32 %v1030, %v968
  %v1032 = vadd.f32 %v1031, %v969
  %v1033 = vadd.f32 %v1032, %v970
  %v1034 = vadd.f32 %v1033, %v971
  %v1035 = vadd.f32 %v1034, %v972
  %v1036 = vadd.f32 %v1035, %v973
  %v1037 = vadd.f32 %v1036, %v974
  %v1038 = vadd.f32 %v1037, %v975
  %v1039 = vadd.f32 %v1038, %v976
  %v1040 = vadd.f32 %v1039, %v977
  %v1041 = vadd.f32 %v1040, %v978
  %v1042 = vadd.f32 %v1041, %v979
  %v1043 = vadd.f32 %v1042, %v980
  %v1044 = vadd.f32 %v1043, %v981
  %v1045 = vadd.f32 %v1044, %v982
  %v1046 = vadd.f32 %v1045, %v983
  %v1047 = vadd.f32 %v1046, %v984
  %v1048 = vadd.f32 %v1047, %v985
  %v1049 = vadd.f32 %v1048, %v986
  %v1050 = vadd.f32 %v1049, %v987
  %v1051 = vadd.f32 %v1050, %v988
  %v1052 = vadd.f32 %v1051, %v989
  %v1053 = vadd.f32 %v1052, %v990
  %v1054 = vadd.f32 %v1053, %v991
  %v1055 = vadd.f32 %v1054, %v992
  %v1056 = vadd.f32 %v1055, %v993
  %v1057 = vadd.f32 %v1056, %v994
  %v1058 = vadd.f32 %v1057, %v995
  %v1059 = vrot.slane %v1058, 4
  %v1060 = vadd.f32 %v1058, %v1059
  %v1061 = vrot.slane %v1060, 2
  %v1062 = vadd.f32 %v1060, %v1061
  %v1063 = vrot.slane %v1062, 1
  %v1064 = vadd.f32 %v1062, %v1063
  %v1065 = vadd.f32 %v996, %v997
  %v1066 = vadd.f32 %v1065, %v998
  %v1067 = vadd.f32 %v1066, %v999
  %v1068 = vadd.f32 %v1067, %v1000
  %v1069 = vadd.f32 %v1068, %v1001
  %v1070 = vadd.f32 %v1069, %v1002
  %v1071 = vadd.f32 %v1070, %v1003
  %v1072 = vadd.f32 %v1071, %v1004
  %v1073 = vadd.f32 %v1072, %v1005
  %v1074 = vadd.f32 %v1073, %v1006
  %v1075 = vadd.f32 %v1074, %v1007
  %v1076 = vadd.f32 %v1075, %v1008
  %v1077 = vadd.f32 %v1076, %v1009
  %v1078 = vadd.f32 %v1077, %v1010
  %v1079 = vadd.f32 %v1078, %v1011
  %v1080 = vadd.f32 %v1079, %v1012
  %v1081 = vadd.f32 %v1080, %v1013
  %v1082 = vadd.f32 %v1081, %v1014
  %v1083 = vadd.f32 %v1082, %v1015
  %v1084 = vadd.f32 %v1083, %v1016
  %v1085 = vadd.f32 %v1084, %v1017
  %v1086 = vadd.f32 %v1085, %v1018
  %v1087 = vadd.f32 %v1086, %v1019
  %v1088 = vadd.f32 %v1087, %v1020
  %v1089 = vadd.f32 %v1088, %v1021
  %v1090 = vadd.f32 %v1089, %v1022
  %v1091 = vadd.f32 %v1090, %v1023
  %v1092 = vadd.f32 %v1091, %v1024
  %v1093 = vadd.f32 %v1092, %v1025
  %v1094 = vadd.f32 %v1093, %v1026
  %v1095 = vadd.f32 %v1094, %v1027
  %v1096 = vrot.slane %v1095, 4
  %v1097 = vadd.f32 %v1095, %v1096
  %v1098 = vrot.slane %v1097, 2
  %v1099 = vadd.f32 %v1097, %v1098
  %v1100 = vrot.slane %v1099, 1
  %v1101 = vadd.f32 %v1099, %v1100
  %v1102 = vmul.f32 %v1064, %v897
  %v1103 = vmul.f32 %v1101, %v897
  %v1104 = vadd.f32 %v1102, 1e-05
  %v1105 = vadd.f32 %v1103, 1e-05
  %v1106 = vrsqrt.pop %v1104
  %v1107 = vrsqrt.pop %v1105
  %v1108 = vmul.f32 %v900, %v1106
  %v1109 = vmul.f32 %v901, %v1106
  %v1110 = vmul.f32 %v902, %v1106
  %v1111 = vmul.f32 %v903, %v1106
  %v1112 = vmul.f32 %v904, %v1106
  %v1113 = vmul.f32 %v905, %v1106
  %v1114 = vmul.f32 %v906, %v1106
  %v1115 = vmul.f32 %v907, %v1106
  %v1116 = vmul.f32 %v908, %v1106
  %v1117 = vmul.f32 %v909, %v1106
  %v1118 = vmul.f32 %v910, %v1106
  %v1119 = vmul.f32 %v911, %v1106
  %v1120 = vmul.f32 %v912, %v1106
  %v1121 = vmul.f32 %v913, %v1106
  %v1122 = vmul.f32 %v914, %v1106
  %v1123 = vmul.f32 %v915, %v1106
  %v1124 = vmul.f32 %v916, %v1106
  %v1125 = vmul.f32 %v917, %v1106
  %v1126 = vmul.f32 %v918, %v1106
  %v1127 = vmul.f32 %v919, %v1106
  %v1128 = vmul.f32 %v920, %v1106
  %v1129 = vmul.f32 %v921, %v1106
  %v1130 = vmul.f32 %v922, %v1106
  %v1131 = vmul.f32 %v923, %v1106
  %v1132 = vmul.f32 %v924, %v1106
  %v1133 = vmul.f32 %v925, %v1106
  %v1134 = vmul.f32 %v926, %v1106
  %v1135 = vmul.f32 %v927, %v1106
  %v1136 = vmul.f32 %v928, %v1106
  %v1137 = vmul.f32 %v929, %v1106
  %v1138 = vmul.f32 %v930, %v1106
  %v1139 = vmul.f32 %v931, %v1106
  %v1140 = vmul.f32 %v932, %v1107
  %v1141 = vmul.f32 %v933, %v1107
  %v1142 = vmul.f32 %v934, %v1107
  %v1143 = vmul.f32 %v935, %v1107
  %v1144 = vmul.f32 %v936, %v1107
  %v1145 = vmul.f32 %v937, %v1107
  %v1146 = vmul.f32 %v938, %v1107
  %v1147 = vmul.f32 %v939, %v1107
  %v1148 = vmul.f32 %v940, %v1107
  %v1149 = vmul.f32 %v941, %v1107
  %v1150 = vmul.f32 %v942, %v1107
  %v1151 = vmul.f32 %v943, %v1107
  %v1152 = vmul.f32 %v944, %v1107
  %v1153 = vmul.f32 %v945, %v1107
  %v1154 = vmul.f32 %v946, %v1107
  %v1155 = vmul.f32 %v947, %v1107
  %v1156 = vmul.f32 %v948, %v1107
  %v1157 = vmul.f32 %v949, %v1107
  %v1158 = vmul.f32 %v950, %v1107
  %v1159 = vmul.f32 %v951, %v1107
  %v1160 = vmul.f32 %v952, %v1107
  %v1161 = vmul.f32 %v953, %v1107
  %v1162 = vmul.f32 %v954, %v1107
  %v1163 = vmul.f32 %v955, %v1107
  %v1164 = vmul.f32 %v956, %v1107
  %v1165 = vmul.f32 %v957, %v1107
  %v1166 = vmul.f32 %v958, %v1107
  %v1167 = vmul.f32 %v959, %v1107
  %v1168 = vmul.f32 %v960, %v1107
  %v1169 = vmul.f32 %v961, %v1107
  %v1170 = vmul.f32 %v962, %v1107
  %v1171 = vmul.f32 %v963, %v1107
  %vm1172 = vcmp.gt.f32.partialorder %v1108, 0.0
  %vm1173 = vcmp.gt.f32.partialorder %v1109, 0.0
  %vm1174 = vcmp.gt.f32.partialorder %v1110, 0.0
  %vm1175 = vcmp.gt.f32.partialorder %v1111, 0.0
  %vm1176 = vcmp.gt.f32.partialorder %v1112, 0.0
  %vm1177 = vcmp.gt.f32.partialorder %v1113, 0.0
  %vm1178 = vcmp.gt.f32.partialorder %v1114, 0.0
  %vm1179 = vcmp.gt.f32.partialorder %v1115, 0.0
  %vm1180 = vcmp.gt.f32.partialorder %v1116, 0.0
  %vm1181 = vcmp.gt.f32.partialorder %v1117, 0.0
  %vm1182 = vcmp.gt.f32.partialorder %v1118, 0.0
  %vm1183 = vcmp.gt.f32.partialorder %v1119, 0.0
  %vm1184 = vcmp.gt.f32.partialorder %v1120, 0.0
  %vm1185 = vcmp.gt.f32.partialorder %v1121, 0.0
  %vm1186 = vcmp.gt.f32.partialorder %v1122, 0.0
  %vm1187 = vcmp.gt.f32.partialorder %v1123, 0.0
  %vm1188 = vcmp.gt.f32.partialorder %v1124, 0.0
  %vm1189 = vcmp.gt.f32.partialorder %v1125, 0.0
  %vm1190 = vcmp.gt.f32.partialorder %v1126, 0.0
  %vm1191 = vcmp.gt.f32.partialorder %v1127, 0.0
  %vm1192 = vcmp.gt.f32.partialorder %v1128, 0.0
  %vm1193 = vcmp.gt.f32.partialorder %v1129, 0.0
  %vm1194 = vcmp.gt.f32.partialorder %v1130, 0.0
  %vm1195 = vcmp.gt.f32.partialorder %v1131, 0.0
  %vm1196 = vcmp.gt.f32.partialorder %v1132, 0.0
  %vm1197 = vcmp.gt.f32.partialorder %v1133, 0.0
  %vm1198 = vcmp.gt.f32.partialorder %v1134, 0.0
  %vm1199 = vcmp.gt.f32.partialorder %v1135, 0.0
  %vm1200 = vcmp.gt.f32.partialorder %v1136, 0.0
  %vm1201 = vcmp.gt.f32.partialorder %v1137, 0.0
  %vm1202 = vcmp.gt.f32.partialorder %v1138, 0.0
  %vm1203 = vcmp.gt.f32.partialorder %v1139, 0.0
  %vm1204 = vcmp.gt.f32.partialorder %v1140, 0.0
  %vm1205 = vcmp.gt.f32.partialorder %v1141, 0.0
  %vm1206 = vcmp.gt.f32.partialorder %v1142, 0.0
  %vm1207 = vcmp.gt.f32.partialorder %v1143, 0.0
  %vm1208 = vcmp.gt.f32.partialorder %v1144, 0.0
  %vm1209 = vcmp.gt.f32.partialorder %v1145, 0.0
  %vm1210 = vcmp.gt.f32.partialorder %v1146, 0.0
  %vm1211 = vcmp.gt.f32.partialorder %v1147, 0.0
  %vm1212 = vcmp.gt.f32.partialorder %v1148, 0.0
  %vm1213 = vcmp.gt.f32.partialorder %v1149, 0.0
  %vm1214 = vcmp.gt.f32.partialorder %v1150, 0.0
  %vm1215 = vcmp.gt.f32.partialorder %v1151, 0.0
  %vm1216 = vcmp.gt.f32.partialorder %v1152, 0.0
  %vm1217 = vcmp.gt.f32.partialorder %v1153, 0.0
  %vm1218 = vcmp.gt.f32.partialorder %v1154, 0.0
  %vm1219 = vcmp.gt.f32.partialorder %v1155, 0.0
  %vm1220 = vcmp.gt.f32.partialorder %v1156, 0.0
  %vm1221 = vcmp.gt.f32.partialorder %v1157, 0.0
  %vm1222 = vcmp.gt.f32.partialorder %v1158, 0.0
  %vm1223 = vcmp.gt.f32.partialorder %v1159, 0.0
  %vm1224 = vcmp.gt.f32.partialorder %v1160, 0.0
  %vm1225 = vcmp.gt.f32.partialorder %v1161, 0.0
  %vm1226 = vcmp.gt.f32.partialorder %v1162, 0.0
  %vm1227 = vcmp.gt.f32.partialorder %v1163, 0.0
  %vm1228 = vcmp.gt.f32.partialorder %v1164, 0.0
  %vm1229 = vcmp.gt.f32.partialorder %v1165, 0.0
  %vm1230 = vcmp.gt.f32.partialorder %v1166, 0.0
  %vm1231 = vcmp.gt.f32.partialorder %v1167, 0.0
  %vm1232 = vcmp.gt.f32.partialorder %v1168, 0.0
  %vm1233 = vcmp.gt.f32.partialorder %v1169, 0.0
  %vm1234 = vcmp.gt.f32.partialorder %v1170, 0.0
  %vm1235 = vcmp.gt.f32.partialorder %v1171, 0.0
  %v1236 = vmin.f32 %v1108, 0.0
  %v1237 = vmin.f32 %v1109, 0.0
  %v1238 = vmin.f32 %v1110, 0.0
  %v1239 = vmin.f32 %v1111, 0.0
  %v1240 = vmin.f32 %v1112, 0.0
  %v1241 = vmin.f32 %v1113, 0.0
  %v1242 = vmin.f32 %v1114, 0.0
  %v1243 = vmin.f32 %v1115, 0.0
  %v1244 = vmin.f32 %v1116, 0.0
  %v1245 = vmin.f32 %v1117, 0.0
  %v1246 = vmin.f32 %v1118, 0.0
  %v1247 = vmin.f32 %v1119, 0.0
  %v1248 = vmin.f32 %v1120, 0.0
  %v1249 = vmin.f32 %v1121, 0.0
  %v1250 = vmin.f32 %v1122, 0.0
  %v1251 = vmin.f32 %v1123, 0.0
  %v1252 = vmin.f32 %v1124, 0.0
  %v1253 = vmin.f32 %v1125, 0.0
  %v1254 = vmin.f32 %v1126, 0.0
  %v1255 = vmin.f32 %v1127, 0.0
  %v1256 = vmin.f32 %v1128, 0.0
  %v1257 = vmin.f32 %v1129, 0.0
  %v1258 = vmin.f32 %v1130, 0.0
  %v1259 = vmin.f32 %v1131, 0.0
  %v1260 = vmin.f32 %v1132, 0.0
  %v1261 = vmin.f32 %v1133, 0.0
  %v1262 = vmin.f32 %v1134, 0.0
  %v1263 = vmin.f32 %v1135, 0.0
  %v1264 = vmin.f32 %v1136, 0.0
  %v1265 = vmin.f32 %v1137, 0.0
  %v1266 = vmin.f32 %v1138, 0.0
  %v1267 = vmin.f32 %v1139, 0.0
  %v1268 = vmin.f32 %v1140, 0.0
  %v1269 = vmin.f32 %v1141, 0.0
  %v1270 = vmin.f32 %v1142, 0.0
  %v1271 = vmin.f32 %v1143, 0.0
  %v1272 = vmin.f32 %v1144, 0.0
  %v1273 = vmin.f32 %v1145, 0.0
  %v1274 = vmin.f32 %v1146, 0.0
  %v1275 = vmin.f32 %v1147, 0.0
  %v1276 = vmin.f32 %v1148, 0.0
  %v1277 = vmin.f32 %v1149, 0.0
  %v1278 = vmin.f32 %v1150, 0.0
  %v1279 = vmin.f32 %v1151, 0.0
  %v1280 = vmin.f32 %v1152, 0.0
  %v1281 = vmin.f32 %v1153, 0.0
  %v1282 = vmin.f32 %v1154, 0.0
  %v1283 = vmin.f32 %v1155, 0.0
  %v1284 = vmin.f32 %v1156, 0.0
  %v1285 = vmin.f32 %v1157, 0.0
  %v1286 = vmin.f32 %v1158, 0.0
  %v1287 = vmin.f32 %v1159, 0.0
  %v1288 = vmin.f32 %v1160, 0.0
  %v1289 = vmin.f32 %v1161, 0.0
  %v1290 = vmin.f32 %v1162, 0.0
  %v1291 = vmin.f32 %v1163, 0.0
  %v1292 = vmin.f32 %v1164, 0.0
  %v1293 = vmin.f32 %v1165, 0.0
  %v1294 = vmin.f32 %v1166, 0.0
  %v1295 = vmin.f32 %v1167, 0.0
  %v1296 = vmin.f32 %v1168, 0.0
  %v1297 = vmin.f32 %v1169, 0.0
  %v1298 = vmin.f32 %v1170, 0.0
  %v1299 = vmin.f32 %v1171, 0.0
  %v1300 = vmul.f32 %v1236, 1.442695
  %v1301 = vpow.pop %v1300
  %v1302 = vmul.f32 %v1237, 1.442695
  %v1303 = vpow.pop %v1302
  %v1304 = vmul.f32 %v1238, 1.442695
  %v1305 = vpow.pop %v1304
  %v1306 = vmul.f32 %v1239, 1.442695
  %v1307 = vpow.pop %v1306
  %v1308 = vmul.f32 %v1240, 1.442695
  %v1309 = vpow.pop %v1308
  %v1310 = vmul.f32 %v1241, 1.442695
  %v1311 = vpow.pop %v1310
  %v1312 = vmul.f32 %v1242, 1.442695
  %v1313 = vpow.pop %v1312
  %v1314 = vmul.f32 %v1243, 1.442695
  %v1315 = vpow.pop %v1314
  %v1316 = vmul.f32 %v1244, 1.442695
  %v1317 = vpow.pop %v1316
  %v1318 = vmul.f32 %v1245, 1.442695
  %v1319 = vpow.pop %v1318
  %v1320 = vmul.f32 %v1246, 1.442695
  %v1321 = vpow.pop %v1320
  %v1322 = vmul.f32 %v1247, 1.442695
  %v1323 = vpow.pop %v1322
  %v1324 = vmul.f32 %v1248, 1.442695
  %v1325 = vpow.pop %v1324
  %v1326 = vmul.f32 %v1249, 1.442695
  %v1327 = vpow.pop %v1326
  %v1328 = vmul.f32 %v1250, 1.442695
  %v1329 = vpow.pop %v1328
  %v1330 = vmul.f32 %v1251, 1.442695
  %v1331 = vpow.pop %v1330
  %v1332 = vmul.f32 %v1252, 1.442695
  %v1333 = vpow.pop %v1332
  %v1334 = vmul.f32 %v1253, 1.442695
  %v1335 = vpow.pop %v1334
  %v1336 = vmul.f32 %v1254, 1.442695
  %v1337 = vpow.pop %v1336
  %v1338 = vmul.f32 %v1255, 1.442695
  %v1339 = vpow.pop %v1338
  %v1340 = vmul.f32 %v1256, 1.442695
  %v1341 = vpow.pop %v1340
  %v1342 = vmul.f32 %v1257, 1.442695
  %v1343 = vpow.pop %v1342
  %v1344 = vmul.f32 %v1258, 1.442695
  %v1345 = vpow.pop %v1344
  %v1346 = vmul.f32 %v1259, 1.442695
  %v1347 = vpow.pop %v1346
  %v1348 = vmul.f32 %v1260, 1.442695
  %v1349 = vpow.pop %v1348
  %v1350 = vmul.f32 %v1261, 1.442695
  %v1351 = vpow.pop %v1350
  %v1352 = vmul.f32 %v1262, 1.442695
  %v1353 = vpow.pop %v1352
  %v1354 = vmul.f32 %v1263, 1.442695
  %v1355 = vpow.pop %v1354
  %v1356 = vmul.f32 %v1264, 1.442695
  %v1357 = vpow.pop %v1356
  %v1358 = vmul.f32 %v1265, 1.442695
  %v1359 = vpow.pop %v1358
  %v1360 = vmul.f32 %v1266, 1.442695
  %v1361 = vpow.pop %v1360
  %v1362 = vmul.f32 %v1267, 1.442695
  %v1363 = vpow.pop %v1362
  %v1364 = vmul.f32 %v1268, 1.442695
  %v1365 = vpow.pop %v1364
  %v1366 = vmul.f32 %v1269, 1.442695
  %v1367 = vpow.pop %v1366
  %v1368 = vmul.f32 %v1270, 1.442695
  %v1369 = vpow.pop %v1368
  %v1370 = vmul.f32 %v1271, 1.442695
  %v1371 = vpow.pop %v1370
  %v1372 = vmul.f32 %v1272, 1.442695
  %v1373 = vpow.pop %v1372
  %v1374 = vmul.f32 %v1273, 1.442695
  %v1375 = vpow.pop %v1374
  %v1376 = vmul.f32 %v1274, 1.442695
  %v1377 = vpow.pop %v1376
  %v1378 = vmul.f32 %v1275, 1.442695
  %v1379 = vpow.pop %v1378
  %v1380 = vmul.f32 %v1276, 1.442695
  %v1381 = vpow.pop %v1380
  %v1382 = vmul.f32 %v1277, 1.442695
  %v1383 = vpow.pop %v1382
  %v1384 = vmul.f32 %v1278, 1.442695
  %v1385 = vpow.pop %v1384
  %v1386 = vmul.f32 %v1279, 1.442695
  %v1387 = vpow.pop %v1386
  %v1388 = vmul.f32 %v1280, 1.442695
  %v1389 = vpow.pop %v1388
  %v1390 = vmul.f32 %v1281, 1.442695
  %v1391 = vpow.pop %v1390
  %v1392 = vmul.f32 %v1282, 1.442695
  %v1393 = vpow.pop %v1392
  %v1394 = vmul.f32 %v1283, 1.442695
  %v1395 = vpow.pop %v1394
  %v1396 = vmul.f32 %v1284, 1.442695
  %v1397 = vpow.pop %v1396
  %v1398 = vmul.f32 %v1285, 1.442695
  %v1399 = vpow.pop %v1398
  %v1400 = vmul.f32 %v1286, 1.442695
  %v1401 = vpow.pop %v1400
  %v1402 = vmul.f32 %v1287, 1.442695
  %v1403 = vpow.pop %v1402
  %v1404 = vmul.f32 %v1288, 1.442695
  %v1405 = vpow.pop %v1404
  %v1406 = vmul.f32 %v1289, 1.442695
  %v1407 = vpow.pop %v1406
  %v1408 = vmul.f32 %v1290, 1.442695
  %v1409 = vpow.pop %v1408
  %v1410 = vmul.f32 %v1291, 1.442695
  %v1411 = vpow.pop %v1410
  %v1412 = vmul.f32 %v1292, 1.442695
  %v1413 = vpow.pop %v1412
  %v1414 = vmul.f32 %v1293, 1.442695
  %v1415 = vpow.pop %v1414
  %v1416 = vmul.f32 %v1294, 1.442695
  %v1417 = vpow.pop %v1416
  %v1418 = vmul.f32 %v1295, 1.442695
  %v1419 = vpow.pop %v1418
  %v1420 = vmul.f32 %v1296, 1.442695
  %v1421 = vpow.pop %v1420
  %v1422 = vmul.f32 %v1297, 1.442695
  %v1423 = vpow.pop %v1422
  %v1424 = vmul.f32 %v1298, 1.442695
  %v1425 = vpow.pop %v1424
  %v1426 = vmul.f32 %v1299, 1.442695
  %v1427 = vpow.pop %v1426
  %v1428 = vsub.f32 %v1301, 1.0
  %v1429 = vsub.f32 %v1303, 1.0
  %v1430 = vsub.f32 %v1305, 1.0
  %v1431 = vsub.f32 %v1307, 1.0
  %v1432 = vsub.f32 %v1309, 1.0
  %v1433 = vsub.f32 %v1311, 1.0
  %v1434 = vsub.f32 %v1313, 1.0
  %v1435 = vsub.f32 %v1315, 1.0
  %v1436 = vsub.f32 %v1317, 1.0
  %v1437 = vsub.f32 %v1319, 1.0
  %v1438 = vsub.f32 %v1321, 1.0
  %v1439 = vsub.f32 %v1323, 1.0
  %v1440 = vsub.f32 %v1325, 1.0
  %v1441 = vsub.f32 %v1327, 1.0
  %v1442 = vsub.f32 %v1329, 1.0
  %v1443 = vsub.f32 %v1331, 1.0
  %v1444 = vsub.f32 %v1333, 1.0
  %v1445 = vsub.f32 %v1335, 1.0
  %v1446 = vsub.f32 %v1337, 1.0
  %v1447 = vsub.f32 %v1339, 1.0
  %v1448 = vsub.f32 %v1341, 1.0
  %v1449 = vsub.f32 %v1343, 1.0
  %v1450 = vsub.f32 %v1345, 1.0
  %v1451 = vsub.f32 %v1347, 1.0
  %v1452 = vsub.f32 %v1349, 1.0
  %v1453 = vsub.f32 %v1351, 1.0
  %v1454 = vsub.f32 %v1353, 1.0
  %v1455 = vsub.f32 %v1355, 1.0
  %v1456 = vsub.f32 %v1357, 1.0
  %v1457 = vsub.f32 %v1359, 1.0
  %v1458 = vsub.f32 %v1361, 1.0
  %v1459 = vsub.f32 %v1363, 1.0
  %v1460 = vsub.f32 %v1365, 1.0
  %v1461 = vsub.f32 %v1367, 1.0
  %v1462 = vsub.f32 %v1369, 1.0
  %v1463 = vsub.f32 %v1371, 1.0
  %v1464 = vsub.f32 %v1373, 1.0
  %v1465 = vsub.f32 %v1375, 1.0
  %v1466 = vsub.f32 %v1377, 1.0
  %v1467 = vsub.f32 %v1379, 1.0
  %v1468 = vsub.f32 %v1381, 1.0
  %v1469 = vsub.f32 %v1383, 1.0
  %v1470 = vsub.f32 %v1385, 1.0
  %v1471 = vsub.f32 %v1387, 1.0
  %v1472 = vsub.f32 %v1389, 1.0
  %v1473 = vsub.f32 %v1391, 1.0
  %v1474 = vsub.f32 %v1393, 1.0
  %v1475 = vsub.f32 %v1395, 1.0
  %v1476 = vsub.f32 %v1397, 1.0
  %v1477 = vsub.f32 %v1399, 1.0
  %v1478 = vsub.f32 %v1401, 1.0
  %v1479 = vsub.f32 %v1403, 1.0
  %v1480 = vsub.f32 %v1405, 1.0
  %v1481 = vsub.f32 %v1407, 1.0
  %v1482 = vsub.f32 %v1409, 1.0
  %v1483 = vsub.f32 %v1411, 1.0
  %v1484 = vsub.f32 %v1413, 1.0
  %v1485 = vsub.f32 %v1415, 1.0
  %v1486 = vsub.f32 %v1417, 1.0
  %v1487 = vsub.f32 %v1419, 1.0
  %v1488 = vsub.f32 %v1421, 1.0
  %v1489 = vsub.f32 %v1423, 1.0
  %v1490 = vsub.f32 %v1425, 1.0
  %v1491 = vsub.f32 %v1427, 1.0
  %v1492 = vsel %vm1172, %v1108, %v1428
  %v1493 = vsel %vm1173, %v1109, %v1429
  %v1494 = vsel %vm1174, %v1110, %v1430
  %v1495 = vsel %vm1175, %v1111, %v1431
  %v1496 = vsel %vm1176, %v1112, %v1432
  %v1497 = vsel %vm1177, %v1113, %v1433
  %v1498 = vsel %vm1178, %v1114, %v1434
  %v1499 = vsel %vm1179, %v1115, %v1435
  %v1500 = vsel %vm1180, %v1116, %v1436
  %v1501 = vsel %vm1181, %v1117, %v1437
  %v1502 = vsel %vm1182, %v1118, %v1438
  %v1503 = vsel %vm1183, %v1119, %v1439
  %v1504 = vsel %vm1184, %v1120, %v1440
  %v1505 = vsel %vm1185, %v1121, %v1441
  %v1506 = vsel %vm1186, %v1122, %v1442
  %v1507 = vsel %vm1187, %v1123, %v1443
  %v1508 = vsel %vm1188, %v1124, %v1444
  %v1509 = vsel %vm1189, %v1125, %v1445
  %v1510 = vsel %vm1190, %v1126, %v1446
  %v1511 = vsel %vm1191, %v1127, %v1447
  %v1512 = vsel %vm1192, %v1128, %v1448
  %v1513 = vsel %vm1193, %v1129, %v1449
  %v1514 = vsel %vm1194, %v1130, %v1450
  %v1515 = vsel %vm1195, %v1131, %v1451
  %v1516 = vsel %vm1196, %v1132, %v1452
  %v1517 = vsel %vm1197, %v1133, %v1453
  %v1518 = vsel %vm1198, %v1134, %v1454
  %v1519 = vsel %vm1199, %v1135, %v1455
  %v1520 = vsel %vm1200, %v1136, %v1456
  %v1521 = vsel %vm1201, %v1137, %v1457
  %v1522 = vsel %vm1202, %v1138, %v1458
  %v1523 = vsel %vm1203, %v1139, %v1459
  %v1524 = vsel %vm1204, %v1140, %v1460
  %v1525 = vsel %vm1205, %v1141, %v1461
  %v1526 = vsel %vm1206, %v1142, %v1462
  %v1527 = vsel %vm1207, %v1143, %v1463
  %v1528 = vsel %vm1208, %v1144, %v1464
  %v1529 = vsel %vm1209, %v1145, %v1465
  %v1530 = vsel %vm1210, %v1146, %v1466
  %v1531 = vsel %vm1211, %v1147, %v1467
  %v1532 = vsel %vm1212, %v1148, %v1468
  %v1533 = vsel %vm1213, %v1149, %v1469
  %v1534 = vsel %vm1214, %v1150, %v1470
  %v1535 = vsel %vm1215, %v1151, %v1471
  %v1536 = vsel %vm1216, %v1152, %v1472
  %v1537 = vsel %vm1217, %v1153, %v1473
  %v1538 = vsel %vm1218, %v1154, %v1474
  %v1539 = vsel %vm1219, %v1155, %v1475
  %v1540 = vsel %vm1220, %v1156, %v1476
  %v1541 = vsel %vm1221, %v1157, %v1477
  %v1542 = vsel %vm1222, %v1158, %v1478
  %v1543 = vsel %vm1223, %v1159, %v1479
  %v1544 = vsel %vm1224, %v1160, %v1480
  %v1545 = vsel %vm1225, %v1161, %v1481
  %v1546 = vsel %vm1226, %v1162, %v1482
  %v1547 = vsel %vm1227, %v1163, %v1483
  %v1548 = vsel %vm1228, %v1164, %v1484
  %v1549 = vsel %vm1229, %v1165, %v1485
  %v1550 = vsel %vm1230, %v1166, %v1486
  %v1551 = vsel %vm1231, %v1167, %v1487
  %v1552 = vsel %vm1232, %v1168, %v1488
  %v1553 = vsel %vm1233, %v1169, %v1489
  %v1554 = vsel %vm1234, %v1170, %v1490
  %v1555 = vsel %vm1235, %v1171, %v1491
  %1556 = vst [vmem:[%s3] sm:$0xff] %v1492
  %1557 = vst [vmem:[%s3 + $0x8] sm:$0xff] %v1493
  %1558 = vst [vmem:[%s3 + $0x10] sm:$0xff] %v1494
  %1559 = vst [vmem:[%s3 + $0x18] sm:$0xff] %v1495
  %1560 = vst [vmem:[%s3 + $0x20] sm:$0xff] %v1496
  %1561 = vst [vmem:[%s3 + $0x28] sm:$0xff] %v1497
  %1562 = vst [vmem:[%s3 + $0x30] sm:$0xff] %v1498
  %1563 = vst [vmem:[%s3 + $0x38] sm:$0xff] %v1499
  %1564 = vst [vmem:[%s3 + $0x40] sm:$0xff] %v1500
  %1565 = vst [vmem:[%s3 + $0x48] sm:$0xff] %v1501
  %1566 = vst [vmem:[%s3 + $0x50] sm:$0xff] %v1502
  %1567 = vst [vmem:[%s3 + $0x58] sm:$0xff] %v1503
  %1568 = vst [vmem:[%s3 + $0x60] sm:$0xff] %v1504
  %1569 = vst [vmem:[%s3 + $0x68] sm:$0xff] %v1505
  %1570 = vst [vmem:[%s3 + $0x70] sm:$0xff] %v1506
  %1571 = vst [vmem:[%s3 + $0x78] sm:$0xff] %v1507
  %1572 = vst [vmem:[%s3 + $0x80] sm:$0xff] %v1508
  %1573 = vst [vmem:[%s3 + $0x88] sm:$0xff] %v1509
  %1574 = vst [vmem:[%s3 + $0x90] sm:$0xff] %v1510
  %1575 = vst [vmem:[%s3 + $0x98] sm:$0xff] %v1511
  %1576 = vst [vmem:[%s3 + $0xa0] sm:$0xff] %v1512
  %1577 = vst [vmem:[%s3 + $0xa8] sm:$0xff] %v1513
  %1578 = vst [vmem:[%s3 + $0xb0] sm:$0xff] %v1514
  %1579 = vst [vmem:[%s3 + $0xb8] sm:$0xff] %v1515
  %1580 = vst [vmem:[%s3 + $0xc0] sm:$0xff] %v1516
  %1581 = vst [vmem:[%s3 + $0xc8] sm:$0xff] %v1517
  %1582 = vst [vmem:[%s3 + $0xd0] sm:$0xff] %v1518
  %1583 = vst [vmem:[%s3 + $0xd8] sm:$0xff] %v1519
  %1584 = vst [vmem:[%s3 + $0xe0] sm:$0xff] %v1520
  %1585 = vst [vmem:[%s3 + $0xe8] sm:$0xff] %v1521
  %1586 = vst [vmem:[%s3 + $0xf0] sm:$0xff] %v1522
  %1587 = vst [vmem:[%s3 + $0xf8] sm:$0xff] %v1523
  %1588 = vst [vmem:[%s3 + $0x100] sm:$0xff] %v1524
  %1589 = vst [vmem:[%s3 + $0x108] sm:$0xff] %v1525
  %1590 = vst [vmem:[%s3 + $0x110] sm:$0xff] %v1526
  %1591 = vst [vmem:[%s3 + $0x118] sm:$0xff] %v1527
  %1592 = vst [vmem:[%s3 + $0x120] sm:$0xff] %v1528
  %1593 = vst [vmem:[%s3 + $0x128] sm:$0xff] %v1529
  %1594 = vst [vmem:[%s3 + $0x130] sm:$0xff] %v1530
  %1595 = vst [vmem:[%s3 + $0x138] sm:$0xff] %v1531
  %1596 = vst [vmem:[%s3 + $0x140] sm:$0xff] %v1532
  %1597 = vst [vmem:[%s3 + $0x148] sm:$0xff] %v1533
  %1598 = vst [vmem:[%s3 + $0x150] sm:$0xff] %v1534
  %1599 = vst [vmem:[%s3 + $0x158] sm:$0xff] %v1535
  %1600 = vst [vmem:[%s3 + $0x160] sm:$0xff] %v1536
  %1601 = vst [vmem:[%s3 + $0x168] sm:$0xff] %v1537
  %1602 = vst [vmem:[%s3 + $0x170] sm:$0xff] %v1538
  %1603 = vst [vmem:[%s3 + $0x178] sm:$0xff] %v1539
  %1604 = vst [vmem:[%s3 + $0x180] sm:$0xff] %v1540
  %1605 = vst [vmem:[%s3 + $0x188] sm:$0xff] %v1541
  %1606 = vst [vmem:[%s3 + $0x190] sm:$0xff] %v1542
  %1607 = vst [vmem:[%s3 + $0x198] sm:$0xff] %v1543
  %1608 = vst [vmem:[%s3 + $0x1a0] sm:$0xff] %v1544
  %1609 = vst [vmem:[%s3 + $0x1a8] sm:$0xff] %v1545
  %1610 = vst [vmem:[%s3 + $0x1b0] sm:$0xff] %v1546
  %1611 = vst [vmem:[%s3 + $0x1b8] sm:$0xff] %v1547
  %1612 = vst [vmem:[%s3 + $0x1c0] sm:$0xff] %v1548
  %1613 = vst [vmem:[%s3 + $0x1c8] sm:$0xff] %v1549
  %1614 = vst [vmem:[%s3 + $0x1d0] sm:$0xff] %v1550
  %1615 = vst [vmem:[%s3 + $0x1d8] sm:$0xff] %v1551
  %1616 = vst [vmem:[%s3 + $0x1e0] sm:$0xff] %v1552
  %1617 = vst [vmem:[%s3 + $0x1e8] sm:$0xff] %v1553
  %1618 = vst [vmem:[%s3 + $0x1f0] sm:$0xff] %v1554
  %1619 = vst [vmem:[%s3 + $0x1f8] sm:$0xff] %v1555
  // Predicated region
  $region14: #{resnet_score_forward.5} parent=0 // pred_check
    _
  $region15: #{resnet_score_forward.5} parent=0 // pred_check_branch
    %1621 = sbr.rel (0) target = $region17
  $region16: #{resnet_score_forward.5} parent=0 // pred_region
    _
  $region17: #{resnet_score_forward.5} parent=0 // pred_fallthru
    _
  // Predicated region
  $region18: #{resnet_score_forward.5} parent=0 // pred_check
    _
  $region19: #{resnet_score_forward.5} parent=0 // pred_check_branch
    %1623 = sbr.rel (0) target = $region21
  $region20: #{resnet_score_forward.5} parent=0 // pred_region
    _
  $region21: #{resnet_score_forward.5} parent=0 // pred_fallthru
    _

// kernel: resnet_score_forward.6
$region0: #{resnet_score_forward.6}
  #allocation0 [shape = 'u32[]', space=smem, size = 0x4, offset = 0x4, fixed_abs, tag = 'smem constant byte address 0x4 - core index']
  #allocation1 [shape = 'u32[144,128]{1,0:T(1,128)}', space=vmem, size = 0x12000, scoped, tag = 'internal scratch']
  %s0 = inlined_call_operand.vmem [shape: bf16[128,256], index: 0, kind: input, shape index: {}]
  %s1 = inlined_call_operand.vmem [shape: bf16[256,128], index: 1, kind: input, shape index: {}]
  %s2 = inlined_call_operand.vmem [shape: f32[1,128], index: 2, kind: input, shape index: {}]
  %s3 = inlined_call_operand.vmem [shape: f32[128,128], index: 3, kind: output, shape index: {}]
  %s4 = sld [smem:[#allocation0]]
  $region22: #{resnet_score_forward.6} parent=0
    _
  %s6 = ssub.s32 1, %s4
  %s7 = scalar_select 0, %s6, %s4
  // Predicated region
  $region2: #{resnet_score_forward.6} parent=0 // pred_check
    _
  $region3: #{resnet_score_forward.6} parent=0 // pred_check_branch
    %9 = sbr.rel (0) target = $region5
  $region4: #{resnet_score_forward.6} parent=0 // pred_region
    _
  $region5: #{resnet_score_forward.6} parent=0 // pred_fallthru
    _
  // Predicated region
  $region6: #{resnet_score_forward.6} parent=0 // pred_check
    _
  $region7: #{resnet_score_forward.6} parent=0 // pred_check_branch
    %11 = sbr.rel (0) target = $region9
  $region8: #{resnet_score_forward.6} parent=0 // pred_region
    _
  $region9: #{resnet_score_forward.6} parent=0 // pred_fallthru
    _
  // Predicated region
  $region10: #{resnet_score_forward.6} parent=0 // pred_check
    _
  $region11: #{resnet_score_forward.6} parent=0 // pred_check_branch
    %13 = sbr.rel (0) target = $region13
  $region12: #{resnet_score_forward.6} parent=0 // pred_region
    _
  $region13: #{resnet_score_forward.6} parent=0 // pred_fallthru
    _
  %v15 = vld [vmem:[%s0] sm:$0xff]
  %v16 = vld [vmem:[%s0 + $0x8] sm:$0xff]
  %v17 = vld [vmem:[%s0 + $0x10] sm:$0xff]
  %v18 = vld [vmem:[%s0 + $0x18] sm:$0xff]
  %v19 = vld [vmem:[%s0 + $0x20] sm:$0xff]
  %v20 = vld [vmem:[%s0 + $0x28] sm:$0xff]
  %v21 = vld [vmem:[%s0 + $0x30] sm:$0xff]
  %v22 = vld [vmem:[%s0 + $0x38] sm:$0xff]
  %v23 = vld [vmem:[%s0 + $0x40] sm:$0xff]
  %v24 = vld [vmem:[%s0 + $0x48] sm:$0xff]
  %v25 = vld [vmem:[%s0 + $0x50] sm:$0xff]
  %v26 = vld [vmem:[%s0 + $0x58] sm:$0xff]
  %v27 = vld [vmem:[%s0 + $0x60] sm:$0xff]
  %v28 = vld [vmem:[%s0 + $0x68] sm:$0xff]
  %v29 = vld [vmem:[%s0 + $0x70] sm:$0xff]
  %v30 = vld [vmem:[%s0 + $0x78] sm:$0xff]
  %v31 = vld [vmem:[%s1] sm:$0xf]
  %v32 = vld [vmem:[%s1 + $0x4] sm:$0xf]
  %v33 = vld [vmem:[%s1 + $0x8] sm:$0xf]
  %v34 = vld [vmem:[%s1 + $0xc] sm:$0xf]
  %v35 = vld [vmem:[%s1 + $0x10] sm:$0xf]
  %v36 = vld [vmem:[%s1 + $0x14] sm:$0xf]
  %v37 = vld [vmem:[%s1 + $0x18] sm:$0xf]
  %v38 = vld [vmem:[%s1 + $0x1c] sm:$0xf]
  %v39 = vld [vmem:[%s1 + $0x20] sm:$0xf]
  %v40 = vld [vmem:[%s1 + $0x24] sm:$0xf]
  %v41 = vld [vmem:[%s1 + $0x28] sm:$0xf]
  %v42 = vld [vmem:[%s1 + $0x2c] sm:$0xf]
  %v43 = vld [vmem:[%s1 + $0x30] sm:$0xf]
  %v44 = vld [vmem:[%s1 + $0x34] sm:$0xf]
  %v45 = vld [vmem:[%s1 + $0x38] sm:$0xf]
  %v46 = vld [vmem:[%s1 + $0x3c] sm:$0xf]
  %v47 = vld [vmem:[%s1 + $0x40] sm:$0xf]
  %v48 = vld [vmem:[%s1 + $0x44] sm:$0xf]
  %v49 = vld [vmem:[%s1 + $0x48] sm:$0xf]
  %v50 = vld [vmem:[%s1 + $0x4c] sm:$0xf]
  %v51 = vld [vmem:[%s1 + $0x50] sm:$0xf]
  %v52 = vld [vmem:[%s1 + $0x54] sm:$0xf]
  %v53 = vld [vmem:[%s1 + $0x58] sm:$0xf]
  %v54 = vld [vmem:[%s1 + $0x5c] sm:$0xf]
  %v55 = vld [vmem:[%s1 + $0x60] sm:$0xf]
  %v56 = vld [vmem:[%s1 + $0x64] sm:$0xf]
  %v57 = vld [vmem:[%s1 + $0x68] sm:$0xf]
  %v58 = vld [vmem:[%s1 + $0x6c] sm:$0xf]
  %v59 = vld [vmem:[%s1 + $0x70] sm:$0xf]
  %v60 = vld [vmem:[%s1 + $0x74] sm:$0xf]
  %v61 = vld [vmem:[%s1 + $0x78] sm:$0xf]
  %v62 = vld [vmem:[%s1 + $0x7c] sm:$0xf]
  %v63 = vld [vmem:[%s2] sm:$0x1]
  %v65 = vlaneseq
  %v66 = vshrl.u32 %v65, 7
  %v67 = vsub.s32 0, %v66
  %v68 = vrot.slane %v63, %v67
  %v86 = vunpack.c.l.b16 %v15
  %v87 = vunpack.c.h.b16 %v15
  %v88 = vunpack.c.l.b16 %v16
  %v89 = vunpack.c.h.b16 %v16
  %v90 = vunpack.c.l.b16 %v17
  %v91 = vunpack.c.h.b16 %v17
  %v92 = vunpack.c.l.b16 %v18
  %v93 = vunpack.c.h.b16 %v18
  %v94 = vunpack.c.l.b16 %v19
  %v95 = vunpack.c.h.b16 %v19
  %v96 = vunpack.c.l.b16 %v20
  %v97 = vunpack.c.h.b16 %v20
  %v98 = vunpack.c.l.b16 %v21
  %v99 = vunpack.c.h.b16 %v21
  %v100 = vunpack.c.l.b16 %v22
  %v101 = vunpack.c.h.b16 %v22
  %v102 = vunpack.c.l.b16 %v23
  %v103 = vunpack.c.h.b16 %v23
  %v104 = vunpack.c.l.b16 %v24
  %v105 = vunpack.c.h.b16 %v24
  %v106 = vunpack.c.l.b16 %v25
  %v107 = vunpack.c.h.b16 %v25
  %v108 = vunpack.c.l.b16 %v26
  %v109 = vunpack.c.h.b16 %v26
  %v110 = vunpack.c.l.b16 %v27
  %v111 = vunpack.c.h.b16 %v27
  %v112 = vunpack.c.l.b16 %v28
  %v113 = vunpack.c.h.b16 %v28
  %v114 = vunpack.c.l.b16 %v29
  %v115 = vunpack.c.h.b16 %v29
  %v116 = vunpack.c.l.b16 %v30
  %v117 = vunpack.c.h.b16 %v30
  %v118 = vpack.c.b16 %v88, %v86
  %v119 = vpack.c.b16 %v89, %v87
  %v120 = vpack.c.b16 %v92, %v90
  %v121 = vpack.c.b16 %v93, %v91
  %v122 = vpack.c.b16 %v96, %v94
  %v123 = vpack.c.b16 %v97, %v95
  %v124 = vpack.c.b16 %v100, %v98
  %v125 = vpack.c.b16 %v101, %v99
  %v126 = vpack.c.b16 %v104, %v102
  %v127 = vpack.c.b16 %v105, %v103
  %v128 = vpack.c.b16 %v108, %v106
  %v129 = vpack.c.b16 %v109, %v107
  %v130 = vpack.c.b16 %v112, %v110
  %v131 = vpack.c.b16 %v113, %v111
  %v132 = vpack.c.b16 %v116, %v114
  %v133 = vpack.c.b16 %v117, %v115
  %v182 = vunpack.c.l.b16 %v31
  %v183 = vunpack.c.l.b16 %v32
  %v184 = vunpack.c.l.b16 %v33
  %v185 = vunpack.c.l.b16 %v34
  %v186 = vunpack.c.l.b16 %v35
  %v187 = vunpack.c.l.b16 %v36
  %v188 = vunpack.c.l.b16 %v37
  %v189 = vunpack.c.l.b16 %v38
  %v190 = vunpack.c.l.b16 %v39
  %v191 = vunpack.c.l.b16 %v40
  %v192 = vunpack.c.l.b16 %v41
  %v193 = vunpack.c.l.b16 %v42
  %v194 = vunpack.c.l.b16 %v43
  %v195 = vunpack.c.l.b16 %v44
  %v196 = vunpack.c.l.b16 %v45
  %v197 = vunpack.c.l.b16 %v46
  %v198 = vunpack.c.l.b16 %v47
  %v199 = vunpack.c.l.b16 %v48
  %v200 = vunpack.c.l.b16 %v49
  %v201 = vunpack.c.l.b16 %v50
  %v202 = vunpack.c.l.b16 %v51
  %v203 = vunpack.c.l.b16 %v52
  %v204 = vunpack.c.l.b16 %v53
  %v205 = vunpack.c.l.b16 %v54
  %v206 = vunpack.c.l.b16 %v55
  %v207 = vunpack.c.l.b16 %v56
  %v208 = vunpack.c.l.b16 %v57
  %v209 = vunpack.c.l.b16 %v58
  %v210 = vunpack.c.l.b16 %v59
  %v211 = vunpack.c.l.b16 %v60
  %v212 = vunpack.c.l.b16 %v61
  %v213 = vunpack.c.l.b16 %v62
  %v214 = vpack.c.b16 %v183, %v182
  %v215 = vpack.c.b16 %v185, %v184
  %v216 = vpack.c.b16 %v187, %v186
  %v217 = vpack.c.b16 %v189, %v188
  %v218 = vpack.c.b16 %v191, %v190
  %v219 = vpack.c.b16 %v193, %v192
  %v220 = vpack.c.b16 %v195, %v194
  %v221 = vpack.c.b16 %v197, %v196
  %v222 = vpack.c.b16 %v199, %v198
  %v223 = vpack.c.b16 %v201, %v200
  %v224 = vpack.c.b16 %v203, %v202
  %v225 = vpack.c.b16 %v205, %v204
  %v226 = vpack.c.b16 %v207, %v206
  %v227 = vpack.c.b16 %v209, %v208
  %v228 = vpack.c.b16 %v211, %v210
  %v229 = vpack.c.b16 %v213, %v212
  %246 = vmatprep.subr.bf16.mxu0 0
  %247 = vmatpush1.bf16.msra.mxu0 %v214
  %248 = vmatprep.subr.bf16.mxu0 0
  %249 = vmatpush1.bf16.msra.mxu0 %v215
  %250 = vmatprep.subr.bf16.mxu0 0
  %251 = vmatpush1.bf16.msra.mxu0 %v216
  %252 = vmatprep.subr.bf16.mxu0 0
  %253 = vmatpush1.bf16.msra.mxu0 %v217
  %254 = vmatprep.subr.bf16.mxu0 0
  %255 = vmatpush1.bf16.msra.mxu0 %v218
  %256 = vmatprep.subr.bf16.mxu0 0
  %257 = vmatpush1.bf16.msra.mxu0 %v219
  %258 = vmatprep.subr.bf16.mxu0 0
  %259 = vmatpush1.bf16.msra.mxu0 %v220
  %260 = vmatprep.subr.bf16.mxu0 0
  %261 = vmatpush1.bf16.msra.mxu0 %v221
  %262 = vmatprep.subr.bf16.mxu0 0
  %263 = vmatpush1.bf16.msra.mxu0 %v222
  %264 = vmatprep.subr.bf16.mxu0 0
  %265 = vmatpush1.bf16.msra.mxu0 %v223
  %266 = vmatprep.subr.bf16.mxu0 0
  %267 = vmatpush1.bf16.msra.mxu0 %v224
  %268 = vmatprep.subr.bf16.mxu0 0
  %269 = vmatpush1.bf16.msra.mxu0 %v225
  %270 = vmatprep.subr.bf16.mxu0 0
  %271 = vmatpush1.bf16.msra.mxu0 %v226
  %272 = vmatprep.subr.bf16.mxu0 0
  %273 = vmatpush1.bf16.msra.mxu0 %v227
  %274 = vmatprep.subr.bf16.mxu0 0
  %275 = vmatpush1.bf16.msra.mxu0 %v228
  %276 = vmatprep.subr.bf16.mxu0 0
  %277 = vmatpush1.bf16.msra.mxu0 %v229
  %278 = vmatprep.mubr.bf16.mxu0 %v119
  %279 = vmatmul.mubr.bf16.gmra.mrb[0].mxu0 %v118
  %v280 = vpop.f32.mrb[0].mxu0
  %v281 = vadd.f32 %v68, %v280
  %v282 = vpop.f32.mrb[0].mxu0
  %v283 = vpop.f32.mrb[0].mxu0
  %v284 = vadd.f32 %v68, %v283
  %v285 = vpop.f32.mrb[0].mxu0
  %286 = vmatprep.mubr.bf16.mxu0 %v121
  %287 = vmatmul.mubr.bf16.gmra.mrb[0].mxu0 %v120
  %v288 = vpop.f32.mrb[0].mxu0
  %v289 = vadd.f32 %v68, %v288
  %v290 = vpop.f32.mrb[0].mxu0
  %v291 = vpop.f32.mrb[0].mxu0
  %v292 = vadd.f32 %v68, %v291
  %v293 = vpop.f32.mrb[0].mxu0
  %294 = vmatprep.mubr.bf16.mxu0 %v123
  %295 = vmatmul.mubr.bf16.gmra.mrb[0].mxu0 %v122
  %v296 = vpop.f32.mrb[0].mxu0
  %v297 = vadd.f32 %v68, %v296
  %v298 = vpop.f32.mrb[0].mxu0
  %v299 = vpop.f32.mrb[0].mxu0
  %v300 = vadd.f32 %v68, %v299
  %v301 = vpop.f32.mrb[0].mxu0
  %302 = vmatprep.mubr.bf16.mxu0 %v125
  %303 = vmatmul.mubr.bf16.gmra.mrb[0].mxu0 %v124
  %v304 = vpop.f32.mrb[0].mxu0
  %v305 = vadd.f32 %v68, %v304
  %v306 = vpop.f32.mrb[0].mxu0
  %v307 = vpop.f32.mrb[0].mxu0
  %v308 = vadd.f32 %v68, %v307
  %v309 = vpop.f32.mrb[0].mxu0
  %310 = vmatprep.mubr.bf16.mxu0 %v127
  %311 = vmatmul.mubr.bf16.gmra.mrb[0].mxu0 %v126
  %v312 = vpop.f32.mrb[0].mxu0
  %v313 = vadd.f32 %v68, %v312
  %v314 = vpop.f32.mrb[0].mxu0
  %v315 = vpop.f32.mrb[0].mxu0
  %v316 = vadd.f32 %v68, %v315
  %v317 = vpop.f32.mrb[0].mxu0
  %318 = vmatprep.mubr.bf16.mxu0 %v129
  %319 = vmatmul.mubr.bf16.gmra.mrb[0].mxu0 %v128
  %v320 = vpop.f32.mrb[0].mxu0
  %v321 = vadd.f32 %v68, %v320
  %v322 = vpop.f32.mrb[0].mxu0
  %v323 = vpop.f32.mrb[0].mxu0
  %v324 = vadd.f32 %v68, %v323
  %v325 = vpop.f32.mrb[0].mxu0
  %326 = vmatprep.mubr.bf16.mxu0 %v131
  %327 = vmatmul.mubr.bf16.gmra.mrb[0].mxu0 %v130
  %v328 = vpop.f32.mrb[0].mxu0
  %v329 = vadd.f32 %v68, %v328
  %v330 = vpop.f32.mrb[0].mxu0
  %v331 = vpop.f32.mrb[0].mxu0
  %v332 = vadd.f32 %v68, %v331
  %v333 = vpop.f32.mrb[0].mxu0
  %334 = vmatprep.mubr.bf16.mxu0 %v133
  %335 = vmatmul.mubr.bf16.gmra.mrb[0].mxu0 %v132
  %v336 = vpop.f32.mrb[0].mxu0
  %v337 = vadd.f32 %v68, %v336
  %v338 = vpop.f32.mrb[0].mxu0
  %v339 = vpop.f32.mrb[0].mxu0
  %v340 = vadd.f32 %v68, %v339
  %v341 = vpop.f32.mrb[0].mxu0
  %342 = vdwg.mxu0
  %v343 = vadd.f32 %v281, %v284
  %v344 = vadd.f32 %v343, %v289
  %v345 = vadd.f32 %v344, %v292
  %v346 = vadd.f32 %v345, %v297
  %v347 = vadd.f32 %v346, %v300
  %v348 = vadd.f32 %v347, %v305
  %v349 = vadd.f32 %v348, %v308
  %v350 = vrot.slane %v349, 4
  %v351 = vadd.f32 %v349, %v350
  %v352 = vrot.slane %v351, 2
  %v353 = vadd.f32 %v351, %v352
  %v354 = vrot.slane %v353, 1
  %v355 = vadd.f32 %v353, %v354
  %v356 = vadd.f32 %v313, %v316
  %v357 = vadd.f32 %v356, %v321
  %v358 = vadd.f32 %v357, %v324
  %v359 = vadd.f32 %v358, %v329
  %v360 = vadd.f32 %v359, %v332
  %v361 = vadd.f32 %v360, %v337
  %v362 = vadd.f32 %v361, %v340
  %v363 = vrot.slane %v362, 4
  %v364 = vadd.f32 %v362, %v363
  %v365 = vrot.slane %v364, 2
  %v366 = vadd.f32 %v364, %v365
  %v367 = vrot.slane %v366, 1
  %v368 = vadd.f32 %v366, %v367
  %v369 = vrcp.pop 64.0
  %v370 = vmul.f32 %v355, %v369
  %v371 = vmul.f32 %v368, %v369
  %v372 = vsub.f32 %v281, %v370
  %v373 = vsub.f32 %v284, %v370
  %v374 = vsub.f32 %v289, %v370
  %v375 = vsub.f32 %v292, %v370
  %v376 = vsub.f32 %v297, %v370
  %v377 = vsub.f32 %v300, %v370
  %v378 = vsub.f32 %v305, %v370
  %v379 = vsub.f32 %v308, %v370
  %v380 = vsub.f32 %v313, %v371
  %v381 = vsub.f32 %v316, %v371
  %v382 = vsub.f32 %v321, %v371
  %v383 = vsub.f32 %v324, %v371
  %v384 = vsub.f32 %v329, %v371
  %v385 = vsub.f32 %v332, %v371
  %v386 = vsub.f32 %v337, %v371
  %v387 = vsub.f32 %v340, %v371
  %v388 = vmul.f32 %v372, %v372
  %v389 = vmul.f32 %v373, %v373
  %v390 = vmul.f32 %v374, %v374
  %v391 = vmul.f32 %v375, %v375
  %v392 = vmul.f32 %v376, %v376
  %v393 = vmul.f32 %v377, %v377
  %v394 = vmul.f32 %v378, %v378
  %v395 = vmul.f32 %v379, %v379
  %v396 = vmul.f32 %v380, %v380
  %v397 = vmul.f32 %v381, %v381
  %v398 = vmul.f32 %v382, %v382
  %v399 = vmul.f32 %v383, %v383
  %v400 = vmul.f32 %v384, %v384
  %v401 = vmul.f32 %v385, %v385
  %v402 = vmul.f32 %v386, %v386
  %v403 = vmul.f32 %v387, %v387
  %v404 = vadd.f32 %v388, %v389
  %v405 = vadd.f32 %v404, %v390
  %v406 = vadd.f32 %v405, %v391
  %v407 = vadd.f32 %v406, %v392
  %v408 = vadd.f32 %v407, %v393
  %v409 = vadd.f32 %v408, %v394
  %v410 = vadd.f32 %v409, %v395
  %v411 = vrot.slane %v410, 4
  %v412 = vadd.f32 %v410, %v411
  %v413 = vrot.slane %v412, 2
  %v414 = vadd.f32 %v412, %v413
  %v415 = vrot.slane %v414, 1
  %v416 = vadd.f32 %v414, %v415
  %v417 = vadd.f32 %v396, %v397
  %v418 = vadd.f32 %v417, %v398
  %v419 = vadd.f32 %v418, %v399
  %v420 = vadd.f32 %v419, %v400
  %v421 = vadd.f32 %v420, %v401
  %v422 = vadd.f32 %v421, %v402
  %v423 = vadd.f32 %v422, %v403
  %v424 = vrot.slane %v423, 4
  %v425 = vadd.f32 %v423, %v424
  %v426 = vrot.slane %v425, 2
  %v427 = vadd.f32 %v425, %v426
  %v428 = vrot.slane %v427, 1
  %v429 = vadd.f32 %v427, %v428
  %v430 = vmul.f32 %v416, %v369
  %v431 = vmul.f32 %v429, %v369
  %v432 = vadd.f32 %v430, 1e-05
  %v433 = vadd.f32 %v431, 1e-05
  %v434 = vrsqrt.pop %v432
  %v435 = vrsqrt.pop %v433
  %v436 = vmul.f32 %v372, %v434
  %v437 = vmul.f32 %v373, %v434
  %v438 = vmul.f32 %v374, %v434
  %v439 = vmul.f32 %v375, %v434
  %v440 = vmul.f32 %v376, %v434
  %v441 = vmul.f32 %v377, %v434
  %v442 = vmul.f32 %v378, %v434
  %v443 = vmul.f32 %v379, %v434
  %v444 = vmul.f32 %v380, %v435
  %v445 = vmul.f32 %v381, %v435
  %v446 = vmul.f32 %v382, %v435
  %v447 = vmul.f32 %v383, %v435
  %v448 = vmul.f32 %v384, %v435
  %v449 = vmul.f32 %v385, %v435
  %v450 = vmul.f32 %v386, %v435
  %v451 = vmul.f32 %v387, %v435
  %vm452 = vcmp.gt.f32.partialorder %v436, 0.0
  %vm453 = vcmp.gt.f32.partialorder %v437, 0.0
  %vm454 = vcmp.gt.f32.partialorder %v438, 0.0
  %vm455 = vcmp.gt.f32.partialorder %v439, 0.0
  %vm456 = vcmp.gt.f32.partialorder %v440, 0.0
  %vm457 = vcmp.gt.f32.partialorder %v441, 0.0
  %vm458 = vcmp.gt.f32.partialorder %v442, 0.0
  %vm459 = vcmp.gt.f32.partialorder %v443, 0.0
  %vm460 = vcmp.gt.f32.partialorder %v444, 0.0
  %vm461 = vcmp.gt.f32.partialorder %v445, 0.0
  %vm462 = vcmp.gt.f32.partialorder %v446, 0.0
  %vm463 = vcmp.gt.f32.partialorder %v447, 0.0
  %vm464 = vcmp.gt.f32.partialorder %v448, 0.0
  %vm465 = vcmp.gt.f32.partialorder %v449, 0.0
  %vm466 = vcmp.gt.f32.partialorder %v450, 0.0
  %vm467 = vcmp.gt.f32.partialorder %v451, 0.0
  %v468 = vmin.f32 %v436, 0.0
  %v469 = vmin.f32 %v437, 0.0
  %v470 = vmin.f32 %v438, 0.0
  %v471 = vmin.f32 %v439, 0.0
  %v472 = vmin.f32 %v440, 0.0
  %v473 = vmin.f32 %v441, 0.0
  %v474 = vmin.f32 %v442, 0.0
  %v475 = vmin.f32 %v443, 0.0
  %v476 = vmin.f32 %v444, 0.0
  %v477 = vmin.f32 %v445, 0.0
  %v478 = vmin.f32 %v446, 0.0
  %v479 = vmin.f32 %v447, 0.0
  %v480 = vmin.f32 %v448, 0.0
  %v481 = vmin.f32 %v449, 0.0
  %v482 = vmin.f32 %v450, 0.0
  %v483 = vmin.f32 %v451, 0.0
  %v484 = vmul.f32 %v468, 1.442695
  %v485 = vpow.pop %v484
  %v486 = vmul.f32 %v469, 1.442695
  %v487 = vpow.pop %v486
  %v488 = vmul.f32 %v470, 1.442695
  %v489 = vpow.pop %v488
  %v490 = vmul.f32 %v471, 1.442695
  %v491 = vpow.pop %v490
  %v492 = vmul.f32 %v472, 1.442695
  %v493 = vpow.pop %v492
  %v494 = vmul.f32 %v473, 1.442695
  %v495 = vpow.pop %v494
  %v496 = vmul.f32 %v474, 1.442695
  %v497 = vpow.pop %v496
  %v498 = vmul.f32 %v475, 1.442695
  %v499 = vpow.pop %v498
  %v500 = vmul.f32 %v476, 1.442695
  %v501 = vpow.pop %v500
  %v502 = vmul.f32 %v477, 1.442695
  %v503 = vpow.pop %v502
  %v504 = vmul.f32 %v478, 1.442695
  %v505 = vpow.pop %v504
  %v506 = vmul.f32 %v479, 1.442695
  %v507 = vpow.pop %v506
  %v508 = vmul.f32 %v480, 1.442695
  %v509 = vpow.pop %v508
  %v510 = vmul.f32 %v481, 1.442695
  %v511 = vpow.pop %v510
  %v512 = vmul.f32 %v482, 1.442695
  %v513 = vpow.pop %v512
  %v514 = vmul.f32 %v483, 1.442695
  %v515 = vpow.pop %v514
  %v516 = vsub.f32 %v485, 1.0
  %v517 = vsub.f32 %v487, 1.0
  %v518 = vsub.f32 %v489, 1.0
  %v519 = vsub.f32 %v491, 1.0
  %v520 = vsub.f32 %v493, 1.0
  %v521 = vsub.f32 %v495, 1.0
  %v522 = vsub.f32 %v497, 1.0
  %v523 = vsub.f32 %v499, 1.0
  %v524 = vsub.f32 %v501, 1.0
  %v525 = vsub.f32 %v503, 1.0
  %v526 = vsub.f32 %v505, 1.0
  %v527 = vsub.f32 %v507, 1.0
  %v528 = vsub.f32 %v509, 1.0
  %v529 = vsub.f32 %v511, 1.0
  %v530 = vsub.f32 %v513, 1.0
  %v531 = vsub.f32 %v515, 1.0
  %v532 = vsel %vm452, %v436, %v516
  %v533 = vsel %vm453, %v437, %v517
  %v534 = vsel %vm454, %v438, %v518
  %v535 = vsel %vm455, %v439, %v519
  %v536 = vsel %vm456, %v440, %v520
  %v537 = vsel %vm457, %v441, %v521
  %v538 = vsel %vm458, %v442, %v522
  %v539 = vsel %vm459, %v443, %v523
  %v540 = vsel %vm460, %v444, %v524
  %v541 = vsel %vm461, %v445, %v525
  %v542 = vsel %vm462, %v446, %v526
  %v543 = vsel %vm463, %v447, %v527
  %v544 = vsel %vm464, %v448, %v528
  %v545 = vsel %vm465, %v449, %v529
  %v546 = vsel %vm466, %v450, %v530
  %v547 = vsel %vm467, %v451, %v531
  %548 = vst [vmem:[%s3] sm:$0xff] %v532
  %549 = vst [vmem:[%s3 + $0x8] sm:$0xff] %v533
  %550 = vst [vmem:[%s3 + $0x10] sm:$0xff] %v534
  %551 = vst [vmem:[%s3 + $0x18] sm:$0xff] %v535
  %552 = vst [vmem:[%s3 + $0x20] sm:$0xff] %v536
  %553 = vst [vmem:[%s3 + $0x28] sm:$0xff] %v537
  %554 = vst [vmem:[%s3 + $0x30] sm:$0xff] %v538
  %555 = vst [vmem:[%s3 + $0x38] sm:$0xff] %v539
  %556 = vst [vmem:[%s3 + $0x40] sm:$0xff] %v540
  %557 = vst [vmem:[%s3 + $0x48] sm:$0xff] %v541
  %558 = vst [vmem:[%s3 + $0x50] sm:$0xff] %v542
  %559 = vst [vmem:[%s3 + $0x58] sm:$0xff] %v543
  %560 = vst [vmem:[%s3 + $0x60] sm:$0xff] %v544
  %561 = vst [vmem:[%s3 + $0x68] sm:$0xff] %v545
  %562 = vst [vmem:[%s3 + $0x70] sm:$0xff] %v546
  %563 = vst [vmem:[%s3 + $0x78] sm:$0xff] %v547
  // Predicated region
  $region14: #{resnet_score_forward.6} parent=0 // pred_check
    _
  $region15: #{resnet_score_forward.6} parent=0 // pred_check_branch
    %565 = sbr.rel (0) target = $region17
  $region16: #{resnet_score_forward.6} parent=0 // pred_region
    _
  $region17: #{resnet_score_forward.6} parent=0 // pred_fallthru
    _
  // Predicated region
  $region18: #{resnet_score_forward.6} parent=0 // pred_check
    _
  $region19: #{resnet_score_forward.6} parent=0 // pred_check_branch
    %567 = sbr.rel (0) target = $region21
  $region20: #{resnet_score_forward.6} parent=0 // pred_region
    _
  $region21: #{resnet_score_forward.6} parent=0 // pred_fallthru
    _

// kernel: resnet_score_forward.8
$region0: #{resnet_score_forward.8}
  #allocation0 [shape = 'u32[]', space=smem, size = 0x4, offset = 0x4, fixed_abs, tag = 'smem constant byte address 0x4 - core index']
  #allocation1 [shape = 'u32[144,128]{1,0:T(1,128)}', space=vmem, size = 0x12000, scoped, tag = 'internal scratch']
  %s0 = inlined_call_operand.vmem [shape: bf16[128,128], index: 0, kind: input, shape index: {}]
  %s1 = inlined_call_operand.vmem [shape: bf16[128,128], index: 1, kind: input, shape index: {}]
  %s2 = inlined_call_operand.vmem [shape: f32[1,128], index: 2, kind: input, shape index: {}]
  %s3 = inlined_call_operand.vmem [shape: f32[128,128], index: 3, kind: input, shape index: {}]
  %s4 = inlined_call_operand.vmem [shape: f32[128,128], index: 4, kind: output, shape index: {}]
  %s5 = sld [smem:[#allocation0]]
  $region26: #{resnet_score_forward.8} parent=0
    _
  %s7 = ssub.s32 1, %s5
  %s8 = scalar_select 0, %s7, %s5
  // Predicated region
  $region2: #{resnet_score_forward.8} parent=0 // pred_check
    _
  $region3: #{resnet_score_forward.8} parent=0 // pred_check_branch
    %10 = sbr.rel (0) target = $region5
  $region4: #{resnet_score_forward.8} parent=0 // pred_region
    _
  $region5: #{resnet_score_forward.8} parent=0 // pred_fallthru
    _
  // Predicated region
  $region6: #{resnet_score_forward.8} parent=0 // pred_check
    _
  $region7: #{resnet_score_forward.8} parent=0 // pred_check_branch
    %12 = sbr.rel (0) target = $region9
  $region8: #{resnet_score_forward.8} parent=0 // pred_region
    _
  $region9: #{resnet_score_forward.8} parent=0 // pred_fallthru
    _
  // Predicated region
  $region10: #{resnet_score_forward.8} parent=0 // pred_check
    _
  $region11: #{resnet_score_forward.8} parent=0 // pred_check_branch
    %14 = sbr.rel (0) target = $region13
  $region12: #{resnet_score_forward.8} parent=0 // pred_region
    _
  $region13: #{resnet_score_forward.8} parent=0 // pred_fallthru
    _
  // Predicated region
  $region14: #{resnet_score_forward.8} parent=0 // pred_check
    _
  $region15: #{resnet_score_forward.8} parent=0 // pred_check_branch
    %16 = sbr.rel (0) target = $region17
  $region16: #{resnet_score_forward.8} parent=0 // pred_region
    _
  $region17: #{resnet_score_forward.8} parent=0 // pred_fallthru
    _
  %v18 = vld [vmem:[%s0] sm:$0xf]
  %v19 = vld [vmem:[%s0 + $0x4] sm:$0xf]
  %v20 = vld [vmem:[%s0 + $0x8] sm:$0xf]
  %v21 = vld [vmem:[%s0 + $0xc] sm:$0xf]
  %v22 = vld [vmem:[%s0 + $0x10] sm:$0xf]
  %v23 = vld [vmem:[%s0 + $0x14] sm:$0xf]
  %v24 = vld [vmem:[%s0 + $0x18] sm:$0xf]
  %v25 = vld [vmem:[%s0 + $0x1c] sm:$0xf]
  %v26 = vld [vmem:[%s0 + $0x20] sm:$0xf]
  %v27 = vld [vmem:[%s0 + $0x24] sm:$0xf]
  %v28 = vld [vmem:[%s0 + $0x28] sm:$0xf]
  %v29 = vld [vmem:[%s0 + $0x2c] sm:$0xf]
  %v30 = vld [vmem:[%s0 + $0x30] sm:$0xf]
  %v31 = vld [vmem:[%s0 + $0x34] sm:$0xf]
  %v32 = vld [vmem:[%s0 + $0x38] sm:$0xf]
  %v33 = vld [vmem:[%s0 + $0x3c] sm:$0xf]
  %v34 = vld [vmem:[%s1] sm:$0xf]
  %v35 = vld [vmem:[%s1 + $0x4] sm:$0xf]
  %v36 = vld [vmem:[%s1 + $0x8] sm:$0xf]
  %v37 = vld [vmem:[%s1 + $0xc] sm:$0xf]
  %v38 = vld [vmem:[%s1 + $0x10] sm:$0xf]
  %v39 = vld [vmem:[%s1 + $0x14] sm:$0xf]
  %v40 = vld [vmem:[%s1 + $0x18] sm:$0xf]
  %v41 = vld [vmem:[%s1 + $0x1c] sm:$0xf]
  %v42 = vld [vmem:[%s1 + $0x20] sm:$0xf]
  %v43 = vld [vmem:[%s1 + $0x24] sm:$0xf]
  %v44 = vld [vmem:[%s1 + $0x28] sm:$0xf]
  %v45 = vld [vmem:[%s1 + $0x2c] sm:$0xf]
  %v46 = vld [vmem:[%s1 + $0x30] sm:$0xf]
  %v47 = vld [vmem:[%s1 + $0x34] sm:$0xf]
  %v48 = vld [vmem:[%s1 + $0x38] sm:$0xf]
  %v49 = vld [vmem:[%s1 + $0x3c] sm:$0xf]
  %v50 = vld [vmem:[%s2] sm:$0x1]
  %v52 = vlaneseq
  %v53 = vshrl.u32 %v52, 7
  %v54 = vsub.s32 0, %v53
  %v55 = vrot.slane %v50, %v54
  %v73 = vunpack.c.l.b16 %v18
  %v74 = vunpack.c.l.b16 %v19
  %v75 = vunpack.c.l.b16 %v20
  %v76 = vunpack.c.l.b16 %v21
  %v77 = vunpack.c.l.b16 %v22
  %v78 = vunpack.c.l.b16 %v23
  %v79 = vunpack.c.l.b16 %v24
  %v80 = vunpack.c.l.b16 %v25
  %v81 = vunpack.c.l.b16 %v26
  %v82 = vunpack.c.l.b16 %v27
  %v83 = vunpack.c.l.b16 %v28
  %v84 = vunpack.c.l.b16 %v29
  %v85 = vunpack.c.l.b16 %v30
  %v86 = vunpack.c.l.b16 %v31
  %v87 = vunpack.c.l.b16 %v32
  %v88 = vunpack.c.l.b16 %v33
  %v89 = vpack.c.b16 %v74, %v73
  %v90 = vpack.c.b16 %v76, %v75
  %v91 = vpack.c.b16 %v78, %v77
  %v92 = vpack.c.b16 %v80, %v79
  %v93 = vpack.c.b16 %v82, %v81
  %v94 = vpack.c.b16 %v84, %v83
  %v95 = vpack.c.b16 %v86, %v85
  %v96 = vpack.c.b16 %v88, %v87
  %v121 = vunpack.c.l.b16 %v34
  %v122 = vunpack.c.l.b16 %v35
  %v123 = vunpack.c.l.b16 %v36
  %v124 = vunpack.c.l.b16 %v37
  %v125 = vunpack.c.l.b16 %v38
  %v126 = vunpack.c.l.b16 %v39
  %v127 = vunpack.c.l.b16 %v40
  %v128 = vunpack.c.l.b16 %v41
  %v129 = vunpack.c.l.b16 %v42
  %v130 = vunpack.c.l.b16 %v43
  %v131 = vunpack.c.l.b16 %v44
  %v132 = vunpack.c.l.b16 %v45
  %v133 = vunpack.c.l.b16 %v46
  %v134 = vunpack.c.l.b16 %v47
  %v135 = vunpack.c.l.b16 %v48
  %v136 = vunpack.c.l.b16 %v49
  %v137 = vpack.c.b16 %v122, %v121
  %v138 = vpack.c.b16 %v124, %v123
  %v139 = vpack.c.b16 %v126, %v125
  %v140 = vpack.c.b16 %v128, %v127
  %v141 = vpack.c.b16 %v130, %v129
  %v142 = vpack.c.b16 %v132, %v131
  %v143 = vpack.c.b16 %v134, %v133
  %v144 = vpack.c.b16 %v136, %v135
  %153 = vmatprep.subr.bf16.mxu0 0
  %154 = vmatpush1.bf16.msra.mxu0 %v137
  %155 = vmatprep.subr.bf16.mxu0 0
  %156 = vmatpush1.bf16.msra.mxu0 %v138
  %157 = vmatprep.subr.bf16.mxu0 0
  %158 = vmatpush1.bf16.msra.mxu0 %v139
  %159 = vmatprep.subr.bf16.mxu0 0
  %160 = vmatpush1.bf16.msra.mxu0 %v140
  %161 = vmatprep.subr.bf16.mxu0 0
  %162 = vmatpush1.bf16.msra.mxu0 %v141
  %163 = vmatprep.subr.bf16.mxu0 0
  %164 = vmatpush1.bf16.msra.mxu0 %v142
  %165 = vmatprep.subr.bf16.mxu0 0
  %166 = vmatpush1.bf16.msra.mxu0 %v143
  %167 = vmatprep.subr.bf16.mxu0 0
  %168 = vmatpush1.bf16.msra.mxu0 %v144
  %169 = vmatprep.subr.bf16.mxu0 0
  %170 = vmatpush1.bf16.msra.mxu0 0
  %171 = vmatprep.subr.bf16.mxu0 0
  %172 = vmatpush1.bf16.msra.mxu0 0
  %173 = vmatprep.subr.bf16.mxu0 0
  %174 = vmatpush1.bf16.msra.mxu0 0
  %175 = vmatprep.subr.bf16.mxu0 0
  %176 = vmatpush1.bf16.msra.mxu0 0
  %177 = vmatprep.subr.bf16.mxu0 0
  %178 = vmatpush1.bf16.msra.mxu0 0
  %179 = vmatprep.subr.bf16.mxu0 0
  %180 = vmatpush1.bf16.msra.mxu0 0
  %181 = vmatprep.subr.bf16.mxu0 0
  %182 = vmatpush1.bf16.msra.mxu0 0
  %183 = vmatprep.subr.bf16.mxu0 0
  %184 = vmatpush1.bf16.msra.mxu0 0
  %185 = vmatprep.mubr.bf16.mxu0 0
  %186 = vmatmul.mubr.bf16.gmra.mrb[0].mxu0 %v89
  %v187 = vpop.f32.mrb[0].mxu0
  %v188 = vadd.f32 %v55, %v187
  %v189 = vpop.f32.mrb[0].mxu0
  %v190 = vpop.f32.mrb[0].mxu0
  %v191 = vadd.f32 %v55, %v190
  %v192 = vpop.f32.mrb[0].mxu0
  %193 = vmatprep.mubr.bf16.mxu0 0
  %194 = vmatmul.mubr.bf16.gmra.mrb[0].mxu0 %v90
  %v195 = vpop.f32.mrb[0].mxu0
  %v196 = vadd.f32 %v55, %v195
  %v197 = vpop.f32.mrb[0].mxu0
  %v198 = vpop.f32.mrb[0].mxu0
  %v199 = vadd.f32 %v55, %v198
  %v200 = vpop.f32.mrb[0].mxu0
  %201 = vmatprep.mubr.bf16.mxu0 0
  %202 = vmatmul.mubr.bf16.gmra.mrb[0].mxu0 %v91
  %v203 = vpop.f32.mrb[0].mxu0
  %v204 = vadd.f32 %v55, %v203
  %v205 = vpop.f32.mrb[0].mxu0
  %v206 = vpop.f32.mrb[0].mxu0
  %v207 = vadd.f32 %v55, %v206
  %v208 = vpop.f32.mrb[0].mxu0
  %209 = vmatprep.mubr.bf16.mxu0 0
  %210 = vmatmul.mubr.bf16.gmra.mrb[0].mxu0 %v92
  %v211 = vpop.f32.mrb[0].mxu0
  %v212 = vadd.f32 %v55, %v211
  %v213 = vpop.f32.mrb[0].mxu0
  %v214 = vpop.f32.mrb[0].mxu0
  %v215 = vadd.f32 %v55, %v214
  %v216 = vpop.f32.mrb[0].mxu0
  %217 = vmatprep.mubr.bf16.mxu0 0
  %218 = vmatmul.mubr.bf16.gmra.mrb[0].mxu0 %v93
  %v219 = vpop.f32.mrb[0].mxu0
  %v220 = vadd.f32 %v55, %v219
  %v221 = vpop.f32.mrb[0].mxu0
  %v222 = vpop.f32.mrb[0].mxu0
  %v223 = vadd.f32 %v55, %v222
  %v224 = vpop.f32.mrb[0].mxu0
  %225 = vmatprep.mubr.bf16.mxu0 0
  %226 = vmatmul.mubr.bf16.gmra.mrb[0].mxu0 %v94
  %v227 = vpop.f32.mrb[0].mxu0
  %v228 = vadd.f32 %v55, %v227
  %v229 = vpop.f32.mrb[0].mxu0
  %v230 = vpop.f32.mrb[0].mxu0
  %v231 = vadd.f32 %v55, %v230
  %v232 = vpop.f32.mrb[0].mxu0
  %233 = vmatprep.mubr.bf16.mxu0 0
  %234 = vmatmul.mubr.bf16.gmra.mrb[0].mxu0 %v95
  %v235 = vpop.f32.mrb[0].mxu0
  %v236 = vadd.f32 %v55, %v235
  %v237 = vpop.f32.mrb[0].mxu0
  %v238 = vpop.f32.mrb[0].mxu0
  %v239 = vadd.f32 %v55, %v238
  %v240 = vpop.f32.mrb[0].mxu0
  %241 = vmatprep.mubr.bf16.mxu0 0
  %242 = vmatmul.mubr.bf16.gmra.mrb[0].mxu0 %v96
  %v243 = vpop.f32.mrb[0].mxu0
  %v244 = vadd.f32 %v55, %v243
  %v245 = vpop.f32.mrb[0].mxu0
  %v246 = vpop.f32.mrb[0].mxu0
  %v247 = vadd.f32 %v55, %v246
  %v248 = vpop.f32.mrb[0].mxu0
  %249 = vdwg.mxu0
  %v250 = vadd.f32 %v188, %v191
  %v251 = vadd.f32 %v250, %v196
  %v252 = vadd.f32 %v251, %v199
  %v253 = vadd.f32 %v252, %v204
  %v254 = vadd.f32 %v253, %v207
  %v255 = vadd.f32 %v254, %v212
  %v256 = vadd.f32 %v255, %v215
  %v257 = vrot.slane %v256, 4
  %v258 = vadd.f32 %v256, %v257
  %v259 = vrot.slane %v258, 2
  %v260 = vadd.f32 %v258, %v259
  %v261 = vrot.slane %v260, 1
  %v262 = vadd.f32 %v260, %v261
  %v263 = vadd.f32 %v220, %v223
  %v264 = vadd.f32 %v263, %v228
  %v265 = vadd.f32 %v264, %v231
  %v266 = vadd.f32 %v265, %v236
  %v267 = vadd.f32 %v266, %v239
  %v268 = vadd.f32 %v267, %v244
  %v269 = vadd.f32 %v268, %v247
  %v270 = vrot.slane %v269, 4
  %v271 = vadd.f32 %v269, %v270
  %v272 = vrot.slane %v271, 2
  %v273 = vadd.f32 %v271, %v272
  %v274 = vrot.slane %v273, 1
  %v275 = vadd.f32 %v273, %v274
  %v276 = vmul.f32 %v188, %v188
  %v277 = vmul.f32 %v191, %v191
  %v278 = vmul.f32 %v196, %v196
  %v279 = vmul.f32 %v199, %v199
  %v280 = vmul.f32 %v204, %v204
  %v281 = vmul.f32 %v207, %v207
  %v282 = vmul.f32 %v212, %v212
  %v283 = vmul.f32 %v215, %v215
  %v284 = vmul.f32 %v220, %v220
  %v285 = vmul.f32 %v223, %v223
  %v286 = vmul.f32 %v228, %v228
  %v287 = vmul.f32 %v231, %v231
  %v288 = vmul.f32 %v236, %v236
  %v289 = vmul.f32 %v239, %v239
  %v290 = vmul.f32 %v244, %v244
  %v291 = vmul.f32 %v247, %v247
  %v292 = vadd.f32 %v276, %v277
  %v293 = vadd.f32 %v292, %v278
  %v294 = vadd.f32 %v293, %v279
  %v295 = vadd.f32 %v294, %v280
  %v296 = vadd.f32 %v295, %v281
  %v297 = vadd.f32 %v296, %v282
  %v298 = vadd.f32 %v297, %v283
  %v299 = vrot.slane %v298, 4
  %v300 = vadd.f32 %v298, %v299
  %v301 = vrot.slane %v300, 2
  %v302 = vadd.f32 %v300, %v301
  %v303 = vrot.slane %v302, 1
  %v304 = vadd.f32 %v302, %v303
  %v305 = vadd.f32 %v284, %v285
  %v306 = vadd.f32 %v305, %v286
  %v307 = vadd.f32 %v306, %v287
  %v308 = vadd.f32 %v307, %v288
  %v309 = vadd.f32 %v308, %v289
  %v310 = vadd.f32 %v309, %v290
  %v311 = vadd.f32 %v310, %v291
  %v312 = vrot.slane %v311, 4
  %v313 = vadd.f32 %v311, %v312
  %v314 = vrot.slane %v313, 2
  %v315 = vadd.f32 %v313, %v314
  %v316 = vrot.slane %v315, 1
  %v317 = vadd.f32 %v315, %v316
  %v318 = vld [vmem:[%s3] sm:$0xff]
  %v319 = vld [vmem:[%s3 + $0x8] sm:$0xff]
  %v320 = vld [vmem:[%s3 + $0x10] sm:$0xff]
  %v321 = vld [vmem:[%s3 + $0x18] sm:$0xff]
  %v322 = vld [vmem:[%s3 + $0x20] sm:$0xff]
  %v323 = vld [vmem:[%s3 + $0x28] sm:$0xff]
  %v324 = vld [vmem:[%s3 + $0x30] sm:$0xff]
  %v325 = vld [vmem:[%s3 + $0x38] sm:$0xff]
  %v326 = vld [vmem:[%s3 + $0x40] sm:$0xff]
  %v327 = vld [vmem:[%s3 + $0x48] sm:$0xff]
  %v328 = vld [vmem:[%s3 + $0x50] sm:$0xff]
  %v329 = vld [vmem:[%s3 + $0x58] sm:$0xff]
  %v330 = vld [vmem:[%s3 + $0x60] sm:$0xff]
  %v331 = vld [vmem:[%s3 + $0x68] sm:$0xff]
  %v332 = vld [vmem:[%s3 + $0x70] sm:$0xff]
  %v333 = vld [vmem:[%s3 + $0x78] sm:$0xff]
  %vm336 = vcmask 1041409
  %v337 = vsel %vm336, %v275, %v262
  %339 = vmatprep.subr.mxu0 0.0
  %340 = vmatpush1.msra.mxu0 %v318
  %341 = vmatprep.subr.mxu0 0.0
  %342 = vmatpush1.msra.mxu0 %v319
  %343 = vmatprep.subr.mxu0 0.0
  %344 = vmatpush1.msra.mxu0 %v320
  %345 = vmatprep.subr.mxu0 0.0
  %346 = vmatpush1.msra.mxu0 %v321
  %347 = vmatprep.subr.mxu0 0.0
  %348 = vmatpush1.msra.mxu0 %v322
  %349 = vmatprep.subr.mxu0 0.0
  %350 = vmatpush1.msra.mxu0 %v323
  %351 = vmatprep.subr.mxu0 0.0
  %352 = vmatpush1.msra.mxu0 %v324
  %353 = vmatprep.subr.mxu0 0.0
  %354 = vmatpush1.msra.mxu0 %v325
  %355 = vmatprep.subr.mxu0 0.0
  %356 = vmatpush1.msra.mxu0 %v326
  %357 = vmatprep.subr.mxu0 0.0
  %358 = vmatpush1.msra.mxu0 %v327
  %359 = vmatprep.subr.mxu0 0.0
  %360 = vmatpush1.msra.mxu0 %v328
  %361 = vmatprep.subr.mxu0 0.0
  %362 = vmatpush1.msra.mxu0 %v329
  %363 = vmatprep.subr.mxu0 0.0
  %364 = vmatpush1.msra.mxu0 %v330
  %365 = vmatprep.subr.mxu0 0.0
  %366 = vmatpush1.msra.mxu0 %v331
  %367 = vmatprep.subr.mxu0 0.0
  %368 = vmatpush1.msra.mxu0 %v332
  %369 = vmatprep.subr.mxu0 0.0
  %370 = vmatpush1.msra.mxu0 %v333
  %371 = vmatprep.subr.mxu0 0.0
  %372 = vmatpush1.msra.mxu0 0.0
  %373 = vmatprep.subr.mxu0 0.0
  %374 = vmatpush1.msra.mxu0 0.0
  %375 = vmatprep.subr.mxu0 0.0
  %376 = vmatpush1.msra.mxu0 0.0
  %377 = vmatprep.subr.mxu0 0.0
  %378 = vmatpush1.msra.mxu0 0.0
  %379 = vmatprep.subr.mxu0 0.0
  %380 = vmatpush1.msra.mxu0 0.0
  %381 = vmatprep.subr.mxu0 0.0
  %382 = vmatpush1.msra.mxu0 0.0
  %383 = vmatprep.subr.mxu0 0.0
  %384 = vmatpush1.msra.mxu0 0.0
  %385 = vmatprep.subr.mxu0 0.0
  %386 = vmatpush1.msra.mxu0 0.0
  %387 = vmatprep.subr.mxu0 0.0
  %388 = vmatpush1.msra.mxu0 0.0
  %389 = vmatprep.subr.mxu0 0.0
  %390 = vmatpush1.msra.mxu0 0.0
  %391 = vmatprep.subr.mxu0 0.0
  %392 = vmatpush1.msra.mxu0 0.0
  %393 = vmatprep.subr.mxu0 0.0
  %394 = vmatpush1.msra.mxu0 0.0
  %395 = vmatprep.subr.mxu0 0.0
  %396 = vmatpush1.msra.mxu0 0.0
  %397 = vmatprep.subr.mxu0 0.0
  %398 = vmatpush1.msra.mxu0 0.0
  %399 = vmatprep.subr.mxu0 0.0
  %400 = vmatpush1.msra.mxu0 0.0
  %401 = vmatprep.subr.mxu0 0.0
  %402 = vmatpush1.msra.mxu0 0.0
  %403 = vmatprep.mubr.f32.mxu0 0.0
  %404 = vmatmul.mubr.f32.gmra.mrb[0].mxu0 %v337
  %v405 = vpop.f32.mrb[0].mxu0
  %v406 = vadd.f32 0.0, %v405
  %v407 = vpop.f32.mrb[0].mxu0
  %408 = vdwg.mxu0
  %v409 = vmul.f32 %v406, 0.00390625
  %v412 = vsel %vm336, %v317, %v304
  %414 = vmatprep.subr.mxu0 0.0
  %415 = vmatpush1.msra.mxu0 %v318
  %416 = vmatprep.subr.mxu0 0.0
  %417 = vmatpush1.msra.mxu0 %v319
  %418 = vmatprep.subr.mxu0 0.0
  %419 = vmatpush1.msra.mxu0 %v320
  %420 = vmatprep.subr.mxu0 0.0
  %421 = vmatpush1.msra.mxu0 %v321
  %422 = vmatprep.subr.mxu0 0.0
  %423 = vmatpush1.msra.mxu0 %v322
  %424 = vmatprep.subr.mxu0 0.0
  %425 = vmatpush1.msra.mxu0 %v323
  %426 = vmatprep.subr.mxu0 0.0
  %427 = vmatpush1.msra.mxu0 %v324
  %428 = vmatprep.subr.mxu0 0.0
  %429 = vmatpush1.msra.mxu0 %v325
  %430 = vmatprep.subr.mxu0 0.0
  %431 = vmatpush1.msra.mxu0 %v326
  %432 = vmatprep.subr.mxu0 0.0
  %433 = vmatpush1.msra.mxu0 %v327
  %434 = vmatprep.subr.mxu0 0.0
  %435 = vmatpush1.msra.mxu0 %v328
  %436 = vmatprep.subr.mxu0 0.0
  %437 = vmatpush1.msra.mxu0 %v329
  %438 = vmatprep.subr.mxu0 0.0
  %439 = vmatpush1.msra.mxu0 %v330
  %440 = vmatprep.subr.mxu0 0.0
  %441 = vmatpush1.msra.mxu0 %v331
  %442 = vmatprep.subr.mxu0 0.0
  %443 = vmatpush1.msra.mxu0 %v332
  %444 = vmatprep.subr.mxu0 0.0
  %445 = vmatpush1.msra.mxu0 %v333
  %446 = vmatprep.subr.mxu0 0.0
  %447 = vmatpush1.msra.mxu0 0.0
  %448 = vmatprep.subr.mxu0 0.0
  %449 = vmatpush1.msra.mxu0 0.0
  %450 = vmatprep.subr.mxu0 0.0
  %451 = vmatpush1.msra.mxu0 0.0
  %452 = vmatprep.subr.mxu0 0.0
  %453 = vmatpush1.msra.mxu0 0.0
  %454 = vmatprep.subr.mxu0 0.0
  %455 = vmatpush1.msra.mxu0 0.0
  %456 = vmatprep.subr.mxu0 0.0
  %457 = vmatpush1.msra.mxu0 0.0
  %458 = vmatprep.subr.mxu0 0.0
  %459 = vmatpush1.msra.mxu0 0.0
  %460 = vmatprep.subr.mxu0 0.0
  %461 = vmatpush1.msra.mxu0 0.0
  %462 = vmatprep.subr.mxu0 0.0
  %463 = vmatpush1.msra.mxu0 0.0
  %464 = vmatprep.subr.mxu0 0.0
  %465 = vmatpush1.msra.mxu0 0.0
  %466 = vmatprep.subr.mxu0 0.0
  %467 = vmatpush1.msra.mxu0 0.0
  %468 = vmatprep.subr.mxu0 0.0
  %469 = vmatpush1.msra.mxu0 0.0
  %470 = vmatprep.subr.mxu0 0.0
  %471 = vmatpush1.msra.mxu0 0.0
  %472 = vmatprep.subr.mxu0 0.0
  %473 = vmatpush1.msra.mxu0 0.0
  %474 = vmatprep.subr.mxu0 0.0
  %475 = vmatpush1.msra.mxu0 0.0
  %476 = vmatprep.subr.mxu0 0.0
  %477 = vmatpush1.msra.mxu0 0.0
  %478 = vmatprep.mubr.f32.mxu0 0.0
  %479 = vmatmul.mubr.f32.gmra.mrb[0].mxu0 %v412
  %v480 = vpop.f32.mrb[0].mxu0
  %v481 = vadd.f32 0.0, %v480
  %v482 = vpop.f32.mrb[0].mxu0
  %483 = vdwg.mxu0
  %v484 = vmul.f32 %v481, 0.00390625
  %v485 = vmul.f32 %v409, %v409
  %v486 = vsub.f32 %v484, %v485
  %v487 = vmax.f32 %v486, 0.0
  %v490 = vunpack.c.l.s4 1966171168
  %v491 = vunpack.c.0.s8 %v490
  %v492 = vlaneseq
  %v493 = vshrl.u32 %v492, 7
  %v494 = vsub.s32 %v491, %v493
  %v495 = vrot.slane %v409, %v494
  %v496 = vcombine.high %v495, %v495
  %v498 = vunpack.c.l.s4 1966171168
  %v499 = vunpack.c.0.s8 %v498
  %v500 = vlaneseq
  %v501 = vshrl.u32 %v500, 7
  %v502 = vsub.s32 %v499, %v501
  %v503 = vrot.slane %v495, %v502
  %v505 = vunpack.c.l.s4 1966171168
  %v506 = vunpack.c.0.s8 %v505
  %v507 = vlaneseq
  %v508 = vshrl.u32 %v507, 7
  %v509 = vsub.s32 %v506, %v508
  %v510 = vrot.slane %v496, %v509
  %v511 = vlaneseq
  %v512 = vshrl.u32 %v511, 7
  %v513 = vsub.s32 0, %v512
  %v514 = vrot.slane %v503, %v513
  %v515 = vlaneseq
  %v516 = vshrl.u32 %v515, 7
  %v517 = vsub.s32 0, %v516
  %v518 = vrot.slane %v510, %v517
  %v521 = vsub.f32 %v188, %v514
  %v522 = vsub.f32 %v191, %v514
  %v523 = vsub.f32 %v196, %v514
  %v524 = vsub.f32 %v199, %v514
  %v525 = vsub.f32 %v204, %v514
  %v526 = vsub.f32 %v207, %v514
  %v527 = vsub.f32 %v212, %v514
  %v528 = vsub.f32 %v215, %v514
  %v529 = vsub.f32 %v220, %v518
  %v530 = vsub.f32 %v223, %v518
  %v531 = vsub.f32 %v228, %v518
  %v532 = vsub.f32 %v231, %v518
  %v533 = vsub.f32 %v236, %v518
  %v534 = vsub.f32 %v239, %v518
  %v535 = vsub.f32 %v244, %v518
  %v536 = vsub.f32 %v247, %v518
  %v537 = vadd.f32 %v487, 1e-05
  %v538 = vrsqrt.pop %v537
  %v541 = vunpack.c.l.s4 1966171168
  %v542 = vunpack.c.0.s8 %v541
  %v543 = vlaneseq
  %v544 = vshrl.u32 %v543, 7
  %v545 = vsub.s32 %v542, %v544
  %v546 = vrot.slane %v538, %v545
  %v547 = vcombine.high %v546, %v546
  %v549 = vunpack.c.l.s4 1966171168
  %v550 = vunpack.c.0.s8 %v549
  %v551 = vlaneseq
  %v552 = vshrl.u32 %v551, 7
  %v553 = vsub.s32 %v550, %v552
  %v554 = vrot.slane %v546, %v553
  %v556 = vunpack.c.l.s4 1966171168
  %v557 = vunpack.c.0.s8 %v556
  %v558 = vlaneseq
  %v559 = vshrl.u32 %v558, 7
  %v560 = vsub.s32 %v557, %v559
  %v561 = vrot.slane %v547, %v560
  %v562 = vlaneseq
  %v563 = vshrl.u32 %v562, 7
  %v564 = vsub.s32 0, %v563
  %v565 = vrot.slane %v554, %v564
  %v566 = vlaneseq
  %v567 = vshrl.u32 %v566, 7
  %v568 = vsub.s32 0, %v567
  %v569 = vrot.slane %v561, %v568
  %v572 = vmul.f32 %v521, %v565
  %v573 = vmul.f32 %v522, %v565
  %v574 = vmul.f32 %v523, %v565
  %v575 = vmul.f32 %v524, %v565
  %v576 = vmul.f32 %v525, %v565
  %v577 = vmul.f32 %v526, %v565
  %v578 = vmul.f32 %v527, %v565
  %v579 = vmul.f32 %v528, %v565
  %v580 = vmul.f32 %v529, %v569
  %v581 = vmul.f32 %v530, %v569
  %v582 = vmul.f32 %v531, %v569
  %v583 = vmul.f32 %v532, %v569
  %v584 = vmul.f32 %v533, %v569
  %v585 = vmul.f32 %v534, %v569
  %v586 = vmul.f32 %v535, %v569
  %v587 = vmul.f32 %v536, %v569
  %vm588 = vcmp.gt.f32.partialorder %v572, 0.0
  %vm589 = vcmp.gt.f32.partialorder %v573, 0.0
  %vm590 = vcmp.gt.f32.partialorder %v574, 0.0
  %vm591 = vcmp.gt.f32.partialorder %v575, 0.0
  %vm592 = vcmp.gt.f32.partialorder %v576, 0.0
  %vm593 = vcmp.gt.f32.partialorder %v577, 0.0
  %vm594 = vcmp.gt.f32.partialorder %v578, 0.0
  %vm595 = vcmp.gt.f32.partialorder %v579, 0.0
  %vm596 = vcmp.gt.f32.partialorder %v580, 0.0
  %vm597 = vcmp.gt.f32.partialorder %v581, 0.0
  %vm598 = vcmp.gt.f32.partialorder %v582, 0.0
  %vm599 = vcmp.gt.f32.partialorder %v583, 0.0
  %vm600 = vcmp.gt.f32.partialorder %v584, 0.0
  %vm601 = vcmp.gt.f32.partialorder %v585, 0.0
  %vm602 = vcmp.gt.f32.partialorder %v586, 0.0
  %vm603 = vcmp.gt.f32.partialorder %v587, 0.0
  %v604 = vmin.f32 %v572, 0.0
  %v605 = vmin.f32 %v573, 0.0
  %v606 = vmin.f32 %v574, 0.0
  %v607 = vmin.f32 %v575, 0.0
  %v608 = vmin.f32 %v576, 0.0
  %v609 = vmin.f32 %v577, 0.0
  %v610 = vmin.f32 %v578, 0.0
  %v611 = vmin.f32 %v579, 0.0
  %v612 = vmin.f32 %v580, 0.0
  %v613 = vmin.f32 %v581, 0.0
  %v614 = vmin.f32 %v582, 0.0
  %v615 = vmin.f32 %v583, 0.0
  %v616 = vmin.f32 %v584, 0.0
  %v617 = vmin.f32 %v585, 0.0
  %v618 = vmin.f32 %v586, 0.0
  %v619 = vmin.f32 %v587, 0.0
  %v620 = vmul.f32 %v604, 1.442695
  %v621 = vpow.pop %v620
  %v622 = vmul.f32 %v605, 1.442695
  %v623 = vpow.pop %v622
  %v624 = vmul.f32 %v606, 1.442695
  %v625 = vpow.pop %v624
  %v626 = vmul.f32 %v607, 1.442695
  %v627 = vpow.pop %v626
  %v628 = vmul.f32 %v608, 1.442695
  %v629 = vpow.pop %v628
  %v630 = vmul.f32 %v609, 1.442695
  %v631 = vpow.pop %v630
  %v632 = vmul.f32 %v610, 1.442695
  %v633 = vpow.pop %v632
  %v634 = vmul.f32 %v611, 1.442695
  %v635 = vpow.pop %v634
  %v636 = vmul.f32 %v612, 1.442695
  %v637 = vpow.pop %v636
  %v638 = vmul.f32 %v613, 1.442695
  %v639 = vpow.pop %v638
  %v640 = vmul.f32 %v614, 1.442695
  %v641 = vpow.pop %v640
  %v642 = vmul.f32 %v615, 1.442695
  %v643 = vpow.pop %v642
  %v644 = vmul.f32 %v616, 1.442695
  %v645 = vpow.pop %v644
  %v646 = vmul.f32 %v617, 1.442695
  %v647 = vpow.pop %v646
  %v648 = vmul.f32 %v618, 1.442695
  %v649 = vpow.pop %v648
  %v650 = vmul.f32 %v619, 1.442695
  %v651 = vpow.pop %v650
  %v652 = vsub.f32 %v621, 1.0
  %v653 = vsub.f32 %v623, 1.0
  %v654 = vsub.f32 %v625, 1.0
  %v655 = vsub.f32 %v627, 1.0
  %v656 = vsub.f32 %v629, 1.0
  %v657 = vsub.f32 %v631, 1.0
  %v658 = vsub.f32 %v633, 1.0
  %v659 = vsub.f32 %v635, 1.0
  %v660 = vsub.f32 %v637, 1.0
  %v661 = vsub.f32 %v639, 1.0
  %v662 = vsub.f32 %v641, 1.0
  %v663 = vsub.f32 %v643, 1.0
  %v664 = vsub.f32 %v645, 1.0
  %v665 = vsub.f32 %v647, 1.0
  %v666 = vsub.f32 %v649, 1.0
  %v667 = vsub.f32 %v651, 1.0
  %v668 = vsel %vm588, %v572, %v652
  %v669 = vsel %vm589, %v573, %v653
  %v670 = vsel %vm590, %v574, %v654
  %v671 = vsel %vm591, %v575, %v655
  %v672 = vsel %vm592, %v576, %v656
  %v673 = vsel %vm593, %v577, %v657
  %v674 = vsel %vm594, %v578, %v658
  %v675 = vsel %vm595, %v579, %v659
  %v676 = vsel %vm596, %v580, %v660
  %v677 = vsel %vm597, %v581, %v661
  %v678 = vsel %vm598, %v582, %v662
  %v679 = vsel %vm599, %v583, %v663
  %v680 = vsel %vm600, %v584, %v664
  %v681 = vsel %vm601, %v585, %v665
  %v682 = vsel %vm602, %v586, %v666
  %v683 = vsel %vm603, %v587, %v667
  %684 = vst [vmem:[%s4] sm:$0xff] %v668
  %685 = vst [vmem:[%s4 + $0x8] sm:$0xff] %v669
  %686 = vst [vmem:[%s4 + $0x10] sm:$0xff] %v670
  %687 = vst [vmem:[%s4 + $0x18] sm:$0xff] %v671
  %688 = vst [vmem:[%s4 + $0x20] sm:$0xff] %v672
  %689 = vst [vmem:[%s4 + $0x28] sm:$0xff] %v673
  %690 = vst [vmem:[%s4 + $0x30] sm:$0xff] %v674
  %691 = vst [vmem:[%s4 + $0x38] sm:$0xff] %v675
  %692 = vst [vmem:[%s4 + $0x40] sm:$0xff] %v676
  %693 = vst [vmem:[%s4 + $0x48] sm:$0xff] %v677
  %694 = vst [vmem:[%s4 + $0x50] sm:$0xff] %v678
  %695 = vst [vmem:[%s4 + $0x58] sm:$0xff] %v679
  %696 = vst [vmem:[%s4 + $0x60] sm:$0xff] %v680
  %697 = vst [vmem:[%s4 + $0x68] sm:$0xff] %v681
  %698 = vst [vmem:[%s4 + $0x70] sm:$0xff] %v682
  %699 = vst [vmem:[%s4 + $0x78] sm:$0xff] %v683
  // Predicated region
  $region18: #{resnet_score_forward.8} parent=0 // pred_check
    _
  $region19: #{resnet_score_forward.8} parent=0 // pred_check_branch
    %701 = sbr.rel (0) target = $region21
  $region20: #{resnet_score_forward.8} parent=0 // pred_region
    _
  $region21: #{resnet_score_forward.8} parent=0 // pred_fallthru
    _
  // Predicated region
  $region22: #{resnet_score_forward.8} parent=0 // pred_check
    _
  $region23: #{resnet_score_forward.8} parent=0 // pred_check_branch
    %703 = sbr.rel (0) target = $region25
  $region24: #{resnet_score_forward.8} parent=0 // pred_region
    _
  $region25: #{resnet_score_forward.8} parent=0 // pred_fallthru
    _

// kernel: resnet_score_forward.7
$region0: #{resnet_score_forward.7}
  #allocation0 [shape = 'u32[]', space=smem, size = 0x4, offset = 0x4, fixed_abs, tag = 'smem constant byte address 0x4 - core index']
  #allocation1 [shape = 'u32[144,128]{1,0:T(1,128)}', space=vmem, size = 0x12000, scoped, tag = 'internal scratch']
  %s0 = inlined_call_operand.vmem [shape: f32[2,8,8,128], index: 0, kind: input, shape index: {}]
  %s1 = inlined_call_operand.vmem [shape: bf16[6,384,128], index: 1, kind: input, shape index: {}]
  %s2 = inlined_call_operand.vmem [shape: f32[6,1,128], index: 2, kind: input, shape index: {}]
  %s3 = inlined_call_operand.vmem [shape: bf16[6,384,128], index: 3, kind: input, shape index: {}]
  %s4 = inlined_call_operand.vmem [shape: f32[6,1,128], index: 4, kind: input, shape index: {}]
  %s5 = inlined_call_operand.vmem [shape: f32[2,8,8,128], index: 5, kind: output, shape index: {}]
  %s6 = sld [smem:[#allocation0]]
  $region37: #{resnet_score_forward.7} parent=0
    _
  %s8 = ssub.s32 1, %s6
  %s9 = scalar_select 0, %s8, %s6
  // Predicated region
  $region2: #{resnet_score_forward.7} parent=0 // pred_check
    _
  $region3: #{resnet_score_forward.7} parent=0 // pred_check_branch
    %11 = sbr.rel (0) target = $region5
  $region4: #{resnet_score_forward.7} parent=0 // pred_region
    _
  $region5: #{resnet_score_forward.7} parent=0 // pred_fallthru
    _
  // Predicated region
  $region6: #{resnet_score_forward.7} parent=0 // pred_check
    _
  $region7: #{resnet_score_forward.7} parent=0 // pred_check_branch
    %13 = sbr.rel (0) target = $region9
  $region8: #{resnet_score_forward.7} parent=0 // pred_region
    _
  $region9: #{resnet_score_forward.7} parent=0 // pred_fallthru
    _
  // Predicated region
  $region10: #{resnet_score_forward.7} parent=0 // pred_check
    _
  $region11: #{resnet_score_forward.7} parent=0 // pred_check_branch
    %15 = sbr.rel (0) target = $region13
  $region12: #{resnet_score_forward.7} parent=0 // pred_region
    _
  $region13: #{resnet_score_forward.7} parent=0 // pred_fallthru
    _
  // Predicated region
  $region14: #{resnet_score_forward.7} parent=0 // pred_check
    _
  $region15: #{resnet_score_forward.7} parent=0 // pred_check_branch
    %17 = sbr.rel (0) target = $region17
  $region16: #{resnet_score_forward.7} parent=0 // pred_region
    _
  $region17: #{resnet_score_forward.7} parent=0 // pred_fallthru
    _
  // Predicated region
  $region18: #{resnet_score_forward.7} parent=0 // pred_check
    _
  $region19: #{resnet_score_forward.7} parent=0 // pred_check_branch
    %19 = sbr.rel (0) target = $region21
  $region20: #{resnet_score_forward.7} parent=0 // pred_region
    _
  $region21: #{resnet_score_forward.7} parent=0 // pred_fallthru
    _
  %v21 = vld [vmem:[%s0] sm:$0xff]
  %v22 = vld [vmem:[%s0 + $0x8] sm:$0xff]
  %v23 = vld [vmem:[%s0 + $0x10] sm:$0xff]
  %v24 = vld [vmem:[%s0 + $0x18] sm:$0xff]
  %v25 = vld [vmem:[%s0 + $0x20] sm:$0xff]
  %v26 = vld [vmem:[%s0 + $0x28] sm:$0xff]
  %v27 = vld [vmem:[%s0 + $0x30] sm:$0xff]
  %v28 = vld [vmem:[%s0 + $0x38] sm:$0xff]
  %v29 = vld [vmem:[%s0 + $0x40] sm:$0xff]
  %v30 = vld [vmem:[%s0 + $0x48] sm:$0xff]
  %v31 = vld [vmem:[%s0 + $0x50] sm:$0xff]
  %v32 = vld [vmem:[%s0 + $0x58] sm:$0xff]
  %v33 = vld [vmem:[%s0 + $0x60] sm:$0xff]
  %v34 = vld [vmem:[%s0 + $0x68] sm:$0xff]
  %v35 = vld [vmem:[%s0 + $0x70] sm:$0xff]
  %v36 = vld [vmem:[%s0 + $0x78] sm:$0xff]
  %37 = vst [vmem:[%s5] sm:$0xff] %v21
  %38 = vst [vmem:[%s5 + $0x8] sm:$0xff] %v22
  %39 = vst [vmem:[%s5 + $0x10] sm:$0xff] %v23
  %40 = vst [vmem:[%s5 + $0x18] sm:$0xff] %v24
  %41 = vst [vmem:[%s5 + $0x20] sm:$0xff] %v25
  %42 = vst [vmem:[%s5 + $0x28] sm:$0xff] %v26
  %43 = vst [vmem:[%s5 + $0x30] sm:$0xff] %v27
  %44 = vst [vmem:[%s5 + $0x38] sm:$0xff] %v28
  %45 = vst [vmem:[%s5 + $0x40] sm:$0xff] %v29
  %46 = vst [vmem:[%s5 + $0x48] sm:$0xff] %v30
  %47 = vst [vmem:[%s5 + $0x50] sm:$0xff] %v31
  %48 = vst [vmem:[%s5 + $0x58] sm:$0xff] %v32
  %49 = vst [vmem:[%s5 + $0x60] sm:$0xff] %v33
  %50 = vst [vmem:[%s5 + $0x68] sm:$0xff] %v34
  %51 = vst [vmem:[%s5 + $0x70] sm:$0xff] %v35
  %52 = vst [vmem:[%s5 + $0x78] sm:$0xff] %v36
  loop: start=0, step=1, limit=6
  $region22: #{resnet_score_forward.7} parent=0 // loop_pre_header
    _
  $region23: #{resnet_score_forward.7} parent=0 // loop_header
    %s54 = sphi 0, %s58
    %p55 = scmp.ge.s32.totalorder %s54, 6
  $region24: #{resnet_score_forward.7} parent=0 // loop_header_branch
    %57 = sbr.rel (%p55) target = $region28
  $region25: #{resnet_score_forward.7} parent=0 // loop_body
    %v59 = vld [vmem:[%s5] sm:$0xff]
    %v60 = vld [vmem:[%s5 + $0x8] sm:$0xff]
    %v61 = vld [vmem:[%s5 + $0x10] sm:$0xff]
    %v62 = vld [vmem:[%s5 + $0x18] sm:$0xff]
    %v63 = vld [vmem:[%s5 + $0x20] sm:$0xff]
    %v64 = vld [vmem:[%s5 + $0x28] sm:$0xff]
    %v65 = vld [vmem:[%s5 + $0x30] sm:$0xff]
    %v66 = vld [vmem:[%s5 + $0x38] sm:$0xff]
    %v67 = vld [vmem:[%s5 + $0x40] sm:$0xff]
    %v68 = vld [vmem:[%s5 + $0x48] sm:$0xff]
    %v69 = vld [vmem:[%s5 + $0x50] sm:$0xff]
    %v70 = vld [vmem:[%s5 + $0x58] sm:$0xff]
    %v71 = vld [vmem:[%s5 + $0x60] sm:$0xff]
    %v72 = vld [vmem:[%s5 + $0x68] sm:$0xff]
    %v73 = vld [vmem:[%s5 + $0x70] sm:$0xff]
    %v74 = vld [vmem:[%s5 + $0x78] sm:$0xff]
    %v75 = vpack.c.bf16 %v59, %v59
    %v76 = vpack.c.bf16 %v60, %v60
    %v77 = vpack.c.bf16 %v61, %v61
    %v78 = vpack.c.bf16 %v62, %v62
    %v79 = vpack.c.bf16 %v63, %v63
    %v80 = vpack.c.bf16 %v64, %v64
    %v81 = vpack.c.bf16 %v65, %v65
    %v82 = vpack.c.bf16 %v66, %v66
    %v83 = vpack.c.bf16 %v67, %v67
    %v84 = vpack.c.bf16 %v68, %v68
    %v85 = vpack.c.bf16 %v69, %v69
    %v86 = vpack.c.bf16 %v70, %v70
    %v87 = vpack.c.bf16 %v71, %v71
    %v88 = vpack.c.bf16 %v72, %v72
    %v89 = vpack.c.bf16 %v73, %v73
    %v90 = vpack.c.bf16 %v74, %v74
    %s91 = smul.u32 %s54, 48
    %s92 = smul.addr %s91, 4
    %s93 = scalar_lea.vmem %s1, %s92
    %v94 = vld [vmem:[%s93] sm:$0xf]
    %v95 = vld [vmem:[%s93 + $0x4] sm:$0xf]
    %v96 = vld [vmem:[%s93 + $0x8] sm:$0xf]
    %v97 = vld [vmem:[%s93 + $0xc] sm:$0xf]
    %v98 = vld [vmem:[%s93 + $0x10] sm:$0xf]
    %v99 = vld [vmem:[%s93 + $0x14] sm:$0xf]
    %v100 = vld [vmem:[%s93 + $0x18] sm:$0xf]
    %v101 = vld [vmem:[%s93 + $0x1c] sm:$0xf]
    %v102 = vld [vmem:[%s93 + $0x20] sm:$0xf]
    %v103 = vld [vmem:[%s93 + $0x24] sm:$0xf]
    %v104 = vld [vmem:[%s93 + $0x28] sm:$0xf]
    %v105 = vld [vmem:[%s93 + $0x2c] sm:$0xf]
    %v106 = vld [vmem:[%s93 + $0x30] sm:$0xf]
    %v107 = vld [vmem:[%s93 + $0x34] sm:$0xf]
    %v108 = vld [vmem:[%s93 + $0x38] sm:$0xf]
    %v109 = vld [vmem:[%s93 + $0x3c] sm:$0xf]
    %v110 = vld [vmem:[%s93 + $0x40] sm:$0xf]
    %v111 = vld [vmem:[%s93 + $0x44] sm:$0xf]
    %v112 = vld [vmem:[%s93 + $0x48] sm:$0xf]
    %v113 = vld [vmem:[%s93 + $0x4c] sm:$0xf]
    %v114 = vld [vmem:[%s93 + $0x50] sm:$0xf]
    %v115 = vld [vmem:[%s93 + $0x54] sm:$0xf]
    %v116 = vld [vmem:[%s93 + $0x58] sm:$0xf]
    %v117 = vld [vmem:[%s93 + $0x5c] sm:$0xf]
    %v118 = vld [vmem:[%s93 + $0x60] sm:$0xf]
    %v119 = vld [vmem:[%s93 + $0x64] sm:$0xf]
    %v120 = vld [vmem:[%s93 + $0x68] sm:$0xf]
    %v121 = vld [vmem:[%s93 + $0x6c] sm:$0xf]
    %v122 = vld [vmem:[%s93 + $0x70] sm:$0xf]
    %v123 = vld [vmem:[%s93 + $0x74] sm:$0xf]
    %v124 = vld [vmem:[%s93 + $0x78] sm:$0xf]
    %v125 = vld [vmem:[%s93 + $0x7c] sm:$0xf]
    %v126 = vld [vmem:[%s93 + $0x80] sm:$0xf]
    %v127 = vld [vmem:[%s93 + $0x84] sm:$0xf]
    %v128 = vld [vmem:[%s93 + $0x88] sm:$0xf]
    %v129 = vld [vmem:[%s93 + $0x8c] sm:$0xf]
    %v130 = vld [vmem:[%s93 + $0x90] sm:$0xf]
    %v131 = vld [vmem:[%s93 + $0x94] sm:$0xf]
    %v132 = vld [vmem:[%s93 + $0x98] sm:$0xf]
    %v133 = vld [vmem:[%s93 + $0x9c] sm:$0xf]
    %v134 = vld [vmem:[%s93 + $0xa0] sm:$0xf]
    %v135 = vld [vmem:[%s93 + $0xa4] sm:$0xf]
    %v136 = vld [vmem:[%s93 + $0xa8] sm:$0xf]
    %v137 = vld [vmem:[%s93 + $0xac] sm:$0xf]
    %v138 = vld [vmem:[%s93 + $0xb0] sm:$0xf]
    %v139 = vld [vmem:[%s93 + $0xb4] sm:$0xf]
    %v140 = vld [vmem:[%s93 + $0xb8] sm:$0xf]
    %v141 = vld [vmem:[%s93 + $0xbc] sm:$0xf]
    %s142 = scalar_lea.vmem %s2, %s54
    %v143 = vld [vmem:[%s142] sm:$0x1]
    %v145 = vshrl.u32 %v76, 16
    %v148 = vshrl.u32 %v75, 16
    %v151 = vshrl.u32 %v77, 16
    %v154 = vshrl.u32 %v78, 16
    %v157 = vshrl.u32 %v79, 16
    %v160 = vshrl.u32 %v80, 16
    %v163 = vshrl.u32 %v81, 16
    %v166 = vshrl.u32 %v82, 16
    %v169 = vshrl.u32 %v84, 16
    %v172 = vshrl.u32 %v83, 16
    %v175 = vshrl.u32 %v85, 16
    %v178 = vshrl.u32 %v86, 16
    %v181 = vshrl.u32 %v87, 16
    %v184 = vshrl.u32 %v88, 16
    %v187 = vshrl.u32 %v89, 16
    %v190 = vshrl.u32 %v90, 16
    %v208 = vrot.slane %v145, 7
    %v209 = vshll.u32 %v76, 16
    %v211 = vor.u32 %v208, %v209
    %v212 = vrot.slane %v148, 7
    %v213 = vshll.u32 %v75, 16
    %v215 = vor.u32 %v212, %v213
    %v216 = vrot.slane %v151, 7
    %v217 = vshll.u32 %v77, 16
    %v219 = vor.u32 %v216, %v217
    %v220 = vrot.slane %v154, 7
    %v221 = vshll.u32 %v78, 16
    %v223 = vor.u32 %v220, %v221
    %v224 = vrot.slane %v157, 7
    %v225 = vshll.u32 %v79, 16
    %v227 = vor.u32 %v224, %v225
    %v228 = vrot.slane %v160, 7
    %v229 = vshll.u32 %v80, 16
    %v231 = vor.u32 %v228, %v229
    %v232 = vrot.slane %v163, 7
    %v233 = vshll.u32 %v81, 16
    %v235 = vor.u32 %v232, %v233
    %v236 = vrot.slane %v166, 7
    %v237 = vshll.u32 %v82, 16
    %v239 = vor.u32 %v236, %v237
    %v240 = vrot.slane %v169, 7
    %v241 = vshll.u32 %v84, 16
    %v243 = vor.u32 %v240, %v241
    %v244 = vrot.slane %v172, 7
    %v245 = vshll.u32 %v83, 16
    %v247 = vor.u32 %v244, %v245
    %v248 = vrot.slane %v175, 7
    %v249 = vshll.u32 %v85, 16
    %v251 = vor.u32 %v248, %v249
    %v252 = vrot.slane %v178, 7
    %v253 = vshll.u32 %v86, 16
    %v255 = vor.u32 %v252, %v253
    %v256 = vrot.slane %v181, 7
    %v257 = vshll.u32 %v87, 16
    %v259 = vor.u32 %v256, %v257
    %v260 = vrot.slane %v184, 7
    %v261 = vshll.u32 %v88, 16
    %v263 = vor.u32 %v260, %v261
    %v264 = vrot.slane %v187, 7
    %v265 = vshll.u32 %v89, 16
    %v267 = vor.u32 %v264, %v265
    %v268 = vrot.slane %v190, 7
    %v269 = vshll.u32 %v90, 16
    %v271 = vor.u32 %v268, %v269
    %v288 = vrot.slane %v209, 7
    %v289 = vrot.slane %v213, 7
    %v290 = vrot.slane %v217, 7
    %v291 = vrot.slane %v221, 7
    %v292 = vrot.slane %v225, 7
    %v293 = vrot.slane %v229, 7
    %v294 = vrot.slane %v233, 7
    %v295 = vrot.slane %v237, 7
    %v296 = vrot.slane %v241, 7
    %v297 = vrot.slane %v245, 7
    %v298 = vrot.slane %v249, 7
    %v299 = vrot.slane %v253, 7
    %v300 = vrot.slane %v257, 7
    %v301 = vrot.slane %v261, 7
    %v302 = vrot.slane %v265, 7
    %v303 = vrot.slane %v269, 7
    %vm320 = vcmask 1040384
    %vm321 = vsmask.f32 256
    %vm322 = vmand %vm320, %vm321
    %v323 = vsel %vm322, %v145, %v211
    %v324 = vsel %vm322, %v148, %v215
    %v325 = vsel %vm322, %v151, %v219
    %v326 = vsel %vm322, %v154, %v223
    %v327 = vsel %vm322, %v157, %v227
    %v328 = vsel %vm322, %v160, %v231
    %v329 = vsel %vm322, %v163, %v235
    %v330 = vsel %vm322, %v166, %v239
    %v331 = vsel %vm322, %v169, %v243
    %v332 = vsel %vm322, %v172, %v247
    %v333 = vsel %vm322, %v175, %v251
    %v334 = vsel %vm322, %v178, %v255
    %v335 = vsel %vm322, %v181, %v259
    %v336 = vsel %vm322, %v184, %v263
    %v337 = vsel %vm322, %v187, %v267
    %v338 = vsel %vm322, %v190, %v271
    %vm339 = vcmask 1044480
    %vm340 = vsmask.f32 4352
    %vm341 = vmand %vm339, %vm340
    %v342 = vsel %vm341, %v323, %v288
    %v343 = vsel %vm341, %v324, %v289
    %v344 = vsel %vm341, %v325, %v290
    %v345 = vsel %vm341, %v326, %v291
    %v346 = vsel %vm341, %v327, %v292
    %v347 = vsel %vm341, %v328, %v293
    %v348 = vsel %vm341, %v329, %v294
    %v349 = vsel %vm341, %v330, %v295
    %v350 = vsel %vm341, %v331, %v296
    %v351 = vsel %vm341, %v332, %v297
    %v352 = vsel %vm341, %v333, %v298
    %v353 = vsel %vm341, %v334, %v299
    %v354 = vsel %vm341, %v335, %v300
    %v355 = vsel %vm341, %v336, %v301
    %v356 = vsel %vm341, %v337, %v302
    %v357 = vsel %vm341, %v338, %v303
    %v359 = vshrl.u32 %v342, 16
    %v361 = vshll.u32 %v342, 16
    %v363 = vrot.slane %v361, 1
    %v364 = vor.u32 %v359, %v363
    %v366 = vshrl.u32 %v343, 16
    %v368 = vshll.u32 %v343, 16
    %v370 = vrot.slane %v368, 1
    %v371 = vor.u32 %v366, %v370
    %v373 = vshrl.u32 %v344, 16
    %v375 = vshll.u32 %v344, 16
    %v377 = vrot.slane %v375, 1
    %v378 = vor.u32 %v373, %v377
    %v380 = vshrl.u32 %v345, 16
    %v382 = vshll.u32 %v345, 16
    %v384 = vrot.slane %v382, 1
    %v385 = vor.u32 %v380, %v384
    %v387 = vshrl.u32 %v346, 16
    %v389 = vshll.u32 %v346, 16
    %v391 = vrot.slane %v389, 1
    %v392 = vor.u32 %v387, %v391
    %v394 = vshrl.u32 %v347, 16
    %v396 = vshll.u32 %v347, 16
    %v398 = vrot.slane %v396, 1
    %v399 = vor.u32 %v394, %v398
    %v401 = vshrl.u32 %v348, 16
    %v403 = vshll.u32 %v348, 16
    %v405 = vrot.slane %v403, 1
    %v406 = vor.u32 %v401, %v405
    %v408 = vshrl.u32 %v350, 16
    %v410 = vshll.u32 %v350, 16
    %v412 = vrot.slane %v410, 1
    %v413 = vor.u32 %v408, %v412
    %v415 = vshrl.u32 %v351, 16
    %v417 = vshll.u32 %v351, 16
    %v419 = vrot.slane %v417, 1
    %v420 = vor.u32 %v415, %v419
    %v422 = vshrl.u32 %v352, 16
    %v424 = vshll.u32 %v352, 16
    %v426 = vrot.slane %v424, 1
    %v427 = vor.u32 %v422, %v426
    %v429 = vshrl.u32 %v353, 16
    %v431 = vshll.u32 %v353, 16
    %v433 = vrot.slane %v431, 1
    %v434 = vor.u32 %v429, %v433
    %v436 = vshrl.u32 %v354, 16
    %v438 = vshll.u32 %v354, 16
    %v440 = vrot.slane %v438, 1
    %v441 = vor.u32 %v436, %v440
    %v443 = vshrl.u32 %v355, 16
    %v445 = vshll.u32 %v355, 16
    %v447 = vrot.slane %v445, 1
    %v448 = vor.u32 %v443, %v447
    %v450 = vshrl.u32 %v356, 16
    %v452 = vshll.u32 %v356, 16
    %v454 = vrot.slane %v452, 1
    %v455 = vor.u32 %v450, %v454
    %456 = vrot.lane.b32.xlu0 %v364, 32
    %v457 = vpop.permute.xlu0 %456
    %458 = vrot.lane.b32.xlu0 %v371, 32
    %v459 = vpop.permute.xlu0 %458
    %460 = vrot.lane.b32.xlu0 %v378, 32
    %v461 = vpop.permute.xlu0 %460
    %462 = vrot.lane.b32.xlu0 %v385, 32
    %v463 = vpop.permute.xlu0 %462
    %464 = vrot.lane.b32.xlu0 %v392, 32
    %v465 = vpop.permute.xlu0 %464
    %466 = vrot.lane.b32.xlu0 %v399, 32
    %v467 = vpop.permute.xlu0 %466
    %468 = vrot.lane.b32.xlu0 %v406, 32
    %v469 = vpop.permute.xlu0 %468
    %470 = vrot.lane.b32.xlu0 %v413, 32
    %v471 = vpop.permute.xlu0 %470
    %472 = vrot.lane.b32.xlu0 %v420, 32
    %v473 = vpop.permute.xlu0 %472
    %474 = vrot.lane.b32.xlu0 %v427, 32
    %v475 = vpop.permute.xlu0 %474
    %476 = vrot.lane.b32.xlu0 %v434, 32
    %v477 = vpop.permute.xlu0 %476
    %478 = vrot.lane.b32.xlu0 %v441, 32
    %v479 = vpop.permute.xlu0 %478
    %480 = vrot.lane.b32.xlu0 %v448, 32
    %v481 = vpop.permute.xlu0 %480
    %482 = vrot.lane.b32.xlu0 %v455, 32
    %v483 = vpop.permute.xlu0 %482
    %v498 = vrot.slane %v342, 1
    %v499 = vrot.slane %v343, 1
    %v500 = vrot.slane %v344, 1
    %v501 = vrot.slane %v345, 1
    %v502 = vrot.slane %v346, 1
    %v503 = vrot.slane %v347, 1
    %v504 = vrot.slane %v348, 1
    %v505 = vrot.slane %v350, 1
    %v506 = vrot.slane %v351, 1
    %v507 = vrot.slane %v352, 1
    %v508 = vrot.slane %v353, 1
    %v509 = vrot.slane %v354, 1
    %v510 = vrot.slane %v355, 1
    %v511 = vrot.slane %v356, 1
    %512 = vrot.lane.b32.xlu0 %v498, 64
    %v513 = vpop.permute.xlu0 %512
    %514 = vrot.lane.b32.xlu0 %v499, 64
    %v515 = vpop.permute.xlu0 %514
    %516 = vrot.lane.b32.xlu0 %v500, 64
    %v517 = vpop.permute.xlu0 %516
    %518 = vrot.lane.b32.xlu0 %v501, 64
    %v519 = vpop.permute.xlu0 %518
    %520 = vrot.lane.b32.xlu0 %v502, 64
    %v521 = vpop.permute.xlu0 %520
    %522 = vrot.lane.b32.xlu0 %v503, 64
    %v523 = vpop.permute.xlu0 %522
    %524 = vrot.lane.b32.xlu0 %v504, 64
    %v525 = vpop.permute.xlu0 %524
    %526 = vrot.lane.b32.xlu0 %v505, 64
    %v527 = vpop.permute.xlu0 %526
    %528 = vrot.lane.b32.xlu0 %v506, 64
    %v529 = vpop.permute.xlu0 %528
    %530 = vrot.lane.b32.xlu0 %v507, 64
    %v531 = vpop.permute.xlu0 %530
    %532 = vrot.lane.b32.xlu0 %v508, 64
    %v533 = vpop.permute.xlu0 %532
    %534 = vrot.lane.b32.xlu0 %v509, 64
    %v535 = vpop.permute.xlu0 %534
    %536 = vrot.lane.b32.xlu0 %v510, 64
    %v537 = vpop.permute.xlu0 %536
    %538 = vrot.lane.b32.xlu0 %v511, 64
    %v539 = vpop.permute.xlu0 %538
    %542 = vrot.lane.b32.xlu0 %v343, 96
    %v543 = vpop.permute.xlu0 %542
    %544 = vrot.lane.b32.xlu0 %v342, 96
    %v545 = vpop.permute.xlu0 %544
    %546 = vrot.lane.b32.xlu0 %v344, 96
    %v547 = vpop.permute.xlu0 %546
    %548 = vrot.lane.b32.xlu0 %v345, 96
    %v549 = vpop.permute.xlu0 %548
    %550 = vrot.lane.b32.xlu0 %v346, 96
    %v551 = vpop.permute.xlu0 %550
    %552 = vrot.lane.b32.xlu0 %v347, 96
    %v553 = vpop.permute.xlu0 %552
    %554 = vrot.lane.b32.xlu0 %v348, 96
    %v555 = vpop.permute.xlu0 %554
    %556 = vrot.lane.b32.xlu0 %v349, 96
    %v557 = vpop.permute.xlu0 %556
    %558 = vrot.lane.b32.xlu0 %v351, 96
    %v559 = vpop.permute.xlu0 %558
    %560 = vrot.lane.b32.xlu0 %v350, 96
    %v561 = vpop.permute.xlu0 %560
    %562 = vrot.lane.b32.xlu0 %v352, 96
    %v563 = vpop.permute.xlu0 %562
    %564 = vrot.lane.b32.xlu0 %v353, 96
    %v565 = vpop.permute.xlu0 %564
    %566 = vrot.lane.b32.xlu0 %v354, 96
    %v567 = vpop.permute.xlu0 %566
    %568 = vrot.lane.b32.xlu0 %v355, 96
    %v569 = vpop.permute.xlu0 %568
    %570 = vrot.lane.b32.xlu0 %v356, 96
    %v571 = vpop.permute.xlu0 %570
    %572 = vrot.lane.b32.xlu0 %v357, 96
    %v573 = vpop.permute.xlu0 %572
    %v575 = vshrl.u32 %v349, 16
    %v577 = vshll.u32 %v349, 16
    %v579 = vrot.slane %v577, 1
    %v580 = vor.u32 %v575, %v579
    %v582 = vshrl.u32 %v357, 16
    %v584 = vshll.u32 %v357, 16
    %v586 = vrot.slane %v584, 1
    %v587 = vor.u32 %v582, %v586
    %v588 = vrot.slane %v349, 1
    %v589 = vrot.slane %v357, 1
    %590 = vrot.lane.b32.xlu0 %v499, 32
    %v591 = vpop.permute.xlu0 %590
    %592 = vrot.lane.b32.xlu0 %v498, 32
    %v593 = vpop.permute.xlu0 %592
    %594 = vrot.lane.b32.xlu0 %v500, 32
    %v595 = vpop.permute.xlu0 %594
    %596 = vrot.lane.b32.xlu0 %v501, 32
    %v597 = vpop.permute.xlu0 %596
    %598 = vrot.lane.b32.xlu0 %v502, 32
    %v599 = vpop.permute.xlu0 %598
    %600 = vrot.lane.b32.xlu0 %v503, 32
    %v601 = vpop.permute.xlu0 %600
    %602 = vrot.lane.b32.xlu0 %v504, 32
    %v603 = vpop.permute.xlu0 %602
    %604 = vrot.lane.b32.xlu0 %v588, 32
    %v605 = vpop.permute.xlu0 %604
    %606 = vrot.lane.b32.xlu0 %v506, 32
    %v607 = vpop.permute.xlu0 %606
    %608 = vrot.lane.b32.xlu0 %v505, 32
    %v609 = vpop.permute.xlu0 %608
    %610 = vrot.lane.b32.xlu0 %v507, 32
    %v611 = vpop.permute.xlu0 %610
    %612 = vrot.lane.b32.xlu0 %v508, 32
    %v613 = vpop.permute.xlu0 %612
    %614 = vrot.lane.b32.xlu0 %v509, 32
    %v615 = vpop.permute.xlu0 %614
    %616 = vrot.lane.b32.xlu0 %v510, 32
    %v617 = vpop.permute.xlu0 %616
    %618 = vrot.lane.b32.xlu0 %v511, 32
    %v619 = vpop.permute.xlu0 %618
    %620 = vrot.lane.b32.xlu0 %v589, 32
    %v621 = vpop.permute.xlu0 %620
    %622 = vrot.lane.b32.xlu0 %v342, 64
    %v623 = vpop.permute.xlu0 %622
    %624 = vrot.lane.b32.xlu0 %v344, 64
    %v625 = vpop.permute.xlu0 %624
    %626 = vrot.lane.b32.xlu0 %v345, 64
    %v627 = vpop.permute.xlu0 %626
    %628 = vrot.lane.b32.xlu0 %v346, 64
    %v629 = vpop.permute.xlu0 %628
    %630 = vrot.lane.b32.xlu0 %v347, 64
    %v631 = vpop.permute.xlu0 %630
    %632 = vrot.lane.b32.xlu0 %v348, 64
    %v633 = vpop.permute.xlu0 %632
    %634 = vrot.lane.b32.xlu0 %v349, 64
    %v635 = vpop.permute.xlu0 %634
    %636 = vrot.lane.b32.xlu0 %v350, 64
    %v637 = vpop.permute.xlu0 %636
    %638 = vrot.lane.b32.xlu0 %v352, 64
    %v639 = vpop.permute.xlu0 %638
    %640 = vrot.lane.b32.xlu0 %v353, 64
    %v641 = vpop.permute.xlu0 %640
    %642 = vrot.lane.b32.xlu0 %v354, 64
    %v643 = vpop.permute.xlu0 %642
    %644 = vrot.lane.b32.xlu0 %v355, 64
    %v645 = vpop.permute.xlu0 %644
    %646 = vrot.lane.b32.xlu0 %v356, 64
    %v647 = vpop.permute.xlu0 %646
    %648 = vrot.lane.b32.xlu0 %v357, 64
    %v649 = vpop.permute.xlu0 %648
    %650 = vrot.lane.b32.xlu0 %v364, 96
    %v651 = vpop.permute.xlu0 %650
    %652 = vrot.lane.b32.xlu0 %v378, 96
    %v653 = vpop.permute.xlu0 %652
    %654 = vrot.lane.b32.xlu0 %v385, 96
    %v655 = vpop.permute.xlu0 %654
    %656 = vrot.lane.b32.xlu0 %v392, 96
    %v657 = vpop.permute.xlu0 %656
    %658 = vrot.lane.b32.xlu0 %v399, 96
    %v659 = vpop.permute.xlu0 %658
    %660 = vrot.lane.b32.xlu0 %v406, 96
    %v661 = vpop.permute.xlu0 %660
    %662 = vrot.lane.b32.xlu0 %v580, 96
    %v663 = vpop.permute.xlu0 %662
    %664 = vrot.lane.b32.xlu0 %v413, 96
    %v665 = vpop.permute.xlu0 %664
    %666 = vrot.lane.b32.xlu0 %v427, 96
    %v667 = vpop.permute.xlu0 %666
    %668 = vrot.lane.b32.xlu0 %v434, 96
    %v669 = vpop.permute.xlu0 %668
    %670 = vrot.lane.b32.xlu0 %v441, 96
    %v671 = vpop.permute.xlu0 %670
    %672 = vrot.lane.b32.xlu0 %v448, 96
    %v673 = vpop.permute.xlu0 %672
    %674 = vrot.lane.b32.xlu0 %v455, 96
    %v675 = vpop.permute.xlu0 %674
    %676 = vrot.lane.b32.xlu0 %v587, 96
    %v677 = vpop.permute.xlu0 %676
    %vm678 = vcmask 261120
    %v680 = vsel %vm678, %v342, %v457
    %v682 = vsel %vm678, %v343, %v459
    %v684 = vsel %vm678, %v344, %v461
    %v686 = vsel %vm678, %v345, %v463
    %v688 = vsel %vm678, %v346, %v465
    %v690 = vsel %vm678, %v347, %v467
    %v692 = vsel %vm678, %v348, %v469
    %v694 = vsel %vm678, %v350, %v471
    %v696 = vsel %vm678, %v351, %v473
    %v698 = vsel %vm678, %v352, %v475
    %v700 = vsel %vm678, %v353, %v477
    %v702 = vsel %vm678, %v354, %v479
    %v704 = vsel %vm678, %v355, %v481
    %v706 = vsel %vm678, %v356, %v483
    %vm707 = vcmask 523264
    %v709 = vsel %vm707, %v680, %v513
    %v711 = vsel %vm707, %v682, %v515
    %v713 = vsel %vm707, %v684, %v517
    %v715 = vsel %vm707, %v686, %v519
    %v717 = vsel %vm707, %v688, %v521
    %v719 = vsel %vm707, %v690, %v523
    %v721 = vsel %vm707, %v692, %v525
    %v723 = vsel %vm707, %v694, %v527
    %v725 = vsel %vm707, %v696, %v529
    %v727 = vsel %vm707, %v698, %v531
    %v729 = vsel %vm707, %v700, %v533
    %v731 = vsel %vm707, %v702, %v535
    %v733 = vsel %vm707, %v704, %v537
    %v735 = vsel %vm707, %v706, %v539
    %vm736 = vcmask 785408
    %v738 = vsel %vm736, %v709, %v543
    %v740 = vsel %vm736, %v711, %v545
    %v742 = vsel %vm736, %v709, %v547
    %v744 = vsel %vm736, %v713, %v549
    %v746 = vsel %vm736, %v715, %v551
    %v748 = vsel %vm736, %v717, %v553
    %v750 = vsel %vm736, %v719, %v555
    %v752 = vsel %vm736, %v721, %v557
    %v754 = vsel %vm736, %v723, %v559
    %v756 = vsel %vm736, %v725, %v561
    %v758 = vsel %vm736, %v723, %v563
    %v760 = vsel %vm736, %v727, %v565
    %v762 = vsel %vm736, %v729, %v567
    %v764 = vsel %vm736, %v731, %v569
    %v766 = vsel %vm736, %v733, %v571
    %v768 = vsel %vm736, %v735, %v573
    %v771 = vsel %vm678, %v371, %v591
    %v774 = vsel %vm678, %v364, %v593
    %v777 = vsel %vm678, %v378, %v595
    %v780 = vsel %vm678, %v385, %v597
    %v783 = vsel %vm678, %v392, %v599
    %v786 = vsel %vm678, %v399, %v601
    %v789 = vsel %vm678, %v406, %v603
    %v792 = vsel %vm678, %v580, %v605
    %v795 = vsel %vm678, %v420, %v607
    %v798 = vsel %vm678, %v413, %v609
    %v801 = vsel %vm678, %v427, %v611
    %v804 = vsel %vm678, %v434, %v613
    %v807 = vsel %vm678, %v441, %v615
    %v810 = vsel %vm678, %v448, %v617
    %v813 = vsel %vm678, %v455, %v619
    %v816 = vsel %vm678, %v587, %v621
    %v818 = vsel %vm707, %v771, %v623
    %v820 = vsel %vm707, %v774, %v625
    %v822 = vsel %vm707, %v777, %v627
    %v824 = vsel %vm707, %v780, %v629
    %v826 = vsel %vm707, %v783, %v631
    %v828 = vsel %vm707, %v786, %v633
    %v830 = vsel %vm707, %v789, %v635
    %v831 = vsel %vm707, %v792, %v633
    %v833 = vsel %vm707, %v795, %v637
    %v835 = vsel %vm707, %v798, %v639
    %v837 = vsel %vm707, %v801, %v641
    %v839 = vsel %vm707, %v804, %v643
    %v841 = vsel %vm707, %v807, %v645
    %v843 = vsel %vm707, %v810, %v647
    %v845 = vsel %vm707, %v813, %v649
    %v846 = vsel %vm707, %v816, %v647
    %v848 = vsel %vm736, %v818, %v651
    %v850 = vsel %vm736, %v820, %v653
    %v852 = vsel %vm736, %v822, %v655
    %v854 = vsel %vm736, %v824, %v657
    %v856 = vsel %vm736, %v826, %v659
    %v858 = vsel %vm736, %v828, %v661
    %v860 = vsel %vm736, %v830, %v663
    %v861 = vsel %vm736, %v831, %v661
    %v863 = vsel %vm736, %v833, %v665
    %v865 = vsel %vm736, %v835, %v667
    %v867 = vsel %vm736, %v837, %v669
    %v869 = vsel %vm736, %v839, %v671
    %v871 = vsel %vm736, %v841, %v673
    %v873 = vsel %vm736, %v843, %v675
    %v875 = vsel %vm736, %v845, %v677
    %v876 = vsel %vm736, %v846, %v675
    %v879 = vsel %vm678, %v498, 0
    %v881 = vsel %vm678, %v500, 0
    %v883 = vsel %vm678, %v501, 0
    %v885 = vsel %vm678, %v502, 0
    %v887 = vsel %vm678, %v503, 0
    %v889 = vsel %vm678, %v504, 0
    %v891 = vsel %vm678, %v588, 0
    %v893 = vsel %vm678, %v505, 0
    %v895 = vsel %vm678, %v507, 0
    %v897 = vsel %vm678, %v508, 0
    %v899 = vsel %vm678, %v509, 0
    %v901 = vsel %vm678, %v510, 0
    %v903 = vsel %vm678, %v511, 0
    %v905 = vsel %vm678, %v589, 0
    %v952 = vunpack.c.l.b16 %v738
    %v953 = vunpack.c.l.b16 %v848
    %v954 = vunpack.c.l.b16 %v879
    %v955 = vunpack.c.l.b16 %v740
    %v956 = vunpack.c.l.b16 %v850
    %v957 = vunpack.c.l.b16 %v881
    %v958 = vunpack.c.l.b16 %v742
    %v959 = vunpack.c.l.b16 %v852
    %v960 = vunpack.c.l.b16 %v883
    %v961 = vunpack.c.l.b16 %v744
    %v962 = vunpack.c.l.b16 %v854
    %v963 = vunpack.c.l.b16 %v885
    %v964 = vunpack.c.l.b16 %v746
    %v965 = vunpack.c.l.b16 %v856
    %v966 = vunpack.c.l.b16 %v887
    %v967 = vunpack.c.l.b16 %v748
    %v968 = vunpack.c.l.b16 %v858
    %v969 = vunpack.c.l.b16 %v889
    %v970 = vunpack.c.l.b16 %v750
    %v971 = vunpack.c.l.b16 %v860
    %v972 = vunpack.c.l.b16 %v891
    %v973 = vunpack.c.l.b16 %v752
    %v974 = vunpack.c.l.b16 %v861
    %v975 = vunpack.c.l.b16 %v754
    %v976 = vunpack.c.l.b16 %v863
    %v977 = vunpack.c.l.b16 %v893
    %v978 = vunpack.c.l.b16 %v756
    %v979 = vunpack.c.l.b16 %v865
    %v980 = vunpack.c.l.b16 %v895
    %v981 = vunpack.c.l.b16 %v758
    %v982 = vunpack.c.l.b16 %v867
    %v983 = vunpack.c.l.b16 %v897
    %v984 = vunpack.c.l.b16 %v760
    %v985 = vunpack.c.l.b16 %v869
    %v986 = vunpack.c.l.b16 %v899
    %v987 = vunpack.c.l.b16 %v762
    %v988 = vunpack.c.l.b16 %v871
    %v989 = vunpack.c.l.b16 %v901
    %v990 = vunpack.c.l.b16 %v764
    %v991 = vunpack.c.l.b16 %v873
    %v992 = vunpack.c.l.b16 %v903
    %v993 = vunpack.c.l.b16 %v766
    %v994 = vunpack.c.l.b16 %v875
    %v995 = vunpack.c.l.b16 %v905
    %v996 = vunpack.c.l.b16 %v768
    %v997 = vunpack.c.l.b16 %v876
    %v999 = vlaneseq
    %v1000 = vshrl.u32 %v999, 7
    %v1001 = vsub.s32 0, %v1000
    %v1002 = vrot.slane %v143, %v1001
    %v1004 = vpack.c.b16 %v955, %v952
    %v1005 = vpack.c.b16 %v956, %v953
    %v1006 = vpack.c.b16 %v957, %v954
    %v1007 = vpack.c.b16 %v961, %v958
    %v1008 = vpack.c.b16 %v962, %v959
    %v1009 = vpack.c.b16 %v963, %v960
    %v1010 = vpack.c.b16 %v967, %v964
    %v1011 = vpack.c.b16 %v968, %v965
    %v1012 = vpack.c.b16 %v969, %v966
    %v1013 = vpack.c.b16 %v973, %v970
    %v1014 = vpack.c.b16 %v974, %v971
    %v1015 = vpack.c.b16 %v969, %v972
    %v1016 = vpack.c.b16 %v978, %v975
    %v1017 = vpack.c.b16 %v979, %v976
    %v1018 = vpack.c.b16 %v980, %v977
    %v1019 = vpack.c.b16 %v984, %v981
    %v1020 = vpack.c.b16 %v985, %v982
    %v1021 = vpack.c.b16 %v986, %v983
    %v1022 = vpack.c.b16 %v990, %v987
    %v1023 = vpack.c.b16 %v991, %v988
    %v1024 = vpack.c.b16 %v992, %v989
    %v1025 = vpack.c.b16 %v996, %v993
    %v1026 = vpack.c.b16 %v997, %v994
    %v1027 = vpack.c.b16 %v992, %v995
    %v1100 = vunpack.c.l.b16 %v94
    %v1101 = vunpack.c.l.b16 %v95
    %v1102 = vunpack.c.l.b16 %v96
    %v1103 = vunpack.c.l.b16 %v97
    %v1104 = vunpack.c.l.b16 %v98
    %v1105 = vunpack.c.l.b16 %v99
    %v1106 = vunpack.c.l.b16 %v100
    %v1107 = vunpack.c.l.b16 %v101
    %v1108 = vunpack.c.l.b16 %v102
    %v1109 = vunpack.c.l.b16 %v103
    %v1110 = vunpack.c.l.b16 %v104
    %v1111 = vunpack.c.l.b16 %v105
    %v1112 = vunpack.c.l.b16 %v106
    %v1113 = vunpack.c.l.b16 %v107
    %v1114 = vunpack.c.l.b16 %v108
    %v1115 = vunpack.c.l.b16 %v109
    %v1116 = vunpack.c.l.b16 %v110
    %v1117 = vunpack.c.l.b16 %v111
    %v1118 = vunpack.c.l.b16 %v112
    %v1119 = vunpack.c.l.b16 %v113
    %v1120 = vunpack.c.l.b16 %v114
    %v1121 = vunpack.c.l.b16 %v115
    %v1122 = vunpack.c.l.b16 %v116
    %v1123 = vunpack.c.l.b16 %v117
    %v1124 = vunpack.c.l.b16 %v118
    %v1125 = vunpack.c.l.b16 %v119
    %v1126 = vunpack.c.l.b16 %v120
    %v1127 = vunpack.c.l.b16 %v121
    %v1128 = vunpack.c.l.b16 %v122
    %v1129 = vunpack.c.l.b16 %v123
    %v1130 = vunpack.c.l.b16 %v124
    %v1131 = vunpack.c.l.b16 %v125
    %v1132 = vunpack.c.l.b16 %v126
    %v1133 = vunpack.c.l.b16 %v127
    %v1134 = vunpack.c.l.b16 %v128
    %v1135 = vunpack.c.l.b16 %v129
    %v1136 = vunpack.c.l.b16 %v130
    %v1137 = vunpack.c.l.b16 %v131
    %v1138 = vunpack.c.l.b16 %v132
    %v1139 = vunpack.c.l.b16 %v133
    %v1140 = vunpack.c.l.b16 %v134
    %v1141 = vunpack.c.l.b16 %v135
    %v1142 = vunpack.c.l.b16 %v136
    %v1143 = vunpack.c.l.b16 %v137
    %v1144 = vunpack.c.l.b16 %v138
    %v1145 = vunpack.c.l.b16 %v139
    %v1146 = vunpack.c.l.b16 %v140
    %v1147 = vunpack.c.l.b16 %v141
    %v1148 = vpack.c.b16 %v1101, %v1100
    %v1149 = vpack.c.b16 %v1103, %v1102
    %v1150 = vpack.c.b16 %v1105, %v1104
    %v1151 = vpack.c.b16 %v1107, %v1106
    %v1152 = vpack.c.b16 %v1109, %v1108
    %v1153 = vpack.c.b16 %v1111, %v1110
    %v1154 = vpack.c.b16 %v1113, %v1112
    %v1155 = vpack.c.b16 %v1115, %v1114
    %v1156 = vpack.c.b16 %v1117, %v1116
    %v1157 = vpack.c.b16 %v1119, %v1118
    %v1158 = vpack.c.b16 %v1121, %v1120
    %v1159 = vpack.c.b16 %v1123, %v1122
    %v1160 = vpack.c.b16 %v1125, %v1124
    %v1161 = vpack.c.b16 %v1127, %v1126
    %v1162 = vpack.c.b16 %v1129, %v1128
    %v1163 = vpack.c.b16 %v1131, %v1130
    %v1164 = vpack.c.b16 %v1133, %v1132
    %v1165 = vpack.c.b16 %v1135, %v1134
    %v1166 = vpack.c.b16 %v1137, %v1136
    %v1167 = vpack.c.b16 %v1139, %v1138
    %v1168 = vpack.c.b16 %v1141, %v1140
    %v1169 = vpack.c.b16 %v1143, %v1142
    %v1170 = vpack.c.b16 %v1145, %v1144
    %v1171 = vpack.c.b16 %v1147, %v1146
    %1196 = vmatprep.subr.bf16.mxu0 0
    %1197 = vmatpush1.bf16.msra.mxu0 %v1148
    %1198 = vmatprep.subr.bf16.mxu0 0
    %1199 = vmatpush1.bf16.msra.mxu0 %v1149
    %1200 = vmatprep.subr.bf16.mxu0 0
    %1201 = vmatpush1.bf16.msra.mxu0 %v1150
    %1202 = vmatprep.subr.bf16.mxu0 0
    %1203 = vmatpush1.bf16.msra.mxu0 %v1151
    %1204 = vmatprep.subr.bf16.mxu0 0
    %1205 = vmatpush1.bf16.msra.mxu0 %v1152
    %1206 = vmatprep.subr.bf16.mxu0 0
    %1207 = vmatpush1.bf16.msra.mxu0 %v1153
    %1208 = vmatprep.subr.bf16.mxu0 0
    %1209 = vmatpush1.bf16.msra.mxu0 %v1154
    %1210 = vmatprep.subr.bf16.mxu0 0
    %1211 = vmatpush1.bf16.msra.mxu0 %v1155
    %1212 = vmatprep.subr.bf16.mxu0 0
    %1213 = vmatpush1.bf16.msra.mxu0 %v1156
    %1214 = vmatprep.subr.bf16.mxu0 0
    %1215 = vmatpush1.bf16.msra.mxu0 %v1157
    %1216 = vmatprep.subr.bf16.mxu0 0
    %1217 = vmatpush1.bf16.msra.mxu0 %v1158
    %1218 = vmatprep.subr.bf16.mxu0 0
    %1219 = vmatpush1.bf16.msra.mxu0 %v1159
    %1220 = vmatprep.subr.bf16.mxu0 0
    %1221 = vmatpush1.bf16.msra.mxu0 %v1160
    %1222 = vmatprep.subr.bf16.mxu0 0
    %1223 = vmatpush1.bf16.msra.mxu0 %v1161
    %1224 = vmatprep.subr.bf16.mxu0 0
    %1225 = vmatpush1.bf16.msra.mxu0 %v1162
    %1226 = vmatprep.subr.bf16.mxu0 0
    %1227 = vmatpush1.bf16.msra.mxu0 %v1163
    %1228 = vmatprep.mubr.bf16.mxu0 %v1005
    %1229 = vmatmul.mubr.bf16.gmra.mrb[0].mxu0 %v1004
    %v1230 = vpop.f32.mrb[0].mxu0
    %v1231 = vadd.f32 %v1002, %v1230
    %v1232 = vpop.f32.mrb[0].mxu0
    %v1233 = vpop.f32.mrb[0].mxu0
    %v1234 = vadd.f32 %v1002, %v1233
    %v1235 = vpop.f32.mrb[0].mxu0
    %1236 = vmatprep.mubr.bf16.mxu0 %v1008
    %1237 = vmatmul.mubr.bf16.gmra.mrb[0].mxu0 %v1007
    %v1238 = vpop.f32.mrb[0].mxu0
    %v1239 = vadd.f32 %v1002, %v1238
    %v1240 = vpop.f32.mrb[0].mxu0
    %v1241 = vpop.f32.mrb[0].mxu0
    %v1242 = vadd.f32 %v1002, %v1241
    %v1243 = vpop.f32.mrb[0].mxu0
    %1244 = vmatprep.mubr.bf16.mxu0 %v1011
    %1245 = vmatmul.mubr.bf16.gmra.mrb[0].mxu0 %v1010
    %v1246 = vpop.f32.mrb[0].mxu0
    %v1247 = vadd.f32 %v1002, %v1246
    %v1248 = vpop.f32.mrb[0].mxu0
    %v1249 = vpop.f32.mrb[0].mxu0
    %v1250 = vadd.f32 %v1002, %v1249
    %v1251 = vpop.f32.mrb[0].mxu0
    %1252 = vmatprep.mubr.bf16.mxu0 %v1014
    %1253 = vmatmul.mubr.bf16.gmra.mrb[0].mxu0 %v1013
    %v1254 = vpop.f32.mrb[0].mxu0
    %v1255 = vadd.f32 %v1002, %v1254
    %v1256 = vpop.f32.mrb[0].mxu0
    %v1257 = vpop.f32.mrb[0].mxu0
    %v1258 = vadd.f32 %v1002, %v1257
    %v1259 = vpop.f32.mrb[0].mxu0
    %1260 = vmatprep.mubr.bf16.mxu0 %v1017
    %1261 = vmatmul.mubr.bf16.gmra.mrb[0].mxu0 %v1016
    %v1262 = vpop.f32.mrb[0].mxu0
    %v1263 = vadd.f32 %v1002, %v1262
    %v1264 = vpop.f32.mrb[0].mxu0
    %v1265 = vpop.f32.mrb[0].mxu0
    %v1266 = vadd.f32 %v1002, %v1265
    %v1267 = vpop.f32.mrb[0].mxu0
    %1268 = vmatprep.mubr.bf16.mxu0 %v1020
    %1269 = vmatmul.mubr.bf16.gmra.mrb[0].mxu0 %v1019
    %v1270 = vpop.f32.mrb[0].mxu0
    %v1271 = vadd.f32 %v1002, %v1270
    %v1272 = vpop.f32.mrb[0].mxu0
    %v1273 = vpop.f32.mrb[0].mxu0
    %v1274 = vadd.f32 %v1002, %v1273
    %v1275 = vpop.f32.mrb[0].mxu0
    %1276 = vmatprep.mubr.bf16.mxu0 %v1023
    %1277 = vmatmul.mubr.bf16.gmra.mrb[0].mxu0 %v1022
    %v1278 = vpop.f32.mrb[0].mxu0
    %v1279 = vadd.f32 %v1002, %v1278
    %v1280 = vpop.f32.mrb[0].mxu0
    %v1281 = vpop.f32.mrb[0].mxu0
    %v1282 = vadd.f32 %v1002, %v1281
    %v1283 = vpop.f32.mrb[0].mxu0
    %1284 = vmatprep.mubr.bf16.mxu0 %v1026
    %1285 = vmatmul.mubr.bf16.gmra.mrb[0].mxu0 %v1025
    %v1286 = vpop.f32.mrb[0].mxu0
    %v1287 = vadd.f32 %v1002, %v1286
    %v1288 = vpop.f32.mrb[0].mxu0
    %v1289 = vpop.f32.mrb[0].mxu0
    %v1290 = vadd.f32 %v1002, %v1289
    %v1291 = vpop.f32.mrb[0].mxu0
    %1292 = vdwg.mxu0
    %1293 = vmatprep.subr.bf16.mxu0 0
    %1294 = vmatpush1.bf16.msra.mxu0 %v1164
    %1295 = vmatprep.subr.bf16.mxu0 0
    %1296 = vmatpush1.bf16.msra.mxu0 %v1165
    %1297 = vmatprep.subr.bf16.mxu0 0
    %1298 = vmatpush1.bf16.msra.mxu0 %v1166
    %1299 = vmatprep.subr.bf16.mxu0 0
    %1300 = vmatpush1.bf16.msra.mxu0 %v1167
    %1301 = vmatprep.subr.bf16.mxu0 0
    %1302 = vmatpush1.bf16.msra.mxu0 %v1168
    %1303 = vmatprep.subr.bf16.mxu0 0
    %1304 = vmatpush1.bf16.msra.mxu0 %v1169
    %1305 = vmatprep.subr.bf16.mxu0 0
    %1306 = vmatpush1.bf16.msra.mxu0 %v1170
    %1307 = vmatprep.subr.bf16.mxu0 0
    %1308 = vmatpush1.bf16.msra.mxu0 %v1171
    %1309 = vmatprep.subr.bf16.mxu0 0
    %1310 = vmatpush1.bf16.msra.mxu0 0
    %1311 = vmatprep.subr.bf16.mxu0 0
    %1312 = vmatpush1.bf16.msra.mxu0 0
    %1313 = vmatprep.subr.bf16.mxu0 0
    %1314 = vmatpush1.bf16.msra.mxu0 0
    %1315 = vmatprep.subr.bf16.mxu0 0
    %1316 = vmatpush1.bf16.msra.mxu0 0
    %1317 = vmatprep.subr.bf16.mxu0 0
    %1318 = vmatpush1.bf16.msra.mxu0 0
    %1319 = vmatprep.subr.bf16.mxu0 0
    %1320 = vmatpush1.bf16.msra.mxu0 0
    %1321 = vmatprep.subr.bf16.mxu0 0
    %1322 = vmatpush1.bf16.msra.mxu0 0
    %1323 = vmatprep.subr.bf16.mxu0 0
    %1324 = vmatpush1.bf16.msra.mxu0 0
    %1325 = vmatprep.mubr.bf16.mxu0 0
    %1326 = vmatmul.mubr.bf16.gmra.mrb[0].mxu0 %v1006
    %v1327 = vpop.f32.mrb[0].mxu0
    %v1328 = vadd.f32 %v1231, %v1327
    %v1329 = vpop.f32.mrb[0].mxu0
    %v1330 = vpop.f32.mrb[0].mxu0
    %v1331 = vadd.f32 %v1234, %v1330
    %v1332 = vpop.f32.mrb[0].mxu0
    %1333 = vmatprep.mubr.bf16.mxu0 0
    %1334 = vmatmul.mubr.bf16.gmra.mrb[0].mxu0 %v1009
    %v1335 = vpop.f32.mrb[0].mxu0
    %v1336 = vadd.f32 %v1239, %v1335
    %v1337 = vpop.f32.mrb[0].mxu0
    %v1338 = vpop.f32.mrb[0].mxu0
    %v1339 = vadd.f32 %v1242, %v1338
    %v1340 = vpop.f32.mrb[0].mxu0
    %1341 = vmatprep.mubr.bf16.mxu0 0
    %1342 = vmatmul.mubr.bf16.gmra.mrb[0].mxu0 %v1012
    %v1343 = vpop.f32.mrb[0].mxu0
    %v1344 = vadd.f32 %v1247, %v1343
    %v1345 = vpop.f32.mrb[0].mxu0
    %v1346 = vpop.f32.mrb[0].mxu0
    %v1347 = vadd.f32 %v1250, %v1346
    %v1348 = vpop.f32.mrb[0].mxu0
    %1349 = vmatprep.mubr.bf16.mxu0 0
    %1350 = vmatmul.mubr.bf16.gmra.mrb[0].mxu0 %v1015
    %v1351 = vpop.f32.mrb[0].mxu0
    %v1352 = vadd.f32 %v1255, %v1351
    %v1353 = vpop.f32.mrb[0].mxu0
    %v1354 = vpop.f32.mrb[0].mxu0
    %v1355 = vadd.f32 %v1258, %v1354
    %v1356 = vpop.f32.mrb[0].mxu0
    %1357 = vmatprep.mubr.bf16.mxu0 0
    %1358 = vmatmul.mubr.bf16.gmra.mrb[0].mxu0 %v1018
    %v1359 = vpop.f32.mrb[0].mxu0
    %v1360 = vadd.f32 %v1263, %v1359
    %v1361 = vpop.f32.mrb[0].mxu0
    %v1362 = vpop.f32.mrb[0].mxu0
    %v1363 = vadd.f32 %v1266, %v1362
    %v1364 = vpop.f32.mrb[0].mxu0
    %1365 = vmatprep.mubr.bf16.mxu0 0
    %1366 = vmatmul.mubr.bf16.gmra.mrb[0].mxu0 %v1021
    %v1367 = vpop.f32.mrb[0].mxu0
    %v1368 = vadd.f32 %v1271, %v1367
    %v1369 = vpop.f32.mrb[0].mxu0
    %v1370 = vpop.f32.mrb[0].mxu0
    %v1371 = vadd.f32 %v1274, %v1370
    %v1372 = vpop.f32.mrb[0].mxu0
    %1373 = vmatprep.mubr.bf16.mxu0 0
    %1374 = vmatmul.mubr.bf16.gmra.mrb[0].mxu0 %v1024
    %v1375 = vpop.f32.mrb[0].mxu0
    %v1376 = vadd.f32 %v1279, %v1375
    %v1377 = vpop.f32.mrb[0].mxu0
    %v1378 = vpop.f32.mrb[0].mxu0
    %v1379 = vadd.f32 %v1282, %v1378
    %v1380 = vpop.f32.mrb[0].mxu0
    %1381 = vmatprep.mubr.bf16.mxu0 0
    %1382 = vmatmul.mubr.bf16.gmra.mrb[0].mxu0 %v1027
    %v1383 = vpop.f32.mrb[0].mxu0
    %v1384 = vadd.f32 %v1287, %v1383
    %v1385 = vpop.f32.mrb[0].mxu0
    %v1386 = vpop.f32.mrb[0].mxu0
    %v1387 = vadd.f32 %v1290, %v1386
    %v1388 = vpop.f32.mrb[0].mxu0
    %1389 = vdwg.mxu0
    %v1390 = vadd.f32 %v1328, %v1331
    %v1391 = vadd.f32 %v1390, %v1336
    %v1392 = vadd.f32 %v1391, %v1339
    %v1393 = vadd.f32 %v1392, %v1344
    %v1394 = vadd.f32 %v1393, %v1347
    %v1395 = vadd.f32 %v1394, %v1352
    %v1396 = vadd.f32 %v1395, %v1355
    %v1397 = vrot.slane %v1396, 4
    %v1398 = vadd.f32 %v1396, %v1397
    %v1399 = vrot.slane %v1398, 2
    %v1400 = vadd.f32 %v1398, %v1399
    %v1401 = vrot.slane %v1400, 1
    %v1402 = vadd.f32 %v1400, %v1401
    %v1403 = vadd.f32 %v1360, %v1363
    %v1404 = vadd.f32 %v1403, %v1368
    %v1405 = vadd.f32 %v1404, %v1371
    %v1406 = vadd.f32 %v1405, %v1376
    %v1407 = vadd.f32 %v1406, %v1379
    %v1408 = vadd.f32 %v1407, %v1384
    %v1409 = vadd.f32 %v1408, %v1387
    %v1410 = vrot.slane %v1409, 4
    %v1411 = vadd.f32 %v1409, %v1410
    %v1412 = vrot.slane %v1411, 2
    %v1413 = vadd.f32 %v1411, %v1412
    %v1414 = vrot.slane %v1413, 1
    %v1415 = vadd.f32 %v1413, %v1414
    %v1416 = vrcp.pop 64.0
    %v1417 = vmul.f32 %v1402, %v1416
    %v1418 = vmul.f32 %v1415, %v1416
    %v1419 = vsub.f32 %v1328, %v1417
    %v1420 = vsub.f32 %v1331, %v1417
    %v1421 = vsub.f32 %v1336, %v1417
    %v1422 = vsub.f32 %v1339, %v1417
    %v1423 = vsub.f32 %v1344, %v1417
    %v1424 = vsub.f32 %v1347, %v1417
    %v1425 = vsub.f32 %v1352, %v1417
    %v1426 = vsub.f32 %v1355, %v1417
    %v1427 = vsub.f32 %v1360, %v1418
    %v1428 = vsub.f32 %v1363, %v1418
    %v1429 = vsub.f32 %v1368, %v1418
    %v1430 = vsub.f32 %v1371, %v1418
    %v1431 = vsub.f32 %v1376, %v1418
    %v1432 = vsub.f32 %v1379, %v1418
    %v1433 = vsub.f32 %v1384, %v1418
    %v1434 = vsub.f32 %v1387, %v1418
    %v1435 = vmul.f32 %v1419, %v1419
    %v1436 = vmul.f32 %v1420, %v1420
    %v1437 = vmul.f32 %v1421, %v1421
    %v1438 = vmul.f32 %v1422, %v1422
    %v1439 = vmul.f32 %v1423, %v1423
    %v1440 = vmul.f32 %v1424, %v1424
    %v1441 = vmul.f32 %v1425, %v1425
    %v1442 = vmul.f32 %v1426, %v1426
    %v1443 = vmul.f32 %v1427, %v1427
    %v1444 = vmul.f32 %v1428, %v1428
    %v1445 = vmul.f32 %v1429, %v1429
    %v1446 = vmul.f32 %v1430, %v1430
    %v1447 = vmul.f32 %v1431, %v1431
    %v1448 = vmul.f32 %v1432, %v1432
    %v1449 = vmul.f32 %v1433, %v1433
    %v1450 = vmul.f32 %v1434, %v1434
    %v1451 = vadd.f32 %v1435, %v1436
    %v1452 = vadd.f32 %v1451, %v1437
    %v1453 = vadd.f32 %v1452, %v1438
    %v1454 = vadd.f32 %v1453, %v1439
    %v1455 = vadd.f32 %v1454, %v1440
    %v1456 = vadd.f32 %v1455, %v1441
    %v1457 = vadd.f32 %v1456, %v1442
    %v1458 = vrot.slane %v1457, 4
    %v1459 = vadd.f32 %v1457, %v1458
    %v1460 = vrot.slane %v1459, 2
    %v1461 = vadd.f32 %v1459, %v1460
    %v1462 = vrot.slane %v1461, 1
    %v1463 = vadd.f32 %v1461, %v1462
    %v1464 = vadd.f32 %v1443, %v1444
    %v1465 = vadd.f32 %v1464, %v1445
    %v1466 = vadd.f32 %v1465, %v1446
    %v1467 = vadd.f32 %v1466, %v1447
    %v1468 = vadd.f32 %v1467, %v1448
    %v1469 = vadd.f32 %v1468, %v1449
    %v1470 = vadd.f32 %v1469, %v1450
    %v1471 = vrot.slane %v1470, 4
    %v1472 = vadd.f32 %v1470, %v1471
    %v1473 = vrot.slane %v1472, 2
    %v1474 = vadd.f32 %v1472, %v1473
    %v1475 = vrot.slane %v1474, 1
    %v1476 = vadd.f32 %v1474, %v1475
    %v1477 = vmul.f32 %v1463, %v1416
    %v1478 = vmul.f32 %v1476, %v1416
    %v1479 = vadd.f32 %v1477, 1e-05
    %v1480 = vadd.f32 %v1478, 1e-05
    %v1481 = vrsqrt.pop %v1479
    %v1482 = vrsqrt.pop %v1480
    %v1483 = vmul.f32 %v1419, %v1481
    %v1484 = vmul.f32 %v1420, %v1481
    %v1485 = vmul.f32 %v1421, %v1481
    %v1486 = vmul.f32 %v1422, %v1481
    %v1487 = vmul.f32 %v1423, %v1481
    %v1488 = vmul.f32 %v1424, %v1481
    %v1489 = vmul.f32 %v1425, %v1481
    %v1490 = vmul.f32 %v1426, %v1481
    %v1491 = vmul.f32 %v1427, %v1482
    %v1492 = vmul.f32 %v1428, %v1482
    %v1493 = vmul.f32 %v1429, %v1482
    %v1494 = vmul.f32 %v1430, %v1482
    %v1495 = vmul.f32 %v1431, %v1482
    %v1496 = vmul.f32 %v1432, %v1482
    %v1497 = vmul.f32 %v1433, %v1482
    %v1498 = vmul.f32 %v1434, %v1482
    %v1499 = vmax.f32 %v1483, 0.0
    %v1500 = vmax.f32 %v1484, 0.0
    %v1501 = vmax.f32 %v1485, 0.0
    %v1502 = vmax.f32 %v1486, 0.0
    %v1503 = vmax.f32 %v1487, 0.0
    %v1504 = vmax.f32 %v1488, 0.0
    %v1505 = vmax.f32 %v1489, 0.0
    %v1506 = vmax.f32 %v1490, 0.0
    %v1507 = vmax.f32 %v1491, 0.0
    %v1508 = vmax.f32 %v1492, 0.0
    %v1509 = vmax.f32 %v1493, 0.0
    %v1510 = vmax.f32 %v1494, 0.0
    %v1511 = vmax.f32 %v1495, 0.0
    %v1512 = vmax.f32 %v1496, 0.0
    %v1513 = vmax.f32 %v1497, 0.0
    %v1514 = vmax.f32 %v1498, 0.0
    %v1515 = vpack.c.bf16 %v1499, %v1499
    %v1516 = vpack.c.bf16 %v1500, %v1500
    %v1517 = vpack.c.bf16 %v1501, %v1501
    %v1518 = vpack.c.bf16 %v1502, %v1502
    %v1519 = vpack.c.bf16 %v1503, %v1503
    %v1520 = vpack.c.bf16 %v1504, %v1504
    %v1521 = vpack.c.bf16 %v1505, %v1505
    %v1522 = vpack.c.bf16 %v1506, %v1506
    %v1523 = vpack.c.bf16 %v1507, %v1507
    %v1524 = vpack.c.bf16 %v1508, %v1508
    %v1525 = vpack.c.bf16 %v1509, %v1509
    %v1526 = vpack.c.bf16 %v1510, %v1510
    %v1527 = vpack.c.bf16 %v1511, %v1511
    %v1528 = vpack.c.bf16 %v1512, %v1512
    %v1529 = vpack.c.bf16 %v1513, %v1513
    %v1530 = vpack.c.bf16 %v1514, %v1514
    %s1531 = smul.addr %s91, 4
    %s1532 = scalar_lea.vmem %s3, %s1531
    %v1533 = vld [vmem:[%s1532] sm:$0xf]
    %v1534 = vld [vmem:[%s1532 + $0x4] sm:$0xf]
    %v1535 = vld [vmem:[%s1532 + $0x8] sm:$0xf]
    %v1536 = vld [vmem:[%s1532 + $0xc] sm:$0xf]
    %v1537 = vld [vmem:[%s1532 + $0x10] sm:$0xf]
    %v1538 = vld [vmem:[%s1532 + $0x14] sm:$0xf]
    %v1539 = vld [vmem:[%s1532 + $0x18] sm:$0xf]
    %v1540 = vld [vmem:[%s1532 + $0x1c] sm:$0xf]
    %v1541 = vld [vmem:[%s1532 + $0x20] sm:$0xf]
    %v1542 = vld [vmem:[%s1532 + $0x24] sm:$0xf]
    %v1543 = vld [vmem:[%s1532 + $0x28] sm:$0xf]
    %v1544 = vld [vmem:[%s1532 + $0x2c] sm:$0xf]
    %v1545 = vld [vmem:[%s1532 + $0x30] sm:$0xf]
    %v1546 = vld [vmem:[%s1532 + $0x34] sm:$0xf]
    %v1547 = vld [vmem:[%s1532 + $0x38] sm:$0xf]
    %v1548 = vld [vmem:[%s1532 + $0x3c] sm:$0xf]
    %v1549 = vld [vmem:[%s1532 + $0x40] sm:$0xf]
    %v1550 = vld [vmem:[%s1532 + $0x44] sm:$0xf]
    %v1551 = vld [vmem:[%s1532 + $0x48] sm:$0xf]
    %v1552 = vld [vmem:[%s1532 + $0x4c] sm:$0xf]
    %v1553 = vld [vmem:[%s1532 + $0x50] sm:$0xf]
    %v1554 = vld [vmem:[%s1532 + $0x54] sm:$0xf]
    %v1555 = vld [vmem:[%s1532 + $0x58] sm:$0xf]
    %v1556 = vld [vmem:[%s1532 + $0x5c] sm:$0xf]
    %v1557 = vld [vmem:[%s1532 + $0x60] sm:$0xf]
    %v1558 = vld [vmem:[%s1532 + $0x64] sm:$0xf]
    %v1559 = vld [vmem:[%s1532 + $0x68] sm:$0xf]
    %v1560 = vld [vmem:[%s1532 + $0x6c] sm:$0xf]
    %v1561 = vld [vmem:[%s1532 + $0x70] sm:$0xf]
    %v1562 = vld [vmem:[%s1532 + $0x74] sm:$0xf]
    %v1563 = vld [vmem:[%s1532 + $0x78] sm:$0xf]
    %v1564 = vld [vmem:[%s1532 + $0x7c] sm:$0xf]
    %v1565 = vld [vmem:[%s1532 + $0x80] sm:$0xf]
    %v1566 = vld [vmem:[%s1532 + $0x84] sm:$0xf]
    %v1567 = vld [vmem:[%s1532 + $0x88] sm:$0xf]
    %v1568 = vld [vmem:[%s1532 + $0x8c] sm:$0xf]
    %v1569 = vld [vmem:[%s1532 + $0x90] sm:$0xf]
    %v1570 = vld [vmem:[%s1532 + $0x94] sm:$0xf]
    %v1571 = vld [vmem:[%s1532 + $0x98] sm:$0xf]
    %v1572 = vld [vmem:[%s1532 + $0x9c] sm:$0xf]
    %v1573 = vld [vmem:[%s1532 + $0xa0] sm:$0xf]
    %v1574 = vld [vmem:[%s1532 + $0xa4] sm:$0xf]
    %v1575 = vld [vmem:[%s1532 + $0xa8] sm:$0xf]
    %v1576 = vld [vmem:[%s1532 + $0xac] sm:$0xf]
    %v1577 = vld [vmem:[%s1532 + $0xb0] sm:$0xf]
    %v1578 = vld [vmem:[%s1532 + $0xb4] sm:$0xf]
    %v1579 = vld [vmem:[%s1532 + $0xb8] sm:$0xf]
    %v1580 = vld [vmem:[%s1532 + $0xbc] sm:$0xf]
    %s1581 = scalar_lea.vmem %s4, %s54
    %v1582 = vld [vmem:[%s1581] sm:$0x1]
    %v1584 = vshrl.u32 %v1516, 16
    %v1587 = vshrl.u32 %v1515, 16
    %v1590 = vshrl.u32 %v1517, 16
    %v1593 = vshrl.u32 %v1518, 16
    %v1596 = vshrl.u32 %v1519, 16
    %v1599 = vshrl.u32 %v1520, 16
    %v1602 = vshrl.u32 %v1521, 16
    %v1605 = vshrl.u32 %v1522, 16
    %v1608 = vshrl.u32 %v1524, 16
    %v1611 = vshrl.u32 %v1523, 16
    %v1614 = vshrl.u32 %v1525, 16
    %v1617 = vshrl.u32 %v1526, 16
    %v1620 = vshrl.u32 %v1527, 16
    %v1623 = vshrl.u32 %v1528, 16
    %v1626 = vshrl.u32 %v1529, 16
    %v1629 = vshrl.u32 %v1530, 16
    %v1647 = vrot.slane %v1584, 7
    %v1648 = vshll.u32 %v1516, 16
    %v1650 = vor.u32 %v1647, %v1648
    %v1651 = vrot.slane %v1587, 7
    %v1652 = vshll.u32 %v1515, 16
    %v1654 = vor.u32 %v1651, %v1652
    %v1655 = vrot.slane %v1590, 7
    %v1656 = vshll.u32 %v1517, 16
    %v1658 = vor.u32 %v1655, %v1656
    %v1659 = vrot.slane %v1593, 7
    %v1660 = vshll.u32 %v1518, 16
    %v1662 = vor.u32 %v1659, %v1660
    %v1663 = vrot.slane %v1596, 7
    %v1664 = vshll.u32 %v1519, 16
    %v1666 = vor.u32 %v1663, %v1664
    %v1667 = vrot.slane %v1599, 7
    %v1668 = vshll.u32 %v1520, 16
    %v1670 = vor.u32 %v1667, %v1668
    %v1671 = vrot.slane %v1602, 7
    %v1672 = vshll.u32 %v1521, 16
    %v1674 = vor.u32 %v1671, %v1672
    %v1675 = vrot.slane %v1605, 7
    %v1676 = vshll.u32 %v1522, 16
    %v1678 = vor.u32 %v1675, %v1676
    %v1679 = vrot.slane %v1608, 7
    %v1680 = vshll.u32 %v1524, 16
    %v1682 = vor.u32 %v1679, %v1680
    %v1683 = vrot.slane %v1611, 7
    %v1684 = vshll.u32 %v1523, 16
    %v1686 = vor.u32 %v1683, %v1684
    %v1687 = vrot.slane %v1614, 7
    %v1688 = vshll.u32 %v1525, 16
    %v1690 = vor.u32 %v1687, %v1688
    %v1691 = vrot.slane %v1617, 7
    %v1692 = vshll.u32 %v1526, 16
    %v1694 = vor.u32 %v1691, %v1692
    %v1695 = vrot.slane %v1620, 7
    %v1696 = vshll.u32 %v1527, 16
    %v1698 = vor.u32 %v1695, %v1696
    %v1699 = vrot.slane %v1623, 7
    %v1700 = vshll.u32 %v1528, 16
    %v1702 = vor.u32 %v1699, %v1700
    %v1703 = vrot.slane %v1626, 7
    %v1704 = vshll.u32 %v1529, 16
    %v1706 = vor.u32 %v1703, %v1704
    %v1707 = vrot.slane %v1629, 7
    %v1708 = vshll.u32 %v1530, 16
    %v1710 = vor.u32 %v1707, %v1708
    %v1727 = vrot.slane %v1648, 7
    %v1728 = vrot.slane %v1652, 7
    %v1729 = vrot.slane %v1656, 7
    %v1730 = vrot.slane %v1660, 7
    %v1731 = vrot.slane %v1664, 7
    %v1732 = vrot.slane %v1668, 7
    %v1733 = vrot.slane %v1672, 7
    %v1734 = vrot.slane %v1676, 7
    %v1735 = vrot.slane %v1680, 7
    %v1736 = vrot.slane %v1684, 7
    %v1737 = vrot.slane %v1688, 7
    %v1738 = vrot.slane %v1692, 7
    %v1739 = vrot.slane %v1696, 7
    %v1740 = vrot.slane %v1700, 7
    %v1741 = vrot.slane %v1704, 7
    %v1742 = vrot.slane %v1708, 7
    %v1759 = vsel %vm322, %v1584, %v1650
    %v1760 = vsel %vm322, %v1587, %v1654
    %v1761 = vsel %vm322, %v1590, %v1658
    %v1762 = vsel %vm322, %v1593, %v1662
    %v1763 = vsel %vm322, %v1596, %v1666
    %v1764 = vsel %vm322, %v1599, %v1670
    %v1765 = vsel %vm322, %v1602, %v1674
    %v1766 = vsel %vm322, %v1605, %v1678
    %v1767 = vsel %vm322, %v1608, %v1682
    %v1768 = vsel %vm322, %v1611, %v1686
    %v1769 = vsel %vm322, %v1614, %v1690
    %v1770 = vsel %vm322, %v1617, %v1694
    %v1771 = vsel %vm322, %v1620, %v1698
    %v1772 = vsel %vm322, %v1623, %v1702
    %v1773 = vsel %vm322, %v1626, %v1706
    %v1774 = vsel %vm322, %v1629, %v1710
    %v1775 = vsel %vm341, %v1759, %v1727
    %v1776 = vsel %vm341, %v1760, %v1728
    %v1777 = vsel %vm341, %v1761, %v1729
    %v1778 = vsel %vm341, %v1762, %v1730
    %v1779 = vsel %vm341, %v1763, %v1731
    %v1780 = vsel %vm341, %v1764, %v1732
    %v1781 = vsel %vm341, %v1765, %v1733
    %v1782 = vsel %vm341, %v1766, %v1734
    %v1783 = vsel %vm341, %v1767, %v1735
    %v1784 = vsel %vm341, %v1768, %v1736
    %v1785 = vsel %vm341, %v1769, %v1737
    %v1786 = vsel %vm341, %v1770, %v1738
    %v1787 = vsel %vm341, %v1771, %v1739
    %v1788 = vsel %vm341, %v1772, %v1740
    %v1789 = vsel %vm341, %v1773, %v1741
    %v1790 = vsel %vm341, %v1774, %v1742
    %v1792 = vshrl.u32 %v1775, 16
    %v1794 = vshll.u32 %v1775, 16
    %v1796 = vrot.slane %v1794, 1
    %v1797 = vor.u32 %v1792, %v1796
    %v1799 = vshrl.u32 %v1776, 16
    %v1801 = vshll.u32 %v1776, 16
    %v1803 = vrot.slane %v1801, 1
    %v1804 = vor.u32 %v1799, %v1803
    %v1806 = vshrl.u32 %v1777, 16
    %v1808 = vshll.u32 %v1777, 16
    %v1810 = vrot.slane %v1808, 1
    %v1811 = vor.u32 %v1806, %v1810
    %v1813 = vshrl.u32 %v1778, 16
    %v1815 = vshll.u32 %v1778, 16
    %v1817 = vrot.slane %v1815, 1
    %v1818 = vor.u32 %v1813, %v1817
    %v1820 = vshrl.u32 %v1779, 16
    %v1822 = vshll.u32 %v1779, 16
    %v1824 = vrot.slane %v1822, 1
    %v1825 = vor.u32 %v1820, %v1824
    %v1827 = vshrl.u32 %v1780, 16
    %v1829 = vshll.u32 %v1780, 16
    %v1831 = vrot.slane %v1829, 1
    %v1832 = vor.u32 %v1827, %v1831
    %v1834 = vshrl.u32 %v1781, 16
    %v1836 = vshll.u32 %v1781, 16
    %v1838 = vrot.slane %v1836, 1
    %v1839 = vor.u32 %v1834, %v1838
    %v1841 = vshrl.u32 %v1783, 16
    %v1843 = vshll.u32 %v1783, 16
    %v1845 = vrot.slane %v1843, 1
    %v1846 = vor.u32 %v1841, %v1845
    %v1848 = vshrl.u32 %v1784, 16
    %v1850 = vshll.u32 %v1784, 16
    %v1852 = vrot.slane %v1850, 1
    %v1853 = vor.u32 %v1848, %v1852
    %v1855 = vshrl.u32 %v1785, 16
    %v1857 = vshll.u32 %v1785, 16
    %v1859 = vrot.slane %v1857, 1
    %v1860 = vor.u32 %v1855, %v1859
    %v1862 = vshrl.u32 %v1786, 16
    %v1864 = vshll.u32 %v1786, 16
    %v1866 = vrot.slane %v1864, 1
    %v1867 = vor.u32 %v1862, %v1866
    %v1869 = vshrl.u32 %v1787, 16
    %v1871 = vshll.u32 %v1787, 16
    %v1873 = vrot.slane %v1871, 1
    %v1874 = vor.u32 %v1869, %v1873
    %v1876 = vshrl.u32 %v1788, 16
    %v1878 = vshll.u32 %v1788, 16
    %v1880 = vrot.slane %v1878, 1
    %v1881 = vor.u32 %v1876, %v1880
    %v1883 = vshrl.u32 %v1789, 16
    %v1885 = vshll.u32 %v1789, 16
    %v1887 = vrot.slane %v1885, 1
    %v1888 = vor.u32 %v1883, %v1887
    %1889 = vrot.lane.b32.xlu0 %v1797, 32
    %v1890 = vpop.permute.xlu0 %1889
    %1891 = vrot.lane.b32.xlu0 %v1804, 32
    %v1892 = vpop.permute.xlu0 %1891
    %1893 = vrot.lane.b32.xlu0 %v1811, 32
    %v1894 = vpop.permute.xlu0 %1893
    %1895 = vrot.lane.b32.xlu0 %v1818, 32
    %v1896 = vpop.permute.xlu0 %1895
    %1897 = vrot.lane.b32.xlu0 %v1825, 32
    %v1898 = vpop.permute.xlu0 %1897
    %1899 = vrot.lane.b32.xlu0 %v1832, 32
    %v1900 = vpop.permute.xlu0 %1899
    %1901 = vrot.lane.b32.xlu0 %v1839, 32
    %v1902 = vpop.permute.xlu0 %1901
    %1903 = vrot.lane.b32.xlu0 %v1846, 32
    %v1904 = vpop.permute.xlu0 %1903
    %1905 = vrot.lane.b32.xlu0 %v1853, 32
    %v1906 = vpop.permute.xlu0 %1905
    %1907 = vrot.lane.b32.xlu0 %v1860, 32
    %v1908 = vpop.permute.xlu0 %1907
    %1909 = vrot.lane.b32.xlu0 %v1867, 32
    %v1910 = vpop.permute.xlu0 %1909
    %1911 = vrot.lane.b32.xlu0 %v1874, 32
    %v1912 = vpop.permute.xlu0 %1911
    %1913 = vrot.lane.b32.xlu0 %v1881, 32
    %v1914 = vpop.permute.xlu0 %1913
    %1915 = vrot.lane.b32.xlu0 %v1888, 32
    %v1916 = vpop.permute.xlu0 %1915
    %v1931 = vrot.slane %v1775, 1
    %v1932 = vrot.slane %v1776, 1
    %v1933 = vrot.slane %v1777, 1
    %v1934 = vrot.slane %v1778, 1
    %v1935 = vrot.slane %v1779, 1
    %v1936 = vrot.slane %v1780, 1
    %v1937 = vrot.slane %v1781, 1
    %v1938 = vrot.slane %v1783, 1
    %v1939 = vrot.slane %v1784, 1
    %v1940 = vrot.slane %v1785, 1
    %v1941 = vrot.slane %v1786, 1
    %v1942 = vrot.slane %v1787, 1
    %v1943 = vrot.slane %v1788, 1
    %v1944 = vrot.slane %v1789, 1
    %1945 = vrot.lane.b32.xlu0 %v1931, 64
    %v1946 = vpop.permute.xlu0 %1945
    %1947 = vrot.lane.b32.xlu0 %v1932, 64
    %v1948 = vpop.permute.xlu0 %1947
    %1949 = vrot.lane.b32.xlu0 %v1933, 64
    %v1950 = vpop.permute.xlu0 %1949
    %1951 = vrot.lane.b32.xlu0 %v1934, 64
    %v1952 = vpop.permute.xlu0 %1951
    %1953 = vrot.lane.b32.xlu0 %v1935, 64
    %v1954 = vpop.permute.xlu0 %1953
    %1955 = vrot.lane.b32.xlu0 %v1936, 64
    %v1956 = vpop.permute.xlu0 %1955
    %1957 = vrot.lane.b32.xlu0 %v1937, 64
    %v1958 = vpop.permute.xlu0 %1957
    %1959 = vrot.lane.b32.xlu0 %v1938, 64
    %v1960 = vpop.permute.xlu0 %1959
    %1961 = vrot.lane.b32.xlu0 %v1939, 64
    %v1962 = vpop.permute.xlu0 %1961
    %1963 = vrot.lane.b32.xlu0 %v1940, 64
    %v1964 = vpop.permute.xlu0 %1963
    %1965 = vrot.lane.b32.xlu0 %v1941, 64
    %v1966 = vpop.permute.xlu0 %1965
    %1967 = vrot.lane.b32.xlu0 %v1942, 64
    %v1968 = vpop.permute.xlu0 %1967
    %1969 = vrot.lane.b32.xlu0 %v1943, 64
    %v1970 = vpop.permute.xlu0 %1969
    %1971 = vrot.lane.b32.xlu0 %v1944, 64
    %v1972 = vpop.permute.xlu0 %1971
    %1975 = vrot.lane.b32.xlu0 %v1776, 96
    %v1976 = vpop.permute.xlu0 %1975
    %1977 = vrot.lane.b32.xlu0 %v1775, 96
    %v1978 = vpop.permute.xlu0 %1977
    %1979 = vrot.lane.b32.xlu0 %v1777, 96
    %v1980 = vpop.permute.xlu0 %1979
    %1981 = vrot.lane.b32.xlu0 %v1778, 96
    %v1982 = vpop.permute.xlu0 %1981
    %1983 = vrot.lane.b32.xlu0 %v1779, 96
    %v1984 = vpop.permute.xlu0 %1983
    %1985 = vrot.lane.b32.xlu0 %v1780, 96
    %v1986 = vpop.permute.xlu0 %1985
    %1987 = vrot.lane.b32.xlu0 %v1781, 96
    %v1988 = vpop.permute.xlu0 %1987
    %1989 = vrot.lane.b32.xlu0 %v1782, 96
    %v1990 = vpop.permute.xlu0 %1989
    %1991 = vrot.lane.b32.xlu0 %v1784, 96
    %v1992 = vpop.permute.xlu0 %1991
    %1993 = vrot.lane.b32.xlu0 %v1783, 96
    %v1994 = vpop.permute.xlu0 %1993
    %1995 = vrot.lane.b32.xlu0 %v1785, 96
    %v1996 = vpop.permute.xlu0 %1995
    %1997 = vrot.lane.b32.xlu0 %v1786, 96
    %v1998 = vpop.permute.xlu0 %1997
    %1999 = vrot.lane.b32.xlu0 %v1787, 96
    %v2000 = vpop.permute.xlu0 %1999
    %2001 = vrot.lane.b32.xlu0 %v1788, 96
    %v2002 = vpop.permute.xlu0 %2001
    %2003 = vrot.lane.b32.xlu0 %v1789, 96
    %v2004 = vpop.permute.xlu0 %2003
    %2005 = vrot.lane.b32.xlu0 %v1790, 96
    %v2006 = vpop.permute.xlu0 %2005
    %v2008 = vshrl.u32 %v1782, 16
    %v2010 = vshll.u32 %v1782, 16
    %v2012 = vrot.slane %v2010, 1
    %v2013 = vor.u32 %v2008, %v2012
    %v2015 = vshrl.u32 %v1790, 16
    %v2017 = vshll.u32 %v1790, 16
    %v2019 = vrot.slane %v2017, 1
    %v2020 = vor.u32 %v2015, %v2019
    %v2021 = vrot.slane %v1782, 1
    %v2022 = vrot.slane %v1790, 1
    %2023 = vrot.lane.b32.xlu0 %v1932, 32
    %v2024 = vpop.permute.xlu0 %2023
    %2025 = vrot.lane.b32.xlu0 %v1931, 32
    %v2026 = vpop.permute.xlu0 %2025
    %2027 = vrot.lane.b32.xlu0 %v1933, 32
    %v2028 = vpop.permute.xlu0 %2027
    %2029 = vrot.lane.b32.xlu0 %v1934, 32
    %v2030 = vpop.permute.xlu0 %2029
    %2031 = vrot.lane.b32.xlu0 %v1935, 32
    %v2032 = vpop.permute.xlu0 %2031
    %2033 = vrot.lane.b32.xlu0 %v1936, 32
    %v2034 = vpop.permute.xlu0 %2033
    %2035 = vrot.lane.b32.xlu0 %v1937, 32
    %v2036 = vpop.permute.xlu0 %2035
    %2037 = vrot.lane.b32.xlu0 %v2021, 32
    %v2038 = vpop.permute.xlu0 %2037
    %2039 = vrot.lane.b32.xlu0 %v1939, 32
    %v2040 = vpop.permute.xlu0 %2039
    %2041 = vrot.lane.b32.xlu0 %v1938, 32
    %v2042 = vpop.permute.xlu0 %2041
    %2043 = vrot.lane.b32.xlu0 %v1940, 32
    %v2044 = vpop.permute.xlu0 %2043
    %2045 = vrot.lane.b32.xlu0 %v1941, 32
    %v2046 = vpop.permute.xlu0 %2045
    %2047 = vrot.lane.b32.xlu0 %v1942, 32
    %v2048 = vpop.permute.xlu0 %2047
    %2049 = vrot.lane.b32.xlu0 %v1943, 32
    %v2050 = vpop.permute.xlu0 %2049
    %2051 = vrot.lane.b32.xlu0 %v1944, 32
    %v2052 = vpop.permute.xlu0 %2051
    %2053 = vrot.lane.b32.xlu0 %v2022, 32
    %v2054 = vpop.permute.xlu0 %2053
    %2055 = vrot.lane.b32.xlu0 %v1775, 64
    %v2056 = vpop.permute.xlu0 %2055
    %2057 = vrot.lane.b32.xlu0 %v1777, 64
    %v2058 = vpop.permute.xlu0 %2057
    %2059 = vrot.lane.b32.xlu0 %v1778, 64
    %v2060 = vpop.permute.xlu0 %2059
    %2061 = vrot.lane.b32.xlu0 %v1779, 64
    %v2062 = vpop.permute.xlu0 %2061
    %2063 = vrot.lane.b32.xlu0 %v1780, 64
    %v2064 = vpop.permute.xlu0 %2063
    %2065 = vrot.lane.b32.xlu0 %v1781, 64
    %v2066 = vpop.permute.xlu0 %2065
    %2067 = vrot.lane.b32.xlu0 %v1782, 64
    %v2068 = vpop.permute.xlu0 %2067
    %2069 = vrot.lane.b32.xlu0 %v1783, 64
    %v2070 = vpop.permute.xlu0 %2069
    %2071 = vrot.lane.b32.xlu0 %v1785, 64
    %v2072 = vpop.permute.xlu0 %2071
    %2073 = vrot.lane.b32.xlu0 %v1786, 64
    %v2074 = vpop.permute.xlu0 %2073
    %2075 = vrot.lane.b32.xlu0 %v1787, 64
    %v2076 = vpop.permute.xlu0 %2075
    %2077 = vrot.lane.b32.xlu0 %v1788, 64
    %v2078 = vpop.permute.xlu0 %2077
    %2079 = vrot.lane.b32.xlu0 %v1789, 64
    %v2080 = vpop.permute.xlu0 %2079
    %2081 = vrot.lane.b32.xlu0 %v1790, 64
    %v2082 = vpop.permute.xlu0 %2081
    %2083 = vrot.lane.b32.xlu0 %v1797, 96
    %v2084 = vpop.permute.xlu0 %2083
    %2085 = vrot.lane.b32.xlu0 %v1811, 96
    %v2086 = vpop.permute.xlu0 %2085
    %2087 = vrot.lane.b32.xlu0 %v1818, 96
    %v2088 = vpop.permute.xlu0 %2087
    %2089 = vrot.lane.b32.xlu0 %v1825, 96
    %v2090 = vpop.permute.xlu0 %2089
    %2091 = vrot.lane.b32.xlu0 %v1832, 96
    %v2092 = vpop.permute.xlu0 %2091
    %2093 = vrot.lane.b32.xlu0 %v1839, 96
    %v2094 = vpop.permute.xlu0 %2093
    %2095 = vrot.lane.b32.xlu0 %v2013, 96
    %v2096 = vpop.permute.xlu0 %2095
    %2097 = vrot.lane.b32.xlu0 %v1846, 96
    %v2098 = vpop.permute.xlu0 %2097
    %2099 = vrot.lane.b32.xlu0 %v1860, 96
    %v2100 = vpop.permute.xlu0 %2099
    %2101 = vrot.lane.b32.xlu0 %v1867, 96
    %v2102 = vpop.permute.xlu0 %2101
    %2103 = vrot.lane.b32.xlu0 %v1874, 96
    %v2104 = vpop.permute.xlu0 %2103
    %2105 = vrot.lane.b32.xlu0 %v1881, 96
    %v2106 = vpop.permute.xlu0 %2105
    %2107 = vrot.lane.b32.xlu0 %v1888, 96
    %v2108 = vpop.permute.xlu0 %2107
    %2109 = vrot.lane.b32.xlu0 %v2020, 96
    %v2110 = vpop.permute.xlu0 %2109
    %v2112 = vsel %vm678, %v1775, %v1890
    %v2114 = vsel %vm678, %v1776, %v1892
    %v2116 = vsel %vm678, %v1777, %v1894
    %v2118 = vsel %vm678, %v1778, %v1896
    %v2120 = vsel %vm678, %v1779, %v1898
    %v2122 = vsel %vm678, %v1780, %v1900
    %v2124 = vsel %vm678, %v1781, %v1902
    %v2126 = vsel %vm678, %v1783, %v1904
    %v2128 = vsel %vm678, %v1784, %v1906
    %v2130 = vsel %vm678, %v1785, %v1908
    %v2132 = vsel %vm678, %v1786, %v1910
    %v2134 = vsel %vm678, %v1787, %v1912
    %v2136 = vsel %vm678, %v1788, %v1914
    %v2138 = vsel %vm678, %v1789, %v1916
    %v2140 = vsel %vm707, %v2112, %v1946
    %v2142 = vsel %vm707, %v2114, %v1948
    %v2144 = vsel %vm707, %v2116, %v1950
    %v2146 = vsel %vm707, %v2118, %v1952
    %v2148 = vsel %vm707, %v2120, %v1954
    %v2150 = vsel %vm707, %v2122, %v1956
    %v2152 = vsel %vm707, %v2124, %v1958
    %v2154 = vsel %vm707, %v2126, %v1960
    %v2156 = vsel %vm707, %v2128, %v1962
    %v2158 = vsel %vm707, %v2130, %v1964
    %v2160 = vsel %vm707, %v2132, %v1966
    %v2162 = vsel %vm707, %v2134, %v1968
    %v2164 = vsel %vm707, %v2136, %v1970
    %v2166 = vsel %vm707, %v2138, %v1972
    %v2168 = vsel %vm736, %v2140, %v1976
    %v2170 = vsel %vm736, %v2142, %v1978
    %v2172 = vsel %vm736, %v2140, %v1980
    %v2174 = vsel %vm736, %v2144, %v1982
    %v2176 = vsel %vm736, %v2146, %v1984
    %v2178 = vsel %vm736, %v2148, %v1986
    %v2180 = vsel %vm736, %v2150, %v1988
    %v2182 = vsel %vm736, %v2152, %v1990
    %v2184 = vsel %vm736, %v2154, %v1992
    %v2186 = vsel %vm736, %v2156, %v1994
    %v2188 = vsel %vm736, %v2154, %v1996
    %v2190 = vsel %vm736, %v2158, %v1998
    %v2192 = vsel %vm736, %v2160, %v2000
    %v2194 = vsel %vm736, %v2162, %v2002
    %v2196 = vsel %vm736, %v2164, %v2004
    %v2198 = vsel %vm736, %v2166, %v2006
    %v2201 = vsel %vm678, %v1804, %v2024
    %v2204 = vsel %vm678, %v1797, %v2026
    %v2207 = vsel %vm678, %v1811, %v2028
    %v2210 = vsel %vm678, %v1818, %v2030
    %v2213 = vsel %vm678, %v1825, %v2032
    %v2216 = vsel %vm678, %v1832, %v2034
    %v2219 = vsel %vm678, %v1839, %v2036
    %v2222 = vsel %vm678, %v2013, %v2038
    %v2225 = vsel %vm678, %v1853, %v2040
    %v2228 = vsel %vm678, %v1846, %v2042
    %v2231 = vsel %vm678, %v1860, %v2044
    %v2234 = vsel %vm678, %v1867, %v2046
    %v2237 = vsel %vm678, %v1874, %v2048
    %v2240 = vsel %vm678, %v1881, %v2050
    %v2243 = vsel %vm678, %v1888, %v2052
    %v2246 = vsel %vm678, %v2020, %v2054
    %v2248 = vsel %vm707, %v2201, %v2056
    %v2250 = vsel %vm707, %v2204, %v2058
    %v2252 = vsel %vm707, %v2207, %v2060
    %v2254 = vsel %vm707, %v2210, %v2062
    %v2256 = vsel %vm707, %v2213, %v2064
    %v2258 = vsel %vm707, %v2216, %v2066
    %v2260 = vsel %vm707, %v2219, %v2068
    %v2261 = vsel %vm707, %v2222, %v2066
    %v2263 = vsel %vm707, %v2225, %v2070
    %v2265 = vsel %vm707, %v2228, %v2072
    %v2267 = vsel %vm707, %v2231, %v2074
    %v2269 = vsel %vm707, %v2234, %v2076
    %v2271 = vsel %vm707, %v2237, %v2078
    %v2273 = vsel %vm707, %v2240, %v2080
    %v2275 = vsel %vm707, %v2243, %v2082
    %v2276 = vsel %vm707, %v2246, %v2080
    %v2278 = vsel %vm736, %v2248, %v2084
    %v2280 = vsel %vm736, %v2250, %v2086
    %v2282 = vsel %vm736, %v2252, %v2088
    %v2284 = vsel %vm736, %v2254, %v2090
    %v2286 = vsel %vm736, %v2256, %v2092
    %v2288 = vsel %vm736, %v2258, %v2094
    %v2290 = vsel %vm736, %v2260, %v2096
    %v2291 = vsel %vm736, %v2261, %v2094
    %v2293 = vsel %vm736, %v2263, %v2098
    %v2295 = vsel %vm736, %v2265, %v2100
    %v2297 = vsel %vm736, %v2267, %v2102
    %v2299 = vsel %vm736, %v2269, %v2104
    %v2301 = vsel %vm736, %v2271, %v2106
    %v2303 = vsel %vm736, %v2273, %v2108
    %v2305 = vsel %vm736, %v2275, %v2110
    %v2306 = vsel %vm736, %v2276, %v2108
    %v2308 = vsel %vm678, %v1931, 0
    %v2310 = vsel %vm678, %v1933, 0
    %v2312 = vsel %vm678, %v1934, 0
    %v2314 = vsel %vm678, %v1935, 0
    %v2316 = vsel %vm678, %v1936, 0
    %v2318 = vsel %vm678, %v1937, 0
    %v2320 = vsel %vm678, %v2021, 0
    %v2322 = vsel %vm678, %v1938, 0
    %v2324 = vsel %vm678, %v1940, 0
    %v2326 = vsel %vm678, %v1941, 0
    %v2328 = vsel %vm678, %v1942, 0
    %v2330 = vsel %vm678, %v1943, 0
    %v2332 = vsel %vm678, %v1944, 0
    %v2334 = vsel %vm678, %v2022, 0
    %v2381 = vunpack.c.l.b16 %v2168
    %v2382 = vunpack.c.l.b16 %v2278
    %v2383 = vunpack.c.l.b16 %v2308
    %v2384 = vunpack.c.l.b16 %v2170
    %v2385 = vunpack.c.l.b16 %v2280
    %v2386 = vunpack.c.l.b16 %v2310
    %v2387 = vunpack.c.l.b16 %v2172
    %v2388 = vunpack.c.l.b16 %v2282
    %v2389 = vunpack.c.l.b16 %v2312
    %v2390 = vunpack.c.l.b16 %v2174
    %v2391 = vunpack.c.l.b16 %v2284
    %v2392 = vunpack.c.l.b16 %v2314
    %v2393 = vunpack.c.l.b16 %v2176
    %v2394 = vunpack.c.l.b16 %v2286
    %v2395 = vunpack.c.l.b16 %v2316
    %v2396 = vunpack.c.l.b16 %v2178
    %v2397 = vunpack.c.l.b16 %v2288
    %v2398 = vunpack.c.l.b16 %v2318
    %v2399 = vunpack.c.l.b16 %v2180
    %v2400 = vunpack.c.l.b16 %v2290
    %v2401 = vunpack.c.l.b16 %v2320
    %v2402 = vunpack.c.l.b16 %v2182
    %v2403 = vunpack.c.l.b16 %v2291
    %v2404 = vunpack.c.l.b16 %v2184
    %v2405 = vunpack.c.l.b16 %v2293
    %v2406 = vunpack.c.l.b16 %v2322
    %v2407 = vunpack.c.l.b16 %v2186
    %v2408 = vunpack.c.l.b16 %v2295
    %v2409 = vunpack.c.l.b16 %v2324
    %v2410 = vunpack.c.l.b16 %v2188
    %v2411 = vunpack.c.l.b16 %v2297
    %v2412 = vunpack.c.l.b16 %v2326
    %v2413 = vunpack.c.l.b16 %v2190
    %v2414 = vunpack.c.l.b16 %v2299
    %v2415 = vunpack.c.l.b16 %v2328
    %v2416 = vunpack.c.l.b16 %v2192
    %v2417 = vunpack.c.l.b16 %v2301
    %v2418 = vunpack.c.l.b16 %v2330
    %v2419 = vunpack.c.l.b16 %v2194
    %v2420 = vunpack.c.l.b16 %v2303
    %v2421 = vunpack.c.l.b16 %v2332
    %v2422 = vunpack.c.l.b16 %v2196
    %v2423 = vunpack.c.l.b16 %v2305
    %v2424 = vunpack.c.l.b16 %v2334
    %v2425 = vunpack.c.l.b16 %v2198
    %v2426 = vunpack.c.l.b16 %v2306
    %v2428 = vlaneseq
    %v2429 = vshrl.u32 %v2428, 7
    %v2430 = vsub.s32 0, %v2429
    %v2431 = vrot.slane %v1582, %v2430
    %v2433 = vpack.c.b16 %v2384, %v2381
    %v2434 = vpack.c.b16 %v2385, %v2382
    %v2435 = vpack.c.b16 %v2386, %v2383
    %v2436 = vpack.c.b16 %v2390, %v2387
    %v2437 = vpack.c.b16 %v2391, %v2388
    %v2438 = vpack.c.b16 %v2392, %v2389
    %v2439 = vpack.c.b16 %v2396, %v2393
    %v2440 = vpack.c.b16 %v2397, %v2394
    %v2441 = vpack.c.b16 %v2398, %v2395
    %v2442 = vpack.c.b16 %v2402, %v2399
    %v2443 = vpack.c.b16 %v2403, %v2400
    %v2444 = vpack.c.b16 %v2398, %v2401
    %v2445 = vpack.c.b16 %v2407, %v2404
    %v2446 = vpack.c.b16 %v2408, %v2405
    %v2447 = vpack.c.b16 %v2409, %v2406
    %v2448 = vpack.c.b16 %v2413, %v2410
    %v2449 = vpack.c.b16 %v2414, %v2411
    %v2450 = vpack.c.b16 %v2415, %v2412
    %v2451 = vpack.c.b16 %v2419, %v2416
    %v2452 = vpack.c.b16 %v2420, %v2417
    %v2453 = vpack.c.b16 %v2421, %v2418
    %v2454 = vpack.c.b16 %v2425, %v2422
    %v2455 = vpack.c.b16 %v2426, %v2423
    %v2456 = vpack.c.b16 %v2421, %v2424
    %v2529 = vunpack.c.l.b16 %v1533
    %v2530 = vunpack.c.l.b16 %v1534
    %v2531 = vunpack.c.l.b16 %v1535
    %v2532 = vunpack.c.l.b16 %v1536
    %v2533 = vunpack.c.l.b16 %v1537
    %v2534 = vunpack.c.l.b16 %v1538
    %v2535 = vunpack.c.l.b16 %v1539
    %v2536 = vunpack.c.l.b16 %v1540
    %v2537 = vunpack.c.l.b16 %v1541
    %v2538 = vunpack.c.l.b16 %v1542
    %v2539 = vunpack.c.l.b16 %v1543
    %v2540 = vunpack.c.l.b16 %v1544
    %v2541 = vunpack.c.l.b16 %v1545
    %v2542 = vunpack.c.l.b16 %v1546
    %v2543 = vunpack.c.l.b16 %v1547
    %v2544 = vunpack.c.l.b16 %v1548
    %v2545 = vunpack.c.l.b16 %v1549
    %v2546 = vunpack.c.l.b16 %v1550
    %v2547 = vunpack.c.l.b16 %v1551
    %v2548 = vunpack.c.l.b16 %v1552
    %v2549 = vunpack.c.l.b16 %v1553
    %v2550 = vunpack.c.l.b16 %v1554
    %v2551 = vunpack.c.l.b16 %v1555
    %v2552 = vunpack.c.l.b16 %v1556
    %v2553 = vunpack.c.l.b16 %v1557
    %v2554 = vunpack.c.l.b16 %v1558
    %v2555 = vunpack.c.l.b16 %v1559
    %v2556 = vunpack.c.l.b16 %v1560
    %v2557 = vunpack.c.l.b16 %v1561
    %v2558 = vunpack.c.l.b16 %v1562
    %v2559 = vunpack.c.l.b16 %v1563
    %v2560 = vunpack.c.l.b16 %v1564
    %v2561 = vunpack.c.l.b16 %v1565
    %v2562 = vunpack.c.l.b16 %v1566
    %v2563 = vunpack.c.l.b16 %v1567
    %v2564 = vunpack.c.l.b16 %v1568
    %v2565 = vunpack.c.l.b16 %v1569
    %v2566 = vunpack.c.l.b16 %v1570
    %v2567 = vunpack.c.l.b16 %v1571
    %v2568 = vunpack.c.l.b16 %v1572
    %v2569 = vunpack.c.l.b16 %v1573
    %v2570 = vunpack.c.l.b16 %v1574
    %v2571 = vunpack.c.l.b16 %v1575
    %v2572 = vunpack.c.l.b16 %v1576
    %v2573 = vunpack.c.l.b16 %v1577
    %v2574 = vunpack.c.l.b16 %v1578
    %v2575 = vunpack.c.l.b16 %v1579
    %v2576 = vunpack.c.l.b16 %v1580
    %v2577 = vpack.c.b16 %v2530, %v2529
    %v2578 = vpack.c.b16 %v2532, %v2531
    %v2579 = vpack.c.b16 %v2534, %v2533
    %v2580 = vpack.c.b16 %v2536, %v2535
    %v2581 = vpack.c.b16 %v2538, %v2537
    %v2582 = vpack.c.b16 %v2540, %v2539
    %v2583 = vpack.c.b16 %v2542, %v2541
    %v2584 = vpack.c.b16 %v2544, %v2543
    %v2585 = vpack.c.b16 %v2546, %v2545
    %v2586 = vpack.c.b16 %v2548, %v2547
    %v2587 = vpack.c.b16 %v2550, %v2549
    %v2588 = vpack.c.b16 %v2552, %v2551
    %v2589 = vpack.c.b16 %v2554, %v2553
    %v2590 = vpack.c.b16 %v2556, %v2555
    %v2591 = vpack.c.b16 %v2558, %v2557
    %v2592 = vpack.c.b16 %v2560, %v2559
    %v2593 = vpack.c.b16 %v2562, %v2561
    %v2594 = vpack.c.b16 %v2564, %v2563
    %v2595 = vpack.c.b16 %v2566, %v2565
    %v2596 = vpack.c.b16 %v2568, %v2567
    %v2597 = vpack.c.b16 %v2570, %v2569
    %v2598 = vpack.c.b16 %v2572, %v2571
    %v2599 = vpack.c.b16 %v2574, %v2573
    %v2600 = vpack.c.b16 %v2576, %v2575
    %2625 = vmatprep.subr.bf16.mxu0 0
    %2626 = vmatpush1.bf16.msra.mxu0 %v2577
    %2627 = vmatprep.subr.bf16.mxu0 0
    %2628 = vmatpush1.bf16.msra.mxu0 %v2578
    %2629 = vmatprep.subr.bf16.mxu0 0
    %2630 = vmatpush1.bf16.msra.mxu0 %v2579
    %2631 = vmatprep.subr.bf16.mxu0 0
    %2632 = vmatpush1.bf16.msra.mxu0 %v2580
    %2633 = vmatprep.subr.bf16.mxu0 0
    %2634 = vmatpush1.bf16.msra.mxu0 %v2581
    %2635 = vmatprep.subr.bf16.mxu0 0
    %2636 = vmatpush1.bf16.msra.mxu0 %v2582
    %2637 = vmatprep.subr.bf16.mxu0 0
    %2638 = vmatpush1.bf16.msra.mxu0 %v2583
    %2639 = vmatprep.subr.bf16.mxu0 0
    %2640 = vmatpush1.bf16.msra.mxu0 %v2584
    %2641 = vmatprep.subr.bf16.mxu0 0
    %2642 = vmatpush1.bf16.msra.mxu0 %v2585
    %2643 = vmatprep.subr.bf16.mxu0 0
    %2644 = vmatpush1.bf16.msra.mxu0 %v2586
    %2645 = vmatprep.subr.bf16.mxu0 0
    %2646 = vmatpush1.bf16.msra.mxu0 %v2587
    %2647 = vmatprep.subr.bf16.mxu0 0
    %2648 = vmatpush1.bf16.msra.mxu0 %v2588
    %2649 = vmatprep.subr.bf16.mxu0 0
    %2650 = vmatpush1.bf16.msra.mxu0 %v2589
    %2651 = vmatprep.subr.bf16.mxu0 0
    %2652 = vmatpush1.bf16.msra.mxu0 %v2590
    %2653 = vmatprep.subr.bf16.mxu0 0
    %2654 = vmatpush1.bf16.msra.mxu0 %v2591
    %2655 = vmatprep.subr.bf16.mxu0 0
    %2656 = vmatpush1.bf16.msra.mxu0 %v2592
    %2657 = vmatprep.mubr.bf16.mxu0 %v2434
    %2658 = vmatmul.mubr.bf16.gmra.mrb[0].mxu0 %v2433
    %v2659 = vpop.f32.mrb[0].mxu0
    %v2660 = vadd.f32 %v2431, %v2659
    %v2661 = vpop.f32.mrb[0].mxu0
    %v2662 = vpop.f32.mrb[0].mxu0
    %v2663 = vadd.f32 %v2431, %v2662
    %v2664 = vpop.f32.mrb[0].mxu0
    %2665 = vmatprep.mubr.bf16.mxu0 %v2437
    %2666 = vmatmul.mubr.bf16.gmra.mrb[0].mxu0 %v2436
    %v2667 = vpop.f32.mrb[0].mxu0
    %v2668 = vadd.f32 %v2431, %v2667
    %v2669 = vpop.f32.mrb[0].mxu0
    %v2670 = vpop.f32.mrb[0].mxu0
    %v2671 = vadd.f32 %v2431, %v2670
    %v2672 = vpop.f32.mrb[0].mxu0
    %2673 = vmatprep.mubr.bf16.mxu0 %v2440
    %2674 = vmatmul.mubr.bf16.gmra.mrb[0].mxu0 %v2439
    %v2675 = vpop.f32.mrb[0].mxu0
    %v2676 = vadd.f32 %v2431, %v2675
    %v2677 = vpop.f32.mrb[0].mxu0
    %v2678 = vpop.f32.mrb[0].mxu0
    %v2679 = vadd.f32 %v2431, %v2678
    %v2680 = vpop.f32.mrb[0].mxu0
    %2681 = vmatprep.mubr.bf16.mxu0 %v2443
    %2682 = vmatmul.mubr.bf16.gmra.mrb[0].mxu0 %v2442
    %v2683 = vpop.f32.mrb[0].mxu0
    %v2684 = vadd.f32 %v2431, %v2683
    %v2685 = vpop.f32.mrb[0].mxu0
    %v2686 = vpop.f32.mrb[0].mxu0
    %v2687 = vadd.f32 %v2431, %v2686
    %v2688 = vpop.f32.mrb[0].mxu0
    %2689 = vmatprep.mubr.bf16.mxu0 %v2446
    %2690 = vmatmul.mubr.bf16.gmra.mrb[0].mxu0 %v2445
    %v2691 = vpop.f32.mrb[0].mxu0
    %v2692 = vadd.f32 %v2431, %v2691
    %v2693 = vpop.f32.mrb[0].mxu0
    %v2694 = vpop.f32.mrb[0].mxu0
    %v2695 = vadd.f32 %v2431, %v2694
    %v2696 = vpop.f32.mrb[0].mxu0
    %2697 = vmatprep.mubr.bf16.mxu0 %v2449
    %2698 = vmatmul.mubr.bf16.gmra.mrb[0].mxu0 %v2448
    %v2699 = vpop.f32.mrb[0].mxu0
    %v2700 = vadd.f32 %v2431, %v2699
    %v2701 = vpop.f32.mrb[0].mxu0
    %v2702 = vpop.f32.mrb[0].mxu0
    %v2703 = vadd.f32 %v2431, %v2702
    %v2704 = vpop.f32.mrb[0].mxu0
    %2705 = vmatprep.mubr.bf16.mxu0 %v2452
    %2706 = vmatmul.mubr.bf16.gmra.mrb[0].mxu0 %v2451
    %v2707 = vpop.f32.mrb[0].mxu0
    %v2708 = vadd.f32 %v2431, %v2707
    %v2709 = vpop.f32.mrb[0].mxu0
    %v2710 = vpop.f32.mrb[0].mxu0
    %v2711 = vadd.f32 %v2431, %v2710
    %v2712 = vpop.f32.mrb[0].mxu0
    %2713 = vmatprep.mubr.bf16.mxu0 %v2455
    %2714 = vmatmul.mubr.bf16.gmra.mrb[0].mxu0 %v2454
    %v2715 = vpop.f32.mrb[0].mxu0
    %v2716 = vadd.f32 %v2431, %v2715
    %v2717 = vpop.f32.mrb[0].mxu0
    %v2718 = vpop.f32.mrb[0].mxu0
    %v2719 = vadd.f32 %v2431, %v2718
    %v2720 = vpop.f32.mrb[0].mxu0
    %2721 = vdwg.mxu0
    %2722 = vmatprep.subr.bf16.mxu0 0
    %2723 = vmatpush1.bf16.msra.mxu0 %v2593
    %2724 = vmatprep.subr.bf16.mxu0 0
    %2725 = vmatpush1.bf16.msra.mxu0 %v2594
    %2726 = vmatprep.subr.bf16.mxu0 0
    %2727 = vmatpush1.bf16.msra.mxu0 %v2595
    %2728 = vmatprep.subr.bf16.mxu0 0
    %2729 = vmatpush1.bf16.msra.mxu0 %v2596
    %2730 = vmatprep.subr.bf16.mxu0 0
    %2731 = vmatpush1.bf16.msra.mxu0 %v2597
    %2732 = vmatprep.subr.bf16.mxu0 0
    %2733 = vmatpush1.bf16.msra.mxu0 %v2598
    %2734 = vmatprep.subr.bf16.mxu0 0
    %2735 = vmatpush1.bf16.msra.mxu0 %v2599
    %2736 = vmatprep.subr.bf16.mxu0 0
    %2737 = vmatpush1.bf16.msra.mxu0 %v2600
    %2738 = vmatprep.subr.bf16.mxu0 0
    %2739 = vmatpush1.bf16.msra.mxu0 0
    %2740 = vmatprep.subr.bf16.mxu0 0
    %2741 = vmatpush1.bf16.msra.mxu0 0
    %2742 = vmatprep.subr.bf16.mxu0 0
    %2743 = vmatpush1.bf16.msra.mxu0 0
    %2744 = vmatprep.subr.bf16.mxu0 0
    %2745 = vmatpush1.bf16.msra.mxu0 0
    %2746 = vmatprep.subr.bf16.mxu0 0
    %2747 = vmatpush1.bf16.msra.mxu0 0
    %2748 = vmatprep.subr.bf16.mxu0 0
    %2749 = vmatpush1.bf16.msra.mxu0 0
    %2750 = vmatprep.subr.bf16.mxu0 0
    %2751 = vmatpush1.bf16.msra.mxu0 0
    %2752 = vmatprep.subr.bf16.mxu0 0
    %2753 = vmatpush1.bf16.msra.mxu0 0
    %2754 = vmatprep.mubr.bf16.mxu0 0
    %2755 = vmatmul.mubr.bf16.gmra.mrb[0].mxu0 %v2435
    %v2756 = vpop.f32.mrb[0].mxu0
    %v2757 = vadd.f32 %v2660, %v2756
    %v2758 = vpop.f32.mrb[0].mxu0
    %v2759 = vpop.f32.mrb[0].mxu0
    %v2760 = vadd.f32 %v2663, %v2759
    %v2761 = vpop.f32.mrb[0].mxu0
    %2762 = vmatprep.mubr.bf16.mxu0 0
    %2763 = vmatmul.mubr.bf16.gmra.mrb[0].mxu0 %v2438
    %v2764 = vpop.f32.mrb[0].mxu0
    %v2765 = vadd.f32 %v2668, %v2764
    %v2766 = vpop.f32.mrb[0].mxu0
    %v2767 = vpop.f32.mrb[0].mxu0
    %v2768 = vadd.f32 %v2671, %v2767
    %v2769 = vpop.f32.mrb[0].mxu0
    %2770 = vmatprep.mubr.bf16.mxu0 0
    %2771 = vmatmul.mubr.bf16.gmra.mrb[0].mxu0 %v2441
    %v2772 = vpop.f32.mrb[0].mxu0
    %v2773 = vadd.f32 %v2676, %v2772
    %v2774 = vpop.f32.mrb[0].mxu0
    %v2775 = vpop.f32.mrb[0].mxu0
    %v2776 = vadd.f32 %v2679, %v2775
    %v2777 = vpop.f32.mrb[0].mxu0
    %2778 = vmatprep.mubr.bf16.mxu0 0
    %2779 = vmatmul.mubr.bf16.gmra.mrb[0].mxu0 %v2444
    %v2780 = vpop.f32.mrb[0].mxu0
    %v2781 = vadd.f32 %v2684, %v2780
    %v2782 = vpop.f32.mrb[0].mxu0
    %v2783 = vpop.f32.mrb[0].mxu0
    %v2784 = vadd.f32 %v2687, %v2783
    %v2785 = vpop.f32.mrb[0].mxu0
    %2786 = vmatprep.mubr.bf16.mxu0 0
    %2787 = vmatmul.mubr.bf16.gmra.mrb[0].mxu0 %v2447
    %v2788 = vpop.f32.mrb[0].mxu0
    %v2789 = vadd.f32 %v2692, %v2788
    %v2790 = vpop.f32.mrb[0].mxu0
    %v2791 = vpop.f32.mrb[0].mxu0
    %v2792 = vadd.f32 %v2695, %v2791
    %v2793 = vpop.f32.mrb[0].mxu0
    %2794 = vmatprep.mubr.bf16.mxu0 0
    %2795 = vmatmul.mubr.bf16.gmra.mrb[0].mxu0 %v2450
    %v2796 = vpop.f32.mrb[0].mxu0
    %v2797 = vadd.f32 %v2700, %v2796
    %v2798 = vpop.f32.mrb[0].mxu0
    %v2799 = vpop.f32.mrb[0].mxu0
    %v2800 = vadd.f32 %v2703, %v2799
    %v2801 = vpop.f32.mrb[0].mxu0
    %2802 = vmatprep.mubr.bf16.mxu0 0
    %2803 = vmatmul.mubr.bf16.gmra.mrb[0].mxu0 %v2453
    %v2804 = vpop.f32.mrb[0].mxu0
    %v2805 = vadd.f32 %v2708, %v2804
    %v2806 = vpop.f32.mrb[0].mxu0
    %v2807 = vpop.f32.mrb[0].mxu0
    %v2808 = vadd.f32 %v2711, %v2807
    %v2809 = vpop.f32.mrb[0].mxu0
    %2810 = vmatprep.mubr.bf16.mxu0 0
    %2811 = vmatmul.mubr.bf16.gmra.mrb[0].mxu0 %v2456
    %v2812 = vpop.f32.mrb[0].mxu0
    %v2813 = vadd.f32 %v2716, %v2812
    %v2814 = vpop.f32.mrb[0].mxu0
    %v2815 = vpop.f32.mrb[0].mxu0
    %v2816 = vadd.f32 %v2719, %v2815
    %v2817 = vpop.f32.mrb[0].mxu0
    %2818 = vdwg.mxu0
    %v2819 = vadd.f32 %v2757, %v2760
    %v2820 = vadd.f32 %v2819, %v2765
    %v2821 = vadd.f32 %v2820, %v2768
    %v2822 = vadd.f32 %v2821, %v2773
    %v2823 = vadd.f32 %v2822, %v2776
    %v2824 = vadd.f32 %v2823, %v2781
    %v2825 = vadd.f32 %v2824, %v2784
    %v2826 = vrot.slane %v2825, 4
    %v2827 = vadd.f32 %v2825, %v2826
    %v2828 = vrot.slane %v2827, 2
    %v2829 = vadd.f32 %v2827, %v2828
    %v2830 = vrot.slane %v2829, 1
    %v2831 = vadd.f32 %v2829, %v2830
    %v2832 = vadd.f32 %v2789, %v2792
    %v2833 = vadd.f32 %v2832, %v2797
    %v2834 = vadd.f32 %v2833, %v2800
    %v2835 = vadd.f32 %v2834, %v2805
    %v2836 = vadd.f32 %v2835, %v2808
    %v2837 = vadd.f32 %v2836, %v2813
    %v2838 = vadd.f32 %v2837, %v2816
    %v2839 = vrot.slane %v2838, 4
    %v2840 = vadd.f32 %v2838, %v2839
    %v2841 = vrot.slane %v2840, 2
    %v2842 = vadd.f32 %v2840, %v2841
    %v2843 = vrot.slane %v2842, 1
    %v2844 = vadd.f32 %v2842, %v2843
    %v2845 = vmul.f32 %v2831, %v1416
    %v2846 = vmul.f32 %v2844, %v1416
    %v2847 = vsub.f32 %v2757, %v2845
    %v2848 = vsub.f32 %v2760, %v2845
    %v2849 = vsub.f32 %v2765, %v2845
    %v2850 = vsub.f32 %v2768, %v2845
    %v2851 = vsub.f32 %v2773, %v2845
    %v2852 = vsub.f32 %v2776, %v2845
    %v2853 = vsub.f32 %v2781, %v2845
    %v2854 = vsub.f32 %v2784, %v2845
    %v2855 = vsub.f32 %v2789, %v2846
    %v2856 = vsub.f32 %v2792, %v2846
    %v2857 = vsub.f32 %v2797, %v2846
    %v2858 = vsub.f32 %v2800, %v2846
    %v2859 = vsub.f32 %v2805, %v2846
    %v2860 = vsub.f32 %v2808, %v2846
    %v2861 = vsub.f32 %v2813, %v2846
    %v2862 = vsub.f32 %v2816, %v2846
    %v2863 = vmul.f32 %v2847, %v2847
    %v2864 = vmul.f32 %v2848, %v2848
    %v2865 = vmul.f32 %v2849, %v2849
    %v2866 = vmul.f32 %v2850, %v2850
    %v2867 = vmul.f32 %v2851, %v2851
    %v2868 = vmul.f32 %v2852, %v2852
    %v2869 = vmul.f32 %v2853, %v2853
    %v2870 = vmul.f32 %v2854, %v2854
    %v2871 = vmul.f32 %v2855, %v2855
    %v2872 = vmul.f32 %v2856, %v2856
    %v2873 = vmul.f32 %v2857, %v2857
    %v2874 = vmul.f32 %v2858, %v2858
    %v2875 = vmul.f32 %v2859, %v2859
    %v2876 = vmul.f32 %v2860, %v2860
    %v2877 = vmul.f32 %v2861, %v2861
    %v2878 = vmul.f32 %v2862, %v2862
    %v2879 = vadd.f32 %v2863, %v2864
    %v2880 = vadd.f32 %v2879, %v2865
    %v2881 = vadd.f32 %v2880, %v2866
    %v2882 = vadd.f32 %v2881, %v2867
    %v2883 = vadd.f32 %v2882, %v2868
    %v2884 = vadd.f32 %v2883, %v2869
    %v2885 = vadd.f32 %v2884, %v2870
    %v2886 = vrot.slane %v2885, 4
    %v2887 = vadd.f32 %v2885, %v2886
    %v2888 = vrot.slane %v2887, 2
    %v2889 = vadd.f32 %v2887, %v2888
    %v2890 = vrot.slane %v2889, 1
    %v2891 = vadd.f32 %v2889, %v2890
    %v2892 = vadd.f32 %v2871, %v2872
    %v2893 = vadd.f32 %v2892, %v2873
    %v2894 = vadd.f32 %v2893, %v2874
    %v2895 = vadd.f32 %v2894, %v2875
    %v2896 = vadd.f32 %v2895, %v2876
    %v2897 = vadd.f32 %v2896, %v2877
    %v2898 = vadd.f32 %v2897, %v2878
    %v2899 = vrot.slane %v2898, 4
    %v2900 = vadd.f32 %v2898, %v2899
    %v2901 = vrot.slane %v2900, 2
    %v2902 = vadd.f32 %v2900, %v2901
    %v2903 = vrot.slane %v2902, 1
    %v2904 = vadd.f32 %v2902, %v2903
    %v2905 = vmul.f32 %v2891, %v1416
    %v2906 = vmul.f32 %v2904, %v1416
    %v2907 = vadd.f32 %v2905, 1e-05
    %v2908 = vadd.f32 %v2906, 1e-05
    %v2909 = vrsqrt.pop %v2907
    %v2910 = vrsqrt.pop %v2908
    %v2911 = vmul.f32 %v2847, %v2909
    %v2912 = vmul.f32 %v2848, %v2909
    %v2913 = vmul.f32 %v2849, %v2909
    %v2914 = vmul.f32 %v2850, %v2909
    %v2915 = vmul.f32 %v2851, %v2909
    %v2916 = vmul.f32 %v2852, %v2909
    %v2917 = vmul.f32 %v2853, %v2909
    %v2918 = vmul.f32 %v2854, %v2909
    %v2919 = vmul.f32 %v2855, %v2910
    %v2920 = vmul.f32 %v2856, %v2910
    %v2921 = vmul.f32 %v2857, %v2910
    %v2922 = vmul.f32 %v2858, %v2910
    %v2923 = vmul.f32 %v2859, %v2910
    %v2924 = vmul.f32 %v2860, %v2910
    %v2925 = vmul.f32 %v2861, %v2910
    %v2926 = vmul.f32 %v2862, %v2910
    %v2927 = vadd.f32 %v59, %v2911
    %v2928 = vadd.f32 %v60, %v2912
    %v2929 = vadd.f32 %v61, %v2913
    %v2930 = vadd.f32 %v62, %v2914
    %v2931 = vadd.f32 %v63, %v2915
    %v2932 = vadd.f32 %v64, %v2916
    %v2933 = vadd.f32 %v65, %v2917
    %v2934 = vadd.f32 %v66, %v2918
    %v2935 = vadd.f32 %v67, %v2919
    %v2936 = vadd.f32 %v68, %v2920
    %v2937 = vadd.f32 %v69, %v2921
    %v2938 = vadd.f32 %v70, %v2922
    %v2939 = vadd.f32 %v71, %v2923
    %v2940 = vadd.f32 %v72, %v2924
    %v2941 = vadd.f32 %v73, %v2925
    %v2942 = vadd.f32 %v74, %v2926
    %2943 = vst [vmem:[%s5] sm:$0xff] %v2927
    %2944 = vst [vmem:[%s5 + $0x8] sm:$0xff] %v2928
    %2945 = vst [vmem:[%s5 + $0x10] sm:$0xff] %v2929
    %2946 = vst [vmem:[%s5 + $0x18] sm:$0xff] %v2930
    %2947 = vst [vmem:[%s5 + $0x20] sm:$0xff] %v2931
    %2948 = vst [vmem:[%s5 + $0x28] sm:$0xff] %v2932
    %2949 = vst [vmem:[%s5 + $0x30] sm:$0xff] %v2933
    %2950 = vst [vmem:[%s5 + $0x38] sm:$0xff] %v2934
    %2951 = vst [vmem:[%s5 + $0x40] sm:$0xff] %v2935
    %2952 = vst [vmem:[%s5 + $0x48] sm:$0xff] %v2936
    %2953 = vst [vmem:[%s5 + $0x50] sm:$0xff] %v2937
    %2954 = vst [vmem:[%s5 + $0x58] sm:$0xff] %v2938
    %2955 = vst [vmem:[%s5 + $0x60] sm:$0xff] %v2939
    %2956 = vst [vmem:[%s5 + $0x68] sm:$0xff] %v2940
    %2957 = vst [vmem:[%s5 + $0x70] sm:$0xff] %v2941
    %2958 = vst [vmem:[%s5 + $0x78] sm:$0xff] %v2942
  $region26: #{resnet_score_forward.7} parent=0 // loop_footer
    %s58 = sadd.s32 1, %s54
  $region27: #{resnet_score_forward.7} parent=0 // loop_footer_branch
    %53 = sbr.rel target = $region23
  $region28: #{resnet_score_forward.7} parent=0 // loop_exit
    _
  // Predicated region
  $region29: #{resnet_score_forward.7} parent=0 // pred_check
    _
  $region30: #{resnet_score_forward.7} parent=0 // pred_check_branch
    %2960 = sbr.rel (0) target = $region32
  $region31: #{resnet_score_forward.7} parent=0 // pred_region
    _
  $region32: #{resnet_score_forward.7} parent=0 // pred_fallthru
    _
  // Predicated region
  $region33: #{resnet_score_forward.7} parent=0 // pred_check
    _
  $region34: #{resnet_score_forward.7} parent=0 // pred_check_branch
    %2962 = sbr.rel (0) target = $region36
  $region35: #{resnet_score_forward.7} parent=0 // pred_region
    _
  $region36: #{resnet_score_forward.7} parent=0 // pred_fallthru
    _

// kernel: resnet_score_forward.9
$region0: #{resnet_score_forward.9}
  #allocation0 [shape = 'u32[]', space=smem, size = 0x4, offset = 0x4, fixed_abs, tag = 'smem constant byte address 0x4 - core index']
  #allocation1 [shape = 'u32[144,128]{1,0:T(1,128)}', space=vmem, size = 0x12000, scoped, tag = 'internal scratch']
  %s0 = inlined_call_operand.vmem [shape: bf16[512,896], index: 0, kind: input, shape index: {}]
  %s1 = inlined_call_operand.vmem [shape: bf16[896,128], index: 1, kind: input, shape index: {}]
  %s2 = inlined_call_operand.vmem [shape: f32[1,128], index: 2, kind: input, shape index: {}]
  %s3 = inlined_call_operand.vmem [shape: f32[512,128], index: 3, kind: output, shape index: {}]
  %s4 = sld [smem:[#allocation0]]
  $region22: #{resnet_score_forward.9} parent=0
    _
  %s6 = ssub.s32 1, %s4
  %s7 = scalar_select 0, %s6, %s4
  // Predicated region
  $region2: #{resnet_score_forward.9} parent=0 // pred_check
    _
  $region3: #{resnet_score_forward.9} parent=0 // pred_check_branch
    %9 = sbr.rel (0) target = $region5
  $region4: #{resnet_score_forward.9} parent=0 // pred_region
    _
  $region5: #{resnet_score_forward.9} parent=0 // pred_fallthru
    _
  // Predicated region
  $region6: #{resnet_score_forward.9} parent=0 // pred_check
    _
  $region7: #{resnet_score_forward.9} parent=0 // pred_check_branch
    %11 = sbr.rel (0) target = $region9
  $region8: #{resnet_score_forward.9} parent=0 // pred_region
    _
  $region9: #{resnet_score_forward.9} parent=0 // pred_fallthru
    _
  // Predicated region
  $region10: #{resnet_score_forward.9} parent=0 // pred_check
    _
  $region11: #{resnet_score_forward.9} parent=0 // pred_check_branch
    %13 = sbr.rel (0) target = $region13
  $region12: #{resnet_score_forward.9} parent=0 // pred_region
    _
  $region13: #{resnet_score_forward.9} parent=0 // pred_fallthru
    _
  %v15 = vld [vmem:[%s0] sm:$0xff]
  %v16 = vld [vmem:[%s0 + $0x8] sm:$0xff]
  %v17 = vld [vmem:[%s0 + $0x10] sm:$0xff]
  %v18 = vld [vmem:[%s0 + $0x18] sm:$0xf]
  %v19 = vld [vmem:[%s0 + $0x1c] sm:$0xff]
  %v20 = vld [vmem:[%s0 + $0x24] sm:$0xff]
  %v21 = vld [vmem:[%s0 + $0x2c] sm:$0xff]
  %v22 = vld [vmem:[%s0 + $0x34] sm:$0xf]
  %v23 = vld [vmem:[%s0 + $0x38] sm:$0xff]
  %v24 = vld [vmem:[%s0 + $0x40] sm:$0xff]
  %v25 = vld [vmem:[%s0 + $0x48] sm:$0xff]
  %v26 = vld [vmem:[%s0 + $0x50] sm:$0xf]
  %v27 = vld [vmem:[%s0 + $0x54] sm:$0xff]
  %v28 = vld [vmem:[%s0 + $0x5c] sm:$0xff]
  %v29 = vld [vmem:[%s0 + $0x64] sm:$0xff]
  %v30 = vld [vmem:[%s0 + $0x6c] sm:$0xf]
  %v31 = vld [vmem:[%s0 + $0x70] sm:$0xff]
  %v32 = vld [vmem:[%s0 + $0x78] sm:$0xff]
  %v33 = vld [vmem:[%s0 + $0x80] sm:$0xff]
  %v34 = vld [vmem:[%s0 + $0x88] sm:$0xf]
  %v35 = vld [vmem:[%s0 + $0x8c] sm:$0xff]
  %v36 = vld [vmem:[%s0 + $0x94] sm:$0xff]
  %v37 = vld [vmem:[%s0 + $0x9c] sm:$0xff]
  %v38 = vld [vmem:[%s0 + $0xa4] sm:$0xf]
  %v39 = vld [vmem:[%s0 + $0xa8] sm:$0xff]
  %v40 = vld [vmem:[%s0 + $0xb0] sm:$0xff]
  %v41 = vld [vmem:[%s0 + $0xb8] sm:$0xff]
  %v42 = vld [vmem:[%s0 + $0xc0] sm:$0xf]
  %v43 = vld [vmem:[%s0 + $0xc4] sm:$0xff]
  %v44 = vld [vmem:[%s0 + $0xcc] sm:$0xff]
  %v45 = vld [vmem:[%s0 + $0xd4] sm:$0xff]
  %v46 = vld [vmem:[%s0 + $0xdc] sm:$0xf]
  %v47 = vld [vmem:[%s0 + $0xe0] sm:$0xff]
  %v48 = vld [vmem:[%s0 + $0xe8] sm:$0xff]
  %v49 = vld [vmem:[%s0 + $0xf0] sm:$0xff]
  %v50 = vld [vmem:[%s0 + $0xf8] sm:$0xf]
  %v51 = vld [vmem:[%s0 + $0xfc] sm:$0xff]
  %v52 = vld [vmem:[%s0 + $0x104] sm:$0xff]
  %v53 = vld [vmem:[%s0 + $0x10c] sm:$0xff]
  %v54 = vld [vmem:[%s0 + $0x114] sm:$0xf]
  %v55 = vld [vmem:[%s0 + $0x118] sm:$0xff]
  %v56 = vld [vmem:[%s0 + $0x120] sm:$0xff]
  %v57 = vld [vmem:[%s0 + $0x128] sm:$0xff]
  %v58 = vld [vmem:[%s0 + $0x130] sm:$0xf]
  %v59 = vld [vmem:[%s0 + $0x134] sm:$0xff]
  %v60 = vld [vmem:[%s0 + $0x13c] sm:$0xff]
  %v61 = vld [vmem:[%s0 + $0x144] sm:$0xff]
  %v62 = vld [vmem:[%s0 + $0x14c] sm:$0xf]
  %v63 = vld [vmem:[%s0 + $0x150] sm:$0xff]
  %v64 = vld [vmem:[%s0 + $0x158] sm:$0xff]
  %v65 = vld [vmem:[%s0 + $0x160] sm:$0xff]
  %v66 = vld [vmem:[%s0 + $0x168] sm:$0xf]
  %v67 = vld [vmem:[%s0 + $0x16c] sm:$0xff]
  %v68 = vld [vmem:[%s0 + $0x174] sm:$0xff]
  %v69 = vld [vmem:[%s0 + $0x17c] sm:$0xff]
  %v70 = vld [vmem:[%s0 + $0x184] sm:$0xf]
  %v71 = vld [vmem:[%s0 + $0x188] sm:$0xff]
  %v72 = vld [vmem:[%s0 + $0x190] sm:$0xff]
  %v73 = vld [vmem:[%s0 + $0x198] sm:$0xff]
  %v74 = vld [vmem:[%s0 + $0x1a0] sm:$0xf]
  %v75 = vld [vmem:[%s0 + $0x1a4] sm:$0xff]
  %v76 = vld [vmem:[%s0 + $0x1ac] sm:$0xff]
  %v77 = vld [vmem:[%s0 + $0x1b4] sm:$0xff]
  %v78 = vld [vmem:[%s0 + $0x1bc] sm:$0xf]
  %v79 = vld [vmem:[%s0 + $0x1c0] sm:$0xff]
  %v80 = vld [vmem:[%s0 + $0x1c8] sm:$0xff]
  %v81 = vld [vmem:[%s0 + $0x1d0] sm:$0xff]
  %v82 = vld [vmem:[%s0 + $0x1d8] sm:$0xf]
  %v83 = vld [vmem:[%s0 + $0x1dc] sm:$0xff]
  %v84 = vld [vmem:[%s0 + $0x1e4] sm:$0xff]
  %v85 = vld [vmem:[%s0 + $0x1ec] sm:$0xff]
  %v86 = vld [vmem:[%s0 + $0x1f4] sm:$0xf]
  %v87 = vld [vmem:[%s0 + $0x1f8] sm:$0xff]
  %v88 = vld [vmem:[%s0 + $0x200] sm:$0xff]
  %v89 = vld [vmem:[%s0 + $0x208] sm:$0xff]
  %v90 = vld [vmem:[%s0 + $0x210] sm:$0xf]
  %v91 = vld [vmem:[%s0 + $0x214] sm:$0xff]
  %v92 = vld [vmem:[%s0 + $0x21c] sm:$0xff]
  %v93 = vld [vmem:[%s0 + $0x224] sm:$0xff]
  %v94 = vld [vmem:[%s0 + $0x22c] sm:$0xf]
  %v95 = vld [vmem:[%s0 + $0x230] sm:$0xff]
  %v96 = vld [vmem:[%s0 + $0x238] sm:$0xff]
  %v97 = vld [vmem:[%s0 + $0x240] sm:$0xff]
  %v98 = vld [vmem:[%s0 + $0x248] sm:$0xf]
  %v99 = vld [vmem:[%s0 + $0x24c] sm:$0xff]
  %v100 = vld [vmem:[%s0 + $0x254] sm:$0xff]
  %v101 = vld [vmem:[%s0 + $0x25c] sm:$0xff]
  %v102 = vld [vmem:[%s0 + $0x264] sm:$0xf]
  %v103 = vld [vmem:[%s0 + $0x268] sm:$0xff]
  %v104 = vld [vmem:[%s0 + $0x270] sm:$0xff]
  %v105 = vld [vmem:[%s0 + $0x278] sm:$0xff]
  %v106 = vld [vmem:[%s0 + $0x280] sm:$0xf]
  %v107 = vld [vmem:[%s0 + $0x284] sm:$0xff]
  %v108 = vld [vmem:[%s0 + $0x28c] sm:$0xff]
  %v109 = vld [vmem:[%s0 + $0x294] sm:$0xff]
  %v110 = vld [vmem:[%s0 + $0x29c] sm:$0xf]
  %v111 = vld [vmem:[%s0 + $0x2a0] sm:$0xff]
  %v112 = vld [vmem:[%s0 + $0x2a8] sm:$0xff]
  %v113 = vld [vmem:[%s0 + $0x2b0] sm:$0xff]
  %v114 = vld [vmem:[%s0 + $0x2b8] sm:$0xf]
  %v115 = vld [vmem:[%s0 + $0x2bc] sm:$0xff]
  %v116 = vld [vmem:[%s0 + $0x2c4] sm:$0xff]
  %v117 = vld [vmem:[%s0 + $0x2cc] sm:$0xff]
  %v118 = vld [vmem:[%s0 + $0x2d4] sm:$0xf]
  %v119 = vld [vmem:[%s0 + $0x2d8] sm:$0xff]
  %v120 = vld [vmem:[%s0 + $0x2e0] sm:$0xff]
  %v121 = vld [vmem:[%s0 + $0x2e8] sm:$0xff]
  %v122 = vld [vmem:[%s0 + $0x2f0] sm:$0xf]
  %v123 = vld [vmem:[%s0 + $0x2f4] sm:$0xff]
  %v124 = vld [vmem:[%s0 + $0x2fc] sm:$0xff]
  %v125 = vld [vmem:[%s0 + $0x304] sm:$0xff]
  %v126 = vld [vmem:[%s0 + $0x30c] sm:$0xf]
  %v127 = vld [vmem:[%s0 + $0x310] sm:$0xff]
  %v128 = vld [vmem:[%s0 + $0x318] sm:$0xff]
  %v129 = vld [vmem:[%s0 + $0x320] sm:$0xff]
  %v130 = vld [vmem:[%s0 + $0x328] sm:$0xf]
  %v131 = vld [vmem:[%s0 + $0x32c] sm:$0xff]
  %v132 = vld [vmem:[%s0 + $0x334] sm:$0xff]
  %v133 = vld [vmem:[%s0 + $0x33c] sm:$0xff]
  %v134 = vld [vmem:[%s0 + $0x344] sm:$0xf]
  %v135 = vld [vmem:[%s0 + $0x348] sm:$0xff]
  %v136 = vld [vmem:[%s0 + $0x350] sm:$0xff]
  %v137 = vld [vmem:[%s0 + $0x358] sm:$0xff]
  %v138 = vld [vmem:[%s0 + $0x360] sm:$0xf]
  %v139 = vld [vmem:[%s0 + $0x364] sm:$0xff]
  %v140 = vld [vmem:[%s0 + $0x36c] sm:$0xff]
  %v141 = vld [vmem:[%s0 + $0x374] sm:$0xff]
  %v142 = vld [vmem:[%s0 + $0x37c] sm:$0xf]
  %v143 = vld [vmem:[%s0 + $0x380] sm:$0xff]
  %v144 = vld [vmem:[%s0 + $0x388] sm:$0xff]
  %v145 = vld [vmem:[%s0 + $0x390] sm:$0xff]
  %v146 = vld [vmem:[%s0 + $0x398] sm:$0xf]
  %v147 = vld [vmem:[%s0 + $0x39c] sm:$0xff]
  %v148 = vld [vmem:[%s0 + $0x3a4] sm:$0xff]
  %v149 = vld [vmem:[%s0 + $0x3ac] sm:$0xff]
  %v150 = vld [vmem:[%s0 + $0x3b4] sm:$0xf]
  %v151 = vld [vmem:[%s0 + $0x3b8] sm:$0xff]
  %v152 = vld [vmem:[%s0 + $0x3c0] sm:$0xff]
  %v153 = vld [vmem:[%s0 + $0x3c8] sm:$0xff]
  %v154 = vld [vmem:[%s0 + $0x3d0] sm:$0xf]
  %v155 = vld [vmem:[%s0 + $0x3d4] sm:$0xff]
  %v156 = vld [vmem:[%s0 + $0x3dc] sm:$0xff]
  %v157 = vld [vmem:[%s0 + $0x3e4] sm:$0xff]
  %v158 = vld [vmem:[%s0 + $0x3ec] sm:$0xf]
  %v159 = vld [vmem:[%s0 + $0x3f0] sm:$0xff]
  %v160 = vld [vmem:[%s0 + $0x3f8] sm:$0xff]
  %v161 = vld [vmem:[%s0 + $0x400] sm:$0xff]
  %v162 = vld [vmem:[%s0 + $0x408] sm:$0xf]
  %v163 = vld [vmem:[%s0 + $0x40c] sm:$0xff]
  %v164 = vld [vmem:[%s0 + $0x414] sm:$0xff]
  %v165 = vld [vmem:[%s0 + $0x41c] sm:$0xff]
  %v166 = vld [vmem:[%s0 + $0x424] sm:$0xf]
  %v167 = vld [vmem:[%s0 + $0x428] sm:$0xff]
  %v168 = vld [vmem:[%s0 + $0x430] sm:$0xff]
  %v169 = vld [vmem:[%s0 + $0x438] sm:$0xff]
  %v170 = vld [vmem:[%s0 + $0x440] sm:$0xf]
  %v171 = vld [vmem:[%s0 + $0x444] sm:$0xff]
  %v172 = vld [vmem:[%s0 + $0x44c] sm:$0xff]
  %v173 = vld [vmem:[%s0 + $0x454] sm:$0xff]
  %v174 = vld [vmem:[%s0 + $0x45c] sm:$0xf]
  %v175 = vld [vmem:[%s0 + $0x460] sm:$0xff]
  %v176 = vld [vmem:[%s0 + $0x468] sm:$0xff]
  %v177 = vld [vmem:[%s0 + $0x470] sm:$0xff]
  %v178 = vld [vmem:[%s0 + $0x478] sm:$0xf]
  %v179 = vld [vmem:[%s0 + $0x47c] sm:$0xff]
  %v180 = vld [vmem:[%s0 + $0x484] sm:$0xff]
  %v181 = vld [vmem:[%s0 + $0x48c] sm:$0xff]
  %v182 = vld [vmem:[%s0 + $0x494] sm:$0xf]
  %v183 = vld [vmem:[%s0 + $0x498] sm:$0xff]
  %v184 = vld [vmem:[%s0 + $0x4a0] sm:$0xff]
  %v185 = vld [vmem:[%s0 + $0x4a8] sm:$0xff]
  %v186 = vld [vmem:[%s0 + $0x4b0] sm:$0xf]
  %v187 = vld [vmem:[%s0 + $0x4b4] sm:$0xff]
  %v188 = vld [vmem:[%s0 + $0x4bc] sm:$0xff]
  %v189 = vld [vmem:[%s0 + $0x4c4] sm:$0xff]
  %v190 = vld [vmem:[%s0 + $0x4cc] sm:$0xf]
  %v191 = vld [vmem:[%s0 + $0x4d0] sm:$0xff]
  %v192 = vld [vmem:[%s0 + $0x4d8] sm:$0xff]
  %v193 = vld [vmem:[%s0 + $0x4e0] sm:$0xff]
  %v194 = vld [vmem:[%s0 + $0x4e8] sm:$0xf]
  %v195 = vld [vmem:[%s0 + $0x4ec] sm:$0xff]
  %v196 = vld [vmem:[%s0 + $0x4f4] sm:$0xff]
  %v197 = vld [vmem:[%s0 + $0x4fc] sm:$0xff]
  %v198 = vld [vmem:[%s0 + $0x504] sm:$0xf]
  %v199 = vld [vmem:[%s0 + $0x508] sm:$0xff]
  %v200 = vld [vmem:[%s0 + $0x510] sm:$0xff]
  %v201 = vld [vmem:[%s0 + $0x518] sm:$0xff]
  %v202 = vld [vmem:[%s0 + $0x520] sm:$0xf]
  %v203 = vld [vmem:[%s0 + $0x524] sm:$0xff]
  %v204 = vld [vmem:[%s0 + $0x52c] sm:$0xff]
  %v205 = vld [vmem:[%s0 + $0x534] sm:$0xff]
  %v206 = vld [vmem:[%s0 + $0x53c] sm:$0xf]
  %v207 = vld [vmem:[%s0 + $0x540] sm:$0xff]
  %v208 = vld [vmem:[%s0 + $0x548] sm:$0xff]
  %v209 = vld [vmem:[%s0 + $0x550] sm:$0xff]
  %v210 = vld [vmem:[%s0 + $0x558] sm:$0xf]
  %v211 = vld [vmem:[%s0 + $0x55c] sm:$0xff]
  %v212 = vld [vmem:[%s0 + $0x564] sm:$0xff]
  %v213 = vld [vmem:[%s0 + $0x56c] sm:$0xff]
  %v214 = vld [vmem:[%s0 + $0x574] sm:$0xf]
  %v215 = vld [vmem:[%s0 + $0x578] sm:$0xff]
  %v216 = vld [vmem:[%s0 + $0x580] sm:$0xff]
  %v217 = vld [vmem:[%s0 + $0x588] sm:$0xff]
  %v218 = vld [vmem:[%s0 + $0x590] sm:$0xf]
  %v219 = vld [vmem:[%s0 + $0x594] sm:$0xff]
  %v220 = vld [vmem:[%s0 + $0x59c] sm:$0xff]
  %v221 = vld [vmem:[%s0 + $0x5a4] sm:$0xff]
  %v222 = vld [vmem:[%s0 + $0x5ac] sm:$0xf]
  %v223 = vld [vmem:[%s0 + $0x5b0] sm:$0xff]
  %v224 = vld [vmem:[%s0 + $0x5b8] sm:$0xff]
  %v225 = vld [vmem:[%s0 + $0x5c0] sm:$0xff]
  %v226 = vld [vmem:[%s0 + $0x5c8] sm:$0xf]
  %v227 = vld [vmem:[%s0 + $0x5cc] sm:$0xff]
  %v228 = vld [vmem:[%s0 + $0x5d4] sm:$0xff]
  %v229 = vld [vmem:[%s0 + $0x5dc] sm:$0xff]
  %v230 = vld [vmem:[%s0 + $0x5e4] sm:$0xf]
  %v231 = vld [vmem:[%s0 + $0x5e8] sm:$0xff]
  %v232 = vld [vmem:[%s0 + $0x5f0] sm:$0xff]
  %v233 = vld [vmem:[%s0 + $0x5f8] sm:$0xff]
  %v234 = vld [vmem:[%s0 + $0x600] sm:$0xf]
  %v235 = vld [vmem:[%s0 + $0x604] sm:$0xff]
  %v236 = vld [vmem:[%s0 + $0x60c] sm:$0xff]
  %v237 = vld [vmem:[%s0 + $0x614] sm:$0xff]
  %v238 = vld [vmem:[%s0 + $0x61c] sm:$0xf]
  %v239 = vld [vmem:[%s0 + $0x620] sm:$0xff]
  %v240 = vld [vmem:[%s0 + $0x628] sm:$0xff]
  %v241 = vld [vmem:[%s0 + $0x630] sm:$0xff]
  %v242 = vld [vmem:[%s0 + $0x638] sm:$0xf]
  %v243 = vld [vmem:[%s0 + $0x63c] sm:$0xff]
  %v244 = vld [vmem:[%s0 + $0x644] sm:$0xff]
  %v245 = vld [vmem:[%s0 + $0x64c] sm:$0xff]
  %v246 = vld [vmem:[%s0 + $0x654] sm:$0xf]
  %v247 = vld [vmem:[%s0 + $0x658] sm:$0xff]
  %v248 = vld [vmem:[%s0 + $0x660] sm:$0xff]
  %v249 = vld [vmem:[%s0 + $0x668] sm:$0xff]
  %v250 = vld [vmem:[%s0 + $0x670] sm:$0xf]
  %v251 = vld [vmem:[%s0 + $0x674] sm:$0xff]
  %v252 = vld [vmem:[%s0 + $0x67c] sm:$0xff]
  %v253 = vld [vmem:[%s0 + $0x684] sm:$0xff]
  %v254 = vld [vmem:[%s0 + $0x68c] sm:$0xf]
  %v255 = vld [vmem:[%s0 + $0x690] sm:$0xff]
  %v256 = vld [vmem:[%s0 + $0x698] sm:$0xff]
  %v257 = vld [vmem:[%s0 + $0x6a0] sm:$0xff]
  %v258 = vld [vmem:[%s0 + $0x6a8] sm:$0xf]
  %v259 = vld [vmem:[%s0 + $0x6ac] sm:$0xff]
  %v260 = vld [vmem:[%s0 + $0x6b4] sm:$0xff]
  %v261 = vld [vmem:[%s0 + $0x6bc] sm:$0xff]
  %v262 = vld [vmem:[%s0 + $0x6c4] sm:$0xf]
  %v263 = vld [vmem:[%s0 + $0x6c8] sm:$0xff]
  %v264 = vld [vmem:[%s0 + $0x6d0] sm:$0xff]
  %v265 = vld [vmem:[%s0 + $0x6d8] sm:$0xff]
  %v266 = vld [vmem:[%s0 + $0x6e0] sm:$0xf]
  %v267 = vld [vmem:[%s0 + $0x6e4] sm:$0xff]
  %v268 = vld [vmem:[%s0 + $0x6ec] sm:$0xff]
  %v269 = vld [vmem:[%s0 + $0x6f4] sm:$0xff]
  %v270 = vld [vmem:[%s0 + $0x6fc] sm:$0xf]
  %v271 = vld [vmem:[%s1] sm:$0xf]
  %v272 = vld [vmem:[%s1 + $0x4] sm:$0xf]
  %v273 = vld [vmem:[%s1 + $0x8] sm:$0xf]
  %v274 = vld [vmem:[%s1 + $0xc] sm:$0xf]
  %v275 = vld [vmem:[%s1 + $0x10] sm:$0xf]
  %v276 = vld [vmem:[%s1 + $0x14] sm:$0xf]
  %v277 = vld [vmem:[%s1 + $0x18] sm:$0xf]
  %v278 = vld [vmem:[%s1 + $0x1c] sm:$0xf]
  %v279 = vld [vmem:[%s1 + $0x20] sm:$0xf]
  %v280 = vld [vmem:[%s1 + $0x24] sm:$0xf]
  %v281 = vld [vmem:[%s1 + $0x28] sm:$0xf]
  %v282 = vld [vmem:[%s1 + $0x2c] sm:$0xf]
  %v283 = vld [vmem:[%s1 + $0x30] sm:$0xf]
  %v284 = vld [vmem:[%s1 + $0x34] sm:$0xf]
  %v285 = vld [vmem:[%s1 + $0x38] sm:$0xf]
  %v286 = vld [vmem:[%s1 + $0x3c] sm:$0xf]
  %v287 = vld [vmem:[%s1 + $0x40] sm:$0xf]
  %v288 = vld [vmem:[%s1 + $0x44] sm:$0xf]
  %v289 = vld [vmem:[%s1 + $0x48] sm:$0xf]
  %v290 = vld [vmem:[%s1 + $0x4c] sm:$0xf]
  %v291 = vld [vmem:[%s1 + $0x50] sm:$0xf]
  %v292 = vld [vmem:[%s1 + $0x54] sm:$0xf]
  %v293 = vld [vmem:[%s1 + $0x58] sm:$0xf]
  %v294 = vld [vmem:[%s1 + $0x5c] sm:$0xf]
  %v295 = vld [vmem:[%s1 + $0x60] sm:$0xf]
  %v296 = vld [vmem:[%s1 + $0x64] sm:$0xf]
  %v297 = vld [vmem:[%s1 + $0x68] sm:$0xf]
  %v298 = vld [vmem:[%s1 + $0x6c] sm:$0xf]
  %v299 = vld [vmem:[%s1 + $0x70] sm:$0xf]
  %v300 = vld [vmem:[%s1 + $0x74] sm:$0xf]
  %v301 = vld [vmem:[%s1 + $0x78] sm:$0xf]
  %v302 = vld [vmem:[%s1 + $0x7c] sm:$0xf]
  %v303 = vld [vmem:[%s1 + $0x80] sm:$0xf]
  %v304 = vld [vmem:[%s1 + $0x84] sm:$0xf]
  %v305 = vld [vmem:[%s1 + $0x88] sm:$0xf]
  %v306 = vld [vmem:[%s1 + $0x8c] sm:$0xf]
  %v307 = vld [vmem:[%s1 + $0x90] sm:$0xf]
  %v308 = vld [vmem:[%s1 + $0x94] sm:$0xf]
  %v309 = vld [vmem:[%s1 + $0x98] sm:$0xf]
  %v310 = vld [vmem:[%s1 + $0x9c] sm:$0xf]
  %v311 = vld [vmem:[%s1 + $0xa0] sm:$0xf]
  %v312 = vld [vmem:[%s1 + $0xa4] sm:$0xf]
  %v313 = vld [vmem:[%s1 + $0xa8] sm:$0xf]
  %v314 = vld [vmem:[%s1 + $0xac] sm:$0xf]
  %v315 = vld [vmem:[%s1 + $0xb0] sm:$0xf]
  %v316 = vld [vmem:[%s1 + $0xb4] sm:$0xf]
  %v317 = vld [vmem:[%s1 + $0xb8] sm:$0xf]
  %v318 = vld [vmem:[%s1 + $0xbc] sm:$0xf]
  %v319 = vld [vmem:[%s1 + $0xc0] sm:$0xf]
  %v320 = vld [vmem:[%s1 + $0xc4] sm:$0xf]
  %v321 = vld [vmem:[%s1 + $0xc8] sm:$0xf]
  %v322 = vld [vmem:[%s1 + $0xcc] sm:$0xf]
  %v323 = vld [vmem:[%s1 + $0xd0] sm:$0xf]
  %v324 = vld [vmem:[%s1 + $0xd4] sm:$0xf]
  %v325 = vld [vmem:[%s1 + $0xd8] sm:$0xf]
  %v326 = vld [vmem:[%s1 + $0xdc] sm:$0xf]
  %v327 = vld [vmem:[%s1 + $0xe0] sm:$0xf]
  %v328 = vld [vmem:[%s1 + $0xe4] sm:$0xf]
  %v329 = vld [vmem:[%s1 + $0xe8] sm:$0xf]
  %v330 = vld [vmem:[%s1 + $0xec] sm:$0xf]
  %v331 = vld [vmem:[%s1 + $0xf0] sm:$0xf]
  %v332 = vld [vmem:[%s1 + $0xf4] sm:$0xf]
  %v333 = vld [vmem:[%s1 + $0xf8] sm:$0xf]
  %v334 = vld [vmem:[%s1 + $0xfc] sm:$0xf]
  %v335 = vld [vmem:[%s1 + $0x100] sm:$0xf]
  %v336 = vld [vmem:[%s1 + $0x104] sm:$0xf]
  %v337 = vld [vmem:[%s1 + $0x108] sm:$0xf]
  %v338 = vld [vmem:[%s1 + $0x10c] sm:$0xf]
  %v339 = vld [vmem:[%s1 + $0x110] sm:$0xf]
  %v340 = vld [vmem:[%s1 + $0x114] sm:$0xf]
  %v341 = vld [vmem:[%s1 + $0x118] sm:$0xf]
  %v342 = vld [vmem:[%s1 + $0x11c] sm:$0xf]
  %v343 = vld [vmem:[%s1 + $0x120] sm:$0xf]
  %v344 = vld [vmem:[%s1 + $0x124] sm:$0xf]
  %v345 = vld [vmem:[%s1 + $0x128] sm:$0xf]
  %v346 = vld [vmem:[%s1 + $0x12c] sm:$0xf]
  %v347 = vld [vmem:[%s1 + $0x130] sm:$0xf]
  %v348 = vld [vmem:[%s1 + $0x134] sm:$0xf]
  %v349 = vld [vmem:[%s1 + $0x138] sm:$0xf]
  %v350 = vld [vmem:[%s1 + $0x13c] sm:$0xf]
  %v351 = vld [vmem:[%s1 + $0x140] sm:$0xf]
  %v352 = vld [vmem:[%s1 + $0x144] sm:$0xf]
  %v353 = vld [vmem:[%s1 + $0x148] sm:$0xf]
  %v354 = vld [vmem:[%s1 + $0x14c] sm:$0xf]
  %v355 = vld [vmem:[%s1 + $0x150] sm:$0xf]
  %v356 = vld [vmem:[%s1 + $0x154] sm:$0xf]
  %v357 = vld [vmem:[%s1 + $0x158] sm:$0xf]
  %v358 = vld [vmem:[%s1 + $0x15c] sm:$0xf]
  %v359 = vld [vmem:[%s1 + $0x160] sm:$0xf]
  %v360 = vld [vmem:[%s1 + $0x164] sm:$0xf]
  %v361 = vld [vmem:[%s1 + $0x168] sm:$0xf]
  %v362 = vld [vmem:[%s1 + $0x16c] sm:$0xf]
  %v363 = vld [vmem:[%s1 + $0x170] sm:$0xf]
  %v364 = vld [vmem:[%s1 + $0x174] sm:$0xf]
  %v365 = vld [vmem:[%s1 + $0x178] sm:$0xf]
  %v366 = vld [vmem:[%s1 + $0x17c] sm:$0xf]
  %v367 = vld [vmem:[%s1 + $0x180] sm:$0xf]
  %v368 = vld [vmem:[%s1 + $0x184] sm:$0xf]
  %v369 = vld [vmem:[%s1 + $0x188] sm:$0xf]
  %v370 = vld [vmem:[%s1 + $0x18c] sm:$0xf]
  %v371 = vld [vmem:[%s1 + $0x190] sm:$0xf]
  %v372 = vld [vmem:[%s1 + $0x194] sm:$0xf]
  %v373 = vld [vmem:[%s1 + $0x198] sm:$0xf]
  %v374 = vld [vmem:[%s1 + $0x19c] sm:$0xf]
  %v375 = vld [vmem:[%s1 + $0x1a0] sm:$0xf]
  %v376 = vld [vmem:[%s1 + $0x1a4] sm:$0xf]
  %v377 = vld [vmem:[%s1 + $0x1a8] sm:$0xf]
  %v378 = vld [vmem:[%s1 + $0x1ac] sm:$0xf]
  %v379 = vld [vmem:[%s1 + $0x1b0] sm:$0xf]
  %v380 = vld [vmem:[%s1 + $0x1b4] sm:$0xf]
  %v381 = vld [vmem:[%s1 + $0x1b8] sm:$0xf]
  %v382 = vld [vmem:[%s1 + $0x1bc] sm:$0xf]
  %v383 = vld [vmem:[%s2] sm:$0x1]
  %v385 = vlaneseq
  %v386 = vshrl.u32 %v385, 7
  %v387 = vsub.s32 0, %v386
  %v388 = vrot.slane %v383, %v387
  %v646 = vunpack.c.l.b16 %v15
  %v647 = vunpack.c.h.b16 %v15
  %v648 = vunpack.c.l.b16 %v16
  %v649 = vunpack.c.h.b16 %v16
  %v650 = vunpack.c.l.b16 %v17
  %v651 = vunpack.c.h.b16 %v17
  %v652 = vunpack.c.l.b16 %v18
  %v653 = vunpack.c.l.b16 %v19
  %v654 = vunpack.c.h.b16 %v19
  %v655 = vunpack.c.l.b16 %v20
  %v656 = vunpack.c.h.b16 %v20
  %v657 = vunpack.c.l.b16 %v21
  %v658 = vunpack.c.h.b16 %v21
  %v659 = vunpack.c.l.b16 %v22
  %v660 = vunpack.c.l.b16 %v23
  %v661 = vunpack.c.h.b16 %v23
  %v662 = vunpack.c.l.b16 %v24
  %v663 = vunpack.c.h.b16 %v24
  %v664 = vunpack.c.l.b16 %v25
  %v665 = vunpack.c.h.b16 %v25
  %v666 = vunpack.c.l.b16 %v26
  %v667 = vunpack.c.l.b16 %v27
  %v668 = vunpack.c.h.b16 %v27
  %v669 = vunpack.c.l.b16 %v28
  %v670 = vunpack.c.h.b16 %v28
  %v671 = vunpack.c.l.b16 %v29
  %v672 = vunpack.c.h.b16 %v29
  %v673 = vunpack.c.l.b16 %v30
  %v674 = vunpack.c.l.b16 %v31
  %v675 = vunpack.c.h.b16 %v31
  %v676 = vunpack.c.l.b16 %v32
  %v677 = vunpack.c.h.b16 %v32
  %v678 = vunpack.c.l.b16 %v33
  %v679 = vunpack.c.h.b16 %v33
  %v680 = vunpack.c.l.b16 %v34
  %v681 = vunpack.c.l.b16 %v35
  %v682 = vunpack.c.h.b16 %v35
  %v683 = vunpack.c.l.b16 %v36
  %v684 = vunpack.c.h.b16 %v36
  %v685 = vunpack.c.l.b16 %v37
  %v686 = vunpack.c.h.b16 %v37
  %v687 = vunpack.c.l.b16 %v38
  %v688 = vunpack.c.l.b16 %v39
  %v689 = vunpack.c.h.b16 %v39
  %v690 = vunpack.c.l.b16 %v40
  %v691 = vunpack.c.h.b16 %v40
  %v692 = vunpack.c.l.b16 %v41
  %v693 = vunpack.c.h.b16 %v41
  %v694 = vunpack.c.l.b16 %v42
  %v695 = vunpack.c.l.b16 %v43
  %v696 = vunpack.c.h.b16 %v43
  %v697 = vunpack.c.l.b16 %v44
  %v698 = vunpack.c.h.b16 %v44
  %v699 = vunpack.c.l.b16 %v45
  %v700 = vunpack.c.h.b16 %v45
  %v701 = vunpack.c.l.b16 %v46
  %v702 = vunpack.c.l.b16 %v47
  %v703 = vunpack.c.h.b16 %v47
  %v704 = vunpack.c.l.b16 %v48
  %v705 = vunpack.c.h.b16 %v48
  %v706 = vunpack.c.l.b16 %v49
  %v707 = vunpack.c.h.b16 %v49
  %v708 = vunpack.c.l.b16 %v50
  %v709 = vunpack.c.l.b16 %v51
  %v710 = vunpack.c.h.b16 %v51
  %v711 = vunpack.c.l.b16 %v52
  %v712 = vunpack.c.h.b16 %v52
  %v713 = vunpack.c.l.b16 %v53
  %v714 = vunpack.c.h.b16 %v53
  %v715 = vunpack.c.l.b16 %v54
  %v716 = vunpack.c.l.b16 %v55
  %v717 = vunpack.c.h.b16 %v55
  %v718 = vunpack.c.l.b16 %v56
  %v719 = vunpack.c.h.b16 %v56
  %v720 = vunpack.c.l.b16 %v57
  %v721 = vunpack.c.h.b16 %v57
  %v722 = vunpack.c.l.b16 %v58
  %v723 = vunpack.c.l.b16 %v59
  %v724 = vunpack.c.h.b16 %v59
  %v725 = vunpack.c.l.b16 %v60
  %v726 = vunpack.c.h.b16 %v60
  %v727 = vunpack.c.l.b16 %v61
  %v728 = vunpack.c.h.b16 %v61
  %v729 = vunpack.c.l.b16 %v62
  %v730 = vunpack.c.l.b16 %v63
  %v731 = vunpack.c.h.b16 %v63
  %v732 = vunpack.c.l.b16 %v64
  %v733 = vunpack.c.h.b16 %v64
  %v734 = vunpack.c.l.b16 %v65
  %v735 = vunpack.c.h.b16 %v65
  %v736 = vunpack.c.l.b16 %v66
  %v737 = vunpack.c.l.b16 %v67
  %v738 = vunpack.c.h.b16 %v67
  %v739 = vunpack.c.l.b16 %v68
  %v740 = vunpack.c.h.b16 %v68
  %v741 = vunpack.c.l.b16 %v69
  %v742 = vunpack.c.h.b16 %v69
  %v743 = vunpack.c.l.b16 %v70
  %v744 = vunpack.c.l.b16 %v71
  %v745 = vunpack.c.h.b16 %v71
  %v746 = vunpack.c.l.b16 %v72
  %v747 = vunpack.c.h.b16 %v72
  %v748 = vunpack.c.l.b16 %v73
  %v749 = vunpack.c.h.b16 %v73
  %v750 = vunpack.c.l.b16 %v74
  %v751 = vunpack.c.l.b16 %v75
  %v752 = vunpack.c.h.b16 %v75
  %v753 = vunpack.c.l.b16 %v76
  %v754 = vunpack.c.h.b16 %v76
  %v755 = vunpack.c.l.b16 %v77
  %v756 = vunpack.c.h.b16 %v77
  %v757 = vunpack.c.l.b16 %v78
  %v758 = vunpack.c.l.b16 %v79
  %v759 = vunpack.c.h.b16 %v79
  %v760 = vunpack.c.l.b16 %v80
  %v761 = vunpack.c.h.b16 %v80
  %v762 = vunpack.c.l.b16 %v81
  %v763 = vunpack.c.h.b16 %v81
  %v764 = vunpack.c.l.b16 %v82
  %v765 = vunpack.c.l.b16 %v83
  %v766 = vunpack.c.h.b16 %v83
  %v767 = vunpack.c.l.b16 %v84
  %v768 = vunpack.c.h.b16 %v84
  %v769 = vunpack.c.l.b16 %v85
  %v770 = vunpack.c.h.b16 %v85
  %v771 = vunpack.c.l.b16 %v86
  %v772 = vunpack.c.l.b16 %v87
  %v773 = vunpack.c.h.b16 %v87
  %v774 = vunpack.c.l.b16 %v88
  %v775 = vunpack.c.h.b16 %v88
  %v776 = vunpack.c.l.b16 %v89
  %v777 = vunpack.c.h.b16 %v89
  %v778 = vunpack.c.l.b16 %v90
  %v779 = vunpack.c.l.b16 %v91
  %v780 = vunpack.c.h.b16 %v91
  %v781 = vunpack.c.l.b16 %v92
  %v782 = vunpack.c.h.b16 %v92
  %v783 = vunpack.c.l.b16 %v93
  %v784 = vunpack.c.h.b16 %v93
  %v785 = vunpack.c.l.b16 %v94
  %v786 = vunpack.c.l.b16 %v95
  %v787 = vunpack.c.h.b16 %v95
  %v788 = vunpack.c.l.b16 %v96
  %v789 = vunpack.c.h.b16 %v96
  %v790 = vunpack.c.l.b16 %v97
  %v791 = vunpack.c.h.b16 %v97
  %v792 = vunpack.c.l.b16 %v98
  %v793 = vunpack.c.l.b16 %v99
  %v794 = vunpack.c.h.b16 %v99
  %v795 = vunpack.c.l.b16 %v100
  %v796 = vunpack.c.h.b16 %v100
  %v797 = vunpack.c.l.b16 %v101
  %v798 = vunpack.c.h.b16 %v101
  %v799 = vunpack.c.l.b16 %v102
  %v800 = vunpack.c.l.b16 %v103
  %v801 = vunpack.c.h.b16 %v103
  %v802 = vunpack.c.l.b16 %v104
  %v803 = vunpack.c.h.b16 %v104
  %v804 = vunpack.c.l.b16 %v105
  %v805 = vunpack.c.h.b16 %v105
  %v806 = vunpack.c.l.b16 %v106
  %v807 = vunpack.c.l.b16 %v107
  %v808 = vunpack.c.h.b16 %v107
  %v809 = vunpack.c.l.b16 %v108
  %v810 = vunpack.c.h.b16 %v108
  %v811 = vunpack.c.l.b16 %v109
  %v812 = vunpack.c.h.b16 %v109
  %v813 = vunpack.c.l.b16 %v110
  %v814 = vunpack.c.l.b16 %v111
  %v815 = vunpack.c.h.b16 %v111
  %v816 = vunpack.c.l.b16 %v112
  %v817 = vunpack.c.h.b16 %v112
  %v818 = vunpack.c.l.b16 %v113
  %v819 = vunpack.c.h.b16 %v113
  %v820 = vunpack.c.l.b16 %v114
  %v821 = vunpack.c.l.b16 %v115
  %v822 = vunpack.c.h.b16 %v115
  %v823 = vunpack.c.l.b16 %v116
  %v824 = vunpack.c.h.b16 %v116
  %v825 = vunpack.c.l.b16 %v117
  %v826 = vunpack.c.h.b16 %v117
  %v827 = vunpack.c.l.b16 %v118
  %v828 = vunpack.c.l.b16 %v119
  %v829 = vunpack.c.h.b16 %v119
  %v830 = vunpack.c.l.b16 %v120
  %v831 = vunpack.c.h.b16 %v120
  %v832 = vunpack.c.l.b16 %v121
  %v833 = vunpack.c.h.b16 %v121
  %v834 = vunpack.c.l.b16 %v122
  %v835 = vunpack.c.l.b16 %v123
  %v836 = vunpack.c.h.b16 %v123
  %v837 = vunpack.c.l.b16 %v124
  %v838 = vunpack.c.h.b16 %v124
  %v839 = vunpack.c.l.b16 %v125
  %v840 = vunpack.c.h.b16 %v125
  %v841 = vunpack.c.l.b16 %v126
  %v842 = vunpack.c.l.b16 %v127
  %v843 = vunpack.c.h.b16 %v127
  %v844 = vunpack.c.l.b16 %v128
  %v845 = vunpack.c.h.b16 %v128
  %v846 = vunpack.c.l.b16 %v129
  %v847 = vunpack.c.h.b16 %v129
  %v848 = vunpack.c.l.b16 %v130
  %v849 = vunpack.c.l.b16 %v131
  %v850 = vunpack.c.h.b16 %v131
  %v851 = vunpack.c.l.b16 %v132
  %v852 = vunpack.c.h.b16 %v132
  %v853 = vunpack.c.l.b16 %v133
  %v854 = vunpack.c.h.b16 %v133
  %v855 = vunpack.c.l.b16 %v134
  %v856 = vunpack.c.l.b16 %v135
  %v857 = vunpack.c.h.b16 %v135
  %v858 = vunpack.c.l.b16 %v136
  %v859 = vunpack.c.h.b16 %v136
  %v860 = vunpack.c.l.b16 %v137
  %v861 = vunpack.c.h.b16 %v137
  %v862 = vunpack.c.l.b16 %v138
  %v863 = vunpack.c.l.b16 %v139
  %v864 = vunpack.c.h.b16 %v139
  %v865 = vunpack.c.l.b16 %v140
  %v866 = vunpack.c.h.b16 %v140
  %v867 = vunpack.c.l.b16 %v141
  %v868 = vunpack.c.h.b16 %v141
  %v869 = vunpack.c.l.b16 %v142
  %v870 = vunpack.c.l.b16 %v143
  %v871 = vunpack.c.h.b16 %v143
  %v872 = vunpack.c.l.b16 %v144
  %v873 = vunpack.c.h.b16 %v144
  %v874 = vunpack.c.l.b16 %v145
  %v875 = vunpack.c.h.b16 %v145
  %v876 = vunpack.c.l.b16 %v146
  %v877 = vunpack.c.l.b16 %v147
  %v878 = vunpack.c.h.b16 %v147
  %v879 = vunpack.c.l.b16 %v148
  %v880 = vunpack.c.h.b16 %v148
  %v881 = vunpack.c.l.b16 %v149
  %v882 = vunpack.c.h.b16 %v149
  %v883 = vunpack.c.l.b16 %v150
  %v884 = vunpack.c.l.b16 %v151
  %v885 = vunpack.c.h.b16 %v151
  %v886 = vunpack.c.l.b16 %v152
  %v887 = vunpack.c.h.b16 %v152
  %v888 = vunpack.c.l.b16 %v153
  %v889 = vunpack.c.h.b16 %v153
  %v890 = vunpack.c.l.b16 %v154
  %v891 = vunpack.c.l.b16 %v155
  %v892 = vunpack.c.h.b16 %v155
  %v893 = vunpack.c.l.b16 %v156
  %v894 = vunpack.c.h.b16 %v156
  %v895 = vunpack.c.l.b16 %v157
  %v896 = vunpack.c.h.b16 %v157
  %v897 = vunpack.c.l.b16 %v158
  %v898 = vunpack.c.l.b16 %v159
  %v899 = vunpack.c.h.b16 %v159
  %v900 = vunpack.c.l.b16 %v160
  %v901 = vunpack.c.h.b16 %v160
  %v902 = vunpack.c.l.b16 %v161
  %v903 = vunpack.c.h.b16 %v161
  %v904 = vunpack.c.l.b16 %v162
  %v905 = vunpack.c.l.b16 %v163
  %v906 = vunpack.c.h.b16 %v163
  %v907 = vunpack.c.l.b16 %v164
  %v908 = vunpack.c.h.b16 %v164
  %v909 = vunpack.c.l.b16 %v165
  %v910 = vunpack.c.h.b16 %v165
  %v911 = vunpack.c.l.b16 %v166
  %v912 = vunpack.c.l.b16 %v167
  %v913 = vunpack.c.h.b16 %v167
  %v914 = vunpack.c.l.b16 %v168
  %v915 = vunpack.c.h.b16 %v168
  %v916 = vunpack.c.l.b16 %v169
  %v917 = vunpack.c.h.b16 %v169
  %v918 = vunpack.c.l.b16 %v170
  %v919 = vunpack.c.l.b16 %v171
  %v920 = vunpack.c.h.b16 %v171
  %v921 = vunpack.c.l.b16 %v172
  %v922 = vunpack.c.h.b16 %v172
  %v923 = vunpack.c.l.b16 %v173
  %v924 = vunpack.c.h.b16 %v173
  %v925 = vunpack.c.l.b16 %v174
  %v926 = vunpack.c.l.b16 %v175
  %v927 = vunpack.c.h.b16 %v175
  %v928 = vunpack.c.l.b16 %v176
  %v929 = vunpack.c.h.b16 %v176
  %v930 = vunpack.c.l.b16 %v177
  %v931 = vunpack.c.h.b16 %v177
  %v932 = vunpack.c.l.b16 %v178
  %v933 = vunpack.c.l.b16 %v179
  %v934 = vunpack.c.h.b16 %v179
  %v935 = vunpack.c.l.b16 %v180
  %v936 = vunpack.c.h.b16 %v180
  %v937 = vunpack.c.l.b16 %v181
  %v938 = vunpack.c.h.b16 %v181
  %v939 = vunpack.c.l.b16 %v182
  %v940 = vunpack.c.l.b16 %v183
  %v941 = vunpack.c.h.b16 %v183
  %v942 = vunpack.c.l.b16 %v184
  %v943 = vunpack.c.h.b16 %v184
  %v944 = vunpack.c.l.b16 %v185
  %v945 = vunpack.c.h.b16 %v185
  %v946 = vunpack.c.l.b16 %v186
  %v947 = vunpack.c.l.b16 %v187
  %v948 = vunpack.c.h.b16 %v187
  %v949 = vunpack.c.l.b16 %v188
  %v950 = vunpack.c.h.b16 %v188
  %v951 = vunpack.c.l.b16 %v189
  %v952 = vunpack.c.h.b16 %v189
  %v953 = vunpack.c.l.b16 %v190
  %v954 = vunpack.c.l.b16 %v191
  %v955 = vunpack.c.h.b16 %v191
  %v956 = vunpack.c.l.b16 %v192
  %v957 = vunpack.c.h.b16 %v192
  %v958 = vunpack.c.l.b16 %v193
  %v959 = vunpack.c.h.b16 %v193
  %v960 = vunpack.c.l.b16 %v194
  %v961 = vunpack.c.l.b16 %v195
  %v962 = vunpack.c.h.b16 %v195
  %v963 = vunpack.c.l.b16 %v196
  %v964 = vunpack.c.h.b16 %v196
  %v965 = vunpack.c.l.b16 %v197
  %v966 = vunpack.c.h.b16 %v197
  %v967 = vunpack.c.l.b16 %v198
  %v968 = vunpack.c.l.b16 %v199
  %v969 = vunpack.c.h.b16 %v199
  %v970 = vunpack.c.l.b16 %v200
  %v971 = vunpack.c.h.b16 %v200
  %v972 = vunpack.c.l.b16 %v201
  %v973 = vunpack.c.h.b16 %v201
  %v974 = vunpack.c.l.b16 %v202
  %v975 = vunpack.c.l.b16 %v203
  %v976 = vunpack.c.h.b16 %v203
  %v977 = vunpack.c.l.b16 %v204
  %v978 = vunpack.c.h.b16 %v204
  %v979 = vunpack.c.l.b16 %v205
  %v980 = vunpack.c.h.b16 %v205
  %v981 = vunpack.c.l.b16 %v206
  %v982 = vunpack.c.l.b16 %v207
  %v983 = vunpack.c.h.b16 %v207
  %v984 = vunpack.c.l.b16 %v208
  %v985 = vunpack.c.h.b16 %v208
  %v986 = vunpack.c.l.b16 %v209
  %v987 = vunpack.c.h.b16 %v209
  %v988 = vunpack.c.l.b16 %v210
  %v989 = vunpack.c.l.b16 %v211
  %v990 = vunpack.c.h.b16 %v211
  %v991 = vunpack.c.l.b16 %v212
  %v992 = vunpack.c.h.b16 %v212
  %v993 = vunpack.c.l.b16 %v213
  %v994 = vunpack.c.h.b16 %v213
  %v995 = vunpack.c.l.b16 %v214
  %v996 = vunpack.c.l.b16 %v215
  %v997 = vunpack.c.h.b16 %v215
  %v998 = vunpack.c.l.b16 %v216
  %v999 = vunpack.c.h.b16 %v216
  %v1000 = vunpack.c.l.b16 %v217
  %v1001 = vunpack.c.h.b16 %v217
  %v1002 = vunpack.c.l.b16 %v218
  %v1003 = vunpack.c.l.b16 %v219
  %v1004 = vunpack.c.h.b16 %v219
  %v1005 = vunpack.c.l.b16 %v220
  %v1006 = vunpack.c.h.b16 %v220
  %v1007 = vunpack.c.l.b16 %v221
  %v1008 = vunpack.c.h.b16 %v221
  %v1009 = vunpack.c.l.b16 %v222
  %v1010 = vunpack.c.l.b16 %v223
  %v1011 = vunpack.c.h.b16 %v223
  %v1012 = vunpack.c.l.b16 %v224
  %v1013 = vunpack.c.h.b16 %v224
  %v1014 = vunpack.c.l.b16 %v225
  %v1015 = vunpack.c.h.b16 %v225
  %v1016 = vunpack.c.l.b16 %v226
  %v1017 = vunpack.c.l.b16 %v227
  %v1018 = vunpack.c.h.b16 %v227
  %v1019 = vunpack.c.l.b16 %v228
  %v1020 = vunpack.c.h.b16 %v228
  %v1021 = vunpack.c.l.b16 %v229
  %v1022 = vunpack.c.h.b16 %v229
  %v1023 = vunpack.c.l.b16 %v230
  %v1024 = vunpack.c.l.b16 %v231
  %v1025 = vunpack.c.h.b16 %v231
  %v1026 = vunpack.c.l.b16 %v232
  %v1027 = vunpack.c.h.b16 %v232
  %v1028 = vunpack.c.l.b16 %v233
  %v1029 = vunpack.c.h.b16 %v233
  %v1030 = vunpack.c.l.b16 %v234
  %v1031 = vunpack.c.l.b16 %v235
  %v1032 = vunpack.c.h.b16 %v235
  %v1033 = vunpack.c.l.b16 %v236
  %v1034 = vunpack.c.h.b16 %v236
  %v1035 = vunpack.c.l.b16 %v237
  %v1036 = vunpack.c.h.b16 %v237
  %v1037 = vunpack.c.l.b16 %v238
  %v1038 = vunpack.c.l.b16 %v239
  %v1039 = vunpack.c.h.b16 %v239
  %v1040 = vunpack.c.l.b16 %v240
  %v1041 = vunpack.c.h.b16 %v240
  %v1042 = vunpack.c.l.b16 %v241
  %v1043 = vunpack.c.h.b16 %v241
  %v1044 = vunpack.c.l.b16 %v242
  %v1045 = vunpack.c.l.b16 %v243
  %v1046 = vunpack.c.h.b16 %v243
  %v1047 = vunpack.c.l.b16 %v244
  %v1048 = vunpack.c.h.b16 %v244
  %v1049 = vunpack.c.l.b16 %v245
  %v1050 = vunpack.c.h.b16 %v245
  %v1051 = vunpack.c.l.b16 %v246
  %v1052 = vunpack.c.l.b16 %v247
  %v1053 = vunpack.c.h.b16 %v247
  %v1054 = vunpack.c.l.b16 %v248
  %v1055 = vunpack.c.h.b16 %v248
  %v1056 = vunpack.c.l.b16 %v249
  %v1057 = vunpack.c.h.b16 %v249
  %v1058 = vunpack.c.l.b16 %v250
  %v1059 = vunpack.c.l.b16 %v251
  %v1060 = vunpack.c.h.b16 %v251
  %v1061 = vunpack.c.l.b16 %v252
  %v1062 = vunpack.c.h.b16 %v252
  %v1063 = vunpack.c.l.b16 %v253
  %v1064 = vunpack.c.h.b16 %v253
  %v1065 = vunpack.c.l.b16 %v254
  %v1066 = vunpack.c.l.b16 %v255
  %v1067 = vunpack.c.h.b16 %v255
  %v1068 = vunpack.c.l.b16 %v256
  %v1069 = vunpack.c.h.b16 %v256
  %v1070 = vunpack.c.l.b16 %v257
  %v1071 = vunpack.c.h.b16 %v257
  %v1072 = vunpack.c.l.b16 %v258
  %v1073 = vunpack.c.l.b16 %v259
  %v1074 = vunpack.c.h.b16 %v259
  %v1075 = vunpack.c.l.b16 %v260
  %v1076 = vunpack.c.h.b16 %v260
  %v1077 = vunpack.c.l.b16 %v261
  %v1078 = vunpack.c.h.b16 %v261
  %v1079 = vunpack.c.l.b16 %v262
  %v1080 = vunpack.c.l.b16 %v263
  %v1081 = vunpack.c.h.b16 %v263
  %v1082 = vunpack.c.l.b16 %v264
  %v1083 = vunpack.c.h.b16 %v264
  %v1084 = vunpack.c.l.b16 %v265
  %v1085 = vunpack.c.h.b16 %v265
  %v1086 = vunpack.c.l.b16 %v266
  %v1087 = vunpack.c.l.b16 %v267
  %v1088 = vunpack.c.h.b16 %v267
  %v1089 = vunpack.c.l.b16 %v268
  %v1090 = vunpack.c.h.b16 %v268
  %v1091 = vunpack.c.l.b16 %v269
  %v1092 = vunpack.c.h.b16 %v269
  %v1093 = vunpack.c.l.b16 %v270
  %v1094 = vpack.c.b16 %v653, %v646
  %v1095 = vpack.c.b16 %v654, %v647
  %v1096 = vpack.c.b16 %v655, %v648
  %v1097 = vpack.c.b16 %v656, %v649
  %v1098 = vpack.c.b16 %v657, %v650
  %v1099 = vpack.c.b16 %v658, %v651
  %v1100 = vpack.c.b16 %v659, %v652
  %v1101 = vpack.c.b16 %v667, %v660
  %v1102 = vpack.c.b16 %v668, %v661
  %v1103 = vpack.c.b16 %v669, %v662
  %v1104 = vpack.c.b16 %v670, %v663
  %v1105 = vpack.c.b16 %v671, %v664
  %v1106 = vpack.c.b16 %v672, %v665
  %v1107 = vpack.c.b16 %v673, %v666
  %v1108 = vpack.c.b16 %v681, %v674
  %v1109 = vpack.c.b16 %v682, %v675
  %v1110 = vpack.c.b16 %v683, %v676
  %v1111 = vpack.c.b16 %v684, %v677
  %v1112 = vpack.c.b16 %v685, %v678
  %v1113 = vpack.c.b16 %v686, %v679
  %v1114 = vpack.c.b16 %v687, %v680
  %v1115 = vpack.c.b16 %v695, %v688
  %v1116 = vpack.c.b16 %v696, %v689
  %v1117 = vpack.c.b16 %v697, %v690
  %v1118 = vpack.c.b16 %v698, %v691
  %v1119 = vpack.c.b16 %v699, %v692
  %v1120 = vpack.c.b16 %v700, %v693
  %v1121 = vpack.c.b16 %v701, %v694
  %v1122 = vpack.c.b16 %v709, %v702
  %v1123 = vpack.c.b16 %v710, %v703
  %v1124 = vpack.c.b16 %v711, %v704
  %v1125 = vpack.c.b16 %v712, %v705
  %v1126 = vpack.c.b16 %v713, %v706
  %v1127 = vpack.c.b16 %v714, %v707
  %v1128 = vpack.c.b16 %v715, %v708
  %v1129 = vpack.c.b16 %v723, %v716
  %v1130 = vpack.c.b16 %v724, %v717
  %v1131 = vpack.c.b16 %v725, %v718
  %v1132 = vpack.c.b16 %v726, %v719
  %v1133 = vpack.c.b16 %v727, %v720
  %v1134 = vpack.c.b16 %v728, %v721
  %v1135 = vpack.c.b16 %v729, %v722
  %v1136 = vpack.c.b16 %v737, %v730
  %v1137 = vpack.c.b16 %v738, %v731
  %v1138 = vpack.c.b16 %v739, %v732
  %v1139 = vpack.c.b16 %v740, %v733
  %v1140 = vpack.c.b16 %v741, %v734
  %v1141 = vpack.c.b16 %v742, %v735
  %v1142 = vpack.c.b16 %v743, %v736
  %v1143 = vpack.c.b16 %v751, %v744
  %v1144 = vpack.c.b16 %v752, %v745
  %v1145 = vpack.c.b16 %v753, %v746
  %v1146 = vpack.c.b16 %v754, %v747
  %v1147 = vpack.c.b16 %v755, %v748
  %v1148 = vpack.c.b16 %v756, %v749
  %v1149 = vpack.c.b16 %v757, %v750
  %v1150 = vpack.c.b16 %v765, %v758
  %v1151 = vpack.c.b16 %v766, %v759
  %v1152 = vpack.c.b16 %v767, %v760
  %v1153 = vpack.c.b16 %v768, %v761
  %v1154 = vpack.c.b16 %v769, %v762
  %v1155 = vpack.c.b16 %v770, %v763
  %v1156 = vpack.c.b16 %v771, %v764
  %v1157 = vpack.c.b16 %v779, %v772
  %v1158 = vpack.c.b16 %v780, %v773
  %v1159 = vpack.c.b16 %v781, %v774
  %v1160 = vpack.c.b16 %v782, %v775
  %v1161 = vpack.c.b16 %v783, %v776
  %v1162 = vpack.c.b16 %v784, %v777
  %v1163 = vpack.c.b16 %v785, %v778
  %v1164 = vpack.c.b16 %v793, %v786
  %v1165 = vpack.c.b16 %v794, %v787
  %v1166 = vpack.c.b16 %v795, %v788
  %v1167 = vpack.c.b16 %v796, %v789
  %v1168 = vpack.c.b16 %v797, %v790
  %v1169 = vpack.c.b16 %v798, %v791
  %v1170 = vpack.c.b16 %v799, %v792
  %v1171 = vpack.c.b16 %v807, %v800
  %v1172 = vpack.c.b16 %v808, %v801
  %v1173 = vpack.c.b16 %v809, %v802
  %v1174 = vpack.c.b16 %v810, %v803
  %v1175 = vpack.c.b16 %v811, %v804
  %v1176 = vpack.c.b16 %v812, %v805
  %v1177 = vpack.c.b16 %v813, %v806
  %v1178 = vpack.c.b16 %v821, %v814
  %v1179 = vpack.c.b16 %v822, %v815
  %v1180 = vpack.c.b16 %v823, %v816
  %v1181 = vpack.c.b16 %v824, %v817
  %v1182 = vpack.c.b16 %v825, %v818
  %v1183 = vpack.c.b16 %v826, %v819
  %v1184 = vpack.c.b16 %v827, %v820
  %v1185 = vpack.c.b16 %v835, %v828
  %v1186 = vpack.c.b16 %v836, %v829
  %v1187 = vpack.c.b16 %v837, %v830
  %v1188 = vpack.c.b16 %v838, %v831
  %v1189 = vpack.c.b16 %v839, %v832
  %v1190 = vpack.c.b16 %v840, %v833
  %v1191 = vpack.c.b16 %v841, %v834
  %v1192 = vpack.c.b16 %v849, %v842
  %v1193 = vpack.c.b16 %v850, %v843
  %v1194 = vpack.c.b16 %v851, %v844
  %v1195 = vpack.c.b16 %v852, %v845
  %v1196 = vpack.c.b16 %v853, %v846
  %v1197 = vpack.c.b16 %v854, %v847
  %v1198 = vpack.c.b16 %v855, %v848
  %v1199 = vpack.c.b16 %v863, %v856
  %v1200 = vpack.c.b16 %v864, %v857
  %v1201 = vpack.c.b16 %v865, %v858
  %v1202 = vpack.c.b16 %v866, %v859
  %v1203 = vpack.c.b16 %v867, %v860
  %v1204 = vpack.c.b16 %v868, %v861
  %v1205 = vpack.c.b16 %v869, %v862
  %v1206 = vpack.c.b16 %v877, %v870
  %v1207 = vpack.c.b16 %v878, %v871
  %v1208 = vpack.c.b16 %v879, %v872
  %v1209 = vpack.c.b16 %v880, %v873
  %v1210 = vpack.c.b16 %v881, %v874
  %v1211 = vpack.c.b16 %v882, %v875
  %v1212 = vpack.c.b16 %v883, %v876
  %v1213 = vpack.c.b16 %v891, %v884
  %v1214 = vpack.c.b16 %v892, %v885
  %v1215 = vpack.c.b16 %v893, %v886
  %v1216 = vpack.c.b16 %v894, %v887
  %v1217 = vpack.c.b16 %v895, %v888
  %v1218 = vpack.c.b16 %v896, %v889
  %v1219 = vpack.c.b16 %v897, %v890
  %v1220 = vpack.c.b16 %v905, %v898
  %v1221 = vpack.c.b16 %v906, %v899
  %v1222 = vpack.c.b16 %v907, %v900
  %v1223 = vpack.c.b16 %v908, %v901
  %v1224 = vpack.c.b16 %v909, %v902
  %v1225 = vpack.c.b16 %v910, %v903
  %v1226 = vpack.c.b16 %v911, %v904
  %v1227 = vpack.c.b16 %v919, %v912
  %v1228 = vpack.c.b16 %v920, %v913
  %v1229 = vpack.c.b16 %v921, %v914
  %v1230 = vpack.c.b16 %v922, %v915
  %v1231 = vpack.c.b16 %v923, %v916
  %v1232 = vpack.c.b16 %v924, %v917
  %v1233 = vpack.c.b16 %v925, %v918
  %v1234 = vpack.c.b16 %v933, %v926
  %v1235 = vpack.c.b16 %v934, %v927
  %v1236 = vpack.c.b16 %v935, %v928
  %v1237 = vpack.c.b16 %v936, %v929
  %v1238 = vpack.c.b16 %v937, %v930
  %v1239 = vpack.c.b16 %v938, %v931
  %v1240 = vpack.c.b16 %v939, %v932
  %v1241 = vpack.c.b16 %v947, %v940
  %v1242 = vpack.c.b16 %v948, %v941
  %v1243 = vpack.c.b16 %v949, %v942
  %v1244 = vpack.c.b16 %v950, %v943
  %v1245 = vpack.c.b16 %v951, %v944
  %v1246 = vpack.c.b16 %v952, %v945
  %v1247 = vpack.c.b16 %v953, %v946
  %v1248 = vpack.c.b16 %v961, %v954
  %v1249 = vpack.c.b16 %v962, %v955
  %v1250 = vpack.c.b16 %v963, %v956
  %v1251 = vpack.c.b16 %v964, %v957
  %v1252 = vpack.c.b16 %v965, %v958
  %v1253 = vpack.c.b16 %v966, %v959
  %v1254 = vpack.c.b16 %v967, %v960
  %v1255 = vpack.c.b16 %v975, %v968
  %v1256 = vpack.c.b16 %v976, %v969
  %v1257 = vpack.c.b16 %v977, %v970
  %v1258 = vpack.c.b16 %v978, %v971
  %v1259 = vpack.c.b16 %v979, %v972
  %v1260 = vpack.c.b16 %v980, %v973
  %v1261 = vpack.c.b16 %v981, %v974
  %v1262 = vpack.c.b16 %v989, %v982
  %v1263 = vpack.c.b16 %v990, %v983
  %v1264 = vpack.c.b16 %v991, %v984
  %v1265 = vpack.c.b16 %v992, %v985
  %v1266 = vpack.c.b16 %v993, %v986
  %v1267 = vpack.c.b16 %v994, %v987
  %v1268 = vpack.c.b16 %v995, %v988
  %v1269 = vpack.c.b16 %v1003, %v996
  %v1270 = vpack.c.b16 %v1004, %v997
  %v1271 = vpack.c.b16 %v1005, %v998
  %v1272 = vpack.c.b16 %v1006, %v999
  %v1273 = vpack.c.b16 %v1007, %v1000
  %v1274 = vpack.c.b16 %v1008, %v1001
  %v1275 = vpack.c.b16 %v1009, %v1002
  %v1276 = vpack.c.b16 %v1017, %v1010
  %v1277 = vpack.c.b16 %v1018, %v1011
  %v1278 = vpack.c.b16 %v1019, %v1012
  %v1279 = vpack.c.b16 %v1020, %v1013
  %v1280 = vpack.c.b16 %v1021, %v1014
  %v1281 = vpack.c.b16 %v1022, %v1015
  %v1282 = vpack.c.b16 %v1023, %v1016
  %v1283 = vpack.c.b16 %v1031, %v1024
  %v1284 = vpack.c.b16 %v1032, %v1025
  %v1285 = vpack.c.b16 %v1033, %v1026
  %v1286 = vpack.c.b16 %v1034, %v1027
  %v1287 = vpack.c.b16 %v1035, %v1028
  %v1288 = vpack.c.b16 %v1036, %v1029
  %v1289 = vpack.c.b16 %v1037, %v1030
  %v1290 = vpack.c.b16 %v1045, %v1038
  %v1291 = vpack.c.b16 %v1046, %v1039
  %v1292 = vpack.c.b16 %v1047, %v1040
  %v1293 = vpack.c.b16 %v1048, %v1041
  %v1294 = vpack.c.b16 %v1049, %v1042
  %v1295 = vpack.c.b16 %v1050, %v1043
  %v1296 = vpack.c.b16 %v1051, %v1044
  %v1297 = vpack.c.b16 %v1059, %v1052
  %v1298 = vpack.c.b16 %v1060, %v1053
  %v1299 = vpack.c.b16 %v1061, %v1054
  %v1300 = vpack.c.b16 %v1062, %v1055
  %v1301 = vpack.c.b16 %v1063, %v1056
  %v1302 = vpack.c.b16 %v1064, %v1057
  %v1303 = vpack.c.b16 %v1065, %v1058
  %v1304 = vpack.c.b16 %v1073, %v1066
  %v1305 = vpack.c.b16 %v1074, %v1067
  %v1306 = vpack.c.b16 %v1075, %v1068
  %v1307 = vpack.c.b16 %v1076, %v1069
  %v1308 = vpack.c.b16 %v1077, %v1070
  %v1309 = vpack.c.b16 %v1078, %v1071
  %v1310 = vpack.c.b16 %v1079, %v1072
  %v1311 = vpack.c.b16 %v1087, %v1080
  %v1312 = vpack.c.b16 %v1088, %v1081
  %v1313 = vpack.c.b16 %v1089, %v1082
  %v1314 = vpack.c.b16 %v1090, %v1083
  %v1315 = vpack.c.b16 %v1091, %v1084
  %v1316 = vpack.c.b16 %v1092, %v1085
  %v1317 = vpack.c.b16 %v1093, %v1086
  %v1654 = vunpack.c.l.b16 %v271
  %v1655 = vunpack.c.l.b16 %v272
  %v1656 = vunpack.c.l.b16 %v273
  %v1657 = vunpack.c.l.b16 %v274
  %v1658 = vunpack.c.l.b16 %v275
  %v1659 = vunpack.c.l.b16 %v276
  %v1660 = vunpack.c.l.b16 %v277
  %v1661 = vunpack.c.l.b16 %v278
  %v1662 = vunpack.c.l.b16 %v279
  %v1663 = vunpack.c.l.b16 %v280
  %v1664 = vunpack.c.l.b16 %v281
  %v1665 = vunpack.c.l.b16 %v282
  %v1666 = vunpack.c.l.b16 %v283
  %v1667 = vunpack.c.l.b16 %v284
  %v1668 = vunpack.c.l.b16 %v285
  %v1669 = vunpack.c.l.b16 %v286
  %v1670 = vunpack.c.l.b16 %v287
  %v1671 = vunpack.c.l.b16 %v288
  %v1672 = vunpack.c.l.b16 %v289
  %v1673 = vunpack.c.l.b16 %v290
  %v1674 = vunpack.c.l.b16 %v291
  %v1675 = vunpack.c.l.b16 %v292
  %v1676 = vunpack.c.l.b16 %v293
  %v1677 = vunpack.c.l.b16 %v294
  %v1678 = vunpack.c.l.b16 %v295
  %v1679 = vunpack.c.l.b16 %v296
  %v1680 = vunpack.c.l.b16 %v297
  %v1681 = vunpack.c.l.b16 %v298
  %v1682 = vunpack.c.l.b16 %v299
  %v1683 = vunpack.c.l.b16 %v300
  %v1684 = vunpack.c.l.b16 %v301
  %v1685 = vunpack.c.l.b16 %v302
  %v1686 = vunpack.c.l.b16 %v303
  %v1687 = vunpack.c.l.b16 %v304
  %v1688 = vunpack.c.l.b16 %v305
  %v1689 = vunpack.c.l.b16 %v306
  %v1690 = vunpack.c.l.b16 %v307
  %v1691 = vunpack.c.l.b16 %v308
  %v1692 = vunpack.c.l.b16 %v309
  %v1693 = vunpack.c.l.b16 %v310
  %v1694 = vunpack.c.l.b16 %v311
  %v1695 = vunpack.c.l.b16 %v312
  %v1696 = vunpack.c.l.b16 %v313
  %v1697 = vunpack.c.l.b16 %v314
  %v1698 = vunpack.c.l.b16 %v315
  %v1699 = vunpack.c.l.b16 %v316
  %v1700 = vunpack.c.l.b16 %v317
  %v1701 = vunpack.c.l.b16 %v318
  %v1702 = vunpack.c.l.b16 %v319
  %v1703 = vunpack.c.l.b16 %v320
  %v1704 = vunpack.c.l.b16 %v321
  %v1705 = vunpack.c.l.b16 %v322
  %v1706 = vunpack.c.l.b16 %v323
  %v1707 = vunpack.c.l.b16 %v324
  %v1708 = vunpack.c.l.b16 %v325
  %v1709 = vunpack.c.l.b16 %v326
  %v1710 = vunpack.c.l.b16 %v327
  %v1711 = vunpack.c.l.b16 %v328
  %v1712 = vunpack.c.l.b16 %v329
  %v1713 = vunpack.c.l.b16 %v330
  %v1714 = vunpack.c.l.b16 %v331
  %v1715 = vunpack.c.l.b16 %v332
  %v1716 = vunpack.c.l.b16 %v333
  %v1717 = vunpack.c.l.b16 %v334
  %v1718 = vunpack.c.l.b16 %v335
  %v1719 = vunpack.c.l.b16 %v336
  %v1720 = vunpack.c.l.b16 %v337
  %v1721 = vunpack.c.l.b16 %v338
  %v1722 = vunpack.c.l.b16 %v339
  %v1723 = vunpack.c.l.b16 %v340
  %v1724 = vunpack.c.l.b16 %v341
  %v1725 = vunpack.c.l.b16 %v342
  %v1726 = vunpack.c.l.b16 %v343
  %v1727 = vunpack.c.l.b16 %v344
  %v1728 = vunpack.c.l.b16 %v345
  %v1729 = vunpack.c.l.b16 %v346
  %v1730 = vunpack.c.l.b16 %v347
  %v1731 = vunpack.c.l.b16 %v348
  %v1732 = vunpack.c.l.b16 %v349
  %v1733 = vunpack.c.l.b16 %v350
  %v1734 = vunpack.c.l.b16 %v351
  %v1735 = vunpack.c.l.b16 %v352
  %v1736 = vunpack.c.l.b16 %v353
  %v1737 = vunpack.c.l.b16 %v354
  %v1738 = vunpack.c.l.b16 %v355
  %v1739 = vunpack.c.l.b16 %v356
  %v1740 = vunpack.c.l.b16 %v357
  %v1741 = vunpack.c.l.b16 %v358
  %v1742 = vunpack.c.l.b16 %v359
  %v1743 = vunpack.c.l.b16 %v360
  %v1744 = vunpack.c.l.b16 %v361
  %v1745 = vunpack.c.l.b16 %v362
  %v1746 = vunpack.c.l.b16 %v363
  %v1747 = vunpack.c.l.b16 %v364
  %v1748 = vunpack.c.l.b16 %v365
  %v1749 = vunpack.c.l.b16 %v366
  %v1750 = vunpack.c.l.b16 %v367
  %v1751 = vunpack.c.l.b16 %v368
  %v1752 = vunpack.c.l.b16 %v369
  %v1753 = vunpack.c.l.b16 %v370
  %v1754 = vunpack.c.l.b16 %v371
  %v1755 = vunpack.c.l.b16 %v372
  %v1756 = vunpack.c.l.b16 %v373
  %v1757 = vunpack.c.l.b16 %v374
  %v1758 = vunpack.c.l.b16 %v375
  %v1759 = vunpack.c.l.b16 %v376
  %v1760 = vunpack.c.l.b16 %v377
  %v1761 = vunpack.c.l.b16 %v378
  %v1762 = vunpack.c.l.b16 %v379
  %v1763 = vunpack.c.l.b16 %v380
  %v1764 = vunpack.c.l.b16 %v381
  %v1765 = vunpack.c.l.b16 %v382
  %v1766 = vpack.c.b16 %v1655, %v1654
  %v1767 = vpack.c.b16 %v1657, %v1656
  %v1768 = vpack.c.b16 %v1659, %v1658
  %v1769 = vpack.c.b16 %v1661, %v1660
  %v1770 = vpack.c.b16 %v1663, %v1662
  %v1771 = vpack.c.b16 %v1665, %v1664
  %v1772 = vpack.c.b16 %v1667, %v1666
  %v1773 = vpack.c.b16 %v1669, %v1668
  %v1774 = vpack.c.b16 %v1671, %v1670
  %v1775 = vpack.c.b16 %v1673, %v1672
  %v1776 = vpack.c.b16 %v1675, %v1674
  %v1777 = vpack.c.b16 %v1677, %v1676
  %v1778 = vpack.c.b16 %v1679, %v1678
  %v1779 = vpack.c.b16 %v1681, %v1680
  %v1780 = vpack.c.b16 %v1683, %v1682
  %v1781 = vpack.c.b16 %v1685, %v1684
  %v1782 = vpack.c.b16 %v1687, %v1686
  %v1783 = vpack.c.b16 %v1689, %v1688
  %v1784 = vpack.c.b16 %v1691, %v1690
  %v1785 = vpack.c.b16 %v1693, %v1692
  %v1786 = vpack.c.b16 %v1695, %v1694
  %v1787 = vpack.c.b16 %v1697, %v1696
  %v1788 = vpack.c.b16 %v1699, %v1698
  %v1789 = vpack.c.b16 %v1701, %v1700
  %v1790 = vpack.c.b16 %v1703, %v1702
  %v1791 = vpack.c.b16 %v1705, %v1704
  %v1792 = vpack.c.b16 %v1707, %v1706
  %v1793 = vpack.c.b16 %v1709, %v1708
  %v1794 = vpack.c.b16 %v1711, %v1710
  %v1795 = vpack.c.b16 %v1713, %v1712
  %v1796 = vpack.c.b16 %v1715, %v1714
  %v1797 = vpack.c.b16 %v1717, %v1716
  %v1798 = vpack.c.b16 %v1719, %v1718
  %v1799 = vpack.c.b16 %v1721, %v1720
  %v1800 = vpack.c.b16 %v1723, %v1722
  %v1801 = vpack.c.b16 %v1725, %v1724
  %v1802 = vpack.c.b16 %v1727, %v1726
  %v1803 = vpack.c.b16 %v1729, %v1728
  %v1804 = vpack.c.b16 %v1731, %v1730
  %v1805 = vpack.c.b16 %v1733, %v1732
  %v1806 = vpack.c.b16 %v1735, %v1734
  %v1807 = vpack.c.b16 %v1737, %v1736
  %v1808 = vpack.c.b16 %v1739, %v1738
  %v1809 = vpack.c.b16 %v1741, %v1740
  %v1810 = vpack.c.b16 %v1743, %v1742
  %v1811 = vpack.c.b16 %v1745, %v1744
  %v1812 = vpack.c.b16 %v1747, %v1746
  %v1813 = vpack.c.b16 %v1749, %v1748
  %v1814 = vpack.c.b16 %v1751, %v1750
  %v1815 = vpack.c.b16 %v1753, %v1752
  %v1816 = vpack.c.b16 %v1755, %v1754
  %v1817 = vpack.c.b16 %v1757, %v1756
  %v1818 = vpack.c.b16 %v1759, %v1758
  %v1819 = vpack.c.b16 %v1761, %v1760
  %v1820 = vpack.c.b16 %v1763, %v1762
  %v1821 = vpack.c.b16 %v1765, %v1764
  %1878 = vmatprep.subr.bf16.mxu0 0
  %1879 = vmatpush1.bf16.msra.mxu0 %v1766
  %1880 = vmatprep.subr.bf16.mxu0 0
  %1881 = vmatpush1.bf16.msra.mxu0 %v1767
  %1882 = vmatprep.subr.bf16.mxu0 0
  %1883 = vmatpush1.bf16.msra.mxu0 %v1768
  %1884 = vmatprep.subr.bf16.mxu0 0
  %1885 = vmatpush1.bf16.msra.mxu0 %v1769
  %1886 = vmatprep.subr.bf16.mxu0 0
  %1887 = vmatpush1.bf16.msra.mxu0 %v1770
  %1888 = vmatprep.subr.bf16.mxu0 0
  %1889 = vmatpush1.bf16.msra.mxu0 %v1771
  %1890 = vmatprep.subr.bf16.mxu0 0
  %1891 = vmatpush1.bf16.msra.mxu0 %v1772
  %1892 = vmatprep.subr.bf16.mxu0 0
  %1893 = vmatpush1.bf16.msra.mxu0 %v1773
  %1894 = vmatprep.subr.bf16.mxu0 0
  %1895 = vmatpush1.bf16.msra.mxu0 %v1774
  %1896 = vmatprep.subr.bf16.mxu0 0
  %1897 = vmatpush1.bf16.msra.mxu0 %v1775
  %1898 = vmatprep.subr.bf16.mxu0 0
  %1899 = vmatpush1.bf16.msra.mxu0 %v1776
  %1900 = vmatprep.subr.bf16.mxu0 0
  %1901 = vmatpush1.bf16.msra.mxu0 %v1777
  %1902 = vmatprep.subr.bf16.mxu0 0
  %1903 = vmatpush1.bf16.msra.mxu0 %v1778
  %1904 = vmatprep.subr.bf16.mxu0 0
  %1905 = vmatpush1.bf16.msra.mxu0 %v1779
  %1906 = vmatprep.subr.bf16.mxu0 0
  %1907 = vmatpush1.bf16.msra.mxu0 %v1780
  %1908 = vmatprep.subr.bf16.mxu0 0
  %1909 = vmatpush1.bf16.msra.mxu0 %v1781
  %1910 = vmatprep.mubr.bf16.mxu0 %v1095
  %1911 = vmatmul.mubr.bf16.gmra.mrb[0].mxu0 %v1094
  %v1912 = vpop.f32.mrb[0].mxu0
  %v1913 = vadd.f32 %v388, %v1912
  %v1914 = vpop.f32.mrb[0].mxu0
  %v1915 = vpop.f32.mrb[0].mxu0
  %v1916 = vadd.f32 %v388, %v1915
  %v1917 = vpop.f32.mrb[0].mxu0
  %1918 = vmatprep.mubr.bf16.mxu0 %v1102
  %1919 = vmatmul.mubr.bf16.gmra.mrb[0].mxu0 %v1101
  %v1920 = vpop.f32.mrb[0].mxu0
  %v1921 = vadd.f32 %v388, %v1920
  %v1922 = vpop.f32.mrb[0].mxu0
  %v1923 = vpop.f32.mrb[0].mxu0
  %v1924 = vadd.f32 %v388, %v1923
  %v1925 = vpop.f32.mrb[0].mxu0
  %1926 = vmatprep.mubr.bf16.mxu0 %v1109
  %1927 = vmatmul.mubr.bf16.gmra.mrb[0].mxu0 %v1108
  %v1928 = vpop.f32.mrb[0].mxu0
  %v1929 = vadd.f32 %v388, %v1928
  %v1930 = vpop.f32.mrb[0].mxu0
  %v1931 = vpop.f32.mrb[0].mxu0
  %v1932 = vadd.f32 %v388, %v1931
  %v1933 = vpop.f32.mrb[0].mxu0
  %1934 = vmatprep.mubr.bf16.mxu0 %v1116
  %1935 = vmatmul.mubr.bf16.gmra.mrb[0].mxu0 %v1115
  %v1936 = vpop.f32.mrb[0].mxu0
  %v1937 = vadd.f32 %v388, %v1936
  %v1938 = vpop.f32.mrb[0].mxu0
  %v1939 = vpop.f32.mrb[0].mxu0
  %v1940 = vadd.f32 %v388, %v1939
  %v1941 = vpop.f32.mrb[0].mxu0
  %1942 = vmatprep.mubr.bf16.mxu0 %v1123
  %1943 = vmatmul.mubr.bf16.gmra.mrb[0].mxu0 %v1122
  %v1944 = vpop.f32.mrb[0].mxu0
  %v1945 = vadd.f32 %v388, %v1944
  %v1946 = vpop.f32.mrb[0].mxu0
  %v1947 = vpop.f32.mrb[0].mxu0
  %v1948 = vadd.f32 %v388, %v1947
  %v1949 = vpop.f32.mrb[0].mxu0
  %1950 = vmatprep.mubr.bf16.mxu0 %v1130
  %1951 = vmatmul.mubr.bf16.gmra.mrb[0].mxu0 %v1129
  %v1952 = vpop.f32.mrb[0].mxu0
  %v1953 = vadd.f32 %v388, %v1952
  %v1954 = vpop.f32.mrb[0].mxu0
  %v1955 = vpop.f32.mrb[0].mxu0
  %v1956 = vadd.f32 %v388, %v1955
  %v1957 = vpop.f32.mrb[0].mxu0
  %1958 = vmatprep.mubr.bf16.mxu0 %v1137
  %1959 = vmatmul.mubr.bf16.gmra.mrb[0].mxu0 %v1136
  %v1960 = vpop.f32.mrb[0].mxu0
  %v1961 = vadd.f32 %v388, %v1960
  %v1962 = vpop.f32.mrb[0].mxu0
  %v1963 = vpop.f32.mrb[0].mxu0
  %v1964 = vadd.f32 %v388, %v1963
  %v1965 = vpop.f32.mrb[0].mxu0
  %1966 = vmatprep.mubr.bf16.mxu0 %v1144
  %1967 = vmatmul.mubr.bf16.gmra.mrb[0].mxu0 %v1143
  %v1968 = vpop.f32.mrb[0].mxu0
  %v1969 = vadd.f32 %v388, %v1968
  %v1970 = vpop.f32.mrb[0].mxu0
  %v1971 = vpop.f32.mrb[0].mxu0
  %v1972 = vadd.f32 %v388, %v1971
  %v1973 = vpop.f32.mrb[0].mxu0
  %1974 = vmatprep.mubr.bf16.mxu0 %v1151
  %1975 = vmatmul.mubr.bf16.gmra.mrb[0].mxu0 %v1150
  %v1976 = vpop.f32.mrb[0].mxu0
  %v1977 = vadd.f32 %v388, %v1976
  %v1978 = vpop.f32.mrb[0].mxu0
  %v1979 = vpop.f32.mrb[0].mxu0
  %v1980 = vadd.f32 %v388, %v1979
  %v1981 = vpop.f32.mrb[0].mxu0
  %1982 = vmatprep.mubr.bf16.mxu0 %v1158
  %1983 = vmatmul.mubr.bf16.gmra.mrb[0].mxu0 %v1157
  %v1984 = vpop.f32.mrb[0].mxu0
  %v1985 = vadd.f32 %v388, %v1984
  %v1986 = vpop.f32.mrb[0].mxu0
  %v1987 = vpop.f32.mrb[0].mxu0
  %v1988 = vadd.f32 %v388, %v1987
  %v1989 = vpop.f32.mrb[0].mxu0
  %1990 = vmatprep.mubr.bf16.mxu0 %v1165
  %1991 = vmatmul.mubr.bf16.gmra.mrb[0].mxu0 %v1164
  %v1992 = vpop.f32.mrb[0].mxu0
  %v1993 = vadd.f32 %v388, %v1992
  %v1994 = vpop.f32.mrb[0].mxu0
  %v1995 = vpop.f32.mrb[0].mxu0
  %v1996 = vadd.f32 %v388, %v1995
  %v1997 = vpop.f32.mrb[0].mxu0
  %1998 = vmatprep.mubr.bf16.mxu0 %v1172
  %1999 = vmatmul.mubr.bf16.gmra.mrb[0].mxu0 %v1171
  %v2000 = vpop.f32.mrb[0].mxu0
  %v2001 = vadd.f32 %v388, %v2000
  %v2002 = vpop.f32.mrb[0].mxu0
  %v2003 = vpop.f32.mrb[0].mxu0
  %v2004 = vadd.f32 %v388, %v2003
  %v2005 = vpop.f32.mrb[0].mxu0
  %2006 = vmatprep.mubr.bf16.mxu0 %v1179
  %2007 = vmatmul.mubr.bf16.gmra.mrb[0].mxu0 %v1178
  %v2008 = vpop.f32.mrb[0].mxu0
  %v2009 = vadd.f32 %v388, %v2008
  %v2010 = vpop.f32.mrb[0].mxu0
  %v2011 = vpop.f32.mrb[0].mxu0
  %v2012 = vadd.f32 %v388, %v2011
  %v2013 = vpop.f32.mrb[0].mxu0
  %2014 = vmatprep.mubr.bf16.mxu0 %v1186
  %2015 = vmatmul.mubr.bf16.gmra.mrb[0].mxu0 %v1185
  %v2016 = vpop.f32.mrb[0].mxu0
  %v2017 = vadd.f32 %v388, %v2016
  %v2018 = vpop.f32.mrb[0].mxu0
  %v2019 = vpop.f32.mrb[0].mxu0
  %v2020 = vadd.f32 %v388, %v2019
  %v2021 = vpop.f32.mrb[0].mxu0
  %2022 = vmatprep.mubr.bf16.mxu0 %v1193
  %2023 = vmatmul.mubr.bf16.gmra.mrb[0].mxu0 %v1192
  %v2024 = vpop.f32.mrb[0].mxu0
  %v2025 = vadd.f32 %v388, %v2024
  %v2026 = vpop.f32.mrb[0].mxu0
  %v2027 = vpop.f32.mrb[0].mxu0
  %v2028 = vadd.f32 %v388, %v2027
  %v2029 = vpop.f32.mrb[0].mxu0
  %2030 = vmatprep.mubr.bf16.mxu0 %v1200
  %2031 = vmatmul.mubr.bf16.gmra.mrb[0].mxu0 %v1199
  %v2032 = vpop.f32.mrb[0].mxu0
  %v2033 = vadd.f32 %v388, %v2032
  %v2034 = vpop.f32.mrb[0].mxu0
  %v2035 = vpop.f32.mrb[0].mxu0
  %v2036 = vadd.f32 %v388, %v2035
  %v2037 = vpop.f32.mrb[0].mxu0
  %2038 = vmatprep.mubr.bf16.mxu0 %v1207
  %2039 = vmatmul.mubr.bf16.gmra.mrb[0].mxu0 %v1206
  %v2040 = vpop.f32.mrb[0].mxu0
  %v2041 = vadd.f32 %v388, %v2040
  %v2042 = vpop.f32.mrb[0].mxu0
  %v2043 = vpop.f32.mrb[0].mxu0
  %v2044 = vadd.f32 %v388, %v2043
  %v2045 = vpop.f32.mrb[0].mxu0
  %2046 = vmatprep.mubr.bf16.mxu0 %v1214
  %2047 = vmatmul.mubr.bf16.gmra.mrb[0].mxu0 %v1213
  %v2048 = vpop.f32.mrb[0].mxu0
  %v2049 = vadd.f32 %v388, %v2048
  %v2050 = vpop.f32.mrb[0].mxu0
  %v2051 = vpop.f32.mrb[0].mxu0
  %v2052 = vadd.f32 %v388, %v2051
  %v2053 = vpop.f32.mrb[0].mxu0
  %2054 = vmatprep.mubr.bf16.mxu0 %v1221
  %2055 = vmatmul.mubr.bf16.gmra.mrb[0].mxu0 %v1220
  %v2056 = vpop.f32.mrb[0].mxu0
  %v2057 = vadd.f32 %v388, %v2056
  %v2058 = vpop.f32.mrb[0].mxu0
  %v2059 = vpop.f32.mrb[0].mxu0
  %v2060 = vadd.f32 %v388, %v2059
  %v2061 = vpop.f32.mrb[0].mxu0
  %2062 = vmatprep.mubr.bf16.mxu0 %v1228
  %2063 = vmatmul.mubr.bf16.gmra.mrb[0].mxu0 %v1227
  %v2064 = vpop.f32.mrb[0].mxu0
  %v2065 = vadd.f32 %v388, %v2064
  %v2066 = vpop.f32.mrb[0].mxu0
  %v2067 = vpop.f32.mrb[0].mxu0
  %v2068 = vadd.f32 %v388, %v2067
  %v2069 = vpop.f32.mrb[0].mxu0
  %2070 = vmatprep.mubr.bf16.mxu0 %v1235
  %2071 = vmatmul.mubr.bf16.gmra.mrb[0].mxu0 %v1234
  %v2072 = vpop.f32.mrb[0].mxu0
  %v2073 = vadd.f32 %v388, %v2072
  %v2074 = vpop.f32.mrb[0].mxu0
  %v2075 = vpop.f32.mrb[0].mxu0
  %v2076 = vadd.f32 %v388, %v2075
  %v2077 = vpop.f32.mrb[0].mxu0
  %2078 = vmatprep.mubr.bf16.mxu0 %v1242
  %2079 = vmatmul.mubr.bf16.gmra.mrb[0].mxu0 %v1241
  %v2080 = vpop.f32.mrb[0].mxu0
  %v2081 = vadd.f32 %v388, %v2080
  %v2082 = vpop.f32.mrb[0].mxu0
  %v2083 = vpop.f32.mrb[0].mxu0
  %v2084 = vadd.f32 %v388, %v2083
  %v2085 = vpop.f32.mrb[0].mxu0
  %2086 = vmatprep.mubr.bf16.mxu0 %v1249
  %2087 = vmatmul.mubr.bf16.gmra.mrb[0].mxu0 %v1248
  %v2088 = vpop.f32.mrb[0].mxu0
  %v2089 = vadd.f32 %v388, %v2088
  %v2090 = vpop.f32.mrb[0].mxu0
  %v2091 = vpop.f32.mrb[0].mxu0
  %v2092 = vadd.f32 %v388, %v2091
  %v2093 = vpop.f32.mrb[0].mxu0
  %2094 = vmatprep.mubr.bf16.mxu0 %v1256
  %2095 = vmatmul.mubr.bf16.gmra.mrb[0].mxu0 %v1255
  %v2096 = vpop.f32.mrb[0].mxu0
  %v2097 = vadd.f32 %v388, %v2096
  %v2098 = vpop.f32.mrb[0].mxu0
  %v2099 = vpop.f32.mrb[0].mxu0
  %v2100 = vadd.f32 %v388, %v2099
  %v2101 = vpop.f32.mrb[0].mxu0
  %2102 = vmatprep.mubr.bf16.mxu0 %v1263
  %2103 = vmatmul.mubr.bf16.gmra.mrb[0].mxu0 %v1262
  %v2104 = vpop.f32.mrb[0].mxu0
  %v2105 = vadd.f32 %v388, %v2104
  %v2106 = vpop.f32.mrb[0].mxu0
  %v2107 = vpop.f32.mrb[0].mxu0
  %v2108 = vadd.f32 %v388, %v2107
  %v2109 = vpop.f32.mrb[0].mxu0
  %2110 = vmatprep.mubr.bf16.mxu0 %v1270
  %2111 = vmatmul.mubr.bf16.gmra.mrb[0].mxu0 %v1269
  %v2112 = vpop.f32.mrb[0].mxu0
  %v2113 = vadd.f32 %v388, %v2112
  %v2114 = vpop.f32.mrb[0].mxu0
  %v2115 = vpop.f32.mrb[0].mxu0
  %v2116 = vadd.f32 %v388, %v2115
  %v2117 = vpop.f32.mrb[0].mxu0
  %2118 = vmatprep.mubr.bf16.mxu0 %v1277
  %2119 = vmatmul.mubr.bf16.gmra.mrb[0].mxu0 %v1276
  %v2120 = vpop.f32.mrb[0].mxu0
  %v2121 = vadd.f32 %v388, %v2120
  %v2122 = vpop.f32.mrb[0].mxu0
  %v2123 = vpop.f32.mrb[0].mxu0
  %v2124 = vadd.f32 %v388, %v2123
  %v2125 = vpop.f32.mrb[0].mxu0
  %2126 = vmatprep.mubr.bf16.mxu0 %v1284
  %2127 = vmatmul.mubr.bf16.gmra.mrb[0].mxu0 %v1283
  %v2128 = vpop.f32.mrb[0].mxu0
  %v2129 = vadd.f32 %v388, %v2128
  %v2130 = vpop.f32.mrb[0].mxu0
  %v2131 = vpop.f32.mrb[0].mxu0
  %v2132 = vadd.f32 %v388, %v2131
  %v2133 = vpop.f32.mrb[0].mxu0
  %2134 = vmatprep.mubr.bf16.mxu0 %v1291
  %2135 = vmatmul.mubr.bf16.gmra.mrb[0].mxu0 %v1290
  %v2136 = vpop.f32.mrb[0].mxu0
  %v2137 = vadd.f32 %v388, %v2136
  %v2138 = vpop.f32.mrb[0].mxu0
  %v2139 = vpop.f32.mrb[0].mxu0
  %v2140 = vadd.f32 %v388, %v2139
  %v2141 = vpop.f32.mrb[0].mxu0
  %2142 = vmatprep.mubr.bf16.mxu0 %v1298
  %2143 = vmatmul.mubr.bf16.gmra.mrb[0].mxu0 %v1297
  %v2144 = vpop.f32.mrb[0].mxu0
  %v2145 = vadd.f32 %v388, %v2144
  %v2146 = vpop.f32.mrb[0].mxu0
  %v2147 = vpop.f32.mrb[0].mxu0
  %v2148 = vadd.f32 %v388, %v2147
  %v2149 = vpop.f32.mrb[0].mxu0
  %2150 = vmatprep.mubr.bf16.mxu0 %v1305
  %2151 = vmatmul.mubr.bf16.gmra.mrb[0].mxu0 %v1304
  %v2152 = vpop.f32.mrb[0].mxu0
  %v2153 = vadd.f32 %v388, %v2152
  %v2154 = vpop.f32.mrb[0].mxu0
  %v2155 = vpop.f32.mrb[0].mxu0
  %v2156 = vadd.f32 %v388, %v2155
  %v2157 = vpop.f32.mrb[0].mxu0
  %2158 = vmatprep.mubr.bf16.mxu0 %v1312
  %2159 = vmatmul.mubr.bf16.gmra.mrb[0].mxu0 %v1311
  %v2160 = vpop.f32.mrb[0].mxu0
  %v2161 = vadd.f32 %v388, %v2160
  %v2162 = vpop.f32.mrb[0].mxu0
  %v2163 = vpop.f32.mrb[0].mxu0
  %v2164 = vadd.f32 %v388, %v2163
  %v2165 = vpop.f32.mrb[0].mxu0
  %2166 = vdwg.mxu0
  %2167 = vmatprep.subr.bf16.mxu0 0
  %2168 = vmatpush1.bf16.msra.mxu0 %v1782
  %2169 = vmatprep.subr.bf16.mxu0 0
  %2170 = vmatpush1.bf16.msra.mxu0 %v1783
  %2171 = vmatprep.subr.bf16.mxu0 0
  %2172 = vmatpush1.bf16.msra.mxu0 %v1784
  %2173 = vmatprep.subr.bf16.mxu0 0
  %2174 = vmatpush1.bf16.msra.mxu0 %v1785
  %2175 = vmatprep.subr.bf16.mxu0 0
  %2176 = vmatpush1.bf16.msra.mxu0 %v1786
  %2177 = vmatprep.subr.bf16.mxu0 0
  %2178 = vmatpush1.bf16.msra.mxu0 %v1787
  %2179 = vmatprep.subr.bf16.mxu0 0
  %2180 = vmatpush1.bf16.msra.mxu0 %v1788
  %2181 = vmatprep.subr.bf16.mxu0 0
  %2182 = vmatpush1.bf16.msra.mxu0 %v1789
  %2183 = vmatprep.subr.bf16.mxu0 0
  %2184 = vmatpush1.bf16.msra.mxu0 %v1790
  %2185 = vmatprep.subr.bf16.mxu0 0
  %2186 = vmatpush1.bf16.msra.mxu0 %v1791
  %2187 = vmatprep.subr.bf16.mxu0 0
  %2188 = vmatpush1.bf16.msra.mxu0 %v1792
  %2189 = vmatprep.subr.bf16.mxu0 0
  %2190 = vmatpush1.bf16.msra.mxu0 %v1793
  %2191 = vmatprep.subr.bf16.mxu0 0
  %2192 = vmatpush1.bf16.msra.mxu0 %v1794
  %2193 = vmatprep.subr.bf16.mxu0 0
  %2194 = vmatpush1.bf16.msra.mxu0 %v1795
  %2195 = vmatprep.subr.bf16.mxu0 0
  %2196 = vmatpush1.bf16.msra.mxu0 %v1796
  %2197 = vmatprep.subr.bf16.mxu0 0
  %2198 = vmatpush1.bf16.msra.mxu0 %v1797
  %2199 = vmatprep.mubr.bf16.mxu0 %v1097
  %2200 = vmatmul.mubr.bf16.gmra.mrb[0].mxu0 %v1096
  %v2201 = vpop.f32.mrb[0].mxu0
  %v2202 = vadd.f32 %v1913, %v2201
  %v2203 = vpop.f32.mrb[0].mxu0
  %v2204 = vpop.f32.mrb[0].mxu0
  %v2205 = vadd.f32 %v1916, %v2204
  %v2206 = vpop.f32.mrb[0].mxu0
  %2207 = vmatprep.mubr.bf16.mxu0 %v1104
  %2208 = vmatmul.mubr.bf16.gmra.mrb[0].mxu0 %v1103
  %v2209 = vpop.f32.mrb[0].mxu0
  %v2210 = vadd.f32 %v1921, %v2209
  %v2211 = vpop.f32.mrb[0].mxu0
  %v2212 = vpop.f32.mrb[0].mxu0
  %v2213 = vadd.f32 %v1924, %v2212
  %v2214 = vpop.f32.mrb[0].mxu0
  %2215 = vmatprep.mubr.bf16.mxu0 %v1111
  %2216 = vmatmul.mubr.bf16.gmra.mrb[0].mxu0 %v1110
  %v2217 = vpop.f32.mrb[0].mxu0
  %v2218 = vadd.f32 %v1929, %v2217
  %v2219 = vpop.f32.mrb[0].mxu0
  %v2220 = vpop.f32.mrb[0].mxu0
  %v2221 = vadd.f32 %v1932, %v2220
  %v2222 = vpop.f32.mrb[0].mxu0
  %2223 = vmatprep.mubr.bf16.mxu0 %v1118
  %2224 = vmatmul.mubr.bf16.gmra.mrb[0].mxu0 %v1117
  %v2225 = vpop.f32.mrb[0].mxu0
  %v2226 = vadd.f32 %v1937, %v2225
  %v2227 = vpop.f32.mrb[0].mxu0
  %v2228 = vpop.f32.mrb[0].mxu0
  %v2229 = vadd.f32 %v1940, %v2228
  %v2230 = vpop.f32.mrb[0].mxu0
  %2231 = vmatprep.mubr.bf16.mxu0 %v1125
  %2232 = vmatmul.mubr.bf16.gmra.mrb[0].mxu0 %v1124
  %v2233 = vpop.f32.mrb[0].mxu0
  %v2234 = vadd.f32 %v1945, %v2233
  %v2235 = vpop.f32.mrb[0].mxu0
  %v2236 = vpop.f32.mrb[0].mxu0
  %v2237 = vadd.f32 %v1948, %v2236
  %v2238 = vpop.f32.mrb[0].mxu0
  %2239 = vmatprep.mubr.bf16.mxu0 %v1132
  %2240 = vmatmul.mubr.bf16.gmra.mrb[0].mxu0 %v1131
  %v2241 = vpop.f32.mrb[0].mxu0
  %v2242 = vadd.f32 %v1953, %v2241
  %v2243 = vpop.f32.mrb[0].mxu0
  %v2244 = vpop.f32.mrb[0].mxu0
  %v2245 = vadd.f32 %v1956, %v2244
  %v2246 = vpop.f32.mrb[0].mxu0
  %2247 = vmatprep.mubr.bf16.mxu0 %v1139
  %2248 = vmatmul.mubr.bf16.gmra.mrb[0].mxu0 %v1138
  %v2249 = vpop.f32.mrb[0].mxu0
  %v2250 = vadd.f32 %v1961, %v2249
  %v2251 = vpop.f32.mrb[0].mxu0
  %v2252 = vpop.f32.mrb[0].mxu0
  %v2253 = vadd.f32 %v1964, %v2252
  %v2254 = vpop.f32.mrb[0].mxu0
  %2255 = vmatprep.mubr.bf16.mxu0 %v1146
  %2256 = vmatmul.mubr.bf16.gmra.mrb[0].mxu0 %v1145
  %v2257 = vpop.f32.mrb[0].mxu0
  %v2258 = vadd.f32 %v1969, %v2257
  %v2259 = vpop.f32.mrb[0].mxu0
  %v2260 = vpop.f32.mrb[0].mxu0
  %v2261 = vadd.f32 %v1972, %v2260
  %v2262 = vpop.f32.mrb[0].mxu0
  %2263 = vmatprep.mubr.bf16.mxu0 %v1153
  %2264 = vmatmul.mubr.bf16.gmra.mrb[0].mxu0 %v1152
  %v2265 = vpop.f32.mrb[0].mxu0
  %v2266 = vadd.f32 %v1977, %v2265
  %v2267 = vpop.f32.mrb[0].mxu0
  %v2268 = vpop.f32.mrb[0].mxu0
  %v2269 = vadd.f32 %v1980, %v2268
  %v2270 = vpop.f32.mrb[0].mxu0
  %2271 = vmatprep.mubr.bf16.mxu0 %v1160
  %2272 = vmatmul.mubr.bf16.gmra.mrb[0].mxu0 %v1159
  %v2273 = vpop.f32.mrb[0].mxu0
  %v2274 = vadd.f32 %v1985, %v2273
  %v2275 = vpop.f32.mrb[0].mxu0
  %v2276 = vpop.f32.mrb[0].mxu0
  %v2277 = vadd.f32 %v1988, %v2276
  %v2278 = vpop.f32.mrb[0].mxu0
  %2279 = vmatprep.mubr.bf16.mxu0 %v1167
  %2280 = vmatmul.mubr.bf16.gmra.mrb[0].mxu0 %v1166
  %v2281 = vpop.f32.mrb[0].mxu0
  %v2282 = vadd.f32 %v1993, %v2281
  %v2283 = vpop.f32.mrb[0].mxu0
  %v2284 = vpop.f32.mrb[0].mxu0
  %v2285 = vadd.f32 %v1996, %v2284
  %v2286 = vpop.f32.mrb[0].mxu0
  %2287 = vmatprep.mubr.bf16.mxu0 %v1174
  %2288 = vmatmul.mubr.bf16.gmra.mrb[0].mxu0 %v1173
  %v2289 = vpop.f32.mrb[0].mxu0
  %v2290 = vadd.f32 %v2001, %v2289
  %v2291 = vpop.f32.mrb[0].mxu0
  %v2292 = vpop.f32.mrb[0].mxu0
  %v2293 = vadd.f32 %v2004, %v2292
  %v2294 = vpop.f32.mrb[0].mxu0
  %2295 = vmatprep.mubr.bf16.mxu0 %v1181
  %2296 = vmatmul.mubr.bf16.gmra.mrb[0].mxu0 %v1180
  %v2297 = vpop.f32.mrb[0].mxu0
  %v2298 = vadd.f32 %v2009, %v2297
  %v2299 = vpop.f32.mrb[0].mxu0
  %v2300 = vpop.f32.mrb[0].mxu0
  %v2301 = vadd.f32 %v2012, %v2300
  %v2302 = vpop.f32.mrb[0].mxu0
  %2303 = vmatprep.mubr.bf16.mxu0 %v1188
  %2304 = vmatmul.mubr.bf16.gmra.mrb[0].mxu0 %v1187
  %v2305 = vpop.f32.mrb[0].mxu0
  %v2306 = vadd.f32 %v2017, %v2305
  %v2307 = vpop.f32.mrb[0].mxu0
  %v2308 = vpop.f32.mrb[0].mxu0
  %v2309 = vadd.f32 %v2020, %v2308
  %v2310 = vpop.f32.mrb[0].mxu0
  %2311 = vmatprep.mubr.bf16.mxu0 %v1195
  %2312 = vmatmul.mubr.bf16.gmra.mrb[0].mxu0 %v1194
  %v2313 = vpop.f32.mrb[0].mxu0
  %v2314 = vadd.f32 %v2025, %v2313
  %v2315 = vpop.f32.mrb[0].mxu0
  %v2316 = vpop.f32.mrb[0].mxu0
  %v2317 = vadd.f32 %v2028, %v2316
  %v2318 = vpop.f32.mrb[0].mxu0
  %2319 = vmatprep.mubr.bf16.mxu0 %v1202
  %2320 = vmatmul.mubr.bf16.gmra.mrb[0].mxu0 %v1201
  %v2321 = vpop.f32.mrb[0].mxu0
  %v2322 = vadd.f32 %v2033, %v2321
  %v2323 = vpop.f32.mrb[0].mxu0
  %v2324 = vpop.f32.mrb[0].mxu0
  %v2325 = vadd.f32 %v2036, %v2324
  %v2326 = vpop.f32.mrb[0].mxu0
  %2327 = vmatprep.mubr.bf16.mxu0 %v1209
  %2328 = vmatmul.mubr.bf16.gmra.mrb[0].mxu0 %v1208
  %v2329 = vpop.f32.mrb[0].mxu0
  %v2330 = vadd.f32 %v2041, %v2329
  %v2331 = vpop.f32.mrb[0].mxu0
  %v2332 = vpop.f32.mrb[0].mxu0
  %v2333 = vadd.f32 %v2044, %v2332
  %v2334 = vpop.f32.mrb[0].mxu0
  %2335 = vmatprep.mubr.bf16.mxu0 %v1216
  %2336 = vmatmul.mubr.bf16.gmra.mrb[0].mxu0 %v1215
  %v2337 = vpop.f32.mrb[0].mxu0
  %v2338 = vadd.f32 %v2049, %v2337
  %v2339 = vpop.f32.mrb[0].mxu0
  %v2340 = vpop.f32.mrb[0].mxu0
  %v2341 = vadd.f32 %v2052, %v2340
  %v2342 = vpop.f32.mrb[0].mxu0
  %2343 = vmatprep.mubr.bf16.mxu0 %v1223
  %2344 = vmatmul.mubr.bf16.gmra.mrb[0].mxu0 %v1222
  %v2345 = vpop.f32.mrb[0].mxu0
  %v2346 = vadd.f32 %v2057, %v2345
  %v2347 = vpop.f32.mrb[0].mxu0
  %v2348 = vpop.f32.mrb[0].mxu0
  %v2349 = vadd.f32 %v2060, %v2348
  %v2350 = vpop.f32.mrb[0].mxu0
  %2351 = vmatprep.mubr.bf16.mxu0 %v1230
  %2352 = vmatmul.mubr.bf16.gmra.mrb[0].mxu0 %v1229
  %v2353 = vpop.f32.mrb[0].mxu0
  %v2354 = vadd.f32 %v2065, %v2353
  %v2355 = vpop.f32.mrb[0].mxu0
  %v2356 = vpop.f32.mrb[0].mxu0
  %v2357 = vadd.f32 %v2068, %v2356
  %v2358 = vpop.f32.mrb[0].mxu0
  %2359 = vmatprep.mubr.bf16.mxu0 %v1237
  %2360 = vmatmul.mubr.bf16.gmra.mrb[0].mxu0 %v1236
  %v2361 = vpop.f32.mrb[0].mxu0
  %v2362 = vadd.f32 %v2073, %v2361
  %v2363 = vpop.f32.mrb[0].mxu0
  %v2364 = vpop.f32.mrb[0].mxu0
  %v2365 = vadd.f32 %v2076, %v2364
  %v2366 = vpop.f32.mrb[0].mxu0
  %2367 = vmatprep.mubr.bf16.mxu0 %v1244
  %2368 = vmatmul.mubr.bf16.gmra.mrb[0].mxu0 %v1243
  %v2369 = vpop.f32.mrb[0].mxu0
  %v2370 = vadd.f32 %v2081, %v2369
  %v2371 = vpop.f32.mrb[0].mxu0
  %v2372 = vpop.f32.mrb[0].mxu0
  %v2373 = vadd.f32 %v2084, %v2372
  %v2374 = vpop.f32.mrb[0].mxu0
  %2375 = vmatprep.mubr.bf16.mxu0 %v1251
  %2376 = vmatmul.mubr.bf16.gmra.mrb[0].mxu0 %v1250
  %v2377 = vpop.f32.mrb[0].mxu0
  %v2378 = vadd.f32 %v2089, %v2377
  %v2379 = vpop.f32.mrb[0].mxu0
  %v2380 = vpop.f32.mrb[0].mxu0
  %v2381 = vadd.f32 %v2092, %v2380
  %v2382 = vpop.f32.mrb[0].mxu0
  %2383 = vmatprep.mubr.bf16.mxu0 %v1258
  %2384 = vmatmul.mubr.bf16.gmra.mrb[0].mxu0 %v1257
  %v2385 = vpop.f32.mrb[0].mxu0
  %v2386 = vadd.f32 %v2097, %v2385
  %v2387 = vpop.f32.mrb[0].mxu0
  %v2388 = vpop.f32.mrb[0].mxu0
  %v2389 = vadd.f32 %v2100, %v2388
  %v2390 = vpop.f32.mrb[0].mxu0
  %2391 = vmatprep.mubr.bf16.mxu0 %v1265
  %2392 = vmatmul.mubr.bf16.gmra.mrb[0].mxu0 %v1264
  %v2393 = vpop.f32.mrb[0].mxu0
  %v2394 = vadd.f32 %v2105, %v2393
  %v2395 = vpop.f32.mrb[0].mxu0
  %v2396 = vpop.f32.mrb[0].mxu0
  %v2397 = vadd.f32 %v2108, %v2396
  %v2398 = vpop.f32.mrb[0].mxu0
  %2399 = vmatprep.mubr.bf16.mxu0 %v1272
  %2400 = vmatmul.mubr.bf16.gmra.mrb[0].mxu0 %v1271
  %v2401 = vpop.f32.mrb[0].mxu0
  %v2402 = vadd.f32 %v2113, %v2401
  %v2403 = vpop.f32.mrb[0].mxu0
  %v2404 = vpop.f32.mrb[0].mxu0
  %v2405 = vadd.f32 %v2116, %v2404
  %v2406 = vpop.f32.mrb[0].mxu0
  %2407 = vmatprep.mubr.bf16.mxu0 %v1279
  %2408 = vmatmul.mubr.bf16.gmra.mrb[0].mxu0 %v1278
  %v2409 = vpop.f32.mrb[0].mxu0
  %v2410 = vadd.f32 %v2121, %v2409
  %v2411 = vpop.f32.mrb[0].mxu0
  %v2412 = vpop.f32.mrb[0].mxu0
  %v2413 = vadd.f32 %v2124, %v2412
  %v2414 = vpop.f32.mrb[0].mxu0
  %2415 = vmatprep.mubr.bf16.mxu0 %v1286
  %2416 = vmatmul.mubr.bf16.gmra.mrb[0].mxu0 %v1285
  %v2417 = vpop.f32.mrb[0].mxu0
  %v2418 = vadd.f32 %v2129, %v2417
  %v2419 = vpop.f32.mrb[0].mxu0
  %v2420 = vpop.f32.mrb[0].mxu0
  %v2421 = vadd.f32 %v2132, %v2420
  %v2422 = vpop.f32.mrb[0].mxu0
  %2423 = vmatprep.mubr.bf16.mxu0 %v1293
  %2424 = vmatmul.mubr.bf16.gmra.mrb[0].mxu0 %v1292
  %v2425 = vpop.f32.mrb[0].mxu0
  %v2426 = vadd.f32 %v2137, %v2425
  %v2427 = vpop.f32.mrb[0].mxu0
  %v2428 = vpop.f32.mrb[0].mxu0
  %v2429 = vadd.f32 %v2140, %v2428
  %v2430 = vpop.f32.mrb[0].mxu0
  %2431 = vmatprep.mubr.bf16.mxu0 %v1300
  %2432 = vmatmul.mubr.bf16.gmra.mrb[0].mxu0 %v1299
  %v2433 = vpop.f32.mrb[0].mxu0
  %v2434 = vadd.f32 %v2145, %v2433
  %v2435 = vpop.f32.mrb[0].mxu0
  %v2436 = vpop.f32.mrb[0].mxu0
  %v2437 = vadd.f32 %v2148, %v2436
  %v2438 = vpop.f32.mrb[0].mxu0
  %2439 = vmatprep.mubr.bf16.mxu0 %v1307
  %2440 = vmatmul.mubr.bf16.gmra.mrb[0].mxu0 %v1306
  %v2441 = vpop.f32.mrb[0].mxu0
  %v2442 = vadd.f32 %v2153, %v2441
  %v2443 = vpop.f32.mrb[0].mxu0
  %v2444 = vpop.f32.mrb[0].mxu0
  %v2445 = vadd.f32 %v2156, %v2444
  %v2446 = vpop.f32.mrb[0].mxu0
  %2447 = vmatprep.mubr.bf16.mxu0 %v1314
  %2448 = vmatmul.mubr.bf16.gmra.mrb[0].mxu0 %v1313
  %v2449 = vpop.f32.mrb[0].mxu0
  %v2450 = vadd.f32 %v2161, %v2449
  %v2451 = vpop.f32.mrb[0].mxu0
  %v2452 = vpop.f32.mrb[0].mxu0
  %v2453 = vadd.f32 %v2164, %v2452
  %v2454 = vpop.f32.mrb[0].mxu0
  %2455 = vdwg.mxu0
  %2456 = vmatprep.subr.bf16.mxu0 0
  %2457 = vmatpush1.bf16.msra.mxu0 %v1798
  %2458 = vmatprep.subr.bf16.mxu0 0
  %2459 = vmatpush1.bf16.msra.mxu0 %v1799
  %2460 = vmatprep.subr.bf16.mxu0 0
  %2461 = vmatpush1.bf16.msra.mxu0 %v1800
  %2462 = vmatprep.subr.bf16.mxu0 0
  %2463 = vmatpush1.bf16.msra.mxu0 %v1801
  %2464 = vmatprep.subr.bf16.mxu0 0
  %2465 = vmatpush1.bf16.msra.mxu0 %v1802
  %2466 = vmatprep.subr.bf16.mxu0 0
  %2467 = vmatpush1.bf16.msra.mxu0 %v1803
  %2468 = vmatprep.subr.bf16.mxu0 0
  %2469 = vmatpush1.bf16.msra.mxu0 %v1804
  %2470 = vmatprep.subr.bf16.mxu0 0
  %2471 = vmatpush1.bf16.msra.mxu0 %v1805
  %2472 = vmatprep.subr.bf16.mxu0 0
  %2473 = vmatpush1.bf16.msra.mxu0 %v1806
  %2474 = vmatprep.subr.bf16.mxu0 0
  %2475 = vmatpush1.bf16.msra.mxu0 %v1807
  %2476 = vmatprep.subr.bf16.mxu0 0
  %2477 = vmatpush1.bf16.msra.mxu0 %v1808
  %2478 = vmatprep.subr.bf16.mxu0 0
  %2479 = vmatpush1.bf16.msra.mxu0 %v1809
  %2480 = vmatprep.subr.bf16.mxu0 0
  %2481 = vmatpush1.bf16.msra.mxu0 %v1810
  %2482 = vmatprep.subr.bf16.mxu0 0
  %2483 = vmatpush1.bf16.msra.mxu0 %v1811
  %2484 = vmatprep.subr.bf16.mxu0 0
  %2485 = vmatpush1.bf16.msra.mxu0 %v1812
  %2486 = vmatprep.subr.bf16.mxu0 0
  %2487 = vmatpush1.bf16.msra.mxu0 %v1813
  %2488 = vmatprep.mubr.bf16.mxu0 %v1099
  %2489 = vmatmul.mubr.bf16.gmra.mrb[0].mxu0 %v1098
  %v2490 = vpop.f32.mrb[0].mxu0
  %v2491 = vadd.f32 %v2202, %v2490
  %v2492 = vpop.f32.mrb[0].mxu0
  %v2493 = vpop.f32.mrb[0].mxu0
  %v2494 = vadd.f32 %v2205, %v2493
  %v2495 = vpop.f32.mrb[0].mxu0
  %2496 = vmatprep.mubr.bf16.mxu0 %v1106
  %2497 = vmatmul.mubr.bf16.gmra.mrb[0].mxu0 %v1105
  %v2498 = vpop.f32.mrb[0].mxu0
  %v2499 = vadd.f32 %v2210, %v2498
  %v2500 = vpop.f32.mrb[0].mxu0
  %v2501 = vpop.f32.mrb[0].mxu0
  %v2502 = vadd.f32 %v2213, %v2501
  %v2503 = vpop.f32.mrb[0].mxu0
  %2504 = vmatprep.mubr.bf16.mxu0 %v1113
  %2505 = vmatmul.mubr.bf16.gmra.mrb[0].mxu0 %v1112
  %v2506 = vpop.f32.mrb[0].mxu0
  %v2507 = vadd.f32 %v2218, %v2506
  %v2508 = vpop.f32.mrb[0].mxu0
  %v2509 = vpop.f32.mrb[0].mxu0
  %v2510 = vadd.f32 %v2221, %v2509
  %v2511 = vpop.f32.mrb[0].mxu0
  %2512 = vmatprep.mubr.bf16.mxu0 %v1120
  %2513 = vmatmul.mubr.bf16.gmra.mrb[0].mxu0 %v1119
  %v2514 = vpop.f32.mrb[0].mxu0
  %v2515 = vadd.f32 %v2226, %v2514
  %v2516 = vpop.f32.mrb[0].mxu0
  %v2517 = vpop.f32.mrb[0].mxu0
  %v2518 = vadd.f32 %v2229, %v2517
  %v2519 = vpop.f32.mrb[0].mxu0
  %2520 = vmatprep.mubr.bf16.mxu0 %v1127
  %2521 = vmatmul.mubr.bf16.gmra.mrb[0].mxu0 %v1126
  %v2522 = vpop.f32.mrb[0].mxu0
  %v2523 = vadd.f32 %v2234, %v2522
  %v2524 = vpop.f32.mrb[0].mxu0
  %v2525 = vpop.f32.mrb[0].mxu0
  %v2526 = vadd.f32 %v2237, %v2525
  %v2527 = vpop.f32.mrb[0].mxu0
  %2528 = vmatprep.mubr.bf16.mxu0 %v1134
  %2529 = vmatmul.mubr.bf16.gmra.mrb[0].mxu0 %v1133
  %v2530 = vpop.f32.mrb[0].mxu0
  %v2531 = vadd.f32 %v2242, %v2530
  %v2532 = vpop.f32.mrb[0].mxu0
  %v2533 = vpop.f32.mrb[0].mxu0
  %v2534 = vadd.f32 %v2245, %v2533
  %v2535 = vpop.f32.mrb[0].mxu0
  %2536 = vmatprep.mubr.bf16.mxu0 %v1141
  %2537 = vmatmul.mubr.bf16.gmra.mrb[0].mxu0 %v1140
  %v2538 = vpop.f32.mrb[0].mxu0
  %v2539 = vadd.f32 %v2250, %v2538
  %v2540 = vpop.f32.mrb[0].mxu0
  %v2541 = vpop.f32.mrb[0].mxu0
  %v2542 = vadd.f32 %v2253, %v2541
  %v2543 = vpop.f32.mrb[0].mxu0
  %2544 = vmatprep.mubr.bf16.mxu0 %v1148
  %2545 = vmatmul.mubr.bf16.gmra.mrb[0].mxu0 %v1147
  %v2546 = vpop.f32.mrb[0].mxu0
  %v2547 = vadd.f32 %v2258, %v2546
  %v2548 = vpop.f32.mrb[0].mxu0
  %v2549 = vpop.f32.mrb[0].mxu0
  %v2550 = vadd.f32 %v2261, %v2549
  %v2551 = vpop.f32.mrb[0].mxu0
  %2552 = vmatprep.mubr.bf16.mxu0 %v1155
  %2553 = vmatmul.mubr.bf16.gmra.mrb[0].mxu0 %v1154
  %v2554 = vpop.f32.mrb[0].mxu0
  %v2555 = vadd.f32 %v2266, %v2554
  %v2556 = vpop.f32.mrb[0].mxu0
  %v2557 = vpop.f32.mrb[0].mxu0
  %v2558 = vadd.f32 %v2269, %v2557
  %v2559 = vpop.f32.mrb[0].mxu0
  %2560 = vmatprep.mubr.bf16.mxu0 %v1162
  %2561 = vmatmul.mubr.bf16.gmra.mrb[0].mxu0 %v1161
  %v2562 = vpop.f32.mrb[0].mxu0
  %v2563 = vadd.f32 %v2274, %v2562
  %v2564 = vpop.f32.mrb[0].mxu0
  %v2565 = vpop.f32.mrb[0].mxu0
  %v2566 = vadd.f32 %v2277, %v2565
  %v2567 = vpop.f32.mrb[0].mxu0
  %2568 = vmatprep.mubr.bf16.mxu0 %v1169
  %2569 = vmatmul.mubr.bf16.gmra.mrb[0].mxu0 %v1168
  %v2570 = vpop.f32.mrb[0].mxu0
  %v2571 = vadd.f32 %v2282, %v2570
  %v2572 = vpop.f32.mrb[0].mxu0
  %v2573 = vpop.f32.mrb[0].mxu0
  %v2574 = vadd.f32 %v2285, %v2573
  %v2575 = vpop.f32.mrb[0].mxu0
  %2576 = vmatprep.mubr.bf16.mxu0 %v1176
  %2577 = vmatmul.mubr.bf16.gmra.mrb[0].mxu0 %v1175
  %v2578 = vpop.f32.mrb[0].mxu0
  %v2579 = vadd.f32 %v2290, %v2578
  %v2580 = vpop.f32.mrb[0].mxu0
  %v2581 = vpop.f32.mrb[0].mxu0
  %v2582 = vadd.f32 %v2293, %v2581
  %v2583 = vpop.f32.mrb[0].mxu0
  %2584 = vmatprep.mubr.bf16.mxu0 %v1183
  %2585 = vmatmul.mubr.bf16.gmra.mrb[0].mxu0 %v1182
  %v2586 = vpop.f32.mrb[0].mxu0
  %v2587 = vadd.f32 %v2298, %v2586
  %v2588 = vpop.f32.mrb[0].mxu0
  %v2589 = vpop.f32.mrb[0].mxu0
  %v2590 = vadd.f32 %v2301, %v2589
  %v2591 = vpop.f32.mrb[0].mxu0
  %2592 = vmatprep.mubr.bf16.mxu0 %v1190
  %2593 = vmatmul.mubr.bf16.gmra.mrb[0].mxu0 %v1189
  %v2594 = vpop.f32.mrb[0].mxu0
  %v2595 = vadd.f32 %v2306, %v2594
  %v2596 = vpop.f32.mrb[0].mxu0
  %v2597 = vpop.f32.mrb[0].mxu0
  %v2598 = vadd.f32 %v2309, %v2597
  %v2599 = vpop.f32.mrb[0].mxu0
  %2600 = vmatprep.mubr.bf16.mxu0 %v1197
  %2601 = vmatmul.mubr.bf16.gmra.mrb[0].mxu0 %v1196
  %v2602 = vpop.f32.mrb[0].mxu0
  %v2603 = vadd.f32 %v2314, %v2602
  %v2604 = vpop.f32.mrb[0].mxu0
  %v2605 = vpop.f32.mrb[0].mxu0
  %v2606 = vadd.f32 %v2317, %v2605
  %v2607 = vpop.f32.mrb[0].mxu0
  %2608 = vmatprep.mubr.bf16.mxu0 %v1204
  %2609 = vmatmul.mubr.bf16.gmra.mrb[0].mxu0 %v1203
  %v2610 = vpop.f32.mrb[0].mxu0
  %v2611 = vadd.f32 %v2322, %v2610
  %v2612 = vpop.f32.mrb[0].mxu0
  %v2613 = vpop.f32.mrb[0].mxu0
  %v2614 = vadd.f32 %v2325, %v2613
  %v2615 = vpop.f32.mrb[0].mxu0
  %2616 = vmatprep.mubr.bf16.mxu0 %v1211
  %2617 = vmatmul.mubr.bf16.gmra.mrb[0].mxu0 %v1210
  %v2618 = vpop.f32.mrb[0].mxu0
  %v2619 = vadd.f32 %v2330, %v2618
  %v2620 = vpop.f32.mrb[0].mxu0
  %v2621 = vpop.f32.mrb[0].mxu0
  %v2622 = vadd.f32 %v2333, %v2621
  %v2623 = vpop.f32.mrb[0].mxu0
  %2624 = vmatprep.mubr.bf16.mxu0 %v1218
  %2625 = vmatmul.mubr.bf16.gmra.mrb[0].mxu0 %v1217
  %v2626 = vpop.f32.mrb[0].mxu0
  %v2627 = vadd.f32 %v2338, %v2626
  %v2628 = vpop.f32.mrb[0].mxu0
  %v2629 = vpop.f32.mrb[0].mxu0
  %v2630 = vadd.f32 %v2341, %v2629
  %v2631 = vpop.f32.mrb[0].mxu0
  %2632 = vmatprep.mubr.bf16.mxu0 %v1225
  %2633 = vmatmul.mubr.bf16.gmra.mrb[0].mxu0 %v1224
  %v2634 = vpop.f32.mrb[0].mxu0
  %v2635 = vadd.f32 %v2346, %v2634
  %v2636 = vpop.f32.mrb[0].mxu0
  %v2637 = vpop.f32.mrb[0].mxu0
  %v2638 = vadd.f32 %v2349, %v2637
  %v2639 = vpop.f32.mrb[0].mxu0
  %2640 = vmatprep.mubr.bf16.mxu0 %v1232
  %2641 = vmatmul.mubr.bf16.gmra.mrb[0].mxu0 %v1231
  %v2642 = vpop.f32.mrb[0].mxu0
  %v2643 = vadd.f32 %v2354, %v2642
  %v2644 = vpop.f32.mrb[0].mxu0
  %v2645 = vpop.f32.mrb[0].mxu0
  %v2646 = vadd.f32 %v2357, %v2645
  %v2647 = vpop.f32.mrb[0].mxu0
  %2648 = vmatprep.mubr.bf16.mxu0 %v1239
  %2649 = vmatmul.mubr.bf16.gmra.mrb[0].mxu0 %v1238
  %v2650 = vpop.f32.mrb[0].mxu0
  %v2651 = vadd.f32 %v2362, %v2650
  %v2652 = vpop.f32.mrb[0].mxu0
  %v2653 = vpop.f32.mrb[0].mxu0
  %v2654 = vadd.f32 %v2365, %v2653
  %v2655 = vpop.f32.mrb[0].mxu0
  %2656 = vmatprep.mubr.bf16.mxu0 %v1246
  %2657 = vmatmul.mubr.bf16.gmra.mrb[0].mxu0 %v1245
  %v2658 = vpop.f32.mrb[0].mxu0
  %v2659 = vadd.f32 %v2370, %v2658
  %v2660 = vpop.f32.mrb[0].mxu0
  %v2661 = vpop.f32.mrb[0].mxu0
  %v2662 = vadd.f32 %v2373, %v2661
  %v2663 = vpop.f32.mrb[0].mxu0
  %2664 = vmatprep.mubr.bf16.mxu0 %v1253
  %2665 = vmatmul.mubr.bf16.gmra.mrb[0].mxu0 %v1252
  %v2666 = vpop.f32.mrb[0].mxu0
  %v2667 = vadd.f32 %v2378, %v2666
  %v2668 = vpop.f32.mrb[0].mxu0
  %v2669 = vpop.f32.mrb[0].mxu0
  %v2670 = vadd.f32 %v2381, %v2669
  %v2671 = vpop.f32.mrb[0].mxu0
  %2672 = vmatprep.mubr.bf16.mxu0 %v1260
  %2673 = vmatmul.mubr.bf16.gmra.mrb[0].mxu0 %v1259
  %v2674 = vpop.f32.mrb[0].mxu0
  %v2675 = vadd.f32 %v2386, %v2674
  %v2676 = vpop.f32.mrb[0].mxu0
  %v2677 = vpop.f32.mrb[0].mxu0
  %v2678 = vadd.f32 %v2389, %v2677
  %v2679 = vpop.f32.mrb[0].mxu0
  %2680 = vmatprep.mubr.bf16.mxu0 %v1267
  %2681 = vmatmul.mubr.bf16.gmra.mrb[0].mxu0 %v1266
  %v2682 = vpop.f32.mrb[0].mxu0
  %v2683 = vadd.f32 %v2394, %v2682
  %v2684 = vpop.f32.mrb[0].mxu0
  %v2685 = vpop.f32.mrb[0].mxu0
  %v2686 = vadd.f32 %v2397, %v2685
  %v2687 = vpop.f32.mrb[0].mxu0
  %2688 = vmatprep.mubr.bf16.mxu0 %v1274
  %2689 = vmatmul.mubr.bf16.gmra.mrb[0].mxu0 %v1273
  %v2690 = vpop.f32.mrb[0].mxu0
  %v2691 = vadd.f32 %v2402, %v2690
  %v2692 = vpop.f32.mrb[0].mxu0
  %v2693 = vpop.f32.mrb[0].mxu0
  %v2694 = vadd.f32 %v2405, %v2693
  %v2695 = vpop.f32.mrb[0].mxu0
  %2696 = vmatprep.mubr.bf16.mxu0 %v1281
  %2697 = vmatmul.mubr.bf16.gmra.mrb[0].mxu0 %v1280
  %v2698 = vpop.f32.mrb[0].mxu0
  %v2699 = vadd.f32 %v2410, %v2698
  %v2700 = vpop.f32.mrb[0].mxu0
  %v2701 = vpop.f32.mrb[0].mxu0
  %v2702 = vadd.f32 %v2413, %v2701
  %v2703 = vpop.f32.mrb[0].mxu0
  %2704 = vmatprep.mubr.bf16.mxu0 %v1288
  %2705 = vmatmul.mubr.bf16.gmra.mrb[0].mxu0 %v1287
  %v2706 = vpop.f32.mrb[0].mxu0
  %v2707 = vadd.f32 %v2418, %v2706
  %v2708 = vpop.f32.mrb[0].mxu0
  %v2709 = vpop.f32.mrb[0].mxu0
  %v2710 = vadd.f32 %v2421, %v2709
  %v2711 = vpop.f32.mrb[0].mxu0
  %2712 = vmatprep.mubr.bf16.mxu0 %v1295
  %2713 = vmatmul.mubr.bf16.gmra.mrb[0].mxu0 %v1294
  %v2714 = vpop.f32.mrb[0].mxu0
  %v2715 = vadd.f32 %v2426, %v2714
  %v2716 = vpop.f32.mrb[0].mxu0
  %v2717 = vpop.f32.mrb[0].mxu0
  %v2718 = vadd.f32 %v2429, %v2717
  %v2719 = vpop.f32.mrb[0].mxu0
  %2720 = vmatprep.mubr.bf16.mxu0 %v1302
  %2721 = vmatmul.mubr.bf16.gmra.mrb[0].mxu0 %v1301
  %v2722 = vpop.f32.mrb[0].mxu0
  %v2723 = vadd.f32 %v2434, %v2722
  %v2724 = vpop.f32.mrb[0].mxu0
  %v2725 = vpop.f32.mrb[0].mxu0
  %v2726 = vadd.f32 %v2437, %v2725
  %v2727 = vpop.f32.mrb[0].mxu0
  %2728 = vmatprep.mubr.bf16.mxu0 %v1309
  %2729 = vmatmul.mubr.bf16.gmra.mrb[0].mxu0 %v1308
  %v2730 = vpop.f32.mrb[0].mxu0
  %v2731 = vadd.f32 %v2442, %v2730
  %v2732 = vpop.f32.mrb[0].mxu0
  %v2733 = vpop.f32.mrb[0].mxu0
  %v2734 = vadd.f32 %v2445, %v2733
  %v2735 = vpop.f32.mrb[0].mxu0
  %2736 = vmatprep.mubr.bf16.mxu0 %v1316
  %2737 = vmatmul.mubr.bf16.gmra.mrb[0].mxu0 %v1315
  %v2738 = vpop.f32.mrb[0].mxu0
  %v2739 = vadd.f32 %v2450, %v2738
  %v2740 = vpop.f32.mrb[0].mxu0
  %v2741 = vpop.f32.mrb[0].mxu0
  %v2742 = vadd.f32 %v2453, %v2741
  %v2743 = vpop.f32.mrb[0].mxu0
  %2744 = vdwg.mxu0
  %2745 = vmatprep.subr.bf16.mxu0 0
  %2746 = vmatpush1.bf16.msra.mxu0 %v1814
  %2747 = vmatprep.subr.bf16.mxu0 0
  %2748 = vmatpush1.bf16.msra.mxu0 %v1815
  %2749 = vmatprep.subr.bf16.mxu0 0
  %2750 = vmatpush1.bf16.msra.mxu0 %v1816
  %2751 = vmatprep.subr.bf16.mxu0 0
  %2752 = vmatpush1.bf16.msra.mxu0 %v1817
  %2753 = vmatprep.subr.bf16.mxu0 0
  %2754 = vmatpush1.bf16.msra.mxu0 %v1818
  %2755 = vmatprep.subr.bf16.mxu0 0
  %2756 = vmatpush1.bf16.msra.mxu0 %v1819
  %2757 = vmatprep.subr.bf16.mxu0 0
  %2758 = vmatpush1.bf16.msra.mxu0 %v1820
  %2759 = vmatprep.subr.bf16.mxu0 0
  %2760 = vmatpush1.bf16.msra.mxu0 %v1821
  %2761 = vmatprep.subr.bf16.mxu0 0
  %2762 = vmatpush1.bf16.msra.mxu0 0
  %2763 = vmatprep.subr.bf16.mxu0 0
  %2764 = vmatpush1.bf16.msra.mxu0 0
  %2765 = vmatprep.subr.bf16.mxu0 0
  %2766 = vmatpush1.bf16.msra.mxu0 0
  %2767 = vmatprep.subr.bf16.mxu0 0
  %2768 = vmatpush1.bf16.msra.mxu0 0
  %2769 = vmatprep.subr.bf16.mxu0 0
  %2770 = vmatpush1.bf16.msra.mxu0 0
  %2771 = vmatprep.subr.bf16.mxu0 0
  %2772 = vmatpush1.bf16.msra.mxu0 0
  %2773 = vmatprep.subr.bf16.mxu0 0
  %2774 = vmatpush1.bf16.msra.mxu0 0
  %2775 = vmatprep.subr.bf16.mxu0 0
  %2776 = vmatpush1.bf16.msra.mxu0 0
  %2777 = vmatprep.mubr.bf16.mxu0 0
  %2778 = vmatmul.mubr.bf16.gmra.mrb[0].mxu0 %v1100
  %v2779 = vpop.f32.mrb[0].mxu0
  %v2780 = vadd.f32 %v2491, %v2779
  %v2781 = vpop.f32.mrb[0].mxu0
  %v2782 = vpop.f32.mrb[0].mxu0
  %v2783 = vadd.f32 %v2494, %v2782
  %v2784 = vpop.f32.mrb[0].mxu0
  %2785 = vmatprep.mubr.bf16.mxu0 0
  %2786 = vmatmul.mubr.bf16.gmra.mrb[0].mxu0 %v1107
  %v2787 = vpop.f32.mrb[0].mxu0
  %v2788 = vadd.f32 %v2499, %v2787
  %v2789 = vpop.f32.mrb[0].mxu0
  %v2790 = vpop.f32.mrb[0].mxu0
  %v2791 = vadd.f32 %v2502, %v2790
  %v2792 = vpop.f32.mrb[0].mxu0
  %2793 = vmatprep.mubr.bf16.mxu0 0
  %2794 = vmatmul.mubr.bf16.gmra.mrb[0].mxu0 %v1114
  %v2795 = vpop.f32.mrb[0].mxu0
  %v2796 = vadd.f32 %v2507, %v2795
  %v2797 = vpop.f32.mrb[0].mxu0
  %v2798 = vpop.f32.mrb[0].mxu0
  %v2799 = vadd.f32 %v2510, %v2798
  %v2800 = vpop.f32.mrb[0].mxu0
  %2801 = vmatprep.mubr.bf16.mxu0 0
  %2802 = vmatmul.mubr.bf16.gmra.mrb[0].mxu0 %v1121
  %v2803 = vpop.f32.mrb[0].mxu0
  %v2804 = vadd.f32 %v2515, %v2803
  %v2805 = vpop.f32.mrb[0].mxu0
  %v2806 = vpop.f32.mrb[0].mxu0
  %v2807 = vadd.f32 %v2518, %v2806
  %v2808 = vpop.f32.mrb[0].mxu0
  %2809 = vmatprep.mubr.bf16.mxu0 0
  %2810 = vmatmul.mubr.bf16.gmra.mrb[0].mxu0 %v1128
  %v2811 = vpop.f32.mrb[0].mxu0
  %v2812 = vadd.f32 %v2523, %v2811
  %v2813 = vpop.f32.mrb[0].mxu0
  %v2814 = vpop.f32.mrb[0].mxu0
  %v2815 = vadd.f32 %v2526, %v2814
  %v2816 = vpop.f32.mrb[0].mxu0
  %2817 = vmatprep.mubr.bf16.mxu0 0
  %2818 = vmatmul.mubr.bf16.gmra.mrb[0].mxu0 %v1135
  %v2819 = vpop.f32.mrb[0].mxu0
  %v2820 = vadd.f32 %v2531, %v2819
  %v2821 = vpop.f32.mrb[0].mxu0
  %v2822 = vpop.f32.mrb[0].mxu0
  %v2823 = vadd.f32 %v2534, %v2822
  %v2824 = vpop.f32.mrb[0].mxu0
  %2825 = vmatprep.mubr.bf16.mxu0 0
  %2826 = vmatmul.mubr.bf16.gmra.mrb[0].mxu0 %v1142
  %v2827 = vpop.f32.mrb[0].mxu0
  %v2828 = vadd.f32 %v2539, %v2827
  %v2829 = vpop.f32.mrb[0].mxu0
  %v2830 = vpop.f32.mrb[0].mxu0
  %v2831 = vadd.f32 %v2542, %v2830
  %v2832 = vpop.f32.mrb[0].mxu0
  %2833 = vmatprep.mubr.bf16.mxu0 0
  %2834 = vmatmul.mubr.bf16.gmra.mrb[0].mxu0 %v1149
  %v2835 = vpop.f32.mrb[0].mxu0
  %v2836 = vadd.f32 %v2547, %v2835
  %v2837 = vpop.f32.mrb[0].mxu0
  %v2838 = vpop.f32.mrb[0].mxu0
  %v2839 = vadd.f32 %v2550, %v2838
  %v2840 = vpop.f32.mrb[0].mxu0
  %2841 = vmatprep.mubr.bf16.mxu0 0
  %2842 = vmatmul.mubr.bf16.gmra.mrb[0].mxu0 %v1156
  %v2843 = vpop.f32.mrb[0].mxu0
  %v2844 = vadd.f32 %v2555, %v2843
  %v2845 = vpop.f32.mrb[0].mxu0
  %v2846 = vpop.f32.mrb[0].mxu0
  %v2847 = vadd.f32 %v2558, %v2846
  %v2848 = vpop.f32.mrb[0].mxu0
  %2849 = vmatprep.mubr.bf16.mxu0 0
  %2850 = vmatmul.mubr.bf16.gmra.mrb[0].mxu0 %v1163
  %v2851 = vpop.f32.mrb[0].mxu0
  %v2852 = vadd.f32 %v2563, %v2851
  %v2853 = vpop.f32.mrb[0].mxu0
  %v2854 = vpop.f32.mrb[0].mxu0
  %v2855 = vadd.f32 %v2566, %v2854
  %v2856 = vpop.f32.mrb[0].mxu0
  %2857 = vmatprep.mubr.bf16.mxu0 0
  %2858 = vmatmul.mubr.bf16.gmra.mrb[0].mxu0 %v1170
  %v2859 = vpop.f32.mrb[0].mxu0
  %v2860 = vadd.f32 %v2571, %v2859
  %v2861 = vpop.f32.mrb[0].mxu0
  %v2862 = vpop.f32.mrb[0].mxu0
  %v2863 = vadd.f32 %v2574, %v2862
  %v2864 = vpop.f32.mrb[0].mxu0
  %2865 = vmatprep.mubr.bf16.mxu0 0
  %2866 = vmatmul.mubr.bf16.gmra.mrb[0].mxu0 %v1177
  %v2867 = vpop.f32.mrb[0].mxu0
  %v2868 = vadd.f32 %v2579, %v2867
  %v2869 = vpop.f32.mrb[0].mxu0
  %v2870 = vpop.f32.mrb[0].mxu0
  %v2871 = vadd.f32 %v2582, %v2870
  %v2872 = vpop.f32.mrb[0].mxu0
  %2873 = vmatprep.mubr.bf16.mxu0 0
  %2874 = vmatmul.mubr.bf16.gmra.mrb[0].mxu0 %v1184
  %v2875 = vpop.f32.mrb[0].mxu0
  %v2876 = vadd.f32 %v2587, %v2875
  %v2877 = vpop.f32.mrb[0].mxu0
  %v2878 = vpop.f32.mrb[0].mxu0
  %v2879 = vadd.f32 %v2590, %v2878
  %v2880 = vpop.f32.mrb[0].mxu0
  %2881 = vmatprep.mubr.bf16.mxu0 0
  %2882 = vmatmul.mubr.bf16.gmra.mrb[0].mxu0 %v1191
  %v2883 = vpop.f32.mrb[0].mxu0
  %v2884 = vadd.f32 %v2595, %v2883
  %v2885 = vpop.f32.mrb[0].mxu0
  %v2886 = vpop.f32.mrb[0].mxu0
  %v2887 = vadd.f32 %v2598, %v2886
  %v2888 = vpop.f32.mrb[0].mxu0
  %2889 = vmatprep.mubr.bf16.mxu0 0
  %2890 = vmatmul.mubr.bf16.gmra.mrb[0].mxu0 %v1198
  %v2891 = vpop.f32.mrb[0].mxu0
  %v2892 = vadd.f32 %v2603, %v2891
  %v2893 = vpop.f32.mrb[0].mxu0
  %v2894 = vpop.f32.mrb[0].mxu0
  %v2895 = vadd.f32 %v2606, %v2894
  %v2896 = vpop.f32.mrb[0].mxu0
  %2897 = vmatprep.mubr.bf16.mxu0 0
  %2898 = vmatmul.mubr.bf16.gmra.mrb[0].mxu0 %v1205
  %v2899 = vpop.f32.mrb[0].mxu0
  %v2900 = vadd.f32 %v2611, %v2899
  %v2901 = vpop.f32.mrb[0].mxu0
  %v2902 = vpop.f32.mrb[0].mxu0
  %v2903 = vadd.f32 %v2614, %v2902
  %v2904 = vpop.f32.mrb[0].mxu0
  %2905 = vmatprep.mubr.bf16.mxu0 0
  %2906 = vmatmul.mubr.bf16.gmra.mrb[0].mxu0 %v1212
  %v2907 = vpop.f32.mrb[0].mxu0
  %v2908 = vadd.f32 %v2619, %v2907
  %v2909 = vpop.f32.mrb[0].mxu0
  %v2910 = vpop.f32.mrb[0].mxu0
  %v2911 = vadd.f32 %v2622, %v2910
  %v2912 = vpop.f32.mrb[0].mxu0
  %2913 = vmatprep.mubr.bf16.mxu0 0
  %2914 = vmatmul.mubr.bf16.gmra.mrb[0].mxu0 %v1219
  %v2915 = vpop.f32.mrb[0].mxu0
  %v2916 = vadd.f32 %v2627, %v2915
  %v2917 = vpop.f32.mrb[0].mxu0
  %v2918 = vpop.f32.mrb[0].mxu0
  %v2919 = vadd.f32 %v2630, %v2918
  %v2920 = vpop.f32.mrb[0].mxu0
  %2921 = vmatprep.mubr.bf16.mxu0 0
  %2922 = vmatmul.mubr.bf16.gmra.mrb[0].mxu0 %v1226
  %v2923 = vpop.f32.mrb[0].mxu0
  %v2924 = vadd.f32 %v2635, %v2923
  %v2925 = vpop.f32.mrb[0].mxu0
  %v2926 = vpop.f32.mrb[0].mxu0
  %v2927 = vadd.f32 %v2638, %v2926
  %v2928 = vpop.f32.mrb[0].mxu0
  %2929 = vmatprep.mubr.bf16.mxu0 0
  %2930 = vmatmul.mubr.bf16.gmra.mrb[0].mxu0 %v1233
  %v2931 = vpop.f32.mrb[0].mxu0
  %v2932 = vadd.f32 %v2643, %v2931
  %v2933 = vpop.f32.mrb[0].mxu0
  %v2934 = vpop.f32.mrb[0].mxu0
  %v2935 = vadd.f32 %v2646, %v2934
  %v2936 = vpop.f32.mrb[0].mxu0
  %2937 = vmatprep.mubr.bf16.mxu0 0
  %2938 = vmatmul.mubr.bf16.gmra.mrb[0].mxu0 %v1240
  %v2939 = vpop.f32.mrb[0].mxu0
  %v2940 = vadd.f32 %v2651, %v2939
  %v2941 = vpop.f32.mrb[0].mxu0
  %v2942 = vpop.f32.mrb[0].mxu0
  %v2943 = vadd.f32 %v2654, %v2942
  %v2944 = vpop.f32.mrb[0].mxu0
  %2945 = vmatprep.mubr.bf16.mxu0 0
  %2946 = vmatmul.mubr.bf16.gmra.mrb[0].mxu0 %v1247
  %v2947 = vpop.f32.mrb[0].mxu0
  %v2948 = vadd.f32 %v2659, %v2947
  %v2949 = vpop.f32.mrb[0].mxu0
  %v2950 = vpop.f32.mrb[0].mxu0
  %v2951 = vadd.f32 %v2662, %v2950
  %v2952 = vpop.f32.mrb[0].mxu0
  %2953 = vmatprep.mubr.bf16.mxu0 0
  %2954 = vmatmul.mubr.bf16.gmra.mrb[0].mxu0 %v1254
  %v2955 = vpop.f32.mrb[0].mxu0
  %v2956 = vadd.f32 %v2667, %v2955
  %v2957 = vpop.f32.mrb[0].mxu0
  %v2958 = vpop.f32.mrb[0].mxu0
  %v2959 = vadd.f32 %v2670, %v2958
  %v2960 = vpop.f32.mrb[0].mxu0
  %2961 = vmatprep.mubr.bf16.mxu0 0
  %2962 = vmatmul.mubr.bf16.gmra.mrb[0].mxu0 %v1261
  %v2963 = vpop.f32.mrb[0].mxu0
  %v2964 = vadd.f32 %v2675, %v2963
  %v2965 = vpop.f32.mrb[0].mxu0
  %v2966 = vpop.f32.mrb[0].mxu0
  %v2967 = vadd.f32 %v2678, %v2966
  %v2968 = vpop.f32.mrb[0].mxu0
  %2969 = vmatprep.mubr.bf16.mxu0 0
  %2970 = vmatmul.mubr.bf16.gmra.mrb[0].mxu0 %v1268
  %v2971 = vpop.f32.mrb[0].mxu0
  %v2972 = vadd.f32 %v2683, %v2971
  %v2973 = vpop.f32.mrb[0].mxu0
  %v2974 = vpop.f32.mrb[0].mxu0
  %v2975 = vadd.f32 %v2686, %v2974
  %v2976 = vpop.f32.mrb[0].mxu0
  %2977 = vmatprep.mubr.bf16.mxu0 0
  %2978 = vmatmul.mubr.bf16.gmra.mrb[0].mxu0 %v1275
  %v2979 = vpop.f32.mrb[0].mxu0
  %v2980 = vadd.f32 %v2691, %v2979
  %v2981 = vpop.f32.mrb[0].mxu0
  %v2982 = vpop.f32.mrb[0].mxu0
  %v2983 = vadd.f32 %v2694, %v2982
  %v2984 = vpop.f32.mrb[0].mxu0
  %2985 = vmatprep.mubr.bf16.mxu0 0
  %2986 = vmatmul.mubr.bf16.gmra.mrb[0].mxu0 %v1282
  %v2987 = vpop.f32.mrb[0].mxu0
  %v2988 = vadd.f32 %v2699, %v2987
  %v2989 = vpop.f32.mrb[0].mxu0
  %v2990 = vpop.f32.mrb[0].mxu0
  %v2991 = vadd.f32 %v2702, %v2990
  %v2992 = vpop.f32.mrb[0].mxu0
  %2993 = vmatprep.mubr.bf16.mxu0 0
  %2994 = vmatmul.mubr.bf16.gmra.mrb[0].mxu0 %v1289
  %v2995 = vpop.f32.mrb[0].mxu0
  %v2996 = vadd.f32 %v2707, %v2995
  %v2997 = vpop.f32.mrb[0].mxu0
  %v2998 = vpop.f32.mrb[0].mxu0
  %v2999 = vadd.f32 %v2710, %v2998
  %v3000 = vpop.f32.mrb[0].mxu0
  %3001 = vmatprep.mubr.bf16.mxu0 0
  %3002 = vmatmul.mubr.bf16.gmra.mrb[0].mxu0 %v1296
  %v3003 = vpop.f32.mrb[0].mxu0
  %v3004 = vadd.f32 %v2715, %v3003
  %v3005 = vpop.f32.mrb[0].mxu0
  %v3006 = vpop.f32.mrb[0].mxu0
  %v3007 = vadd.f32 %v2718, %v3006
  %v3008 = vpop.f32.mrb[0].mxu0
  %3009 = vmatprep.mubr.bf16.mxu0 0
  %3010 = vmatmul.mubr.bf16.gmra.mrb[0].mxu0 %v1303
  %v3011 = vpop.f32.mrb[0].mxu0
  %v3012 = vadd.f32 %v2723, %v3011
  %v3013 = vpop.f32.mrb[0].mxu0
  %v3014 = vpop.f32.mrb[0].mxu0
  %v3015 = vadd.f32 %v2726, %v3014
  %v3016 = vpop.f32.mrb[0].mxu0
  %3017 = vmatprep.mubr.bf16.mxu0 0
  %3018 = vmatmul.mubr.bf16.gmra.mrb[0].mxu0 %v1310
  %v3019 = vpop.f32.mrb[0].mxu0
  %v3020 = vadd.f32 %v2731, %v3019
  %v3021 = vpop.f32.mrb[0].mxu0
  %v3022 = vpop.f32.mrb[0].mxu0
  %v3023 = vadd.f32 %v2734, %v3022
  %v3024 = vpop.f32.mrb[0].mxu0
  %3025 = vmatprep.mubr.bf16.mxu0 0
  %3026 = vmatmul.mubr.bf16.gmra.mrb[0].mxu0 %v1317
  %v3027 = vpop.f32.mrb[0].mxu0
  %v3028 = vadd.f32 %v2739, %v3027
  %v3029 = vpop.f32.mrb[0].mxu0
  %v3030 = vpop.f32.mrb[0].mxu0
  %v3031 = vadd.f32 %v2742, %v3030
  %v3032 = vpop.f32.mrb[0].mxu0
  %3033 = vdwg.mxu0
  %3034 = vst [vmem:[%s3] sm:$0xff] %v2780
  %3035 = vst [vmem:[%s3 + $0x8] sm:$0xff] %v2783
  %3036 = vst [vmem:[%s3 + $0x10] sm:$0xff] %v2788
  %3037 = vst [vmem:[%s3 + $0x18] sm:$0xff] %v2791
  %3038 = vst [vmem:[%s3 + $0x20] sm:$0xff] %v2796
  %3039 = vst [vmem:[%s3 + $0x28] sm:$0xff] %v2799
  %3040 = vst [vmem:[%s3 + $0x30] sm:$0xff] %v2804
  %3041 = vst [vmem:[%s3 + $0x38] sm:$0xff] %v2807
  %3042 = vst [vmem:[%s3 + $0x40] sm:$0xff] %v2812
  %3043 = vst [vmem:[%s3 + $0x48] sm:$0xff] %v2815
  %3044 = vst [vmem:[%s3 + $0x50] sm:$0xff] %v2820
  %3045 = vst [vmem:[%s3 + $0x58] sm:$0xff] %v2823
  %3046 = vst [vmem:[%s3 + $0x60] sm:$0xff] %v2828
  %3047 = vst [vmem:[%s3 + $0x68] sm:$0xff] %v2831
  %3048 = vst [vmem:[%s3 + $0x70] sm:$0xff] %v2836
  %3049 = vst [vmem:[%s3 + $0x78] sm:$0xff] %v2839
  %3050 = vst [vmem:[%s3 + $0x80] sm:$0xff] %v2844
  %3051 = vst [vmem:[%s3 + $0x88] sm:$0xff] %v2847
  %3052 = vst [vmem:[%s3 + $0x90] sm:$0xff] %v2852
  %3053 = vst [vmem:[%s3 + $0x98] sm:$0xff] %v2855
  %3054 = vst [vmem:[%s3 + $0xa0] sm:$0xff] %v2860
  %3055 = vst [vmem:[%s3 + $0xa8] sm:$0xff] %v2863
  %3056 = vst [vmem:[%s3 + $0xb0] sm:$0xff] %v2868
  %3057 = vst [vmem:[%s3 + $0xb8] sm:$0xff] %v2871
  %3058 = vst [vmem:[%s3 + $0xc0] sm:$0xff] %v2876
  %3059 = vst [vmem:[%s3 + $0xc8] sm:$0xff] %v2879
  %3060 = vst [vmem:[%s3 + $0xd0] sm:$0xff] %v2884
  %3061 = vst [vmem:[%s3 + $0xd8] sm:$0xff] %v2887
  %3062 = vst [vmem:[%s3 + $0xe0] sm:$0xff] %v2892
  %3063 = vst [vmem:[%s3 + $0xe8] sm:$0xff] %v2895
  %3064 = vst [vmem:[%s3 + $0xf0] sm:$0xff] %v2900
  %3065 = vst [vmem:[%s3 + $0xf8] sm:$0xff] %v2903
  %3066 = vst [vmem:[%s3 + $0x100] sm:$0xff] %v2908
  %3067 = vst [vmem:[%s3 + $0x108] sm:$0xff] %v2911
  %3068 = vst [vmem:[%s3 + $0x110] sm:$0xff] %v2916
  %3069 = vst [vmem:[%s3 + $0x118] sm:$0xff] %v2919
  %3070 = vst [vmem:[%s3 + $0x120] sm:$0xff] %v2924
  %3071 = vst [vmem:[%s3 + $0x128] sm:$0xff] %v2927
  %3072 = vst [vmem:[%s3 + $0x130] sm:$0xff] %v2932
  %3073 = vst [vmem:[%s3 + $0x138] sm:$0xff] %v2935
  %3074 = vst [vmem:[%s3 + $0x140] sm:$0xff] %v2940
  %3075 = vst [vmem:[%s3 + $0x148] sm:$0xff] %v2943
  %3076 = vst [vmem:[%s3 + $0x150] sm:$0xff] %v2948
  %3077 = vst [vmem:[%s3 + $0x158] sm:$0xff] %v2951
  %3078 = vst [vmem:[%s3 + $0x160] sm:$0xff] %v2956
  %3079 = vst [vmem:[%s3 + $0x168] sm:$0xff] %v2959
  %3080 = vst [vmem:[%s3 + $0x170] sm:$0xff] %v2964
  %3081 = vst [vmem:[%s3 + $0x178] sm:$0xff] %v2967
  %3082 = vst [vmem:[%s3 + $0x180] sm:$0xff] %v2972
  %3083 = vst [vmem:[%s3 + $0x188] sm:$0xff] %v2975
  %3084 = vst [vmem:[%s3 + $0x190] sm:$0xff] %v2980
  %3085 = vst [vmem:[%s3 + $0x198] sm:$0xff] %v2983
  %3086 = vst [vmem:[%s3 + $0x1a0] sm:$0xff] %v2988
  %3087 = vst [vmem:[%s3 + $0x1a8] sm:$0xff] %v2991
  %3088 = vst [vmem:[%s3 + $0x1b0] sm:$0xff] %v2996
  %3089 = vst [vmem:[%s3 + $0x1b8] sm:$0xff] %v2999
  %3090 = vst [vmem:[%s3 + $0x1c0] sm:$0xff] %v3004
  %3091 = vst [vmem:[%s3 + $0x1c8] sm:$0xff] %v3007
  %3092 = vst [vmem:[%s3 + $0x1d0] sm:$0xff] %v3012
  %3093 = vst [vmem:[%s3 + $0x1d8] sm:$0xff] %v3015
  %3094 = vst [vmem:[%s3 + $0x1e0] sm:$0xff] %v3020
  %3095 = vst [vmem:[%s3 + $0x1e8] sm:$0xff] %v3023
  %3096 = vst [vmem:[%s3 + $0x1f0] sm:$0xff] %v3028
  %3097 = vst [vmem:[%s3 + $0x1f8] sm:$0xff] %v3031
  // Predicated region
  $region14: #{resnet_score_forward.9} parent=0 // pred_check
    _
  $region15: #{resnet_score_forward.9} parent=0 // pred_check_branch
    %3099 = sbr.rel (0) target = $region17
  $region16: #{resnet_score_forward.9} parent=0 // pred_region
    _
  $region17: #{resnet_score_forward.9} parent=0 // pred_fallthru
    _
  // Predicated region
  $region18: #{resnet_score_forward.9} parent=0 // pred_check
    _
  $region19: #{resnet_score_forward.9} parent=0 // pred_check_branch
    %3101 = sbr.rel (0) target = $region21
  $region20: #{resnet_score_forward.9} parent=0 // pred_region
    _
  $region21: #{resnet_score_forward.9} parent=0 // pred_fallthru
    _

</llo_original>
